<compile_context>
chip_gen: v6e
topology: v6e:2x2x1
jax: 0.10.0
libtpu: 0.0.40
codegen_flags: <defaults>
</compile_context>

<pallas_src>
import functools

import jax
import jax.numpy as jnp
from jax.experimental import pallas as pl
from jax.experimental.pallas import tpu as pltpu

NEG_SLOPE = 0.01   # nn.LeakyReLU() default
BN_EPS = 1e-5


# -----------------------------------------------------------------------------
# Chip-aware VMEM budget (v7x: 64 MiB physical; v5e/v6e: 128 MiB)
# -----------------------------------------------------------------------------
@functools.lru_cache(maxsize=None)
def _vmem_limit_bytes():
    fallback = 48 * 1024 * 1024          # safe on every generation incl. v7x
    try:
        cap = int(pltpu.get_tpu_info().vmem_capacity_bytes)
    except Exception:
        return fallback
    return max(min(cap * 3 // 4, 96 * 1024 * 1024), 16 * 1024 * 1024)


def _compiler_params(dim_semantics):
    return pltpu.CompilerParams(
        dimension_semantics=dim_semantics,
        vmem_limit_bytes=_vmem_limit_bytes(),
    )


def _choose_tk(K, cap=1024):
    """K tile that divides K exactly -> zero contraction padding."""
    if K % 128 != 0 or K <= cap:
        return K, 1                       # block == full K (legal even if K < 128)
    units = K // 128
    best = 1
    for d in range(1, units + 1):
        if units % d == 0 and d * 128 <= cap:
            best = d
    tk = best * 128
    return tk, K // tk


def _choose_tm(M, cap=512):
    """Row tile for the M-parallel axis (single tile if M is small)."""
    if M <= cap:
        return M, M, 1
    tm = cap
    Mp = ((M + tm - 1) // tm) * tm
    return tm, Mp, Mp // tm


# -----------------------------------------------------------------------------
# Kernel 1: GEMM + bias + LeakyReLU, tiled over (M parallel, K arbitrary).
# Accumulates directly into the resident f32 output block (no scratch).
# -----------------------------------------------------------------------------
def _gemm_bias_act_kernel(a_ref, b_ref, bias_ref, o_ref, *, activation):
    k = pl.program_id(1)

    @pl.when(k == 0)
    def _():
        o_ref[...] = jnp.zeros_like(o_ref)

    o_ref[...] += jnp.dot(a_ref[...], b_ref[...], preferred_element_type=jnp.float32)

    @pl.when(k == pl.num_programs(1) - 1)
    def _():
        y = o_ref[...] + bias_ref[...]
        if activation == "leaky":
            y = jnp.where(y > 0, y, NEG_SLOPE * y)
        o_ref[...] = y


def gemm_bias_act(a, b, bias, *, activation="leaky"):
    """act(a @ b + bias); a:(M,K) bf16, b:(K,N) bf16, bias:(N,) f32 -> (M,N) f32."""
    M, K = a.shape
    Kb, N = b.shape
    assert K == Kb
    tk, ksteps = _choose_tk(K)
    tm, Mp, msteps = _choose_tm(M)
    if Mp != M:
        a = jnp.pad(a, ((0, Mp - M), (0, 0)))
    bias2 = bias.reshape(1, N).astype(jnp.float32)

    out = pl.pallas_call(
        functools.partial(_gemm_bias_act_kernel, activation=activation),
        out_shape=jax.ShapeDtypeStruct((Mp, N), jnp.float32),
        grid_spec=pltpu.PrefetchScalarGridSpec(
            num_scalar_prefetch=0,
            grid=(msteps, ksteps),
            in_specs=[
                pl.BlockSpec((tm, tk), lambda m, k: (m, k)),
                pl.BlockSpec((tk, N), lambda m, k: (k, 0)),
                pl.BlockSpec((1, N), lambda m, k: (0, 0)),
            ],
            out_specs=pl.BlockSpec((tm, N), lambda m, k: (m, 0)),
        ),
        compiler_params=_compiler_params(("parallel", "arbitrary")),
    )(a, b, bias2)
    return out[:M] if Mp != M else out


# -----------------------------------------------------------------------------
# Kernel 2: GEMM + training-mode BatchNorm (full-batch stats over rows) + LeakyReLU.
# Bias is intentionally omitted: a per-column bias is cancelled by the BN mean.
# -----------------------------------------------------------------------------
def _gemm_bn_act_kernel(a_ref, b_ref, gamma_ref, beta_ref, o_ref):
    k = pl.program_id(0)

    @pl.when(k == 0)
    def _():
        o_ref[...] = jnp.zeros_like(o_ref)

    o_ref[...] += jnp.dot(a_ref[...], b_ref[...], preferred_element_type=jnp.float32)

    @pl.when(k == pl.num_programs(0) - 1)
    def _():
        y = o_ref[...]
        mean = jnp.mean(y, axis=0, keepdims=True)
        var = jnp.mean((y - mean) ** 2, axis=0, keepdims=True)   # biased (training mode)
        y = gamma_ref[...] * (y - mean) * jax.lax.rsqrt(var + BN_EPS) + beta_ref[...]
        o_ref[...] = jnp.where(y > 0, y, NEG_SLOPE * y)


def gemm_bn_act(a, b, gamma, beta):
    """LeakyReLU(BN(a @ b)) with full-batch statistics (single M tile).
    # TODO(synk): cross-M-tile sum / sum-of-squares accumulation for very large batches.
    """
    M, K = a.shape
    Kb, N = b.shape
    assert K == Kb
    tk, ksteps = _choose_tk(K)
    gamma2 = gamma.reshape(1, N).astype(jnp.float32)
    beta2 = beta.reshape(1, N).astype(jnp.float32)

    return pl.pallas_call(
        _gemm_bn_act_kernel,
        out_shape=jax.ShapeDtypeStruct((M, N), jnp.float32),
        grid_spec=pltpu.PrefetchScalarGridSpec(
            num_scalar_prefetch=0,
            grid=(ksteps,),
            in_specs=[
                pl.BlockSpec((M, tk), lambda k: (0, k)),
                pl.BlockSpec((tk, N), lambda k: (k, 0)),
                pl.BlockSpec((1, N), lambda k: (0, 0)),
                pl.BlockSpec((1, N), lambda k: (0, 0)),
            ],
            out_specs=pl.BlockSpec((M, N), lambda k: (0, 0)),
        ),
        compiler_params=_compiler_params(("arbitrary",)),
    )(a, b, gamma2, beta2)


# -----------------------------------------------------------------------------
# Kernel 3: fused FC head = Linear(K->H) + BatchNorm1d + LeakyReLU + Linear(H->1) + Sigmoid.
# The (M,H) accumulation lives in VMEM scratch; only the (M,1) result is written out.
# -----------------------------------------------------------------------------
def _mlp_head_kernel(a_ref, b_ref, gamma_ref, beta_ref, w2_ref, b2_ref, o_ref, acc_ref):
    k = pl.program_id(0)

    @pl.when(k == 0)
    def _():
        acc_ref[...] = jnp.zeros_like(acc_ref)

    acc_ref[...] += jnp.dot(a_ref[...], b_ref[...], preferred_element_type=jnp.float32)

    @pl.when(k == pl.num_programs(0) - 1)
    def _():
        y = acc_ref[...]
        mean = jnp.mean(y, axis=0, keepdims=True)
        var = jnp.mean((y - mean) ** 2, axis=0, keepdims=True)
        y = gamma_ref[...] * (y - mean) * jax.lax.rsqrt(var + BN_EPS) + beta_ref[...]
        y = jnp.where(y > 0, y, NEG_SLOPE * y)
        logits = jnp.dot(y, w2_ref[...], preferred_element_type=jnp.float32) + b2_ref[...]
        o_ref[...] = pl.reciprocal(1.0 + jnp.exp(-logits), approx=True)


def mlp_head(a, b, gamma, beta, w2, b2):
    """sigmoid(LeakyReLU(BN1d(a @ b)) @ w2 + b2); a:(M,K) bf16, b:(K,H) bf16 -> (M,1) f32."""
    M, K = a.shape
    Kb, H = b.shape
    assert K == Kb
    tk, ksteps = _choose_tk(K)
    gamma2 = gamma.reshape(1, H).astype(jnp.float32)
    beta2 = beta.reshape(1, H).astype(jnp.float32)
    w2_2 = w2.reshape(H, 1).astype(jnp.float32)
    b2_2 = b2.reshape(1, 1).astype(jnp.float32)

    return pl.pallas_call(
        _mlp_head_kernel,
        out_shape=jax.ShapeDtypeStruct((M, 1), jnp.float32),
        grid_spec=pltpu.PrefetchScalarGridSpec(
            num_scalar_prefetch=0,
            grid=(ksteps,),
            in_specs=[
                pl.BlockSpec((M, tk), lambda k: (0, k)),
                pl.BlockSpec((tk, H), lambda k: (k, 0)),
                pl.BlockSpec((1, H), lambda k: (0, 0)),
                pl.BlockSpec((1, H), lambda k: (0, 0)),
                pl.BlockSpec((H, 1), lambda k: (0, 0)),
                pl.BlockSpec((1, 1), lambda k: (0, 0)),
            ],
            out_specs=pl.BlockSpec((M, 1), lambda k: (0, 0)),
            scratch_shapes=[pltpu.VMEM((M, H), jnp.float32)],
        ),
        compiler_params=_compiler_params(("arbitrary",)),
    )(a, b, gamma2, beta2, w2_2, b2_2)


# -----------------------------------------------------------------------------
# NHWC im2col glue (plain JAX): rows n-major/h/w, columns ordered (kh, kw, c)
# -----------------------------------------------------------------------------
def im2col_nhwc(x, ksize, stride, pad):
    N, H, W, C = x.shape
    xp = jnp.pad(x, ((0, 0), (pad, pad), (pad, pad), (0, 0)))
    OH = (H + 2 * pad - ksize) // stride + 1
    OW = (W + 2 * pad - ksize) // stride + 1
    cols = []
    for i in range(ksize):
        for j in range(ksize):
            cols.append(xp[:, i:i + stride * OH:stride, j:j + stride * OW:stride, :])
    pat = jnp.stack(cols, axis=3)                    # (N, OH, OW, KH*KW, C)
    return pat.reshape(N * OH * OW, ksize * ksize * C), OH, OW


# -----------------------------------------------------------------------------
# Parameters: PyTorch layout + one-time (hoisted) layout/dtype prep for the kernels
# -----------------------------------------------------------------------------
def init_params(key):
    ks = jax.random.split(key, 12)
    s = 0.05
    return {
        "conv1_w": s * jax.random.normal(ks[0], (64, 1, 4, 4), jnp.float32),
        "conv1_b": 0.1 * jax.random.normal(ks[1], (64,), jnp.float32),
        "conv2_w": s * jax.random.normal(ks[2], (128, 64, 4, 4), jnp.float32),
        "conv2_b": 0.1 * jax.random.normal(ks[3], (128,), jnp.float32),
        "bn2d_g": 1.0 + 0.1 * jax.random.normal(ks[4], (128,), jnp.float32),
        "bn2d_b": 0.1 * jax.random.normal(ks[5], (128,), jnp.float32),
        "fc1_w": s * jax.random.normal(ks[6], (1024, 128 * 7 * 7), jnp.float32),
        "fc1_b": 0.1 * jax.random.normal(ks[7], (1024,), jnp.float32),
        "bn1d_g": 1.0 + 0.1 * jax.random.normal(ks[8], (1024,), jnp.float32),
        "bn1d_b": 0.1 * jax.random.normal(ks[9], (1024,), jnp.float32),
        "fc2_w": s * jax.random.normal(ks[10], (1, 1024), jnp.float32),
        "fc2_b": 0.1 * jax.random.normal(ks[11], (1,), jnp.float32),
    }


def prepare_params(p):
    """One-time weight prep hoisted out of the forward pass:
       * conv weights -> (kh*kw*cin, cout) matching the NHWC im2col column order
       * fc1 columns permuted from PyTorch (c,h,w) flatten to the NHWC (h,w,c) flatten
       * GEMM operands cast to bf16 once (kernels accumulate in f32)
       conv2_b / fc1_b are dropped: a per-channel bias is exactly cancelled by the
       mean subtraction of the following training-mode BatchNorm."""
    w1 = p["conv1_w"].transpose(0, 2, 3, 1).reshape(64, -1).T            # (16, 64)
    w2 = p["conv2_w"].transpose(0, 2, 3, 1).reshape(128, -1).T           # (1024, 128)
    fc1 = (p["fc1_w"].reshape(1024, 128, 7, 7)
           .transpose(0, 2, 3, 1).reshape(1024, -1).T)                   # (6272, 1024)
    return {
        "w1": w1.astype(jnp.bfloat16), "b1": p["conv1_b"].astype(jnp.float32),
        "w2": w2.astype(jnp.bfloat16),
        "bn2d_g": p["bn2d_g"], "bn2d_b": p["bn2d_b"],
        "fc1": fc1.astype(jnp.bfloat16),
        "bn1d_g": p["bn1d_g"], "bn1d_b": p["bn1d_b"],
        "fc2": p["fc2_w"].T.astype(jnp.float32),                         # (1024, 1)
        "fc2_b": p["fc2_b"].astype(jnp.float32),
    }


# -----------------------------------------------------------------------------
# Discriminator forward (NHWC end-to-end; no NCHW round trips)
# -----------------------------------------------------------------------------
@jax.jit
def discriminator_forward(x_nchw, prep):
    N = x_nchw.shape[0]
    x = jnp.transpose(x_nchw, (0, 2, 3, 1)).astype(jnp.bfloat16)          # (N,28,28,1)

    # conv1: Conv2d(1->64, k4, s2, p1) + LeakyReLU                        -> (N,14,14,64)
    a1, oh1, ow1 = im2col_nhwc(x, 4, 2, 1)                                # (N*196, 16)
    y1 = gemm_bias_act(a1, prep["w1"], prep["b1"], activation="leaky")    # (N*196, 64)
    y1 = y1.reshape(N, oh1, ow1, 64).astype(jnp.bfloat16)                 # stays NHWC

    # conv2: Conv2d(64->128, k4, s2, p1) + BatchNorm2d + LeakyReLU        -> (N,7,7,128)
    a2, oh2, ow2 = im2col_nhwc(y1, 4, 2, 1)                               # (N*49, 1024)
    y2 = gemm_bn_act(a2, prep["w2"], prep["bn2d_g"], prep["bn2d_b"])      # (N*49, 128)

    # NHWC flatten (fc1 columns were permuted to match) + fused
    # Linear(6272->1024) + BatchNorm1d + LeakyReLU + Linear(1024->1) + Sigmoid
    y2 = y2.reshape(N, oh2 * ow2 * 128).astype(jnp.bfloat16)              # (N, 6272)
    return mlp_head(y2, prep["fc1"], prep["bn1d_g"], prep["bn1d_b"],
                    prep["fc2"], prep["fc2_b"])                           # (N, 1)


# -----------------------------------------------------------------------------
# Pure-JAX reference (PyTorch layout/semantics; same bf16 matmul inputs, f32 accum)
# -----------------------------------------------------------------------------
@jax.jit
def reference_forward(x, p):
    def leaky(y):
        return jnp.where(y > 0, y, NEG_SLOPE * y)

    def bn(y, g, b, axes):
        mean = jnp.mean(y, axis=axes, keepdims=True)
        var = jnp.mean((y - mean) ** 2, axis=axes, keepdims=True)
        shape = [1] * y.ndim
        shape[1 if y.ndim == 4 else -1] = -1
        return g.reshape(shape) * (y - mean) * jax.lax.rsqrt(var + BN_EPS) + b.reshape(shape)

    def conv(x, w, b, stride, pad):
        y = jax.lax.conv_general_dilated(
            x.astype(jnp.bfloat16), w.astype(jnp.bfloat16),
            window_strides=(stride, stride), padding=[(pad, pad), (pad, pad)],
            dimension_numbers=("NCHW", "OIHW", "NCHW"),
            preferred_element_type=jnp.float32)
        return y + b.reshape(1, -1, 1, 1)

    N = x.shape[0]
    y1 = leaky(conv(x, p["conv1_w"], p["conv1_b"], 2, 1))                 # (N,64,14,14)
    y2 = conv(y1, p["conv2_w"], p["conv2_b"], 2, 1)                       # (N,128,7,7)
    y2 = leaky(bn(y2, p["bn2d_g"], p["bn2d_b"], (0, 2, 3)))
    y2f = y2.reshape(N, -1)                                               # (N, 6272) (c,h,w)
    y3 = jnp.dot(y2f.astype(jnp.bfloat16), p["fc1_w"].T.astype(jnp.bfloat16),
                 preferred_element_type=jnp.float32) + p["fc1_b"]
    y3 = leaky(bn(y3, p["bn1d_g"], p["bn1d_b"], (0,)))
    logits = jnp.dot(y3, p["fc2_w"].T, preferred_element_type=jnp.float32) + p["fc2_b"]
    return jax.nn.sigmoid(logits)


if __name__ == "__main__":
    key = jax.random.PRNGKey(0)
    pkey, xkey = jax.random.split(key)
    params = init_params(pkey)
    prep = prepare_params(params)                    # one-time, hoisted out of forward

    # MNIST-sized input implied by the 128*7*7 flatten: (batch, 1, 28, 28)
    x = jax.random.normal(xkey, (4, 1, 28, 28), jnp.float32)

    out = jax.block_until_ready(discriminator_forward(x, prep))
    assert out.shape == (4, 1), out.shape
    assert bool(jnp.all(jnp.isfinite(out)))

    ref = jax.block_until_ready(reference_forward(x, params))
    assert bool(jnp.allclose(out, ref, atol=2e-2)), (out, ref)

    print("KERNEL_OK")
</pallas_src>

<mosaic_0001>
module attributes {stable_mosaic.version = 11 : i64} {
  func.func @_gemm_bias_act_kernel(%arg0: i32, %arg1: i32, %arg2: memref<512x16xbf16, #tpu.memory_space<vmem>>, %arg3: memref<16x64xbf16, #tpu.memory_space<vmem>>, %arg4: memref<1x64xf32, #tpu.memory_space<vmem>>, %arg5: memref<512x64xf32, #tpu.memory_space<vmem>>) attributes {dimension_semantics = [#tpu.dimension_semantics<parallel>, #tpu.dimension_semantics<arbitrary>], iteration_bounds = array<i64: 2, 1>, scalar_prefetch = 0 : i64, scratch_operands = 0 : i64, tpu.core_type = #tpu.core_type<tc>, window_params = [{transform_indices = @transform_0, window_bounds = array<i64: 512, 16>}, {transform_indices = @transform_1, window_bounds = array<i64: 16, 64>}, {pipeline_mode = #tpu.pipeline_mode<synchronous>, transform_indices = @transform_2, window_bounds = array<i64: 1, 64>}, {transform_indices = @transform_3, window_bounds = array<i64: 512, 64>}]} {
    %c0_i32 = arith.constant 0 : i32
    %0 = arith.cmpi eq, %arg1, %c0_i32 : i32
    %1 = arith.extui %0 : i1 to i32
    %c0_i32_0 = arith.constant 0 : i32
    %2 = arith.cmpi ne, %1, %c0_i32_0 : i32
    scf.if %2 {
      %cst_10 = arith.constant 0.000000e+00 : f32
      %12 = vector.broadcast %cst_10 : f32 to vector<512x64xf32>
      %c0_11 = arith.constant 0 : index
      %c0_12 = arith.constant 0 : index
      %13 = vector.load %arg5[%c0_11, %c0_12] : memref<512x64xf32, #tpu.memory_space<vmem>>, vector<512x64xf32>
      tpu.vector_store %arg5[%c0_11, %c0_12], %12 {strides = array<i32>} : memref<512x64xf32, #tpu.memory_space<vmem>>, vector<512x64xf32>,
    } else {
    }
    %c0 = arith.constant 0 : index
    %c0_1 = arith.constant 0 : index
    %3 = vector.load %arg5[%c0, %c0_1] : memref<512x64xf32, #tpu.memory_space<vmem>>, vector<512x64xf32>
    %c0_2 = arith.constant 0 : index
    %c0_3 = arith.constant 0 : index
    %4 = vector.load %arg2[%c0_2, %c0_3] : memref<512x16xbf16, #tpu.memory_space<vmem>>, vector<512x16xbf16>
    %c0_4 = arith.constant 0 : index
    %c0_5 = arith.constant 0 : index
    %5 = vector.load %arg3[%c0_4, %c0_5] : memref<16x64xbf16, #tpu.memory_space<vmem>>, vector<16x64xbf16>
    %cst = arith.constant dense<0.000000e+00> : vector<512x64xf32>
    %6 = tpu.matmul %4, %5, %cst {dimension_numbers = #tpu.dot_dimension_numbers<[1], [0], [0], [1], [0, 0, 1, 1], [], []>} : vector<512x16xbf16>, vector<16x64xbf16>, vector<512x64xf32> -> vector<512x64xf32>
    %7 = arith.addf %3, %6 : vector<512x64xf32>
    %c0_6 = arith.constant 0 : index
    %c0_7 = arith.constant 0 : index
    %8 = vector.load %arg5[%c0_6, %c0_7] : memref<512x64xf32, #tpu.memory_space<vmem>>, vector<512x64xf32>
    tpu.vector_store %arg5[%c0_6, %c0_7], %7 {strides = array<i32>} : memref<512x64xf32, #tpu.memory_space<vmem>>, vector<512x64xf32>,
    %c0_i32_8 = arith.constant 0 : i32
    %9 = arith.cmpi eq, %arg1, %c0_i32_8 : i32
    %10 = arith.extui %9 : i1 to i32
    %c0_i32_9 = arith.constant 0 : i32
    %11 = arith.cmpi ne, %10, %c0_i32_9 : i32
    scf.if %11 {
      %c0_10 = arith.constant 0 : index
      %c0_11 = arith.constant 0 : index
      %12 = vector.load %arg5[%c0_10, %c0_11] : memref<512x64xf32, #tpu.memory_space<vmem>>, vector<512x64xf32>
      %c0_12 = arith.constant 0 : index
      %c0_13 = arith.constant 0 : index
      %13 = vector.load %arg4[%c0_12, %c0_13] : memref<1x64xf32, #tpu.memory_space<vmem>>, vector<1x64xf32>
      %14 = vector.broadcast %13 : vector<1x64xf32> to vector<512x64xf32>
      %15 = arith.addf %12, %14 : vector<512x64xf32>
      %cst_14 = arith.constant 0.000000e+00 : f32
      %16 = vector.broadcast %cst_14 : f32 to vector<512x64xf32>
      %17 = arith.cmpf ogt, %15, %16 : vector<512x64xf32>
      %cst_15 = arith.constant 0.00999999977 : f32
      %18 = vector.broadcast %cst_15 : f32 to vector<512x64xf32>
      %19 = arith.mulf %18, %15 : vector<512x64xf32>
      %20 = arith.select %17, %15, %19 : vector<512x64xi1>, vector<512x64xf32>
      %c0_16 = arith.constant 0 : index
      %c0_17 = arith.constant 0 : index
      %21 = vector.load %arg5[%c0_16, %c0_17] : memref<512x64xf32, #tpu.memory_space<vmem>>, vector<512x64xf32>
      tpu.vector_store %arg5[%c0_16, %c0_17], %20 {strides = array<i32>} : memref<512x64xf32, #tpu.memory_space<vmem>>, vector<512x64xf32>,
    } else {
    }
    return
  }
  func.func @transform_0(%arg0: i32, %arg1: i32) -> (i32, i32) {
    %c0_i32 = arith.constant 0 : i32
    return %arg0, %arg1 : i32, i32
  }
  func.func @transform_1(%arg0: i32, %arg1: i32) -> (i32, i32) {
    %c0_i32 = arith.constant 0 : i32
    %c0_i32_0 = arith.constant 0 : i32
    return %arg1, %c0_i32 : i32, i32
  }
  func.func @transform_2(%arg0: i32, %arg1: i32) -> (i32, i32) {
    %c0_i32 = arith.constant 0 : i32
    %c0_i32_0 = arith.constant 0 : i32
    %c0_i32_1 = arith.constant 0 : i32
    return %c0_i32, %c0_i32_0 : i32, i32
  }
  func.func @transform_3(%arg0: i32, %arg1: i32) -> (i32, i32) {
    %c0_i32 = arith.constant 0 : i32
    %c0_i32_0 = arith.constant 0 : i32
    return %arg0, %c0_i32 : i32, i32
  }
}

module attributes {stable_mosaic.version = 11 : i64} {
  func.func @_gemm_bn_act_kernel(%arg0: i32, %arg1: memref<196x1024xbf16, #tpu.memory_space<vmem>>, %arg2: memref<1024x128xbf16, #tpu.memory_space<vmem>>, %arg3: memref<1x128xf32, #tpu.memory_space<vmem>>, %arg4: memref<1x128xf32, #tpu.memory_space<vmem>>, %arg5: memref<196x128xf32, #tpu.memory_space<vmem>>) attributes {dimension_semantics = [#tpu.dimension_semantics<arbitrary>], iteration_bounds = array<i64: 1>, scalar_prefetch = 0 : i64, scratch_operands = 0 : i64, tpu.core_type = #tpu.core_type<tc>, window_params = [{transform_indices = @transform_0, window_bounds = array<i64: 196, 1024>}, {transform_indices = @transform_1, window_bounds = array<i64: 1024, 128>}, {pipeline_mode = #tpu.pipeline_mode<synchronous>, transform_indices = @transform_2, window_bounds = array<i64: 1, 128>}, {pipeline_mode = #tpu.pipeline_mode<synchronous>, transform_indices = @transform_3, window_bounds = array<i64: 1, 128>}, {pipeline_mode = #tpu.pipeline_mode<synchronous>, transform_indices = @transform_4, window_bounds = array<i64: 196, 128>}]} {
    %c0_i32 = arith.constant 0 : i32
    %0 = arith.cmpi eq, %arg0, %c0_i32 : i32
    %1 = arith.extui %0 : i1 to i32
    %c0_i32_0 = arith.constant 0 : i32
    %2 = arith.cmpi ne, %1, %c0_i32_0 : i32
    scf.if %2 {
      %cst_10 = arith.constant 0.000000e+00 : f32
      %12 = vector.broadcast %cst_10 : f32 to vector<196x128xf32>
      %c0_11 = arith.constant 0 : index
      %c0_12 = arith.constant 0 : index
      %13 = vector.load %arg5[%c0_11, %c0_12] : memref<196x128xf32, #tpu.memory_space<vmem>>, vector<196x128xf32>
      tpu.vector_store %arg5[%c0_11, %c0_12], %12 {strides = array<i32>} : memref<196x128xf32, #tpu.memory_space<vmem>>, vector<196x128xf32>,
    } else {
    }
    %c0 = arith.constant 0 : index
    %c0_1 = arith.constant 0 : index
    %3 = vector.load %arg5[%c0, %c0_1] : memref<196x128xf32, #tpu.memory_space<vmem>>, vector<196x128xf32>
    %c0_2 = arith.constant 0 : index
    %c0_3 = arith.constant 0 : index
    %4 = vector.load %arg1[%c0_2, %c0_3] : memref<196x1024xbf16, #tpu.memory_space<vmem>>, vector<196x1024xbf16>
    %c0_4 = arith.constant 0 : index
    %c0_5 = arith.constant 0 : index
    %5 = vector.load %arg2[%c0_4, %c0_5] : memref<1024x128xbf16, #tpu.memory_space<vmem>>, vector<1024x128xbf16>
    %cst = arith.constant dense<0.000000e+00> : vector<196x128xf32>
    %6 = tpu.matmul %4, %5, %cst {dimension_numbers = #tpu.dot_dimension_numbers<[1], [0], [0], [1], [0, 0, 1, 1], [], []>} : vector<196x1024xbf16>, vector<1024x128xbf16>, vector<196x128xf32> -> vector<196x128xf32>
    %7 = arith.addf %3, %6 : vector<196x128xf32>
    %c0_6 = arith.constant 0 : index
    %c0_7 = arith.constant 0 : index
    %8 = vector.load %arg5[%c0_6, %c0_7] : memref<196x128xf32, #tpu.memory_space<vmem>>, vector<196x128xf32>
    tpu.vector_store %arg5[%c0_6, %c0_7], %7 {strides = array<i32>} : memref<196x128xf32, #tpu.memory_space<vmem>>, vector<196x128xf32>,
    %c0_i32_8 = arith.constant 0 : i32
    %9 = arith.cmpi eq, %arg0, %c0_i32_8 : i32
    %10 = arith.extui %9 : i1 to i32
    %c0_i32_9 = arith.constant 0 : i32
    %11 = arith.cmpi ne, %10, %c0_i32_9 : i32
    scf.if %11 {
      %c0_10 = arith.constant 0 : index
      %c0_11 = arith.constant 0 : index
      %12 = vector.load %arg5[%c0_10, %c0_11] : memref<196x128xf32, #tpu.memory_space<vmem>>, vector<196x128xf32>
      %cst_12 = arith.constant dense<0.000000e+00> : vector<128xf32>
      %13 = vector.multi_reduction <add>, %12, %cst_12 [0] : vector<196x128xf32> to vector<128xf32>
      %14 = vector.shape_cast %13 : vector<128xf32> to vector<1x128xf32>
      %cst_13 = arith.constant 1.960000e+02 : f32
      %15 = vector.broadcast %cst_13 : f32 to vector<1x128xf32>
      %16 = arith.divf %14, %15 : vector<1x128xf32>
      %17 = vector.broadcast %16 : vector<1x128xf32> to vector<196x128xf32>
      %18 = arith.subf %12, %17 : vector<196x128xf32>
      %19 = arith.mulf %18, %18 : vector<196x128xf32>
      %cst_14 = arith.constant dense<0.000000e+00> : vector<128xf32>
      %20 = vector.multi_reduction <add>, %19, %cst_14 [0] : vector<196x128xf32> to vector<128xf32>
      %21 = vector.shape_cast %20 : vector<128xf32> to vector<1x128xf32>
      %cst_15 = arith.constant 1.960000e+02 : f32
      %22 = vector.broadcast %cst_15 : f32 to vector<1x128xf32>
      %23 = arith.divf %21, %22 : vector<1x128xf32>
      %c0_16 = arith.constant 0 : index
      %c0_17 = arith.constant 0 : index
      %24 = vector.load %arg3[%c0_16, %c0_17] : memref<1x128xf32, #tpu.memory_space<vmem>>, vector<1x128xf32>
      %25 = vector.broadcast %16 : vector<1x128xf32> to vector<196x128xf32>
      %26 = arith.subf %12, %25 : vector<196x128xf32>
      %27 = vector.broadcast %24 : vector<1x128xf32> to vector<196x128xf32>
      %28 = arith.mulf %27, %26 : vector<196x128xf32>
      %cst_18 = arith.constant 9.99999974E-6 : f32
      %29 = vector.broadcast %cst_18 : f32 to vector<1x128xf32>
      %30 = arith.addf %23, %29 : vector<1x128xf32>
      %31 = math.rsqrt %30 : vector<1x128xf32>
      %32 = vector.broadcast %31 : vector<1x128xf32> to vector<196x128xf32>
      %33 = arith.mulf %28, %32 : vector<196x128xf32>
      %c0_19 = arith.constant 0 : index
      %c0_20 = arith.constant 0 : index
      %34 = vector.load %arg4[%c0_19, %c0_20] : memref<1x128xf32, #tpu.memory_space<vmem>>, vector<1x128xf32>
      %35 = vector.broadcast %34 : vector<1x128xf32> to vector<196x128xf32>
      %36 = arith.addf %33, %35 : vector<196x128xf32>
      %cst_21 = arith.constant 0.000000e+00 : f32
      %37 = vector.broadcast %cst_21 : f32 to vector<196x128xf32>
      %38 = arith.cmpf ogt, %36, %37 : vector<196x128xf32>
      %cst_22 = arith.constant 0.00999999977 : f32
      %39 = vector.broadcast %cst_22 : f32 to vector<196x128xf32>
      %40 = arith.mulf %39, %36 : vector<196x128xf32>
      %41 = arith.select %38, %36, %40 : vector<196x128xi1>, vector<196x128xf32>
      %c0_23 = arith.constant 0 : index
      %c0_24 = arith.constant 0 : index
      %42 = vector.load %arg5[%c0_23, %c0_24] : memref<196x128xf32, #tpu.memory_space<vmem>>, vector<196x128xf32>
      tpu.vector_store %arg5[%c0_23, %c0_24], %41 {strides = array<i32>} : memref<196x128xf32, #tpu.memory_space<vmem>>, vector<196x128xf32>,
    } else {
    }
    return
  }
  func.func @transform_0(%arg0: i32) -> (i32, i32) {
    %c0_i32 = arith.constant 0 : i32
    %c0_i32_0 = arith.constant 0 : i32
    return %c0_i32, %arg0 : i32, i32
  }
  func.func @transform_1(%arg0: i32) -> (i32, i32) {
    %c0_i32 = arith.constant 0 : i32
    %c0_i32_0 = arith.constant 0 : i32
    return %arg0, %c0_i32 : i32, i32
  }
  func.func @transform_2(%arg0: i32) -> (i32, i32) {
    %c0_i32 = arith.constant 0 : i32
    %c0_i32_0 = arith.constant 0 : i32
    %c0_i32_1 = arith.constant 0 : i32
    return %c0_i32, %c0_i32_0 : i32, i32
  }
  func.func @transform_3(%arg0: i32) -> (i32, i32) {
    %c0_i32 = arith.constant 0 : i32
    %c0_i32_0 = arith.constant 0 : i32
    %c0_i32_1 = arith.constant 0 : i32
    return %c0_i32, %c0_i32_0 : i32, i32
  }
  func.func @transform_4(%arg0: i32) -> (i32, i32) {
    %c0_i32 = arith.constant 0 : i32
    %c0_i32_0 = arith.constant 0 : i32
    %c0_i32_1 = arith.constant 0 : i32
    return %c0_i32, %c0_i32_0 : i32, i32
  }
}

module attributes {stable_mosaic.version = 11 : i64} {
  func.func @_mlp_head_kernel(%arg0: i32, %arg1: memref<4x896xbf16, #tpu.memory_space<vmem>>, %arg2: memref<896x1024xbf16, #tpu.memory_space<vmem>>, %arg3: memref<1x1024xf32, #tpu.memory_space<vmem>>, %arg4: memref<1x1024xf32, #tpu.memory_space<vmem>>, %arg5: memref<1024x1xf32, #tpu.memory_space<vmem>>, %arg6: memref<1x1xf32, #tpu.memory_space<vmem>>, %arg7: memref<4x1xf32, #tpu.memory_space<vmem>>, %arg8: memref<4x1024xf32, #tpu.memory_space<vmem>>) attributes {dimension_semantics = [#tpu.dimension_semantics<arbitrary>], iteration_bounds = array<i64: 7>, scalar_prefetch = 0 : i64, scratch_operands = 1 : i64, tpu.core_type = #tpu.core_type<tc>, window_params = [{transform_indices = @transform_0, window_bounds = array<i64: 4, 896>}, {transform_indices = @transform_1, window_bounds = array<i64: 896, 1024>}, {pipeline_mode = #tpu.pipeline_mode<synchronous>, transform_indices = @transform_2, window_bounds = array<i64: 1, 1024>}, {pipeline_mode = #tpu.pipeline_mode<synchronous>, transform_indices = @transform_3, window_bounds = array<i64: 1, 1024>}, {pipeline_mode = #tpu.pipeline_mode<synchronous>, transform_indices = @transform_4, window_bounds = array<i64: 1024, 1>}, {pipeline_mode = #tpu.pipeline_mode<synchronous>, transform_indices = @transform_5, window_bounds = array<i64: 1, 1>}, {pipeline_mode = #tpu.pipeline_mode<synchronous>, transform_indices = @transform_6, window_bounds = array<i64: 4, 1>}]} {
    %c0_i32 = arith.constant 0 : i32
    %0 = arith.cmpi eq, %arg0, %c0_i32 : i32
    %1 = arith.extui %0 : i1 to i32
    %c0_i32_0 = arith.constant 0 : i32
    %2 = arith.cmpi ne, %1, %c0_i32_0 : i32
    scf.if %2 {
      %cst_9 = arith.constant 0.000000e+00 : f32
      %12 = vector.broadcast %cst_9 : f32 to vector<4x1024xf32>
      %c0_10 = arith.constant 0 : index
      %c0_11 = arith.constant 0 : index
      %13 = vector.load %arg8[%c0_10, %c0_11] : memref<4x1024xf32, #tpu.memory_space<vmem>>, vector<4x1024xf32>
      tpu.vector_store %arg8[%c0_10, %c0_11], %12 {strides = array<i32>} : memref<4x1024xf32, #tpu.memory_space<vmem>>, vector<4x1024xf32>,
    } else {
    }
    %c0 = arith.constant 0 : index
    %c0_1 = arith.constant 0 : index
    %3 = vector.load %arg8[%c0, %c0_1] : memref<4x1024xf32, #tpu.memory_space<vmem>>, vector<4x1024xf32>
    %c0_2 = arith.constant 0 : index
    %c0_3 = arith.constant 0 : index
    %4 = vector.load %arg1[%c0_2, %c0_3] : memref<4x896xbf16, #tpu.memory_space<vmem>>, vector<4x896xbf16>
    %c0_4 = arith.constant 0 : index
    %c0_5 = arith.constant 0 : index
    %5 = vector.load %arg2[%c0_4, %c0_5] : memref<896x1024xbf16, #tpu.memory_space<vmem>>, vector<896x1024xbf16>
    %cst = arith.constant dense<0.000000e+00> : vector<4x1024xf32>
    %6 = tpu.matmul %4, %5, %cst {dimension_numbers = #tpu.dot_dimension_numbers<[1], [0], [0], [1], [0, 0, 1, 1], [], []>} : vector<4x896xbf16>, vector<896x1024xbf16>, vector<4x1024xf32> -> vector<4x1024xf32>
    %7 = arith.addf %3, %6 : vector<4x1024xf32>
    %c0_6 = arith.constant 0 : index
    %c0_7 = arith.constant 0 : index
    %8 = vector.load %arg8[%c0_6, %c0_7] : memref<4x1024xf32, #tpu.memory_space<vmem>>, vector<4x1024xf32>
    tpu.vector_store %arg8[%c0_6, %c0_7], %7 {strides = array<i32>} : memref<4x1024xf32, #tpu.memory_space<vmem>>, vector<4x1024xf32>,
    %c6_i32 = arith.constant 6 : i32
    %9 = arith.cmpi eq, %arg0, %c6_i32 : i32
    %10 = arith.extui %9 : i1 to i32
    %c0_i32_8 = arith.constant 0 : i32
    %11 = arith.cmpi ne, %10, %c0_i32_8 : i32
    scf.if %11 {
      %c0_9 = arith.constant 0 : index
      %c0_10 = arith.constant 0 : index
      %12 = vector.load %arg8[%c0_9, %c0_10] : memref<4x1024xf32, #tpu.memory_space<vmem>>, vector<4x1024xf32>
      %cst_11 = arith.constant dense<0.000000e+00> : vector<1024xf32>
      %13 = vector.multi_reduction <add>, %12, %cst_11 [0] : vector<4x1024xf32> to vector<1024xf32>
      %14 = vector.shape_cast %13 : vector<1024xf32> to vector<1x1024xf32>
      %cst_12 = arith.constant 4.000000e+00 : f32
      %15 = vector.broadcast %cst_12 : f32 to vector<1x1024xf32>
      %16 = arith.divf %14, %15 : vector<1x1024xf32>
      %17 = vector.broadcast %16 : vector<1x1024xf32> to vector<4x1024xf32>
      %18 = arith.subf %12, %17 : vector<4x1024xf32>
      %19 = arith.mulf %18, %18 : vector<4x1024xf32>
      %cst_13 = arith.constant dense<0.000000e+00> : vector<1024xf32>
      %20 = vector.multi_reduction <add>, %19, %cst_13 [0] : vector<4x1024xf32> to vector<1024xf32>
      %21 = vector.shape_cast %20 : vector<1024xf32> to vector<1x1024xf32>
      %cst_14 = arith.constant 4.000000e+00 : f32
      %22 = vector.broadcast %cst_14 : f32 to vector<1x1024xf32>
      %23 = arith.divf %21, %22 : vector<1x1024xf32>
      %c0_15 = arith.constant 0 : index
      %c0_16 = arith.constant 0 : index
      %24 = vector.load %arg3[%c0_15, %c0_16] : memref<1x1024xf32, #tpu.memory_space<vmem>>, vector<1x1024xf32>
      %25 = vector.broadcast %16 : vector<1x1024xf32> to vector<4x1024xf32>
      %26 = arith.subf %12, %25 : vector<4x1024xf32>
      %27 = vector.broadcast %24 : vector<1x1024xf32> to vector<4x1024xf32>
      %28 = arith.mulf %27, %26 : vector<4x1024xf32>
      %cst_17 = arith.constant 9.99999974E-6 : f32
      %29 = vector.broadcast %cst_17 : f32 to vector<1x1024xf32>
      %30 = arith.addf %23, %29 : vector<1x1024xf32>
      %31 = math.rsqrt %30 : vector<1x1024xf32>
      %32 = vector.broadcast %31 : vector<1x1024xf32> to vector<4x1024xf32>
      %33 = arith.mulf %28, %32 : vector<4x1024xf32>
      %c0_18 = arith.constant 0 : index
      %c0_19 = arith.constant 0 : index
      %34 = vector.load %arg4[%c0_18, %c0_19] : memref<1x1024xf32, #tpu.memory_space<vmem>>, vector<1x1024xf32>
      %35 = vector.broadcast %34 : vector<1x1024xf32> to vector<4x1024xf32>
      %36 = arith.addf %33, %35 : vector<4x1024xf32>
      %cst_20 = arith.constant 0.000000e+00 : f32
      %37 = vector.broadcast %cst_20 : f32 to vector<4x1024xf32>
      %38 = arith.cmpf ogt, %36, %37 : vector<4x1024xf32>
      %cst_21 = arith.constant 0.00999999977 : f32
      %39 = vector.broadcast %cst_21 : f32 to vector<4x1024xf32>
      %40 = arith.mulf %39, %36 : vector<4x1024xf32>
      %41 = arith.select %38, %36, %40 : vector<4x1024xi1>, vector<4x1024xf32>
      %c0_22 = arith.constant 0 : index
      %c0_23 = arith.constant 0 : index
      %42 = vector.load %arg5[%c0_22, %c0_23] : memref<1024x1xf32, #tpu.memory_space<vmem>>, vector<1024x1xf32>
      %cst_24 = arith.constant dense<0.000000e+00> : vector<4x1xf32>
      %43 = tpu.matmul %41, %42, %cst_24 {dimension_numbers = #tpu.dot_dimension_numbers<[1], [0], [0], [1], [0, 0, 1, 1], [], []>} : vector<4x1024xf32>, vector<1024x1xf32>, vector<4x1xf32> -> vector<4x1xf32>
      %c0_25 = arith.constant 0 : index
      %c0_26 = arith.constant 0 : index
      %44 = vector.load %arg6[%c0_25, %c0_26] : memref<1x1xf32, #tpu.memory_space<vmem>>, vector<1x1xf32>
      %45 = vector.broadcast %44 : vector<1x1xf32> to vector<4x1xf32>
      %46 = arith.addf %43, %45 : vector<4x1xf32>
      %cst_27 = arith.constant 0.000000e+00 : f32
      %47 = vector.broadcast %cst_27 : f32 to vector<4x1xf32>
      %48 = arith.subf %47, %46 : vector<4x1xf32>
      %49 = math.exp %48 : vector<4x1xf32>
      %cst_28 = arith.constant 1.000000e+00 : f32
      %50 = vector.broadcast %cst_28 : f32 to vector<4x1xf32>
      %51 = arith.addf %50, %49 : vector<4x1xf32>
      %52 = tpu.reciprocal %51 {approx = true} : vector<4x1xf32> -> vector<4x1xf32>
      %c0_29 = arith.constant 0 : index
      %c0_30 = arith.constant 0 : index
      %53 = vector.load %arg7[%c0_29, %c0_30] : memref<4x1xf32, #tpu.memory_space<vmem>>, vector<4x1xf32>
      tpu.vector_store %arg7[%c0_29, %c0_30], %52 {strides = array<i32>} : memref<4x1xf32, #tpu.memory_space<vmem>>, vector<4x1xf32>,
    } else {
    }
    return
  }
  func.func @transform_0(%arg0: i32) -> (i32, i32) {
    %c0_i32 = arith.constant 0 : i32
    %c0_i32_0 = arith.constant 0 : i32
    return %c0_i32, %arg0 : i32, i32
  }
  func.func @transform_1(%arg0: i32) -> (i32, i32) {
    %c0_i32 = arith.constant 0 : i32
    %c0_i32_0 = arith.constant 0 : i32
    return %arg0, %c0_i32 : i32, i32
  }
  func.func @transform_2(%arg0: i32) -> (i32, i32) {
    %c0_i32 = arith.constant 0 : i32
    %c0_i32_0 = arith.constant 0 : i32
    %c0_i32_1 = arith.constant 0 : i32
    return %c0_i32, %c0_i32_0 : i32, i32
  }
  func.func @transform_3(%arg0: i32) -> (i32, i32) {
    %c0_i32 = arith.constant 0 : i32
    %c0_i32_0 = arith.constant 0 : i32
    %c0_i32_1 = arith.constant 0 : i32
    return %c0_i32, %c0_i32_0 : i32, i32
  }
  func.func @transform_4(%arg0: i32) -> (i32, i32) {
    %c0_i32 = arith.constant 0 : i32
    %c0_i32_0 = arith.constant 0 : i32
    %c0_i32_1 = arith.constant 0 : i32
    return %c0_i32, %c0_i32_0 : i32, i32
  }
  func.func @transform_5(%arg0: i32) -> (i32, i32) {
    %c0_i32 = arith.constant 0 : i32
    %c0_i32_0 = arith.constant 0 : i32
    %c0_i32_1 = arith.constant 0 : i32
    return %c0_i32, %c0_i32_0 : i32, i32
  }
  func.func @transform_6(%arg0: i32) -> (i32, i32) {
    %c0_i32 = arith.constant 0 : i32
    %c0_i32_0 = arith.constant 0 : i32
    %c0_i32_1 = arith.constant 0 : i32
    return %c0_i32, %c0_i32_0 : i32, i32
  }
}

</mosaic_0001>

<llo_original>
// kernel: discriminator_forward.3
$region0: #{discriminator_forward.3}
  #allocation0 [shape = 'u32[]', space=smem, size = 0x4, offset = 0x4, fixed_abs, tag = 'smem constant byte address 0x4 - core index']
  #allocation1 [shape = 'u32[144,128]{1,0:T(1,128)}', space=vmem, size = 0x12000, scoped, tag = 'internal scratch']
  %s0 = inlined_call_operand.vmem [shape: bf16[1024,16], index: 0, kind: input, shape index: {}]
  %s1 = inlined_call_operand.hbm [shape: bf16[16,64], index: 1, kind: input, shape index: {}]
  %s2 = inlined_call_operand.hbm [shape: f32[1,64], index: 2, kind: input, shape index: {}]
  %s3 = inlined_call_operand.vmem [shape: f32[1024,64], index: 3, kind: output, shape index: {}]
  %s4 = sld [smem:[#allocation0]]
  $region61: #{discriminator_forward.3} parent=0
    _
  %s6 = ssub.s32 1, %s4
  %s7 = scalar_select 0, %s6, %s4
  $region1: #{discriminator_forward.3} parent=0
    #allocation2 [shape = 'u8[4096]{0}', space=vmem, size = 0x1000, scoped, tag = 'input window, operand 1, single buffered']
    #allocation3 [shape = 's32[2]{0}', space=sflag, size = 0x8, scoped, tag = 'scoped memory for discriminator_forward.3']
    #allocation4 [shape = 'u8[512]{0}', space=vmem, size = 0x400, scoped, tag = 'input window, operand 2, single buffered']
    #allocation5 [shape = 's32[1]{0}', space=sflag, size = 0x4, scoped, tag = 'scoped memory for discriminator_forward.3']
    %8 = vsyncpa [#allocation3], 0
    %9 = vsyncpa [#allocation5], 0
    loop: start=0, step=1, limit=4
    $region2: #{discriminator_forward.3} parent=1 // loop_pre_header
      _
    $region3: #{discriminator_forward.3} parent=1 // loop_header
      %s11 = sphi 0, %s15
      %p12 = scmp.ge.s32.totalorder %s11, 4
      %s18 = sphi 0, %s30
      %s19 = sphi 0, %s26
      %s20 = sphi 0, %s18
      %s21 = sphi 0, %s19
      %s22 = sphi 0, %s20
      %s23 = sphi 0, %s21
      %s35 = sphi 0, %s37
      %s38 = sphi 0, %s35
      %s39 = sphi 0, %s38
      %s55 = sphi 0, %s39
      %s61 = sphi 0, %s63
      %s64 = sphi 0, %s61
      %s65 = sphi 0, %s64
      %s81 = sphi 0, %s65
      %s85 = sphi 0, %s85
      %s87 = sphi 0, %s85
      %s88 = sphi 0, %s87
      %s102 = sphi 0, %s88
      %s108 = sphi 0, %s110
      %s111 = sphi 0, %s108
      %s112 = sphi 0, %s111
      %s128 = sphi 0, %s112
    $region4: #{discriminator_forward.3} parent=1 // loop_header_branch
      %14 = sbr.rel (%p12) target = $region8
    $region5: #{discriminator_forward.3} parent=1 // loop_body
      %s16 = ssub.s32 %s11, 1
      %s17 = ssub.s32 %s11, 2
      %s24 = sadd.s32 1, %s19
      %p25 = scmp.ge.s32.totalorder %s24, 1
      %s26 = scalar_select %p25, 0, %s24
      %s27 = sadd.s32 1, %s18
      %s28 = scalar_select %p25, %s27, %s18
      %p29 = scmp.ge.s32.totalorder %s28, 2
      %s30 = scalar_select %p29, 0, %s28
      %s31 = ssub.s32 %s18, %s30
      %s32 = ssub.s32 %s19, %s26
      %s33 = sor.u32 %s31, %s32
      %p34 = scmp.eq.s32.totalorder %s33, 0
      %s36 = sadd.s32 %s35, 1
      %s37 = scalar_select %p34, %s35, %s36
      %p40 = pneg %p34
      %p41 = scmp.eq.s32.totalorder %s11, 1
      %p42 = por %p40, %p41
      %p43 = scmp.ne.s32.totalorder %s35, %s38
      %p44 = scmp.eq.s32.totalorder %s11, 0
      %p45 = por %p43, %p44
      %p46 = scmp.ne.s32.totalorder %s35, %s38
      %p47 = scmp.eq.s32.totalorder %s16, 1
      %p48 = por %p46, %p47
      %p49 = scmp.ne.s32.totalorder %s38, %s39
      %p50 = scmp.eq.s32.totalorder %s16, 0
      %p51 = por %p49, %p50
      %p52 = scmp.ne.s32.totalorder %s38, %s39
      %p53 = scmp.eq.s32.totalorder %s17, 1
      %p54 = por %p52, %p53
      %p56 = scmp.ne.s32.totalorder %s39, %s55
      %p57 = scmp.eq.s32.totalorder %s17, 0
      %p58 = por %p56, %p57
      %s59 = ssub.s32 %s19, %s26
      %p60 = scmp.eq.s32.totalorder %s59, 0
      %s62 = sadd.s32 %s61, 1
      %s63 = scalar_select %p60, %s61, %s62
      %p66 = pneg %p60
      %p67 = scmp.eq.s32.totalorder %s11, 1
      %p68 = por %p66, %p67
      %p69 = scmp.ne.s32.totalorder %s61, %s64
      %p70 = scmp.eq.s32.totalorder %s11, 0
      %p71 = por %p69, %p70
      %p72 = scmp.ne.s32.totalorder %s61, %s64
      %p73 = scmp.eq.s32.totalorder %s16, 1
      %p74 = por %p72, %p73
      %p75 = scmp.ne.s32.totalorder %s64, %s65
      %p76 = scmp.eq.s32.totalorder %s16, 0
      %p77 = por %p75, %p76
      %p78 = scmp.ne.s32.totalorder %s64, %s65
      %p79 = scmp.eq.s32.totalorder %s17, 1
      %p80 = por %p78, %p79
      %p82 = scmp.ne.s32.totalorder %s65, %s81
      %p83 = scmp.eq.s32.totalorder %s17, 0
      %p84 = por %p82, %p83
      %s86 = sadd.s32 %s85, 1
      %p89 = scmp.eq.s32.totalorder %s11, 1
      %p90 = scmp.ne.s32.totalorder %s85, %s87
      %p91 = scmp.eq.s32.totalorder %s11, 0
      %p92 = por %p90, %p91
      %p93 = scmp.ne.s32.totalorder %s85, %s87
      %p94 = scmp.eq.s32.totalorder %s16, 1
      %p95 = por %p93, %p94
      %p96 = scmp.ne.s32.totalorder %s87, %s88
      %p97 = scmp.eq.s32.totalorder %s16, 0
      %p98 = por %p96, %p97
      %p99 = scmp.ne.s32.totalorder %s87, %s88
      %p100 = scmp.eq.s32.totalorder %s17, 1
      %p101 = por %p99, %p100
      %p103 = scmp.ne.s32.totalorder %s88, %s102
      %p104 = scmp.eq.s32.totalorder %s17, 0
      %p105 = por %p103, %p104
      %s106 = ssub.s32 %s18, %s30
      %p107 = scmp.eq.s32.totalorder %s106, 0
      %s109 = sadd.s32 %s108, 1
      %s110 = scalar_select %p107, %s108, %s109
      %p113 = pneg %p107
      %p114 = scmp.eq.s32.totalorder %s11, 1
      %p115 = por %p113, %p114
      %p116 = scmp.ne.s32.totalorder %s108, %s111
      %p117 = scmp.eq.s32.totalorder %s11, 0
      %p118 = por %p116, %p117
      %p119 = scmp.ne.s32.totalorder %s108, %s111
      %p120 = scmp.eq.s32.totalorder %s16, 1
      %p121 = por %p119, %p120
      %p122 = scmp.ne.s32.totalorder %s111, %s112
      %p123 = scmp.eq.s32.totalorder %s16, 0
      %p124 = por %p122, %p123
      %p125 = scmp.ne.s32.totalorder %s111, %s112
      %p126 = scmp.eq.s32.totalorder %s17, 1
      %p127 = por %p125, %p126
      %p129 = scmp.ne.s32.totalorder %s112, %s128
      %p130 = scmp.eq.s32.totalorder %s17, 0
      %p131 = por %p129, %p130
      %p132 = scmp.le.s32.totalorder 1, %s11
      %p133 = scmp.lt.s32.totalorder %s11, 3
      %p134 = pnand %p132, %p133
      %p135 = pneg %p134
      // Predicated region
      $region9: #{discriminator_forward.3} parent=5 // pred_check
        _
      $region10: #{discriminator_forward.3} parent=5 // pred_check_branch
        %137 = sbr.rel (%p134) target = $region12
      $region11: #{discriminator_forward.3} parent=5 // pred_region
        %s138 = ssub.s32 %s11, 1
        // Predicated region
        $region13: #{discriminator_forward.3} parent=11 // pred_check
          %p139 = pneg %p77
        $region14: #{discriminator_forward.3} parent=11 // pred_check_branch
          %141 = sbr.rel (%p139) target = $region16
        $region15: #{discriminator_forward.3} parent=11 // pred_region
          %s142 = smul.u32 2, %s21
          %s144 = ssub.s32 128, 128
          %145 = vsyncadd [#allocation3], %s144
          %s146 = smul.addr %s142, 64
          %s147 = scalar_lea.hbm %s1, %s146
          %s148 = sshll.u32 [#allocation2], 4
          %s149 = int_to_ptr.vmem [resolvable:$true] %s148
          %154 = dma.hbm_to_vmem [thread:$0]  %s147, 128, %s149, [#allocation3], 64, 64, 4
        $region16: #{discriminator_forward.3} parent=11 // pred_fallthru
          _
        // Predicated region
        $region17: #{discriminator_forward.3} parent=11 // pred_check
          %p155 = pneg %p98
        $region18: #{discriminator_forward.3} parent=11 // pred_check_branch
          %157 = sbr.rel (%p155) target = $region20
        $region19: #{discriminator_forward.3} parent=11 // pred_region
          %s159 = ssub.s32 16, 16
          %160 = vsyncadd [#allocation5], %s159
          %s162 = sshll.u32 [#allocation4], 4
          %s163 = int_to_ptr.vmem [resolvable:$true] %s162
          %165 = dma.hbm_to_vmem [thread:$0]  %s2, 16, %s163, [#allocation5]
        $region20: #{discriminator_forward.3} parent=11 // pred_fallthru
          _
      $region12: #{discriminator_forward.3} parent=5 // pred_fallthru
        _
      %p166 = scmp.lt.s32.totalorder %s11, 2
      // Predicated region
      $region21: #{discriminator_forward.3} parent=5 // pred_check
        %p167 = pneg %p166
      $region22: #{discriminator_forward.3} parent=5 // pred_check_branch
        %169 = sbr.rel (%p167) target = $region24
      $region23: #{discriminator_forward.3} parent=5 // pred_region
        // Predicated region
        $region25: #{discriminator_forward.3} parent=23 // pred_check
          %p170 = pneg %p45
        $region26: #{discriminator_forward.3} parent=23 // pred_check_branch
          %172 = sbr.rel (%p170) target = $region28
        $region27: #{discriminator_forward.3} parent=23 // pred_region
          %s173 = smul.u32 64, %s18
          %p174 = scmp.lt.s32.totalorder %s173, 127
          %s175 = scalar_select %p174, %s173, 127
          %p176 = scmp.lt.s32.totalorder %s19, 0
          %s177 = scalar_select %p176, %s19, 0
          %s178 = sadd.s32 %s177, %s175
          %s179 = smul.addr %s178, 4
          %s180 = scalar_lea.vmem %s0, %s179
          %s181 = smul.u32 64, %s18
        $region28: #{discriminator_forward.3} parent=23 // pred_fallthru
          _
      $region24: #{discriminator_forward.3} parent=5 // pred_fallthru
        _
      %p182 = scmp.le.s32.totalorder 1, %s11
      %p183 = scmp.lt.s32.totalorder %s11, 3
      %p184 = pnand %p182, %p183
      %p185 = pneg %p184
      // Predicated region
      $region29: #{discriminator_forward.3} parent=5 // pred_check
        _
      $region30: #{discriminator_forward.3} parent=5 // pred_check_branch
        %187 = sbr.rel (%p184) target = $region32
      $region31: #{discriminator_forward.3} parent=5 // pred_region
        %s188 = ssub.s32 %s11, 1
        // Predicated region
        $region33: #{discriminator_forward.3} parent=31 // pred_check
          %p189 = pneg %p77
        $region34: #{discriminator_forward.3} parent=31 // pred_check_branch
          %191 = sbr.rel (%p189) target = $region36
        $region35: #{discriminator_forward.3} parent=31 // pred_region
          %192 = dma.done [#allocation3], 128
        $region36: #{discriminator_forward.3} parent=31 // pred_fallthru
          _
        // Predicated region
        $region37: #{discriminator_forward.3} parent=31 // pred_check
          %p193 = pneg %p98
        $region38: #{discriminator_forward.3} parent=31 // pred_check_branch
          %195 = sbr.rel (%p193) target = $region40
        $region39: #{discriminator_forward.3} parent=31 // pred_region
          %196 = dma.done [#allocation5], 16
        $region40: #{discriminator_forward.3} parent=31 // pred_fallthru
          _
        %s197 = smul.u32 64, %s20
        %p198 = scmp.lt.s32.totalorder %s197, 127
        %s199 = scalar_select %p198, %s197, 127
        %p200 = scmp.lt.s32.totalorder %s21, 0
        %s201 = scalar_select %p200, %s21, 0
        %s202 = sadd.s32 %s201, %s199
        %s203 = smul.addr %s202, 4
        %s204 = scalar_lea.vmem %s0, %s203
        %p205 = pneg %p51
        %p206 = pneg %p48
        %p207 = pneg %p77
        %p208 = pneg %p74
        %p209 = pneg %p98
        %p210 = pneg %p95
        %p211 = pneg %p124
        %p212 = pneg %p121
        %s213 = smul.u32 64, %s20
        %p214 = scmp.lt.s32.totalorder %s213, 127
        %s215 = scalar_select %p214, %s213, 127
        %s216 = smul.addr %s215, 8
        %s217 = scalar_lea.vmem %s3, %s216
        %s218 = smul.u32 64, %s20
        %p219 = scmp.lt.s32.totalorder %s218, 127
        %s220 = scalar_select %p219, %s218, 127
        %p221 = scmp.lt.s32.totalorder %s21, 0
        %s222 = scalar_select %p221, %s21, 0
        %s223 = sadd.s32 %s222, %s220
        %s224 = smul.addr %s223, 4
        %s225 = scalar_lea.vmem %s0, %s224
        %s226 = smul.u32 64, %s20
        %s227 = smul.u32 2, %s21
        %s228 = smul.u32 64, %s20
        %p229 = scmp.lt.s32.totalorder %s228, 127
        %s230 = scalar_select %p229, %s228, 127
        %s231 = smul.addr %s230, 8
        %s232 = scalar_lea.vmem %s3, %s231
        %s233 = smul.u32 64, %s20
        %p235 = scmp.eq.s32.totalorder %s21, 0
        // Predicated region
        $region41: #{discriminator_forward.3} parent=31 // pred_check
          %p236 = pneg %p235
        $region42: #{discriminator_forward.3} parent=31 // pred_check_branch
          %238 = sbr.rel (%p236) target = $region44
        $region43: #{discriminator_forward.3} parent=31 // pred_region
          %vm239 = vcmask 523264
          %240 = vst.msk [vmem:[%s232] sm:$0xff] %vm239, 0.0
          %241 = vst.msk [vmem:[%s232 + $0x8] sm:$0xff] %vm239, 0.0
          %242 = vst.msk [vmem:[%s232 + $0x10] sm:$0xff] %vm239, 0.0
          %243 = vst.msk [vmem:[%s232 + $0x18] sm:$0xff] %vm239, 0.0
          %244 = vst.msk [vmem:[%s232 + $0x20] sm:$0xff] %vm239, 0.0
          %245 = vst.msk [vmem:[%s232 + $0x28] sm:$0xff] %vm239, 0.0
          %246 = vst.msk [vmem:[%s232 + $0x30] sm:$0xff] %vm239, 0.0
          %247 = vst.msk [vmem:[%s232 + $0x38] sm:$0xff] %vm239, 0.0
          %248 = vst.msk [vmem:[%s232 + $0x40] sm:$0xff] %vm239, 0.0
          %249 = vst.msk [vmem:[%s232 + $0x48] sm:$0xff] %vm239, 0.0
          %250 = vst.msk [vmem:[%s232 + $0x50] sm:$0xff] %vm239, 0.0
          %251 = vst.msk [vmem:[%s232 + $0x58] sm:$0xff] %vm239, 0.0
          %252 = vst.msk [vmem:[%s232 + $0x60] sm:$0xff] %vm239, 0.0
          %253 = vst.msk [vmem:[%s232 + $0x68] sm:$0xff] %vm239, 0.0
          %254 = vst.msk [vmem:[%s232 + $0x70] sm:$0xff] %vm239, 0.0
          %255 = vst.msk [vmem:[%s232 + $0x78] sm:$0xff] %vm239, 0.0
          %256 = vst.msk [vmem:[%s232 + $0x80] sm:$0xff] %vm239, 0.0
          %257 = vst.msk [vmem:[%s232 + $0x88] sm:$0xff] %vm239, 0.0
          %258 = vst.msk [vmem:[%s232 + $0x90] sm:$0xff] %vm239, 0.0
          %259 = vst.msk [vmem:[%s232 + $0x98] sm:$0xff] %vm239, 0.0
          %260 = vst.msk [vmem:[%s232 + $0xa0] sm:$0xff] %vm239, 0.0
          %261 = vst.msk [vmem:[%s232 + $0xa8] sm:$0xff] %vm239, 0.0
          %262 = vst.msk [vmem:[%s232 + $0xb0] sm:$0xff] %vm239, 0.0
          %263 = vst.msk [vmem:[%s232 + $0xb8] sm:$0xff] %vm239, 0.0
          %264 = vst.msk [vmem:[%s232 + $0xc0] sm:$0xff] %vm239, 0.0
          %265 = vst.msk [vmem:[%s232 + $0xc8] sm:$0xff] %vm239, 0.0
          %266 = vst.msk [vmem:[%s232 + $0xd0] sm:$0xff] %vm239, 0.0
          %267 = vst.msk [vmem:[%s232 + $0xd8] sm:$0xff] %vm239, 0.0
          %268 = vst.msk [vmem:[%s232 + $0xe0] sm:$0xff] %vm239, 0.0
          %269 = vst.msk [vmem:[%s232 + $0xe8] sm:$0xff] %vm239, 0.0
          %270 = vst.msk [vmem:[%s232 + $0xf0] sm:$0xff] %vm239, 0.0
          %271 = vst.msk [vmem:[%s232 + $0xf8] sm:$0xff] %vm239, 0.0
          %272 = vst.msk [vmem:[%s232 + $0x100] sm:$0xff] %vm239, 0.0
          %273 = vst.msk [vmem:[%s232 + $0x108] sm:$0xff] %vm239, 0.0
          %274 = vst.msk [vmem:[%s232 + $0x110] sm:$0xff] %vm239, 0.0
          %275 = vst.msk [vmem:[%s232 + $0x118] sm:$0xff] %vm239, 0.0
          %276 = vst.msk [vmem:[%s232 + $0x120] sm:$0xff] %vm239, 0.0
          %277 = vst.msk [vmem:[%s232 + $0x128] sm:$0xff] %vm239, 0.0
          %278 = vst.msk [vmem:[%s232 + $0x130] sm:$0xff] %vm239, 0.0
          %279 = vst.msk [vmem:[%s232 + $0x138] sm:$0xff] %vm239, 0.0
          %280 = vst.msk [vmem:[%s232 + $0x140] sm:$0xff] %vm239, 0.0
          %281 = vst.msk [vmem:[%s232 + $0x148] sm:$0xff] %vm239, 0.0
          %282 = vst.msk [vmem:[%s232 + $0x150] sm:$0xff] %vm239, 0.0
          %283 = vst.msk [vmem:[%s232 + $0x158] sm:$0xff] %vm239, 0.0
          %284 = vst.msk [vmem:[%s232 + $0x160] sm:$0xff] %vm239, 0.0
          %285 = vst.msk [vmem:[%s232 + $0x168] sm:$0xff] %vm239, 0.0
          %286 = vst.msk [vmem:[%s232 + $0x170] sm:$0xff] %vm239, 0.0
          %287 = vst.msk [vmem:[%s232 + $0x178] sm:$0xff] %vm239, 0.0
          %288 = vst.msk [vmem:[%s232 + $0x180] sm:$0xff] %vm239, 0.0
          %289 = vst.msk [vmem:[%s232 + $0x188] sm:$0xff] %vm239, 0.0
          %290 = vst.msk [vmem:[%s232 + $0x190] sm:$0xff] %vm239, 0.0
          %291 = vst.msk [vmem:[%s232 + $0x198] sm:$0xff] %vm239, 0.0
          %292 = vst.msk [vmem:[%s232 + $0x1a0] sm:$0xff] %vm239, 0.0
          %293 = vst.msk [vmem:[%s232 + $0x1a8] sm:$0xff] %vm239, 0.0
          %294 = vst.msk [vmem:[%s232 + $0x1b0] sm:$0xff] %vm239, 0.0
          %295 = vst.msk [vmem:[%s232 + $0x1b8] sm:$0xff] %vm239, 0.0
          %296 = vst.msk [vmem:[%s232 + $0x1c0] sm:$0xff] %vm239, 0.0
          %297 = vst.msk [vmem:[%s232 + $0x1c8] sm:$0xff] %vm239, 0.0
          %298 = vst.msk [vmem:[%s232 + $0x1d0] sm:$0xff] %vm239, 0.0
          %299 = vst.msk [vmem:[%s232 + $0x1d8] sm:$0xff] %vm239, 0.0
          %300 = vst.msk [vmem:[%s232 + $0x1e0] sm:$0xff] %vm239, 0.0
          %301 = vst.msk [vmem:[%s232 + $0x1e8] sm:$0xff] %vm239, 0.0
          %302 = vst.msk [vmem:[%s232 + $0x1f0] sm:$0xff] %vm239, 0.0
          %303 = vst.msk [vmem:[%s232 + $0x1f8] sm:$0xff] %vm239, 0.0
        $region44: #{discriminator_forward.3} parent=31 // pred_fallthru
          _
        %v304 = vld [vmem:[%s232] sm:$0xff]
        %v305 = vld [vmem:[%s232 + $0x8] sm:$0xff]
        %v306 = vld [vmem:[%s232 + $0x10] sm:$0xff]
        %v307 = vld [vmem:[%s232 + $0x18] sm:$0xff]
        %v308 = vld [vmem:[%s232 + $0x20] sm:$0xff]
        %v309 = vld [vmem:[%s232 + $0x28] sm:$0xff]
        %v310 = vld [vmem:[%s232 + $0x30] sm:$0xff]
        %v311 = vld [vmem:[%s232 + $0x38] sm:$0xff]
        %v312 = vld [vmem:[%s232 + $0x40] sm:$0xff]
        %v313 = vld [vmem:[%s232 + $0x48] sm:$0xff]
        %v314 = vld [vmem:[%s232 + $0x50] sm:$0xff]
        %v315 = vld [vmem:[%s232 + $0x58] sm:$0xff]
        %v316 = vld [vmem:[%s232 + $0x60] sm:$0xff]
        %v317 = vld [vmem:[%s232 + $0x68] sm:$0xff]
        %v318 = vld [vmem:[%s232 + $0x70] sm:$0xff]
        %v319 = vld [vmem:[%s232 + $0x78] sm:$0xff]
        %v320 = vld [vmem:[%s232 + $0x80] sm:$0xff]
        %v321 = vld [vmem:[%s232 + $0x88] sm:$0xff]
        %v322 = vld [vmem:[%s232 + $0x90] sm:$0xff]
        %v323 = vld [vmem:[%s232 + $0x98] sm:$0xff]
        %v324 = vld [vmem:[%s232 + $0xa0] sm:$0xff]
        %v325 = vld [vmem:[%s232 + $0xa8] sm:$0xff]
        %v326 = vld [vmem:[%s232 + $0xb0] sm:$0xff]
        %v327 = vld [vmem:[%s232 + $0xb8] sm:$0xff]
        %v328 = vld [vmem:[%s232 + $0xc0] sm:$0xff]
        %v329 = vld [vmem:[%s232 + $0xc8] sm:$0xff]
        %v330 = vld [vmem:[%s232 + $0xd0] sm:$0xff]
        %v331 = vld [vmem:[%s232 + $0xd8] sm:$0xff]
        %v332 = vld [vmem:[%s232 + $0xe0] sm:$0xff]
        %v333 = vld [vmem:[%s232 + $0xe8] sm:$0xff]
        %v334 = vld [vmem:[%s232 + $0xf0] sm:$0xff]
        %v335 = vld [vmem:[%s232 + $0xf8] sm:$0xff]
        %v336 = vld [vmem:[%s232 + $0x100] sm:$0xff]
        %v337 = vld [vmem:[%s232 + $0x108] sm:$0xff]
        %v338 = vld [vmem:[%s232 + $0x110] sm:$0xff]
        %v339 = vld [vmem:[%s232 + $0x118] sm:$0xff]
        %v340 = vld [vmem:[%s232 + $0x120] sm:$0xff]
        %v341 = vld [vmem:[%s232 + $0x128] sm:$0xff]
        %v342 = vld [vmem:[%s232 + $0x130] sm:$0xff]
        %v343 = vld [vmem:[%s232 + $0x138] sm:$0xff]
        %v344 = vld [vmem:[%s232 + $0x140] sm:$0xff]
        %v345 = vld [vmem:[%s232 + $0x148] sm:$0xff]
        %v346 = vld [vmem:[%s232 + $0x150] sm:$0xff]
        %v347 = vld [vmem:[%s232 + $0x158] sm:$0xff]
        %v348 = vld [vmem:[%s232 + $0x160] sm:$0xff]
        %v349 = vld [vmem:[%s232 + $0x168] sm:$0xff]
        %v350 = vld [vmem:[%s232 + $0x170] sm:$0xff]
        %v351 = vld [vmem:[%s232 + $0x178] sm:$0xff]
        %v352 = vld [vmem:[%s232 + $0x180] sm:$0xff]
        %v353 = vld [vmem:[%s232 + $0x188] sm:$0xff]
        %v354 = vld [vmem:[%s232 + $0x190] sm:$0xff]
        %v355 = vld [vmem:[%s232 + $0x198] sm:$0xff]
        %v356 = vld [vmem:[%s232 + $0x1a0] sm:$0xff]
        %v357 = vld [vmem:[%s232 + $0x1a8] sm:$0xff]
        %v358 = vld [vmem:[%s232 + $0x1b0] sm:$0xff]
        %v359 = vld [vmem:[%s232 + $0x1b8] sm:$0xff]
        %v360 = vld [vmem:[%s232 + $0x1c0] sm:$0xff]
        %v361 = vld [vmem:[%s232 + $0x1c8] sm:$0xff]
        %v362 = vld [vmem:[%s232 + $0x1d0] sm:$0xff]
        %v363 = vld [vmem:[%s232 + $0x1d8] sm:$0xff]
        %v364 = vld [vmem:[%s232 + $0x1e0] sm:$0xff]
        %v365 = vld [vmem:[%s232 + $0x1e8] sm:$0xff]
        %v366 = vld [vmem:[%s232 + $0x1f0] sm:$0xff]
        %v367 = vld [vmem:[%s232 + $0x1f8] sm:$0xff]
        %v368 = vld [vmem:[%s225] sm:$0xf]
        %v369 = vld [vmem:[%s225 + $0x4] sm:$0xf]
        %v370 = vld [vmem:[%s225 + $0x8] sm:$0xf]
        %v371 = vld [vmem:[%s225 + $0xc] sm:$0xf]
        %v372 = vld [vmem:[%s225 + $0x10] sm:$0xf]
        %v373 = vld [vmem:[%s225 + $0x14] sm:$0xf]
        %v374 = vld [vmem:[%s225 + $0x18] sm:$0xf]
        %v375 = vld [vmem:[%s225 + $0x1c] sm:$0xf]
        %v376 = vld [vmem:[%s225 + $0x20] sm:$0xf]
        %v377 = vld [vmem:[%s225 + $0x24] sm:$0xf]
        %v378 = vld [vmem:[%s225 + $0x28] sm:$0xf]
        %v379 = vld [vmem:[%s225 + $0x2c] sm:$0xf]
        %v380 = vld [vmem:[%s225 + $0x30] sm:$0xf]
        %v381 = vld [vmem:[%s225 + $0x34] sm:$0xf]
        %v382 = vld [vmem:[%s225 + $0x38] sm:$0xf]
        %v383 = vld [vmem:[%s225 + $0x3c] sm:$0xf]
        %v384 = vld [vmem:[%s225 + $0x40] sm:$0xf]
        %v385 = vld [vmem:[%s225 + $0x44] sm:$0xf]
        %v386 = vld [vmem:[%s225 + $0x48] sm:$0xf]
        %v387 = vld [vmem:[%s225 + $0x4c] sm:$0xf]
        %v388 = vld [vmem:[%s225 + $0x50] sm:$0xf]
        %v389 = vld [vmem:[%s225 + $0x54] sm:$0xf]
        %v390 = vld [vmem:[%s225 + $0x58] sm:$0xf]
        %v391 = vld [vmem:[%s225 + $0x5c] sm:$0xf]
        %v392 = vld [vmem:[%s225 + $0x60] sm:$0xf]
        %v393 = vld [vmem:[%s225 + $0x64] sm:$0xf]
        %v394 = vld [vmem:[%s225 + $0x68] sm:$0xf]
        %v395 = vld [vmem:[%s225 + $0x6c] sm:$0xf]
        %v396 = vld [vmem:[%s225 + $0x70] sm:$0xf]
        %v397 = vld [vmem:[%s225 + $0x74] sm:$0xf]
        %v398 = vld [vmem:[%s225 + $0x78] sm:$0xf]
        %v399 = vld [vmem:[%s225 + $0x7c] sm:$0xf]
        %v400 = vld [vmem:[%s225 + $0x80] sm:$0xf]
        %v401 = vld [vmem:[%s225 + $0x84] sm:$0xf]
        %v402 = vld [vmem:[%s225 + $0x88] sm:$0xf]
        %v403 = vld [vmem:[%s225 + $0x8c] sm:$0xf]
        %v404 = vld [vmem:[%s225 + $0x90] sm:$0xf]
        %v405 = vld [vmem:[%s225 + $0x94] sm:$0xf]
        %v406 = vld [vmem:[%s225 + $0x98] sm:$0xf]
        %v407 = vld [vmem:[%s225 + $0x9c] sm:$0xf]
        %v408 = vld [vmem:[%s225 + $0xa0] sm:$0xf]
        %v409 = vld [vmem:[%s225 + $0xa4] sm:$0xf]
        %v410 = vld [vmem:[%s225 + $0xa8] sm:$0xf]
        %v411 = vld [vmem:[%s225 + $0xac] sm:$0xf]
        %v412 = vld [vmem:[%s225 + $0xb0] sm:$0xf]
        %v413 = vld [vmem:[%s225 + $0xb4] sm:$0xf]
        %v414 = vld [vmem:[%s225 + $0xb8] sm:$0xf]
        %v415 = vld [vmem:[%s225 + $0xbc] sm:$0xf]
        %v416 = vld [vmem:[%s225 + $0xc0] sm:$0xf]
        %v417 = vld [vmem:[%s225 + $0xc4] sm:$0xf]
        %v418 = vld [vmem:[%s225 + $0xc8] sm:$0xf]
        %v419 = vld [vmem:[%s225 + $0xcc] sm:$0xf]
        %v420 = vld [vmem:[%s225 + $0xd0] sm:$0xf]
        %v421 = vld [vmem:[%s225 + $0xd4] sm:$0xf]
        %v422 = vld [vmem:[%s225 + $0xd8] sm:$0xf]
        %v423 = vld [vmem:[%s225 + $0xdc] sm:$0xf]
        %v424 = vld [vmem:[%s225 + $0xe0] sm:$0xf]
        %v425 = vld [vmem:[%s225 + $0xe4] sm:$0xf]
        %v426 = vld [vmem:[%s225 + $0xe8] sm:$0xf]
        %v427 = vld [vmem:[%s225 + $0xec] sm:$0xf]
        %v428 = vld [vmem:[%s225 + $0xf0] sm:$0xf]
        %v429 = vld [vmem:[%s225 + $0xf4] sm:$0xf]
        %v430 = vld [vmem:[%s225 + $0xf8] sm:$0xf]
        %v431 = vld [vmem:[%s225 + $0xfc] sm:$0xf]
        %v432 = vld [vmem:[#allocation2] sm:$0xf]
        %v433 = vld [vmem:[#allocation2 + $0x4] sm:$0xf]
        %v498 = vunpack.c.l.b16 %v368
        %v499 = vunpack.c.l.b16 %v369
        %v500 = vunpack.c.l.b16 %v370
        %v501 = vunpack.c.l.b16 %v371
        %v502 = vunpack.c.l.b16 %v372
        %v503 = vunpack.c.l.b16 %v373
        %v504 = vunpack.c.l.b16 %v374
        %v505 = vunpack.c.l.b16 %v375
        %v506 = vunpack.c.l.b16 %v376
        %v507 = vunpack.c.l.b16 %v377
        %v508 = vunpack.c.l.b16 %v378
        %v509 = vunpack.c.l.b16 %v379
        %v510 = vunpack.c.l.b16 %v380
        %v511 = vunpack.c.l.b16 %v381
        %v512 = vunpack.c.l.b16 %v382
        %v513 = vunpack.c.l.b16 %v383
        %v514 = vunpack.c.l.b16 %v384
        %v515 = vunpack.c.l.b16 %v385
        %v516 = vunpack.c.l.b16 %v386
        %v517 = vunpack.c.l.b16 %v387
        %v518 = vunpack.c.l.b16 %v388
        %v519 = vunpack.c.l.b16 %v389
        %v520 = vunpack.c.l.b16 %v390
        %v521 = vunpack.c.l.b16 %v391
        %v522 = vunpack.c.l.b16 %v392
        %v523 = vunpack.c.l.b16 %v393
        %v524 = vunpack.c.l.b16 %v394
        %v525 = vunpack.c.l.b16 %v395
        %v526 = vunpack.c.l.b16 %v396
        %v527 = vunpack.c.l.b16 %v397
        %v528 = vunpack.c.l.b16 %v398
        %v529 = vunpack.c.l.b16 %v399
        %v530 = vunpack.c.l.b16 %v400
        %v531 = vunpack.c.l.b16 %v401
        %v532 = vunpack.c.l.b16 %v402
        %v533 = vunpack.c.l.b16 %v403
        %v534 = vunpack.c.l.b16 %v404
        %v535 = vunpack.c.l.b16 %v405
        %v536 = vunpack.c.l.b16 %v406
        %v537 = vunpack.c.l.b16 %v407
        %v538 = vunpack.c.l.b16 %v408
        %v539 = vunpack.c.l.b16 %v409
        %v540 = vunpack.c.l.b16 %v410
        %v541 = vunpack.c.l.b16 %v411
        %v542 = vunpack.c.l.b16 %v412
        %v543 = vunpack.c.l.b16 %v413
        %v544 = vunpack.c.l.b16 %v414
        %v545 = vunpack.c.l.b16 %v415
        %v546 = vunpack.c.l.b16 %v416
        %v547 = vunpack.c.l.b16 %v417
        %v548 = vunpack.c.l.b16 %v418
        %v549 = vunpack.c.l.b16 %v419
        %v550 = vunpack.c.l.b16 %v420
        %v551 = vunpack.c.l.b16 %v421
        %v552 = vunpack.c.l.b16 %v422
        %v553 = vunpack.c.l.b16 %v423
        %v554 = vunpack.c.l.b16 %v424
        %v555 = vunpack.c.l.b16 %v425
        %v556 = vunpack.c.l.b16 %v426
        %v557 = vunpack.c.l.b16 %v427
        %v558 = vunpack.c.l.b16 %v428
        %v559 = vunpack.c.l.b16 %v429
        %v560 = vunpack.c.l.b16 %v430
        %v561 = vunpack.c.l.b16 %v431
        %v562 = vpack.c.b16 %v499, %v498
        %v563 = vpack.c.b16 %v501, %v500
        %v564 = vpack.c.b16 %v503, %v502
        %v565 = vpack.c.b16 %v505, %v504
        %v566 = vpack.c.b16 %v507, %v506
        %v567 = vpack.c.b16 %v509, %v508
        %v568 = vpack.c.b16 %v511, %v510
        %v569 = vpack.c.b16 %v513, %v512
        %v570 = vpack.c.b16 %v515, %v514
        %v571 = vpack.c.b16 %v517, %v516
        %v572 = vpack.c.b16 %v519, %v518
        %v573 = vpack.c.b16 %v521, %v520
        %v574 = vpack.c.b16 %v523, %v522
        %v575 = vpack.c.b16 %v525, %v524
        %v576 = vpack.c.b16 %v527, %v526
        %v577 = vpack.c.b16 %v529, %v528
        %v578 = vpack.c.b16 %v531, %v530
        %v579 = vpack.c.b16 %v533, %v532
        %v580 = vpack.c.b16 %v535, %v534
        %v581 = vpack.c.b16 %v537, %v536
        %v582 = vpack.c.b16 %v539, %v538
        %v583 = vpack.c.b16 %v541, %v540
        %v584 = vpack.c.b16 %v543, %v542
        %v585 = vpack.c.b16 %v545, %v544
        %v586 = vpack.c.b16 %v547, %v546
        %v587 = vpack.c.b16 %v549, %v548
        %v588 = vpack.c.b16 %v551, %v550
        %v589 = vpack.c.b16 %v553, %v552
        %v590 = vpack.c.b16 %v555, %v554
        %v591 = vpack.c.b16 %v557, %v556
        %v592 = vpack.c.b16 %v559, %v558
        %v593 = vpack.c.b16 %v561, %v560
        %v596 = vunpack.c.l.b16 %v432
        %v597 = vunpack.c.l.b16 %v433
        %v598 = vpack.c.b16 %v597, %v596
        %vm600 = vcmask 130048
        %v602 = vsel %vm600, %v562, 0
        %v605 = vsel %vm600, %v563, 0
        %v608 = vsel %vm600, %v564, 0
        %v611 = vsel %vm600, %v565, 0
        %v614 = vsel %vm600, %v566, 0
        %v617 = vsel %vm600, %v567, 0
        %v620 = vsel %vm600, %v568, 0
        %v623 = vsel %vm600, %v569, 0
        %v626 = vsel %vm600, %v570, 0
        %v629 = vsel %vm600, %v571, 0
        %v632 = vsel %vm600, %v572, 0
        %v635 = vsel %vm600, %v573, 0
        %v638 = vsel %vm600, %v574, 0
        %v641 = vsel %vm600, %v575, 0
        %v644 = vsel %vm600, %v576, 0
        %v647 = vsel %vm600, %v577, 0
        %v650 = vsel %vm600, %v578, 0
        %v653 = vsel %vm600, %v579, 0
        %v656 = vsel %vm600, %v580, 0
        %v659 = vsel %vm600, %v581, 0
        %v662 = vsel %vm600, %v582, 0
        %v665 = vsel %vm600, %v583, 0
        %v668 = vsel %vm600, %v584, 0
        %v671 = vsel %vm600, %v585, 0
        %v674 = vsel %vm600, %v586, 0
        %v677 = vsel %vm600, %v587, 0
        %v680 = vsel %vm600, %v588, 0
        %v683 = vsel %vm600, %v589, 0
        %v686 = vsel %vm600, %v590, 0
        %v689 = vsel %vm600, %v591, 0
        %v692 = vsel %vm600, %v592, 0
        %v695 = vsel %vm600, %v593, 0
        %697 = vmatprep.subr.bf16.mxu0 0
        %698 = vmatpush1.bf16.msra.mxu0 0
        %699 = vmatprep.subr.bf16.mxu0 0
        %700 = vmatpush1.bf16.msra.mxu0 0
        %701 = vmatprep.subr.bf16.mxu0 0
        %702 = vmatpush1.bf16.msra.mxu0 0
        %703 = vmatprep.subr.bf16.mxu0 0
        %704 = vmatpush1.bf16.msra.mxu0 0
        %705 = vmatprep.subr.bf16.mxu0 0
        %706 = vmatpush1.bf16.msra.mxu0 0
        %707 = vmatprep.subr.bf16.mxu0 0
        %708 = vmatpush1.bf16.msra.mxu0 0
        %709 = vmatprep.subr.bf16.mxu0 0
        %710 = vmatpush1.bf16.msra.mxu0 0
        %711 = vmatprep.subr.bf16.mxu0 0
        %712 = vmatpush1.bf16.msra.mxu0 %v598
        %713 = vmatprep.subr.bf16.mxu0 0
        %714 = vmatpush2.bf16.msra.mxu0 0
        %715 = vmatprep.subr.bf16.mxu0 0
        %716 = vmatpush2.bf16.msra.mxu0 0
        %717 = vmatprep.subr.bf16.mxu0 0
        %718 = vmatpush2.bf16.msra.mxu0 0
        %719 = vmatprep.subr.bf16.mxu0 0
        %720 = vmatpush2.bf16.msra.mxu0 0
        %721 = vmatprep.subr.bf16.mxu0 0
        %722 = vmatpush2.bf16.msra.mxu0 0
        %723 = vmatprep.subr.bf16.mxu0 0
        %724 = vmatpush2.bf16.msra.mxu0 0
        %725 = vmatprep.subr.bf16.mxu0 0
        %726 = vmatpush2.bf16.msra.mxu0 0
        %727 = vmatprep.subr.bf16.mxu0 0
        %728 = vmatpush2.bf16.msra.mxu0 0
        %729 = vmatprep.mubr.bf16.mxu0 0
        %730 = vmatmul.mubr.bf16.gmra.mxu0 %v602
        %v731 = vpop.f32.mrf.mxu0
        %v732 = vadd.f32 0.0, %v731
        %v733 = vpop.f32.mrf.mxu0
        %v734 = vpop.f32.mrf.mxu0
        %v735 = vadd.f32 0.0, %v734
        %v736 = vpop.f32.mrf.mxu0
        %737 = vmatprep.mubr.bf16.mxu0 0
        %738 = vmatmul.mubr.bf16.gmra.mxu0 %v605
        %v739 = vpop.f32.mrf.mxu0
        %v740 = vadd.f32 0.0, %v739
        %v741 = vpop.f32.mrf.mxu0
        %v742 = vpop.f32.mrf.mxu0
        %v743 = vadd.f32 0.0, %v742
        %v744 = vpop.f32.mrf.mxu0
        %745 = vmatprep.mubr.bf16.mxu0 0
        %746 = vmatmul.mubr.bf16.gmra.mxu0 %v608
        %v747 = vpop.f32.mrf.mxu0
        %v748 = vadd.f32 0.0, %v747
        %v749 = vpop.f32.mrf.mxu0
        %v750 = vpop.f32.mrf.mxu0
        %v751 = vadd.f32 0.0, %v750
        %v752 = vpop.f32.mrf.mxu0
        %753 = vmatprep.mubr.bf16.mxu0 0
        %754 = vmatmul.mubr.bf16.gmra.mxu0 %v611
        %v755 = vpop.f32.mrf.mxu0
        %v756 = vadd.f32 0.0, %v755
        %v757 = vpop.f32.mrf.mxu0
        %v758 = vpop.f32.mrf.mxu0
        %v759 = vadd.f32 0.0, %v758
        %v760 = vpop.f32.mrf.mxu0
        %761 = vmatprep.mubr.bf16.mxu0 0
        %762 = vmatmul.mubr.bf16.gmra.mxu0 %v614
        %v763 = vpop.f32.mrf.mxu0
        %v764 = vadd.f32 0.0, %v763
        %v765 = vpop.f32.mrf.mxu0
        %v766 = vpop.f32.mrf.mxu0
        %v767 = vadd.f32 0.0, %v766
        %v768 = vpop.f32.mrf.mxu0
        %769 = vmatprep.mubr.bf16.mxu0 0
        %770 = vmatmul.mubr.bf16.gmra.mxu0 %v617
        %v771 = vpop.f32.mrf.mxu0
        %v772 = vadd.f32 0.0, %v771
        %v773 = vpop.f32.mrf.mxu0
        %v774 = vpop.f32.mrf.mxu0
        %v775 = vadd.f32 0.0, %v774
        %v776 = vpop.f32.mrf.mxu0
        %777 = vmatprep.mubr.bf16.mxu0 0
        %778 = vmatmul.mubr.bf16.gmra.mxu0 %v620
        %v779 = vpop.f32.mrf.mxu0
        %v780 = vadd.f32 0.0, %v779
        %v781 = vpop.f32.mrf.mxu0
        %v782 = vpop.f32.mrf.mxu0
        %v783 = vadd.f32 0.0, %v782
        %v784 = vpop.f32.mrf.mxu0
        %785 = vmatprep.mubr.bf16.mxu0 0
        %786 = vmatmul.mubr.bf16.gmra.mxu0 %v623
        %v787 = vpop.f32.mrf.mxu0
        %v788 = vadd.f32 0.0, %v787
        %v789 = vpop.f32.mrf.mxu0
        %v790 = vpop.f32.mrf.mxu0
        %v791 = vadd.f32 0.0, %v790
        %v792 = vpop.f32.mrf.mxu0
        %793 = vmatprep.mubr.bf16.mxu0 0
        %794 = vmatmul.mubr.bf16.gmra.mxu0 %v626
        %v795 = vpop.f32.mrf.mxu0
        %v796 = vadd.f32 0.0, %v795
        %v797 = vpop.f32.mrf.mxu0
        %v798 = vpop.f32.mrf.mxu0
        %v799 = vadd.f32 0.0, %v798
        %v800 = vpop.f32.mrf.mxu0
        %801 = vmatprep.mubr.bf16.mxu0 0
        %802 = vmatmul.mubr.bf16.gmra.mxu0 %v629
        %v803 = vpop.f32.mrf.mxu0
        %v804 = vadd.f32 0.0, %v803
        %v805 = vpop.f32.mrf.mxu0
        %v806 = vpop.f32.mrf.mxu0
        %v807 = vadd.f32 0.0, %v806
        %v808 = vpop.f32.mrf.mxu0
        %809 = vmatprep.mubr.bf16.mxu0 0
        %810 = vmatmul.mubr.bf16.gmra.mxu0 %v632
        %v811 = vpop.f32.mrf.mxu0
        %v812 = vadd.f32 0.0, %v811
        %v813 = vpop.f32.mrf.mxu0
        %v814 = vpop.f32.mrf.mxu0
        %v815 = vadd.f32 0.0, %v814
        %v816 = vpop.f32.mrf.mxu0
        %817 = vmatprep.mubr.bf16.mxu0 0
        %818 = vmatmul.mubr.bf16.gmra.mxu0 %v635
        %v819 = vpop.f32.mrf.mxu0
        %v820 = vadd.f32 0.0, %v819
        %v821 = vpop.f32.mrf.mxu0
        %v822 = vpop.f32.mrf.mxu0
        %v823 = vadd.f32 0.0, %v822
        %v824 = vpop.f32.mrf.mxu0
        %825 = vmatprep.mubr.bf16.mxu0 0
        %826 = vmatmul.mubr.bf16.gmra.mxu0 %v638
        %v827 = vpop.f32.mrf.mxu0
        %v828 = vadd.f32 0.0, %v827
        %v829 = vpop.f32.mrf.mxu0
        %v830 = vpop.f32.mrf.mxu0
        %v831 = vadd.f32 0.0, %v830
        %v832 = vpop.f32.mrf.mxu0
        %833 = vmatprep.mubr.bf16.mxu0 0
        %834 = vmatmul.mubr.bf16.gmra.mxu0 %v641
        %v835 = vpop.f32.mrf.mxu0
        %v836 = vadd.f32 0.0, %v835
        %v837 = vpop.f32.mrf.mxu0
        %v838 = vpop.f32.mrf.mxu0
        %v839 = vadd.f32 0.0, %v838
        %v840 = vpop.f32.mrf.mxu0
        %841 = vmatprep.mubr.bf16.mxu0 0
        %842 = vmatmul.mubr.bf16.gmra.mxu0 %v644
        %v843 = vpop.f32.mrf.mxu0
        %v844 = vadd.f32 0.0, %v843
        %v845 = vpop.f32.mrf.mxu0
        %v846 = vpop.f32.mrf.mxu0
        %v847 = vadd.f32 0.0, %v846
        %v848 = vpop.f32.mrf.mxu0
        %849 = vmatprep.mubr.bf16.mxu0 0
        %850 = vmatmul.mubr.bf16.gmra.mxu0 %v647
        %v851 = vpop.f32.mrf.mxu0
        %v852 = vadd.f32 0.0, %v851
        %v853 = vpop.f32.mrf.mxu0
        %v854 = vpop.f32.mrf.mxu0
        %v855 = vadd.f32 0.0, %v854
        %v856 = vpop.f32.mrf.mxu0
        %857 = vmatprep.mubr.bf16.mxu0 0
        %858 = vmatmul.mubr.bf16.gmra.mxu0 %v650
        %v859 = vpop.f32.mrf.mxu0
        %v860 = vadd.f32 0.0, %v859
        %v861 = vpop.f32.mrf.mxu0
        %v862 = vpop.f32.mrf.mxu0
        %v863 = vadd.f32 0.0, %v862
        %v864 = vpop.f32.mrf.mxu0
        %865 = vmatprep.mubr.bf16.mxu0 0
        %866 = vmatmul.mubr.bf16.gmra.mxu0 %v653
        %v867 = vpop.f32.mrf.mxu0
        %v868 = vadd.f32 0.0, %v867
        %v869 = vpop.f32.mrf.mxu0
        %v870 = vpop.f32.mrf.mxu0
        %v871 = vadd.f32 0.0, %v870
        %v872 = vpop.f32.mrf.mxu0
        %873 = vmatprep.mubr.bf16.mxu0 0
        %874 = vmatmul.mubr.bf16.gmra.mxu0 %v656
        %v875 = vpop.f32.mrf.mxu0
        %v876 = vadd.f32 0.0, %v875
        %v877 = vpop.f32.mrf.mxu0
        %v878 = vpop.f32.mrf.mxu0
        %v879 = vadd.f32 0.0, %v878
        %v880 = vpop.f32.mrf.mxu0
        %881 = vmatprep.mubr.bf16.mxu0 0
        %882 = vmatmul.mubr.bf16.gmra.mxu0 %v659
        %v883 = vpop.f32.mrf.mxu0
        %v884 = vadd.f32 0.0, %v883
        %v885 = vpop.f32.mrf.mxu0
        %v886 = vpop.f32.mrf.mxu0
        %v887 = vadd.f32 0.0, %v886
        %v888 = vpop.f32.mrf.mxu0
        %889 = vmatprep.mubr.bf16.mxu0 0
        %890 = vmatmul.mubr.bf16.gmra.mxu0 %v662
        %v891 = vpop.f32.mrf.mxu0
        %v892 = vadd.f32 0.0, %v891
        %v893 = vpop.f32.mrf.mxu0
        %v894 = vpop.f32.mrf.mxu0
        %v895 = vadd.f32 0.0, %v894
        %v896 = vpop.f32.mrf.mxu0
        %897 = vmatprep.mubr.bf16.mxu0 0
        %898 = vmatmul.mubr.bf16.gmra.mxu0 %v665
        %v899 = vpop.f32.mrf.mxu0
        %v900 = vadd.f32 0.0, %v899
        %v901 = vpop.f32.mrf.mxu0
        %v902 = vpop.f32.mrf.mxu0
        %v903 = vadd.f32 0.0, %v902
        %v904 = vpop.f32.mrf.mxu0
        %905 = vmatprep.mubr.bf16.mxu0 0
        %906 = vmatmul.mubr.bf16.gmra.mxu0 %v668
        %v907 = vpop.f32.mrf.mxu0
        %v908 = vadd.f32 0.0, %v907
        %v909 = vpop.f32.mrf.mxu0
        %v910 = vpop.f32.mrf.mxu0
        %v911 = vadd.f32 0.0, %v910
        %v912 = vpop.f32.mrf.mxu0
        %913 = vmatprep.mubr.bf16.mxu0 0
        %914 = vmatmul.mubr.bf16.gmra.mxu0 %v671
        %v915 = vpop.f32.mrf.mxu0
        %v916 = vadd.f32 0.0, %v915
        %v917 = vpop.f32.mrf.mxu0
        %v918 = vpop.f32.mrf.mxu0
        %v919 = vadd.f32 0.0, %v918
        %v920 = vpop.f32.mrf.mxu0
        %921 = vmatprep.mubr.bf16.mxu0 0
        %922 = vmatmul.mubr.bf16.gmra.mxu0 %v674
        %v923 = vpop.f32.mrf.mxu0
        %v924 = vadd.f32 0.0, %v923
        %v925 = vpop.f32.mrf.mxu0
        %v926 = vpop.f32.mrf.mxu0
        %v927 = vadd.f32 0.0, %v926
        %v928 = vpop.f32.mrf.mxu0
        %929 = vmatprep.mubr.bf16.mxu0 0
        %930 = vmatmul.mubr.bf16.gmra.mxu0 %v677
        %v931 = vpop.f32.mrf.mxu0
        %v932 = vadd.f32 0.0, %v931
        %v933 = vpop.f32.mrf.mxu0
        %v934 = vpop.f32.mrf.mxu0
        %v935 = vadd.f32 0.0, %v934
        %v936 = vpop.f32.mrf.mxu0
        %937 = vmatprep.mubr.bf16.mxu0 0
        %938 = vmatmul.mubr.bf16.gmra.mxu0 %v680
        %v939 = vpop.f32.mrf.mxu0
        %v940 = vadd.f32 0.0, %v939
        %v941 = vpop.f32.mrf.mxu0
        %v942 = vpop.f32.mrf.mxu0
        %v943 = vadd.f32 0.0, %v942
        %v944 = vpop.f32.mrf.mxu0
        %945 = vmatprep.mubr.bf16.mxu0 0
        %946 = vmatmul.mubr.bf16.gmra.mxu0 %v683
        %v947 = vpop.f32.mrf.mxu0
        %v948 = vadd.f32 0.0, %v947
        %v949 = vpop.f32.mrf.mxu0
        %v950 = vpop.f32.mrf.mxu0
        %v951 = vadd.f32 0.0, %v950
        %v952 = vpop.f32.mrf.mxu0
        %953 = vmatprep.mubr.bf16.mxu0 0
        %954 = vmatmul.mubr.bf16.gmra.mxu0 %v686
        %v955 = vpop.f32.mrf.mxu0
        %v956 = vadd.f32 0.0, %v955
        %v957 = vpop.f32.mrf.mxu0
        %v958 = vpop.f32.mrf.mxu0
        %v959 = vadd.f32 0.0, %v958
        %v960 = vpop.f32.mrf.mxu0
        %961 = vmatprep.mubr.bf16.mxu0 0
        %962 = vmatmul.mubr.bf16.gmra.mxu0 %v689
        %v963 = vpop.f32.mrf.mxu0
        %v964 = vadd.f32 0.0, %v963
        %v965 = vpop.f32.mrf.mxu0
        %v966 = vpop.f32.mrf.mxu0
        %v967 = vadd.f32 0.0, %v966
        %v968 = vpop.f32.mrf.mxu0
        %969 = vmatprep.mubr.bf16.mxu0 0
        %970 = vmatmul.mubr.bf16.gmra.mxu0 %v692
        %v971 = vpop.f32.mrf.mxu0
        %v972 = vadd.f32 0.0, %v971
        %v973 = vpop.f32.mrf.mxu0
        %v974 = vpop.f32.mrf.mxu0
        %v975 = vadd.f32 0.0, %v974
        %v976 = vpop.f32.mrf.mxu0
        %977 = vmatprep.mubr.bf16.mxu0 0
        %978 = vmatmul.mubr.bf16.gmra.mxu0 %v695
        %v979 = vpop.f32.mrf.mxu0
        %v980 = vadd.f32 0.0, %v979
        %v981 = vpop.f32.mrf.mxu0
        %v982 = vpop.f32.mrf.mxu0
        %v983 = vadd.f32 0.0, %v982
        %v984 = vpop.f32.mrf.mxu0
        %985 = vdwg.mxu0
        %v986 = vadd.f32 %v304, %v732
        %v987 = vadd.f32 %v305, %v735
        %v988 = vadd.f32 %v306, %v740
        %v989 = vadd.f32 %v307, %v743
        %v990 = vadd.f32 %v308, %v748
        %v991 = vadd.f32 %v309, %v751
        %v992 = vadd.f32 %v310, %v756
        %v993 = vadd.f32 %v311, %v759
        %v994 = vadd.f32 %v312, %v764
        %v995 = vadd.f32 %v313, %v767
        %v996 = vadd.f32 %v314, %v772
        %v997 = vadd.f32 %v315, %v775
        %v998 = vadd.f32 %v316, %v780
        %v999 = vadd.f32 %v317, %v783
        %v1000 = vadd.f32 %v318, %v788
        %v1001 = vadd.f32 %v319, %v791
        %v1002 = vadd.f32 %v320, %v796
        %v1003 = vadd.f32 %v321, %v799
        %v1004 = vadd.f32 %v322, %v804
        %v1005 = vadd.f32 %v323, %v807
        %v1006 = vadd.f32 %v324, %v812
        %v1007 = vadd.f32 %v325, %v815
        %v1008 = vadd.f32 %v326, %v820
        %v1009 = vadd.f32 %v327, %v823
        %v1010 = vadd.f32 %v328, %v828
        %v1011 = vadd.f32 %v329, %v831
        %v1012 = vadd.f32 %v330, %v836
        %v1013 = vadd.f32 %v331, %v839
        %v1014 = vadd.f32 %v332, %v844
        %v1015 = vadd.f32 %v333, %v847
        %v1016 = vadd.f32 %v334, %v852
        %v1017 = vadd.f32 %v335, %v855
        %v1018 = vadd.f32 %v336, %v860
        %v1019 = vadd.f32 %v337, %v863
        %v1020 = vadd.f32 %v338, %v868
        %v1021 = vadd.f32 %v339, %v871
        %v1022 = vadd.f32 %v340, %v876
        %v1023 = vadd.f32 %v341, %v879
        %v1024 = vadd.f32 %v342, %v884
        %v1025 = vadd.f32 %v343, %v887
        %v1026 = vadd.f32 %v344, %v892
        %v1027 = vadd.f32 %v345, %v895
        %v1028 = vadd.f32 %v346, %v900
        %v1029 = vadd.f32 %v347, %v903
        %v1030 = vadd.f32 %v348, %v908
        %v1031 = vadd.f32 %v349, %v911
        %v1032 = vadd.f32 %v350, %v916
        %v1033 = vadd.f32 %v351, %v919
        %v1034 = vadd.f32 %v352, %v924
        %v1035 = vadd.f32 %v353, %v927
        %v1036 = vadd.f32 %v354, %v932
        %v1037 = vadd.f32 %v355, %v935
        %v1038 = vadd.f32 %v356, %v940
        %v1039 = vadd.f32 %v357, %v943
        %v1040 = vadd.f32 %v358, %v948
        %v1041 = vadd.f32 %v359, %v951
        %v1042 = vadd.f32 %v360, %v956
        %v1043 = vadd.f32 %v361, %v959
        %v1044 = vadd.f32 %v362, %v964
        %v1045 = vadd.f32 %v363, %v967
        %v1046 = vadd.f32 %v364, %v972
        %v1047 = vadd.f32 %v365, %v975
        %v1048 = vadd.f32 %v366, %v980
        %v1049 = vadd.f32 %v367, %v983
        %vm1050 = vcmask 523264
        %1051 = vst.msk [vmem:[%s232] sm:$0xff] %vm1050, %v986
        %1052 = vst.msk [vmem:[%s232 + $0x8] sm:$0xff] %vm1050, %v987
        %1053 = vst.msk [vmem:[%s232 + $0x10] sm:$0xff] %vm1050, %v988
        %1054 = vst.msk [vmem:[%s232 + $0x18] sm:$0xff] %vm1050, %v989
        %1055 = vst.msk [vmem:[%s232 + $0x20] sm:$0xff] %vm1050, %v990
        %1056 = vst.msk [vmem:[%s232 + $0x28] sm:$0xff] %vm1050, %v991
        %1057 = vst.msk [vmem:[%s232 + $0x30] sm:$0xff] %vm1050, %v992
        %1058 = vst.msk [vmem:[%s232 + $0x38] sm:$0xff] %vm1050, %v993
        %1059 = vst.msk [vmem:[%s232 + $0x40] sm:$0xff] %vm1050, %v994
        %1060 = vst.msk [vmem:[%s232 + $0x48] sm:$0xff] %vm1050, %v995
        %1061 = vst.msk [vmem:[%s232 + $0x50] sm:$0xff] %vm1050, %v996
        %1062 = vst.msk [vmem:[%s232 + $0x58] sm:$0xff] %vm1050, %v997
        %1063 = vst.msk [vmem:[%s232 + $0x60] sm:$0xff] %vm1050, %v998
        %1064 = vst.msk [vmem:[%s232 + $0x68] sm:$0xff] %vm1050, %v999
        %1065 = vst.msk [vmem:[%s232 + $0x70] sm:$0xff] %vm1050, %v1000
        %1066 = vst.msk [vmem:[%s232 + $0x78] sm:$0xff] %vm1050, %v1001
        %1067 = vst.msk [vmem:[%s232 + $0x80] sm:$0xff] %vm1050, %v1002
        %1068 = vst.msk [vmem:[%s232 + $0x88] sm:$0xff] %vm1050, %v1003
        %1069 = vst.msk [vmem:[%s232 + $0x90] sm:$0xff] %vm1050, %v1004
        %1070 = vst.msk [vmem:[%s232 + $0x98] sm:$0xff] %vm1050, %v1005
        %1071 = vst.msk [vmem:[%s232 + $0xa0] sm:$0xff] %vm1050, %v1006
        %1072 = vst.msk [vmem:[%s232 + $0xa8] sm:$0xff] %vm1050, %v1007
        %1073 = vst.msk [vmem:[%s232 + $0xb0] sm:$0xff] %vm1050, %v1008
        %1074 = vst.msk [vmem:[%s232 + $0xb8] sm:$0xff] %vm1050, %v1009
        %1075 = vst.msk [vmem:[%s232 + $0xc0] sm:$0xff] %vm1050, %v1010
        %1076 = vst.msk [vmem:[%s232 + $0xc8] sm:$0xff] %vm1050, %v1011
        %1077 = vst.msk [vmem:[%s232 + $0xd0] sm:$0xff] %vm1050, %v1012
        %1078 = vst.msk [vmem:[%s232 + $0xd8] sm:$0xff] %vm1050, %v1013
        %1079 = vst.msk [vmem:[%s232 + $0xe0] sm:$0xff] %vm1050, %v1014
        %1080 = vst.msk [vmem:[%s232 + $0xe8] sm:$0xff] %vm1050, %v1015
        %1081 = vst.msk [vmem:[%s232 + $0xf0] sm:$0xff] %vm1050, %v1016
        %1082 = vst.msk [vmem:[%s232 + $0xf8] sm:$0xff] %vm1050, %v1017
        %1083 = vst.msk [vmem:[%s232 + $0x100] sm:$0xff] %vm1050, %v1018
        %1084 = vst.msk [vmem:[%s232 + $0x108] sm:$0xff] %vm1050, %v1019
        %1085 = vst.msk [vmem:[%s232 + $0x110] sm:$0xff] %vm1050, %v1020
        %1086 = vst.msk [vmem:[%s232 + $0x118] sm:$0xff] %vm1050, %v1021
        %1087 = vst.msk [vmem:[%s232 + $0x120] sm:$0xff] %vm1050, %v1022
        %1088 = vst.msk [vmem:[%s232 + $0x128] sm:$0xff] %vm1050, %v1023
        %1089 = vst.msk [vmem:[%s232 + $0x130] sm:$0xff] %vm1050, %v1024
        %1090 = vst.msk [vmem:[%s232 + $0x138] sm:$0xff] %vm1050, %v1025
        %1091 = vst.msk [vmem:[%s232 + $0x140] sm:$0xff] %vm1050, %v1026
        %1092 = vst.msk [vmem:[%s232 + $0x148] sm:$0xff] %vm1050, %v1027
        %1093 = vst.msk [vmem:[%s232 + $0x150] sm:$0xff] %vm1050, %v1028
        %1094 = vst.msk [vmem:[%s232 + $0x158] sm:$0xff] %vm1050, %v1029
        %1095 = vst.msk [vmem:[%s232 + $0x160] sm:$0xff] %vm1050, %v1030
        %1096 = vst.msk [vmem:[%s232 + $0x168] sm:$0xff] %vm1050, %v1031
        %1097 = vst.msk [vmem:[%s232 + $0x170] sm:$0xff] %vm1050, %v1032
        %1098 = vst.msk [vmem:[%s232 + $0x178] sm:$0xff] %vm1050, %v1033
        %1099 = vst.msk [vmem:[%s232 + $0x180] sm:$0xff] %vm1050, %v1034
        %1100 = vst.msk [vmem:[%s232 + $0x188] sm:$0xff] %vm1050, %v1035
        %1101 = vst.msk [vmem:[%s232 + $0x190] sm:$0xff] %vm1050, %v1036
        %1102 = vst.msk [vmem:[%s232 + $0x198] sm:$0xff] %vm1050, %v1037
        %1103 = vst.msk [vmem:[%s232 + $0x1a0] sm:$0xff] %vm1050, %v1038
        %1104 = vst.msk [vmem:[%s232 + $0x1a8] sm:$0xff] %vm1050, %v1039
        %1105 = vst.msk [vmem:[%s232 + $0x1b0] sm:$0xff] %vm1050, %v1040
        %1106 = vst.msk [vmem:[%s232 + $0x1b8] sm:$0xff] %vm1050, %v1041
        %1107 = vst.msk [vmem:[%s232 + $0x1c0] sm:$0xff] %vm1050, %v1042
        %1108 = vst.msk [vmem:[%s232 + $0x1c8] sm:$0xff] %vm1050, %v1043
        %1109 = vst.msk [vmem:[%s232 + $0x1d0] sm:$0xff] %vm1050, %v1044
        %1110 = vst.msk [vmem:[%s232 + $0x1d8] sm:$0xff] %vm1050, %v1045
        %1111 = vst.msk [vmem:[%s232 + $0x1e0] sm:$0xff] %vm1050, %v1046
        %1112 = vst.msk [vmem:[%s232 + $0x1e8] sm:$0xff] %vm1050, %v1047
        %1113 = vst.msk [vmem:[%s232 + $0x1f0] sm:$0xff] %vm1050, %v1048
        %1114 = vst.msk [vmem:[%s232 + $0x1f8] sm:$0xff] %vm1050, %v1049
        // Predicated region
        $region45: #{discriminator_forward.3} parent=31 // pred_check
          %p1115 = pneg %p235
        $region46: #{discriminator_forward.3} parent=31 // pred_check_branch
          %1117 = sbr.rel (%p1115) target = $region48
        $region47: #{discriminator_forward.3} parent=31 // pred_region
          %v1118 = vld [vmem:[%s232] sm:$0xff]
          %v1119 = vld [vmem:[%s232 + $0x8] sm:$0xff]
          %v1120 = vld [vmem:[%s232 + $0x10] sm:$0xff]
          %v1121 = vld [vmem:[%s232 + $0x18] sm:$0xff]
          %v1122 = vld [vmem:[%s232 + $0x20] sm:$0xff]
          %v1123 = vld [vmem:[%s232 + $0x28] sm:$0xff]
          %v1124 = vld [vmem:[%s232 + $0x30] sm:$0xff]
          %v1125 = vld [vmem:[%s232 + $0x38] sm:$0xff]
          %v1126 = vld [vmem:[%s232 + $0x40] sm:$0xff]
          %v1127 = vld [vmem:[%s232 + $0x48] sm:$0xff]
          %v1128 = vld [vmem:[%s232 + $0x50] sm:$0xff]
          %v1129 = vld [vmem:[%s232 + $0x58] sm:$0xff]
          %v1130 = vld [vmem:[%s232 + $0x60] sm:$0xff]
          %v1131 = vld [vmem:[%s232 + $0x68] sm:$0xff]
          %v1132 = vld [vmem:[%s232 + $0x70] sm:$0xff]
          %v1133 = vld [vmem:[%s232 + $0x78] sm:$0xff]
          %v1134 = vld [vmem:[%s232 + $0x80] sm:$0xff]
          %v1135 = vld [vmem:[%s232 + $0x88] sm:$0xff]
          %v1136 = vld [vmem:[%s232 + $0x90] sm:$0xff]
          %v1137 = vld [vmem:[%s232 + $0x98] sm:$0xff]
          %v1138 = vld [vmem:[%s232 + $0xa0] sm:$0xff]
          %v1139 = vld [vmem:[%s232 + $0xa8] sm:$0xff]
          %v1140 = vld [vmem:[%s232 + $0xb0] sm:$0xff]
          %v1141 = vld [vmem:[%s232 + $0xb8] sm:$0xff]
          %v1142 = vld [vmem:[%s232 + $0xc0] sm:$0xff]
          %v1143 = vld [vmem:[%s232 + $0xc8] sm:$0xff]
          %v1144 = vld [vmem:[%s232 + $0xd0] sm:$0xff]
          %v1145 = vld [vmem:[%s232 + $0xd8] sm:$0xff]
          %v1146 = vld [vmem:[%s232 + $0xe0] sm:$0xff]
          %v1147 = vld [vmem:[%s232 + $0xe8] sm:$0xff]
          %v1148 = vld [vmem:[%s232 + $0xf0] sm:$0xff]
          %v1149 = vld [vmem:[%s232 + $0xf8] sm:$0xff]
          %v1150 = vld [vmem:[%s232 + $0x100] sm:$0xff]
          %v1151 = vld [vmem:[%s232 + $0x108] sm:$0xff]
          %v1152 = vld [vmem:[%s232 + $0x110] sm:$0xff]
          %v1153 = vld [vmem:[%s232 + $0x118] sm:$0xff]
          %v1154 = vld [vmem:[%s232 + $0x120] sm:$0xff]
          %v1155 = vld [vmem:[%s232 + $0x128] sm:$0xff]
          %v1156 = vld [vmem:[%s232 + $0x130] sm:$0xff]
          %v1157 = vld [vmem:[%s232 + $0x138] sm:$0xff]
          %v1158 = vld [vmem:[%s232 + $0x140] sm:$0xff]
          %v1159 = vld [vmem:[%s232 + $0x148] sm:$0xff]
          %v1160 = vld [vmem:[%s232 + $0x150] sm:$0xff]
          %v1161 = vld [vmem:[%s232 + $0x158] sm:$0xff]
          %v1162 = vld [vmem:[%s232 + $0x160] sm:$0xff]
          %v1163 = vld [vmem:[%s232 + $0x168] sm:$0xff]
          %v1164 = vld [vmem:[%s232 + $0x170] sm:$0xff]
          %v1165 = vld [vmem:[%s232 + $0x178] sm:$0xff]
          %v1166 = vld [vmem:[%s232 + $0x180] sm:$0xff]
          %v1167 = vld [vmem:[%s232 + $0x188] sm:$0xff]
          %v1168 = vld [vmem:[%s232 + $0x190] sm:$0xff]
          %v1169 = vld [vmem:[%s232 + $0x198] sm:$0xff]
          %v1170 = vld [vmem:[%s232 + $0x1a0] sm:$0xff]
          %v1171 = vld [vmem:[%s232 + $0x1a8] sm:$0xff]
          %v1172 = vld [vmem:[%s232 + $0x1b0] sm:$0xff]
          %v1173 = vld [vmem:[%s232 + $0x1b8] sm:$0xff]
          %v1174 = vld [vmem:[%s232 + $0x1c0] sm:$0xff]
          %v1175 = vld [vmem:[%s232 + $0x1c8] sm:$0xff]
          %v1176 = vld [vmem:[%s232 + $0x1d0] sm:$0xff]
          %v1177 = vld [vmem:[%s232 + $0x1d8] sm:$0xff]
          %v1178 = vld [vmem:[%s232 + $0x1e0] sm:$0xff]
          %v1179 = vld [vmem:[%s232 + $0x1e8] sm:$0xff]
          %v1180 = vld [vmem:[%s232 + $0x1f0] sm:$0xff]
          %v1181 = vld [vmem:[%s232 + $0x1f8] sm:$0xff]
          %v1182 = vld [vmem:[#allocation4] sm:$0x1]
          %v1184 = vlaneseq
          %v1185 = vshrl.u32 %v1184, 7
          %v1186 = vsub.s32 0, %v1185
          %v1187 = vrot.slane %v1182, %v1186
          %v1189 = vadd.f32 %v1118, %v1187
          %v1190 = vadd.f32 %v1119, %v1187
          %v1191 = vadd.f32 %v1120, %v1187
          %v1192 = vadd.f32 %v1121, %v1187
          %v1193 = vadd.f32 %v1122, %v1187
          %v1194 = vadd.f32 %v1123, %v1187
          %v1195 = vadd.f32 %v1124, %v1187
          %v1196 = vadd.f32 %v1125, %v1187
          %v1197 = vadd.f32 %v1126, %v1187
          %v1198 = vadd.f32 %v1127, %v1187
          %v1199 = vadd.f32 %v1128, %v1187
          %v1200 = vadd.f32 %v1129, %v1187
          %v1201 = vadd.f32 %v1130, %v1187
          %v1202 = vadd.f32 %v1131, %v1187
          %v1203 = vadd.f32 %v1132, %v1187
          %v1204 = vadd.f32 %v1133, %v1187
          %v1205 = vadd.f32 %v1134, %v1187
          %v1206 = vadd.f32 %v1135, %v1187
          %v1207 = vadd.f32 %v1136, %v1187
          %v1208 = vadd.f32 %v1137, %v1187
          %v1209 = vadd.f32 %v1138, %v1187
          %v1210 = vadd.f32 %v1139, %v1187
          %v1211 = vadd.f32 %v1140, %v1187
          %v1212 = vadd.f32 %v1141, %v1187
          %v1213 = vadd.f32 %v1142, %v1187
          %v1214 = vadd.f32 %v1143, %v1187
          %v1215 = vadd.f32 %v1144, %v1187
          %v1216 = vadd.f32 %v1145, %v1187
          %v1217 = vadd.f32 %v1146, %v1187
          %v1218 = vadd.f32 %v1147, %v1187
          %v1219 = vadd.f32 %v1148, %v1187
          %v1220 = vadd.f32 %v1149, %v1187
          %v1221 = vadd.f32 %v1150, %v1187
          %v1222 = vadd.f32 %v1151, %v1187
          %v1223 = vadd.f32 %v1152, %v1187
          %v1224 = vadd.f32 %v1153, %v1187
          %v1225 = vadd.f32 %v1154, %v1187
          %v1226 = vadd.f32 %v1155, %v1187
          %v1227 = vadd.f32 %v1156, %v1187
          %v1228 = vadd.f32 %v1157, %v1187
          %v1229 = vadd.f32 %v1158, %v1187
          %v1230 = vadd.f32 %v1159, %v1187
          %v1231 = vadd.f32 %v1160, %v1187
          %v1232 = vadd.f32 %v1161, %v1187
          %v1233 = vadd.f32 %v1162, %v1187
          %v1234 = vadd.f32 %v1163, %v1187
          %v1235 = vadd.f32 %v1164, %v1187
          %v1236 = vadd.f32 %v1165, %v1187
          %v1237 = vadd.f32 %v1166, %v1187
          %v1238 = vadd.f32 %v1167, %v1187
          %v1239 = vadd.f32 %v1168, %v1187
          %v1240 = vadd.f32 %v1169, %v1187
          %v1241 = vadd.f32 %v1170, %v1187
          %v1242 = vadd.f32 %v1171, %v1187
          %v1243 = vadd.f32 %v1172, %v1187
          %v1244 = vadd.f32 %v1173, %v1187
          %v1245 = vadd.f32 %v1174, %v1187
          %v1246 = vadd.f32 %v1175, %v1187
          %v1247 = vadd.f32 %v1176, %v1187
          %v1248 = vadd.f32 %v1177, %v1187
          %v1249 = vadd.f32 %v1178, %v1187
          %v1250 = vadd.f32 %v1179, %v1187
          %v1251 = vadd.f32 %v1180, %v1187
          %v1252 = vadd.f32 %v1181, %v1187
          %vm1253 = vcmp.gt.f32.partialorder %v1189, 0.0
          %vm1254 = vcmp.gt.f32.partialorder %v1190, 0.0
          %vm1255 = vcmp.gt.f32.partialorder %v1191, 0.0
          %vm1256 = vcmp.gt.f32.partialorder %v1192, 0.0
          %vm1257 = vcmp.gt.f32.partialorder %v1193, 0.0
          %vm1258 = vcmp.gt.f32.partialorder %v1194, 0.0
          %vm1259 = vcmp.gt.f32.partialorder %v1195, 0.0
          %vm1260 = vcmp.gt.f32.partialorder %v1196, 0.0
          %vm1261 = vcmp.gt.f32.partialorder %v1197, 0.0
          %vm1262 = vcmp.gt.f32.partialorder %v1198, 0.0
          %vm1263 = vcmp.gt.f32.partialorder %v1199, 0.0
          %vm1264 = vcmp.gt.f32.partialorder %v1200, 0.0
          %vm1265 = vcmp.gt.f32.partialorder %v1201, 0.0
          %vm1266 = vcmp.gt.f32.partialorder %v1202, 0.0
          %vm1267 = vcmp.gt.f32.partialorder %v1203, 0.0
          %vm1268 = vcmp.gt.f32.partialorder %v1204, 0.0
          %vm1269 = vcmp.gt.f32.partialorder %v1205, 0.0
          %vm1270 = vcmp.gt.f32.partialorder %v1206, 0.0
          %vm1271 = vcmp.gt.f32.partialorder %v1207, 0.0
          %vm1272 = vcmp.gt.f32.partialorder %v1208, 0.0
          %vm1273 = vcmp.gt.f32.partialorder %v1209, 0.0
          %vm1274 = vcmp.gt.f32.partialorder %v1210, 0.0
          %vm1275 = vcmp.gt.f32.partialorder %v1211, 0.0
          %vm1276 = vcmp.gt.f32.partialorder %v1212, 0.0
          %vm1277 = vcmp.gt.f32.partialorder %v1213, 0.0
          %vm1278 = vcmp.gt.f32.partialorder %v1214, 0.0
          %vm1279 = vcmp.gt.f32.partialorder %v1215, 0.0
          %vm1280 = vcmp.gt.f32.partialorder %v1216, 0.0
          %vm1281 = vcmp.gt.f32.partialorder %v1217, 0.0
          %vm1282 = vcmp.gt.f32.partialorder %v1218, 0.0
          %vm1283 = vcmp.gt.f32.partialorder %v1219, 0.0
          %vm1284 = vcmp.gt.f32.partialorder %v1220, 0.0
          %vm1285 = vcmp.gt.f32.partialorder %v1221, 0.0
          %vm1286 = vcmp.gt.f32.partialorder %v1222, 0.0
          %vm1287 = vcmp.gt.f32.partialorder %v1223, 0.0
          %vm1288 = vcmp.gt.f32.partialorder %v1224, 0.0
          %vm1289 = vcmp.gt.f32.partialorder %v1225, 0.0
          %vm1290 = vcmp.gt.f32.partialorder %v1226, 0.0
          %vm1291 = vcmp.gt.f32.partialorder %v1227, 0.0
          %vm1292 = vcmp.gt.f32.partialorder %v1228, 0.0
          %vm1293 = vcmp.gt.f32.partialorder %v1229, 0.0
          %vm1294 = vcmp.gt.f32.partialorder %v1230, 0.0
          %vm1295 = vcmp.gt.f32.partialorder %v1231, 0.0
          %vm1296 = vcmp.gt.f32.partialorder %v1232, 0.0
          %vm1297 = vcmp.gt.f32.partialorder %v1233, 0.0
          %vm1298 = vcmp.gt.f32.partialorder %v1234, 0.0
          %vm1299 = vcmp.gt.f32.partialorder %v1235, 0.0
          %vm1300 = vcmp.gt.f32.partialorder %v1236, 0.0
          %vm1301 = vcmp.gt.f32.partialorder %v1237, 0.0
          %vm1302 = vcmp.gt.f32.partialorder %v1238, 0.0
          %vm1303 = vcmp.gt.f32.partialorder %v1239, 0.0
          %vm1304 = vcmp.gt.f32.partialorder %v1240, 0.0
          %vm1305 = vcmp.gt.f32.partialorder %v1241, 0.0
          %vm1306 = vcmp.gt.f32.partialorder %v1242, 0.0
          %vm1307 = vcmp.gt.f32.partialorder %v1243, 0.0
          %vm1308 = vcmp.gt.f32.partialorder %v1244, 0.0
          %vm1309 = vcmp.gt.f32.partialorder %v1245, 0.0
          %vm1310 = vcmp.gt.f32.partialorder %v1246, 0.0
          %vm1311 = vcmp.gt.f32.partialorder %v1247, 0.0
          %vm1312 = vcmp.gt.f32.partialorder %v1248, 0.0
          %vm1313 = vcmp.gt.f32.partialorder %v1249, 0.0
          %vm1314 = vcmp.gt.f32.partialorder %v1250, 0.0
          %vm1315 = vcmp.gt.f32.partialorder %v1251, 0.0
          %vm1316 = vcmp.gt.f32.partialorder %v1252, 0.0
          %v1317 = vmul.f32 %v1189, 0.01
          %v1318 = vmul.f32 %v1190, 0.01
          %v1319 = vmul.f32 %v1191, 0.01
          %v1320 = vmul.f32 %v1192, 0.01
          %v1321 = vmul.f32 %v1193, 0.01
          %v1322 = vmul.f32 %v1194, 0.01
          %v1323 = vmul.f32 %v1195, 0.01
          %v1324 = vmul.f32 %v1196, 0.01
          %v1325 = vmul.f32 %v1197, 0.01
          %v1326 = vmul.f32 %v1198, 0.01
          %v1327 = vmul.f32 %v1199, 0.01
          %v1328 = vmul.f32 %v1200, 0.01
          %v1329 = vmul.f32 %v1201, 0.01
          %v1330 = vmul.f32 %v1202, 0.01
          %v1331 = vmul.f32 %v1203, 0.01
          %v1332 = vmul.f32 %v1204, 0.01
          %v1333 = vmul.f32 %v1205, 0.01
          %v1334 = vmul.f32 %v1206, 0.01
          %v1335 = vmul.f32 %v1207, 0.01
          %v1336 = vmul.f32 %v1208, 0.01
          %v1337 = vmul.f32 %v1209, 0.01
          %v1338 = vmul.f32 %v1210, 0.01
          %v1339 = vmul.f32 %v1211, 0.01
          %v1340 = vmul.f32 %v1212, 0.01
          %v1341 = vmul.f32 %v1213, 0.01
          %v1342 = vmul.f32 %v1214, 0.01
          %v1343 = vmul.f32 %v1215, 0.01
          %v1344 = vmul.f32 %v1216, 0.01
          %v1345 = vmul.f32 %v1217, 0.01
          %v1346 = vmul.f32 %v1218, 0.01
          %v1347 = vmul.f32 %v1219, 0.01
          %v1348 = vmul.f32 %v1220, 0.01
          %v1349 = vmul.f32 %v1221, 0.01
          %v1350 = vmul.f32 %v1222, 0.01
          %v1351 = vmul.f32 %v1223, 0.01
          %v1352 = vmul.f32 %v1224, 0.01
          %v1353 = vmul.f32 %v1225, 0.01
          %v1354 = vmul.f32 %v1226, 0.01
          %v1355 = vmul.f32 %v1227, 0.01
          %v1356 = vmul.f32 %v1228, 0.01
          %v1357 = vmul.f32 %v1229, 0.01
          %v1358 = vmul.f32 %v1230, 0.01
          %v1359 = vmul.f32 %v1231, 0.01
          %v1360 = vmul.f32 %v1232, 0.01
          %v1361 = vmul.f32 %v1233, 0.01
          %v1362 = vmul.f32 %v1234, 0.01
          %v1363 = vmul.f32 %v1235, 0.01
          %v1364 = vmul.f32 %v1236, 0.01
          %v1365 = vmul.f32 %v1237, 0.01
          %v1366 = vmul.f32 %v1238, 0.01
          %v1367 = vmul.f32 %v1239, 0.01
          %v1368 = vmul.f32 %v1240, 0.01
          %v1369 = vmul.f32 %v1241, 0.01
          %v1370 = vmul.f32 %v1242, 0.01
          %v1371 = vmul.f32 %v1243, 0.01
          %v1372 = vmul.f32 %v1244, 0.01
          %v1373 = vmul.f32 %v1245, 0.01
          %v1374 = vmul.f32 %v1246, 0.01
          %v1375 = vmul.f32 %v1247, 0.01
          %v1376 = vmul.f32 %v1248, 0.01
          %v1377 = vmul.f32 %v1249, 0.01
          %v1378 = vmul.f32 %v1250, 0.01
          %v1379 = vmul.f32 %v1251, 0.01
          %v1380 = vmul.f32 %v1252, 0.01
          %v1381 = vsel %vm1253, %v1189, %v1317
          %v1382 = vsel %vm1254, %v1190, %v1318
          %v1383 = vsel %vm1255, %v1191, %v1319
          %v1384 = vsel %vm1256, %v1192, %v1320
          %v1385 = vsel %vm1257, %v1193, %v1321
          %v1386 = vsel %vm1258, %v1194, %v1322
          %v1387 = vsel %vm1259, %v1195, %v1323
          %v1388 = vsel %vm1260, %v1196, %v1324
          %v1389 = vsel %vm1261, %v1197, %v1325
          %v1390 = vsel %vm1262, %v1198, %v1326
          %v1391 = vsel %vm1263, %v1199, %v1327
          %v1392 = vsel %vm1264, %v1200, %v1328
          %v1393 = vsel %vm1265, %v1201, %v1329
          %v1394 = vsel %vm1266, %v1202, %v1330
          %v1395 = vsel %vm1267, %v1203, %v1331
          %v1396 = vsel %vm1268, %v1204, %v1332
          %v1397 = vsel %vm1269, %v1205, %v1333
          %v1398 = vsel %vm1270, %v1206, %v1334
          %v1399 = vsel %vm1271, %v1207, %v1335
          %v1400 = vsel %vm1272, %v1208, %v1336
          %v1401 = vsel %vm1273, %v1209, %v1337
          %v1402 = vsel %vm1274, %v1210, %v1338
          %v1403 = vsel %vm1275, %v1211, %v1339
          %v1404 = vsel %vm1276, %v1212, %v1340
          %v1405 = vsel %vm1277, %v1213, %v1341
          %v1406 = vsel %vm1278, %v1214, %v1342
          %v1407 = vsel %vm1279, %v1215, %v1343
          %v1408 = vsel %vm1280, %v1216, %v1344
          %v1409 = vsel %vm1281, %v1217, %v1345
          %v1410 = vsel %vm1282, %v1218, %v1346
          %v1411 = vsel %vm1283, %v1219, %v1347
          %v1412 = vsel %vm1284, %v1220, %v1348
          %v1413 = vsel %vm1285, %v1221, %v1349
          %v1414 = vsel %vm1286, %v1222, %v1350
          %v1415 = vsel %vm1287, %v1223, %v1351
          %v1416 = vsel %vm1288, %v1224, %v1352
          %v1417 = vsel %vm1289, %v1225, %v1353
          %v1418 = vsel %vm1290, %v1226, %v1354
          %v1419 = vsel %vm1291, %v1227, %v1355
          %v1420 = vsel %vm1292, %v1228, %v1356
          %v1421 = vsel %vm1293, %v1229, %v1357
          %v1422 = vsel %vm1294, %v1230, %v1358
          %v1423 = vsel %vm1295, %v1231, %v1359
          %v1424 = vsel %vm1296, %v1232, %v1360
          %v1425 = vsel %vm1297, %v1233, %v1361
          %v1426 = vsel %vm1298, %v1234, %v1362
          %v1427 = vsel %vm1299, %v1235, %v1363
          %v1428 = vsel %vm1300, %v1236, %v1364
          %v1429 = vsel %vm1301, %v1237, %v1365
          %v1430 = vsel %vm1302, %v1238, %v1366
          %v1431 = vsel %vm1303, %v1239, %v1367
          %v1432 = vsel %vm1304, %v1240, %v1368
          %v1433 = vsel %vm1305, %v1241, %v1369
          %v1434 = vsel %vm1306, %v1242, %v1370
          %v1435 = vsel %vm1307, %v1243, %v1371
          %v1436 = vsel %vm1308, %v1244, %v1372
          %v1437 = vsel %vm1309, %v1245, %v1373
          %v1438 = vsel %vm1310, %v1246, %v1374
          %v1439 = vsel %vm1311, %v1247, %v1375
          %v1440 = vsel %vm1312, %v1248, %v1376
          %v1441 = vsel %vm1313, %v1249, %v1377
          %v1442 = vsel %vm1314, %v1250, %v1378
          %v1443 = vsel %vm1315, %v1251, %v1379
          %v1444 = vsel %vm1316, %v1252, %v1380
          %1445 = vst.msk [vmem:[%s232] sm:$0xff] %vm1050, %v1381
          %1446 = vst.msk [vmem:[%s232 + $0x8] sm:$0xff] %vm1050, %v1382
          %1447 = vst.msk [vmem:[%s232 + $0x10] sm:$0xff] %vm1050, %v1383
          %1448 = vst.msk [vmem:[%s232 + $0x18] sm:$0xff] %vm1050, %v1384
          %1449 = vst.msk [vmem:[%s232 + $0x20] sm:$0xff] %vm1050, %v1385
          %1450 = vst.msk [vmem:[%s232 + $0x28] sm:$0xff] %vm1050, %v1386
          %1451 = vst.msk [vmem:[%s232 + $0x30] sm:$0xff] %vm1050, %v1387
          %1452 = vst.msk [vmem:[%s232 + $0x38] sm:$0xff] %vm1050, %v1388
          %1453 = vst.msk [vmem:[%s232 + $0x40] sm:$0xff] %vm1050, %v1389
          %1454 = vst.msk [vmem:[%s232 + $0x48] sm:$0xff] %vm1050, %v1390
          %1455 = vst.msk [vmem:[%s232 + $0x50] sm:$0xff] %vm1050, %v1391
          %1456 = vst.msk [vmem:[%s232 + $0x58] sm:$0xff] %vm1050, %v1392
          %1457 = vst.msk [vmem:[%s232 + $0x60] sm:$0xff] %vm1050, %v1393
          %1458 = vst.msk [vmem:[%s232 + $0x68] sm:$0xff] %vm1050, %v1394
          %1459 = vst.msk [vmem:[%s232 + $0x70] sm:$0xff] %vm1050, %v1395
          %1460 = vst.msk [vmem:[%s232 + $0x78] sm:$0xff] %vm1050, %v1396
          %1461 = vst.msk [vmem:[%s232 + $0x80] sm:$0xff] %vm1050, %v1397
          %1462 = vst.msk [vmem:[%s232 + $0x88] sm:$0xff] %vm1050, %v1398
          %1463 = vst.msk [vmem:[%s232 + $0x90] sm:$0xff] %vm1050, %v1399
          %1464 = vst.msk [vmem:[%s232 + $0x98] sm:$0xff] %vm1050, %v1400
          %1465 = vst.msk [vmem:[%s232 + $0xa0] sm:$0xff] %vm1050, %v1401
          %1466 = vst.msk [vmem:[%s232 + $0xa8] sm:$0xff] %vm1050, %v1402
          %1467 = vst.msk [vmem:[%s232 + $0xb0] sm:$0xff] %vm1050, %v1403
          %1468 = vst.msk [vmem:[%s232 + $0xb8] sm:$0xff] %vm1050, %v1404
          %1469 = vst.msk [vmem:[%s232 + $0xc0] sm:$0xff] %vm1050, %v1405
          %1470 = vst.msk [vmem:[%s232 + $0xc8] sm:$0xff] %vm1050, %v1406
          %1471 = vst.msk [vmem:[%s232 + $0xd0] sm:$0xff] %vm1050, %v1407
          %1472 = vst.msk [vmem:[%s232 + $0xd8] sm:$0xff] %vm1050, %v1408
          %1473 = vst.msk [vmem:[%s232 + $0xe0] sm:$0xff] %vm1050, %v1409
          %1474 = vst.msk [vmem:[%s232 + $0xe8] sm:$0xff] %vm1050, %v1410
          %1475 = vst.msk [vmem:[%s232 + $0xf0] sm:$0xff] %vm1050, %v1411
          %1476 = vst.msk [vmem:[%s232 + $0xf8] sm:$0xff] %vm1050, %v1412
          %1477 = vst.msk [vmem:[%s232 + $0x100] sm:$0xff] %vm1050, %v1413
          %1478 = vst.msk [vmem:[%s232 + $0x108] sm:$0xff] %vm1050, %v1414
          %1479 = vst.msk [vmem:[%s232 + $0x110] sm:$0xff] %vm1050, %v1415
          %1480 = vst.msk [vmem:[%s232 + $0x118] sm:$0xff] %vm1050, %v1416
          %1481 = vst.msk [vmem:[%s232 + $0x120] sm:$0xff] %vm1050, %v1417
          %1482 = vst.msk [vmem:[%s232 + $0x128] sm:$0xff] %vm1050, %v1418
          %1483 = vst.msk [vmem:[%s232 + $0x130] sm:$0xff] %vm1050, %v1419
          %1484 = vst.msk [vmem:[%s232 + $0x138] sm:$0xff] %vm1050, %v1420
          %1485 = vst.msk [vmem:[%s232 + $0x140] sm:$0xff] %vm1050, %v1421
          %1486 = vst.msk [vmem:[%s232 + $0x148] sm:$0xff] %vm1050, %v1422
          %1487 = vst.msk [vmem:[%s232 + $0x150] sm:$0xff] %vm1050, %v1423
          %1488 = vst.msk [vmem:[%s232 + $0x158] sm:$0xff] %vm1050, %v1424
          %1489 = vst.msk [vmem:[%s232 + $0x160] sm:$0xff] %vm1050, %v1425
          %1490 = vst.msk [vmem:[%s232 + $0x168] sm:$0xff] %vm1050, %v1426
          %1491 = vst.msk [vmem:[%s232 + $0x170] sm:$0xff] %vm1050, %v1427
          %1492 = vst.msk [vmem:[%s232 + $0x178] sm:$0xff] %vm1050, %v1428
          %1493 = vst.msk [vmem:[%s232 + $0x180] sm:$0xff] %vm1050, %v1429
          %1494 = vst.msk [vmem:[%s232 + $0x188] sm:$0xff] %vm1050, %v1430
          %1495 = vst.msk [vmem:[%s232 + $0x190] sm:$0xff] %vm1050, %v1431
          %1496 = vst.msk [vmem:[%s232 + $0x198] sm:$0xff] %vm1050, %v1432
          %1497 = vst.msk [vmem:[%s232 + $0x1a0] sm:$0xff] %vm1050, %v1433
          %1498 = vst.msk [vmem:[%s232 + $0x1a8] sm:$0xff] %vm1050, %v1434
          %1499 = vst.msk [vmem:[%s232 + $0x1b0] sm:$0xff] %vm1050, %v1435
          %1500 = vst.msk [vmem:[%s232 + $0x1b8] sm:$0xff] %vm1050, %v1436
          %1501 = vst.msk [vmem:[%s232 + $0x1c0] sm:$0xff] %vm1050, %v1437
          %1502 = vst.msk [vmem:[%s232 + $0x1c8] sm:$0xff] %vm1050, %v1438
          %1503 = vst.msk [vmem:[%s232 + $0x1d0] sm:$0xff] %vm1050, %v1439
          %1504 = vst.msk [vmem:[%s232 + $0x1d8] sm:$0xff] %vm1050, %v1440
          %1505 = vst.msk [vmem:[%s232 + $0x1e0] sm:$0xff] %vm1050, %v1441
          %1506 = vst.msk [vmem:[%s232 + $0x1e8] sm:$0xff] %vm1050, %v1442
          %1507 = vst.msk [vmem:[%s232 + $0x1f0] sm:$0xff] %vm1050, %v1443
          %1508 = vst.msk [vmem:[%s232 + $0x1f8] sm:$0xff] %vm1050, %v1444
        $region48: #{discriminator_forward.3} parent=31 // pred_fallthru
          _
        %s1509 = smul.u32 64, %s20
        %p1510 = scmp.lt.s32.totalorder %s1509, 127
        %s1511 = scalar_select %p1510, %s1509, 127
        %s1512 = smul.addr %s1511, 8
        %s1513 = scalar_lea.vmem %s3, %s1512
        // Predicated region
        $region49: #{discriminator_forward.3} parent=31 // pred_check
          %p1514 = pneg %p121
        $region50: #{discriminator_forward.3} parent=31 // pred_check_branch
          %1516 = sbr.rel (%p1514) target = $region52
        $region51: #{discriminator_forward.3} parent=31 // pred_region
          %s1517 = smul.u32 64, %s20
        $region52: #{discriminator_forward.3} parent=31 // pred_fallthru
          _
      $region32: #{discriminator_forward.3} parent=5 // pred_fallthru
        _
      %p1518 = scmp.le.s32.totalorder 2, %s11
      // Predicated region
      $region53: #{discriminator_forward.3} parent=5 // pred_check
        %p1519 = pneg %p1518
      $region54: #{discriminator_forward.3} parent=5 // pred_check_branch
        %1521 = sbr.rel (%p1519) target = $region56
      $region55: #{discriminator_forward.3} parent=5 // pred_region
        %s1522 = ssub.s32 %s11, 2
        // Predicated region
        $region57: #{discriminator_forward.3} parent=55 // pred_check
          %p1523 = pneg %p127
        $region58: #{discriminator_forward.3} parent=55 // pred_check_branch
          %1525 = sbr.rel (%p1523) target = $region60
        $region59: #{discriminator_forward.3} parent=55 // pred_region
          %s1526 = smul.u32 64, %s22
          %p1527 = scmp.lt.s32.totalorder %s1526, 127
          %s1528 = scalar_select %p1527, %s1526, 127
          %s1529 = smul.addr %s1528, 8
          %s1530 = scalar_lea.vmem %s3, %s1529
        $region60: #{discriminator_forward.3} parent=55 // pred_fallthru
          _
      $region56: #{discriminator_forward.3} parent=5 // pred_fallthru
        _
    $region6: #{discriminator_forward.3} parent=1 // loop_footer
      %s15 = sadd.s32 1, %s11
    $region7: #{discriminator_forward.3} parent=1 // loop_footer_branch
      %10 = sbr.rel target = $region3
    $region8: #{discriminator_forward.3} parent=1 // loop_exit
      _
    %1531 = vsyncpa [#allocation3], 1
    %s1532 = scalar_lea.sflag [#allocation3], 1
    %1533 = vsyncpa %s1532, 1
    %1534 = vsyncpa [#allocation5], 1

// kernel: discriminator_forward.4
$region0: #{discriminator_forward.4}
  #allocation0 [shape = 'u32[]', space=smem, size = 0x4, offset = 0x4, fixed_abs, tag = 'smem constant byte address 0x4 - core index']
  #allocation1 [shape = 'u32[144,128]{1,0:T(1,128)}', space=vmem, size = 0x12000, scoped, tag = 'internal scratch']
  %s0 = inlined_call_operand.vmem [shape: bf16[196,1024], index: 0, kind: input, shape index: {}]
  %s1 = inlined_call_operand.hbm [shape: bf16[1024,128], index: 1, kind: input, shape index: {}]
  %s2 = inlined_call_operand.hbm [shape: f32[1,128], index: 2, kind: input, shape index: {}]
  %s3 = inlined_call_operand.hbm [shape: f32[1,128], index: 3, kind: input, shape index: {}]
  %s4 = inlined_call_operand.vmem [shape: f32[196,128], index: 4, kind: output, shape index: {}]
  %s5 = sld [smem:[#allocation0]]
  $region46: #{discriminator_forward.4} parent=0
    _
  %s7 = ssub.s32 1, %s5
  %s8 = scalar_select 0, %s7, %s5
  $region1: #{discriminator_forward.4} parent=0
    #allocation2 [shape = 'u8[262144]{0}', space=vmem, size = 0x40000, scoped, tag = 'input window, operand 1, single buffered']
    #allocation3 [shape = 's32[1]{0}', space=sflag, size = 0x4, scoped, tag = 'scoped memory for discriminator_forward.4']
    #allocation4 [shape = 'u8[512]{0}', space=vmem, size = 0x400, scoped, tag = 'input window, operand 2, single buffered']
    #allocation5 [shape = 's32[1]{0}', space=sflag, size = 0x4, scoped, tag = 'scoped memory for discriminator_forward.4']
    #allocation6 [shape = 'u8[512]{0}', space=vmem, size = 0x400, scoped, tag = 'input window, operand 3, single buffered']
    %9 = vsyncpa [#allocation3], 0
    %10 = vsyncpa [#allocation5], 0
    // Predicated region
    $region2: #{discriminator_forward.4} parent=1 // pred_check
      _
    $region3: #{discriminator_forward.4} parent=1 // pred_check_branch
      %12 = sbr.rel (0) target = $region5
    $region4: #{discriminator_forward.4} parent=1 // pred_region
      _
    $region5: #{discriminator_forward.4} parent=1 // pred_fallthru
      _
    // Predicated region
    $region6: #{discriminator_forward.4} parent=1 // pred_check
      _
    $region7: #{discriminator_forward.4} parent=1 // pred_check_branch
      %14 = sbr.rel (0) target = $region9
    $region8: #{discriminator_forward.4} parent=1 // pred_region
      %s16 = ssub.s32 8192, 8192
      %17 = vsyncadd [#allocation3], %s16
      %s18 = sshll.u32 [#allocation2], 4
      %s19 = int_to_ptr.vmem [resolvable:$true] %s18
      %24 = dma.hbm_to_vmem [thread:$0]  %s1, 8192, %s19, [#allocation3], 64, 64, 4
    $region9: #{discriminator_forward.4} parent=1 // pred_fallthru
      _
    // Predicated region
    $region10: #{discriminator_forward.4} parent=1 // pred_check
      _
    $region11: #{discriminator_forward.4} parent=1 // pred_check_branch
      %26 = sbr.rel (0) target = $region13
    $region12: #{discriminator_forward.4} parent=1 // pred_region
      %s28 = ssub.s32 16, 16
      %29 = vsyncadd [#allocation5], %s28
      %s31 = sshll.u32 [#allocation4], 4
      %s32 = int_to_ptr.vmem [resolvable:$true] %s31
      %34 = dma.hbm_to_vmem [thread:$0]  %s2, 16, %s32, [#allocation5]
    $region13: #{discriminator_forward.4} parent=1 // pred_fallthru
      _
    // Predicated region
    $region14: #{discriminator_forward.4} parent=1 // pred_check
      _
    $region15: #{discriminator_forward.4} parent=1 // pred_check_branch
      %36 = sbr.rel (0) target = $region17
    $region16: #{discriminator_forward.4} parent=1 // pred_region
      %s38 = ssub.s32 16, 16
      %39 = vsyncadd [#allocation5], %s38
      %s41 = sshll.u32 [#allocation6], 4
      %s42 = int_to_ptr.vmem [resolvable:$true] %s41
      %44 = dma.hbm_to_vmem [thread:$0]  %s3, 16, %s42, [#allocation5]
    $region17: #{discriminator_forward.4} parent=1 // pred_fallthru
      _
    // Predicated region
    $region18: #{discriminator_forward.4} parent=1 // pred_check
      _
    $region19: #{discriminator_forward.4} parent=1 // pred_check_branch
      %46 = sbr.rel (0) target = $region21
    $region20: #{discriminator_forward.4} parent=1 // pred_region
      %47 = dma.done [#allocation3], 8192
    $region21: #{discriminator_forward.4} parent=1 // pred_fallthru
      _
    // Predicated region
    $region22: #{discriminator_forward.4} parent=1 // pred_check
      _
    $region23: #{discriminator_forward.4} parent=1 // pred_check_branch
      %49 = sbr.rel (0) target = $region25
    $region24: #{discriminator_forward.4} parent=1 // pred_region
      %50 = dma.done [#allocation5], 16
    $region25: #{discriminator_forward.4} parent=1 // pred_fallthru
      _
    // Predicated region
    $region26: #{discriminator_forward.4} parent=1 // pred_check
      _
    $region27: #{discriminator_forward.4} parent=1 // pred_check_branch
      %52 = sbr.rel (0) target = $region29
    $region28: #{discriminator_forward.4} parent=1 // pred_region
      %53 = dma.done [#allocation5], 16
    $region29: #{discriminator_forward.4} parent=1 // pred_fallthru
      _
    %p55 = scmp.eq.s32.totalorder 0, 0
    // Predicated region
    $region30: #{discriminator_forward.4} parent=1 // pred_check
      %p56 = pneg %p55
    $region31: #{discriminator_forward.4} parent=1 // pred_check_branch
      %58 = sbr.rel (%p56) target = $region33
    $region32: #{discriminator_forward.4} parent=1 // pred_region
      %59 = vst [vmem:[%s4] sm:$0xff] 0.0
      %60 = vst [vmem:[%s4 + $0x8] sm:$0xff] 0.0
      %61 = vst [vmem:[%s4 + $0x10] sm:$0xff] 0.0
      %62 = vst [vmem:[%s4 + $0x18] sm:$0xff] 0.0
      %63 = vst [vmem:[%s4 + $0x20] sm:$0xff] 0.0
      %64 = vst [vmem:[%s4 + $0x28] sm:$0xff] 0.0
      %65 = vst [vmem:[%s4 + $0x30] sm:$0xff] 0.0
      %66 = vst [vmem:[%s4 + $0x38] sm:$0xff] 0.0
      %67 = vst [vmem:[%s4 + $0x40] sm:$0xff] 0.0
      %68 = vst [vmem:[%s4 + $0x48] sm:$0xff] 0.0
      %69 = vst [vmem:[%s4 + $0x50] sm:$0xff] 0.0
      %70 = vst [vmem:[%s4 + $0x58] sm:$0xff] 0.0
      %71 = vst [vmem:[%s4 + $0x60] sm:$0xff] 0.0
      %72 = vst [vmem:[%s4 + $0x68] sm:$0xff] 0.0
      %73 = vst [vmem:[%s4 + $0x70] sm:$0xff] 0.0
      %74 = vst [vmem:[%s4 + $0x78] sm:$0xff] 0.0
      %75 = vst [vmem:[%s4 + $0x80] sm:$0xff] 0.0
      %76 = vst [vmem:[%s4 + $0x88] sm:$0xff] 0.0
      %77 = vst [vmem:[%s4 + $0x90] sm:$0xff] 0.0
      %78 = vst [vmem:[%s4 + $0x98] sm:$0xff] 0.0
      %79 = vst [vmem:[%s4 + $0xa0] sm:$0xff] 0.0
      %80 = vst [vmem:[%s4 + $0xa8] sm:$0xff] 0.0
      %81 = vst [vmem:[%s4 + $0xb0] sm:$0xff] 0.0
      %82 = vst [vmem:[%s4 + $0xb8] sm:$0xff] 0.0
      %83 = vst [vmem:[%s4 + $0xc0] sm:$0xf] 0.0
    $region33: #{discriminator_forward.4} parent=1 // pred_fallthru
      _
    %v84 = vld [vmem:[%s4] sm:$0xff]
    %v85 = vld [vmem:[%s4 + $0x8] sm:$0xff]
    %v86 = vld [vmem:[%s4 + $0x10] sm:$0xff]
    %v87 = vld [vmem:[%s4 + $0x18] sm:$0xff]
    %v88 = vld [vmem:[%s4 + $0x20] sm:$0xff]
    %v89 = vld [vmem:[%s4 + $0x28] sm:$0xff]
    %v90 = vld [vmem:[%s4 + $0x30] sm:$0xff]
    %v91 = vld [vmem:[%s4 + $0x38] sm:$0xff]
    %v92 = vld [vmem:[%s4 + $0x40] sm:$0xff]
    %v93 = vld [vmem:[%s4 + $0x48] sm:$0xff]
    %v94 = vld [vmem:[%s4 + $0x50] sm:$0xff]
    %v95 = vld [vmem:[%s4 + $0x58] sm:$0xff]
    %v96 = vld [vmem:[%s4 + $0x60] sm:$0xff]
    %v97 = vld [vmem:[%s4 + $0x68] sm:$0xff]
    %v98 = vld [vmem:[%s4 + $0x70] sm:$0xff]
    %v99 = vld [vmem:[%s4 + $0x78] sm:$0xff]
    %v100 = vld [vmem:[%s4 + $0x80] sm:$0xff]
    %v101 = vld [vmem:[%s4 + $0x88] sm:$0xff]
    %v102 = vld [vmem:[%s4 + $0x90] sm:$0xff]
    %v103 = vld [vmem:[%s4 + $0x98] sm:$0xff]
    %v104 = vld [vmem:[%s4 + $0xa0] sm:$0xff]
    %v105 = vld [vmem:[%s4 + $0xa8] sm:$0xff]
    %v106 = vld [vmem:[%s4 + $0xb0] sm:$0xff]
    %v107 = vld [vmem:[%s4 + $0xb8] sm:$0xff]
    %v108 = vld [vmem:[%s4 + $0xc0] sm:$0xf]
    %v109 = vld [vmem:[%s0] sm:$0xff]
    %v110 = vld [vmem:[%s0 + $0x8] sm:$0xff]
    %v111 = vld [vmem:[%s0 + $0x10] sm:$0xff]
    %v112 = vld [vmem:[%s0 + $0x18] sm:$0xff]
    %v113 = vld [vmem:[%s0 + $0x20] sm:$0xff]
    %v114 = vld [vmem:[%s0 + $0x28] sm:$0xff]
    %v115 = vld [vmem:[%s0 + $0x30] sm:$0xff]
    %v116 = vld [vmem:[%s0 + $0x38] sm:$0xff]
    %v117 = vld [vmem:[%s0 + $0x40] sm:$0xff]
    %v118 = vld [vmem:[%s0 + $0x48] sm:$0xff]
    %v119 = vld [vmem:[%s0 + $0x50] sm:$0xff]
    %v120 = vld [vmem:[%s0 + $0x58] sm:$0xff]
    %v121 = vld [vmem:[%s0 + $0x60] sm:$0xff]
    %v122 = vld [vmem:[%s0 + $0x68] sm:$0xff]
    %v123 = vld [vmem:[%s0 + $0x70] sm:$0xff]
    %v124 = vld [vmem:[%s0 + $0x78] sm:$0xff]
    %v125 = vld [vmem:[%s0 + $0x80] sm:$0xff]
    %v126 = vld [vmem:[%s0 + $0x88] sm:$0xff]
    %v127 = vld [vmem:[%s0 + $0x90] sm:$0xff]
    %v128 = vld [vmem:[%s0 + $0x98] sm:$0xff]
    %v129 = vld [vmem:[%s0 + $0xa0] sm:$0xff]
    %v130 = vld [vmem:[%s0 + $0xa8] sm:$0xff]
    %v131 = vld [vmem:[%s0 + $0xb0] sm:$0xff]
    %v132 = vld [vmem:[%s0 + $0xb8] sm:$0xff]
    %v133 = vld [vmem:[%s0 + $0xc0] sm:$0xff]
    %v134 = vld [vmem:[%s0 + $0xc8] sm:$0xff]
    %v135 = vld [vmem:[%s0 + $0xd0] sm:$0xff]
    %v136 = vld [vmem:[%s0 + $0xd8] sm:$0xff]
    %v137 = vld [vmem:[%s0 + $0xe0] sm:$0xff]
    %v138 = vld [vmem:[%s0 + $0xe8] sm:$0xff]
    %v139 = vld [vmem:[%s0 + $0xf0] sm:$0xff]
    %v140 = vld [vmem:[%s0 + $0xf8] sm:$0xff]
    %v141 = vld [vmem:[%s0 + $0x100] sm:$0xff]
    %v142 = vld [vmem:[%s0 + $0x108] sm:$0xff]
    %v143 = vld [vmem:[%s0 + $0x110] sm:$0xff]
    %v144 = vld [vmem:[%s0 + $0x118] sm:$0xff]
    %v145 = vld [vmem:[%s0 + $0x120] sm:$0xff]
    %v146 = vld [vmem:[%s0 + $0x128] sm:$0xff]
    %v147 = vld [vmem:[%s0 + $0x130] sm:$0xff]
    %v148 = vld [vmem:[%s0 + $0x138] sm:$0xff]
    %v149 = vld [vmem:[%s0 + $0x140] sm:$0xff]
    %v150 = vld [vmem:[%s0 + $0x148] sm:$0xff]
    %v151 = vld [vmem:[%s0 + $0x150] sm:$0xff]
    %v152 = vld [vmem:[%s0 + $0x158] sm:$0xff]
    %v153 = vld [vmem:[%s0 + $0x160] sm:$0xff]
    %v154 = vld [vmem:[%s0 + $0x168] sm:$0xff]
    %v155 = vld [vmem:[%s0 + $0x170] sm:$0xff]
    %v156 = vld [vmem:[%s0 + $0x178] sm:$0xff]
    %v157 = vld [vmem:[%s0 + $0x180] sm:$0xff]
    %v158 = vld [vmem:[%s0 + $0x188] sm:$0xff]
    %v159 = vld [vmem:[%s0 + $0x190] sm:$0xff]
    %v160 = vld [vmem:[%s0 + $0x198] sm:$0xff]
    %v161 = vld [vmem:[%s0 + $0x1a0] sm:$0xff]
    %v162 = vld [vmem:[%s0 + $0x1a8] sm:$0xff]
    %v163 = vld [vmem:[%s0 + $0x1b0] sm:$0xff]
    %v164 = vld [vmem:[%s0 + $0x1b8] sm:$0xff]
    %v165 = vld [vmem:[%s0 + $0x1c0] sm:$0xff]
    %v166 = vld [vmem:[%s0 + $0x1c8] sm:$0xff]
    %v167 = vld [vmem:[%s0 + $0x1d0] sm:$0xff]
    %v168 = vld [vmem:[%s0 + $0x1d8] sm:$0xff]
    %v169 = vld [vmem:[%s0 + $0x1e0] sm:$0xff]
    %v170 = vld [vmem:[%s0 + $0x1e8] sm:$0xff]
    %v171 = vld [vmem:[%s0 + $0x1f0] sm:$0xff]
    %v172 = vld [vmem:[%s0 + $0x1f8] sm:$0xff]
    %v173 = vld [vmem:[%s0 + $0x200] sm:$0xff]
    %v174 = vld [vmem:[%s0 + $0x208] sm:$0xff]
    %v175 = vld [vmem:[%s0 + $0x210] sm:$0xff]
    %v176 = vld [vmem:[%s0 + $0x218] sm:$0xff]
    %v177 = vld [vmem:[%s0 + $0x220] sm:$0xff]
    %v178 = vld [vmem:[%s0 + $0x228] sm:$0xff]
    %v179 = vld [vmem:[%s0 + $0x230] sm:$0xff]
    %v180 = vld [vmem:[%s0 + $0x238] sm:$0xff]
    %v181 = vld [vmem:[%s0 + $0x240] sm:$0xff]
    %v182 = vld [vmem:[%s0 + $0x248] sm:$0xff]
    %v183 = vld [vmem:[%s0 + $0x250] sm:$0xff]
    %v184 = vld [vmem:[%s0 + $0x258] sm:$0xff]
    %v185 = vld [vmem:[%s0 + $0x260] sm:$0xff]
    %v186 = vld [vmem:[%s0 + $0x268] sm:$0xff]
    %v187 = vld [vmem:[%s0 + $0x270] sm:$0xff]
    %v188 = vld [vmem:[%s0 + $0x278] sm:$0xff]
    %v189 = vld [vmem:[%s0 + $0x280] sm:$0xff]
    %v190 = vld [vmem:[%s0 + $0x288] sm:$0xff]
    %v191 = vld [vmem:[%s0 + $0x290] sm:$0xff]
    %v192 = vld [vmem:[%s0 + $0x298] sm:$0xff]
    %v193 = vld [vmem:[%s0 + $0x2a0] sm:$0xff]
    %v194 = vld [vmem:[%s0 + $0x2a8] sm:$0xff]
    %v195 = vld [vmem:[%s0 + $0x2b0] sm:$0xff]
    %v196 = vld [vmem:[%s0 + $0x2b8] sm:$0xff]
    %v197 = vld [vmem:[%s0 + $0x2c0] sm:$0xff]
    %v198 = vld [vmem:[%s0 + $0x2c8] sm:$0xff]
    %v199 = vld [vmem:[%s0 + $0x2d0] sm:$0xff]
    %v200 = vld [vmem:[%s0 + $0x2d8] sm:$0xff]
    %v201 = vld [vmem:[%s0 + $0x2e0] sm:$0xff]
    %v202 = vld [vmem:[%s0 + $0x2e8] sm:$0xff]
    %v203 = vld [vmem:[%s0 + $0x2f0] sm:$0xff]
    %v204 = vld [vmem:[%s0 + $0x2f8] sm:$0xff]
    %v205 = vld [vmem:[%s0 + $0x300] sm:$0x33]
    %v206 = vld [vmem:[%s0 + $0x308] sm:$0x33]
    %v207 = vld [vmem:[%s0 + $0x310] sm:$0x33]
    %v208 = vld [vmem:[%s0 + $0x318] sm:$0x33]
    %v209 = vld [vmem:[#allocation2] sm:$0xf]
    %v210 = vld [vmem:[#allocation2 + $0x4] sm:$0xf]
    %v211 = vld [vmem:[#allocation2 + $0x8] sm:$0xf]
    %v212 = vld [vmem:[#allocation2 + $0xc] sm:$0xf]
    %v213 = vld [vmem:[#allocation2 + $0x10] sm:$0xf]
    %v214 = vld [vmem:[#allocation2 + $0x14] sm:$0xf]
    %v215 = vld [vmem:[#allocation2 + $0x18] sm:$0xf]
    %v216 = vld [vmem:[#allocation2 + $0x1c] sm:$0xf]
    %v217 = vld [vmem:[#allocation2 + $0x20] sm:$0xf]
    %v218 = vld [vmem:[#allocation2 + $0x24] sm:$0xf]
    %v219 = vld [vmem:[#allocation2 + $0x28] sm:$0xf]
    %v220 = vld [vmem:[#allocation2 + $0x2c] sm:$0xf]
    %v221 = vld [vmem:[#allocation2 + $0x30] sm:$0xf]
    %v222 = vld [vmem:[#allocation2 + $0x34] sm:$0xf]
    %v223 = vld [vmem:[#allocation2 + $0x38] sm:$0xf]
    %v224 = vld [vmem:[#allocation2 + $0x3c] sm:$0xf]
    %v225 = vld [vmem:[#allocation2 + $0x40] sm:$0xf]
    %v226 = vld [vmem:[#allocation2 + $0x44] sm:$0xf]
    %v227 = vld [vmem:[#allocation2 + $0x48] sm:$0xf]
    %v228 = vld [vmem:[#allocation2 + $0x4c] sm:$0xf]
    %v229 = vld [vmem:[#allocation2 + $0x50] sm:$0xf]
    %v230 = vld [vmem:[#allocation2 + $0x54] sm:$0xf]
    %v231 = vld [vmem:[#allocation2 + $0x58] sm:$0xf]
    %v232 = vld [vmem:[#allocation2 + $0x5c] sm:$0xf]
    %v233 = vld [vmem:[#allocation2 + $0x60] sm:$0xf]
    %v234 = vld [vmem:[#allocation2 + $0x64] sm:$0xf]
    %v235 = vld [vmem:[#allocation2 + $0x68] sm:$0xf]
    %v236 = vld [vmem:[#allocation2 + $0x6c] sm:$0xf]
    %v237 = vld [vmem:[#allocation2 + $0x70] sm:$0xf]
    %v238 = vld [vmem:[#allocation2 + $0x74] sm:$0xf]
    %v239 = vld [vmem:[#allocation2 + $0x78] sm:$0xf]
    %v240 = vld [vmem:[#allocation2 + $0x7c] sm:$0xf]
    %v241 = vld [vmem:[#allocation2 + $0x80] sm:$0xf]
    %v242 = vld [vmem:[#allocation2 + $0x84] sm:$0xf]
    %v243 = vld [vmem:[#allocation2 + $0x88] sm:$0xf]
    %v244 = vld [vmem:[#allocation2 + $0x8c] sm:$0xf]
    %v245 = vld [vmem:[#allocation2 + $0x90] sm:$0xf]
    %v246 = vld [vmem:[#allocation2 + $0x94] sm:$0xf]
    %v247 = vld [vmem:[#allocation2 + $0x98] sm:$0xf]
    %v248 = vld [vmem:[#allocation2 + $0x9c] sm:$0xf]
    %v249 = vld [vmem:[#allocation2 + $0xa0] sm:$0xf]
    %v250 = vld [vmem:[#allocation2 + $0xa4] sm:$0xf]
    %v251 = vld [vmem:[#allocation2 + $0xa8] sm:$0xf]
    %v252 = vld [vmem:[#allocation2 + $0xac] sm:$0xf]
    %v253 = vld [vmem:[#allocation2 + $0xb0] sm:$0xf]
    %v254 = vld [vmem:[#allocation2 + $0xb4] sm:$0xf]
    %v255 = vld [vmem:[#allocation2 + $0xb8] sm:$0xf]
    %v256 = vld [vmem:[#allocation2 + $0xbc] sm:$0xf]
    %v257 = vld [vmem:[#allocation2 + $0xc0] sm:$0xf]
    %v258 = vld [vmem:[#allocation2 + $0xc4] sm:$0xf]
    %v259 = vld [vmem:[#allocation2 + $0xc8] sm:$0xf]
    %v260 = vld [vmem:[#allocation2 + $0xcc] sm:$0xf]
    %v261 = vld [vmem:[#allocation2 + $0xd0] sm:$0xf]
    %v262 = vld [vmem:[#allocation2 + $0xd4] sm:$0xf]
    %v263 = vld [vmem:[#allocation2 + $0xd8] sm:$0xf]
    %v264 = vld [vmem:[#allocation2 + $0xdc] sm:$0xf]
    %v265 = vld [vmem:[#allocation2 + $0xe0] sm:$0xf]
    %v266 = vld [vmem:[#allocation2 + $0xe4] sm:$0xf]
    %v267 = vld [vmem:[#allocation2 + $0xe8] sm:$0xf]
    %v268 = vld [vmem:[#allocation2 + $0xec] sm:$0xf]
    %v269 = vld [vmem:[#allocation2 + $0xf0] sm:$0xf]
    %v270 = vld [vmem:[#allocation2 + $0xf4] sm:$0xf]
    %v271 = vld [vmem:[#allocation2 + $0xf8] sm:$0xf]
    %v272 = vld [vmem:[#allocation2 + $0xfc] sm:$0xf]
    %v273 = vld [vmem:[#allocation2 + $0x100] sm:$0xf]
    %v274 = vld [vmem:[#allocation2 + $0x104] sm:$0xf]
    %v275 = vld [vmem:[#allocation2 + $0x108] sm:$0xf]
    %v276 = vld [vmem:[#allocation2 + $0x10c] sm:$0xf]
    %v277 = vld [vmem:[#allocation2 + $0x110] sm:$0xf]
    %v278 = vld [vmem:[#allocation2 + $0x114] sm:$0xf]
    %v279 = vld [vmem:[#allocation2 + $0x118] sm:$0xf]
    %v280 = vld [vmem:[#allocation2 + $0x11c] sm:$0xf]
    %v281 = vld [vmem:[#allocation2 + $0x120] sm:$0xf]
    %v282 = vld [vmem:[#allocation2 + $0x124] sm:$0xf]
    %v283 = vld [vmem:[#allocation2 + $0x128] sm:$0xf]
    %v284 = vld [vmem:[#allocation2 + $0x12c] sm:$0xf]
    %v285 = vld [vmem:[#allocation2 + $0x130] sm:$0xf]
    %v286 = vld [vmem:[#allocation2 + $0x134] sm:$0xf]
    %v287 = vld [vmem:[#allocation2 + $0x138] sm:$0xf]
    %v288 = vld [vmem:[#allocation2 + $0x13c] sm:$0xf]
    %v289 = vld [vmem:[#allocation2 + $0x140] sm:$0xf]
    %v290 = vld [vmem:[#allocation2 + $0x144] sm:$0xf]
    %v291 = vld [vmem:[#allocation2 + $0x148] sm:$0xf]
    %v292 = vld [vmem:[#allocation2 + $0x14c] sm:$0xf]
    %v293 = vld [vmem:[#allocation2 + $0x150] sm:$0xf]
    %v294 = vld [vmem:[#allocation2 + $0x154] sm:$0xf]
    %v295 = vld [vmem:[#allocation2 + $0x158] sm:$0xf]
    %v296 = vld [vmem:[#allocation2 + $0x15c] sm:$0xf]
    %v297 = vld [vmem:[#allocation2 + $0x160] sm:$0xf]
    %v298 = vld [vmem:[#allocation2 + $0x164] sm:$0xf]
    %v299 = vld [vmem:[#allocation2 + $0x168] sm:$0xf]
    %v300 = vld [vmem:[#allocation2 + $0x16c] sm:$0xf]
    %v301 = vld [vmem:[#allocation2 + $0x170] sm:$0xf]
    %v302 = vld [vmem:[#allocation2 + $0x174] sm:$0xf]
    %v303 = vld [vmem:[#allocation2 + $0x178] sm:$0xf]
    %v304 = vld [vmem:[#allocation2 + $0x17c] sm:$0xf]
    %v305 = vld [vmem:[#allocation2 + $0x180] sm:$0xf]
    %v306 = vld [vmem:[#allocation2 + $0x184] sm:$0xf]
    %v307 = vld [vmem:[#allocation2 + $0x188] sm:$0xf]
    %v308 = vld [vmem:[#allocation2 + $0x18c] sm:$0xf]
    %v309 = vld [vmem:[#allocation2 + $0x190] sm:$0xf]
    %v310 = vld [vmem:[#allocation2 + $0x194] sm:$0xf]
    %v311 = vld [vmem:[#allocation2 + $0x198] sm:$0xf]
    %v312 = vld [vmem:[#allocation2 + $0x19c] sm:$0xf]
    %v313 = vld [vmem:[#allocation2 + $0x1a0] sm:$0xf]
    %v314 = vld [vmem:[#allocation2 + $0x1a4] sm:$0xf]
    %v315 = vld [vmem:[#allocation2 + $0x1a8] sm:$0xf]
    %v316 = vld [vmem:[#allocation2 + $0x1ac] sm:$0xf]
    %v317 = vld [vmem:[#allocation2 + $0x1b0] sm:$0xf]
    %v318 = vld [vmem:[#allocation2 + $0x1b4] sm:$0xf]
    %v319 = vld [vmem:[#allocation2 + $0x1b8] sm:$0xf]
    %v320 = vld [vmem:[#allocation2 + $0x1bc] sm:$0xf]
    %v321 = vld [vmem:[#allocation2 + $0x1c0] sm:$0xf]
    %v322 = vld [vmem:[#allocation2 + $0x1c4] sm:$0xf]
    %v323 = vld [vmem:[#allocation2 + $0x1c8] sm:$0xf]
    %v324 = vld [vmem:[#allocation2 + $0x1cc] sm:$0xf]
    %v325 = vld [vmem:[#allocation2 + $0x1d0] sm:$0xf]
    %v326 = vld [vmem:[#allocation2 + $0x1d4] sm:$0xf]
    %v327 = vld [vmem:[#allocation2 + $0x1d8] sm:$0xf]
    %v328 = vld [vmem:[#allocation2 + $0x1dc] sm:$0xf]
    %v329 = vld [vmem:[#allocation2 + $0x1e0] sm:$0xf]
    %v330 = vld [vmem:[#allocation2 + $0x1e4] sm:$0xf]
    %v331 = vld [vmem:[#allocation2 + $0x1e8] sm:$0xf]
    %v332 = vld [vmem:[#allocation2 + $0x1ec] sm:$0xf]
    %v333 = vld [vmem:[#allocation2 + $0x1f0] sm:$0xf]
    %v334 = vld [vmem:[#allocation2 + $0x1f4] sm:$0xf]
    %v335 = vld [vmem:[#allocation2 + $0x1f8] sm:$0xf]
    %v336 = vld [vmem:[#allocation2 + $0x1fc] sm:$0xf]
    %v437 = vunpack.c.l.b16 %v109
    %v438 = vunpack.c.h.b16 %v109
    %v439 = vunpack.c.l.b16 %v110
    %v440 = vunpack.c.h.b16 %v110
    %v441 = vunpack.c.l.b16 %v111
    %v442 = vunpack.c.h.b16 %v111
    %v443 = vunpack.c.l.b16 %v112
    %v444 = vunpack.c.h.b16 %v112
    %v445 = vunpack.c.l.b16 %v113
    %v446 = vunpack.c.h.b16 %v113
    %v447 = vunpack.c.l.b16 %v114
    %v448 = vunpack.c.h.b16 %v114
    %v449 = vunpack.c.l.b16 %v115
    %v450 = vunpack.c.h.b16 %v115
    %v451 = vunpack.c.l.b16 %v116
    %v452 = vunpack.c.h.b16 %v116
    %v453 = vunpack.c.l.b16 %v117
    %v454 = vunpack.c.h.b16 %v117
    %v455 = vunpack.c.l.b16 %v118
    %v456 = vunpack.c.h.b16 %v118
    %v457 = vunpack.c.l.b16 %v119
    %v458 = vunpack.c.h.b16 %v119
    %v459 = vunpack.c.l.b16 %v120
    %v460 = vunpack.c.h.b16 %v120
    %v461 = vunpack.c.l.b16 %v121
    %v462 = vunpack.c.h.b16 %v121
    %v463 = vunpack.c.l.b16 %v122
    %v464 = vunpack.c.h.b16 %v122
    %v465 = vunpack.c.l.b16 %v123
    %v466 = vunpack.c.h.b16 %v123
    %v467 = vunpack.c.l.b16 %v124
    %v468 = vunpack.c.h.b16 %v124
    %v469 = vunpack.c.l.b16 %v125
    %v470 = vunpack.c.h.b16 %v125
    %v471 = vunpack.c.l.b16 %v126
    %v472 = vunpack.c.h.b16 %v126
    %v473 = vunpack.c.l.b16 %v127
    %v474 = vunpack.c.h.b16 %v127
    %v475 = vunpack.c.l.b16 %v128
    %v476 = vunpack.c.h.b16 %v128
    %v477 = vunpack.c.l.b16 %v129
    %v478 = vunpack.c.h.b16 %v129
    %v479 = vunpack.c.l.b16 %v130
    %v480 = vunpack.c.h.b16 %v130
    %v481 = vunpack.c.l.b16 %v131
    %v482 = vunpack.c.h.b16 %v131
    %v483 = vunpack.c.l.b16 %v132
    %v484 = vunpack.c.h.b16 %v132
    %v485 = vunpack.c.l.b16 %v133
    %v486 = vunpack.c.h.b16 %v133
    %v487 = vunpack.c.l.b16 %v134
    %v488 = vunpack.c.h.b16 %v134
    %v489 = vunpack.c.l.b16 %v135
    %v490 = vunpack.c.h.b16 %v135
    %v491 = vunpack.c.l.b16 %v136
    %v492 = vunpack.c.h.b16 %v136
    %v493 = vunpack.c.l.b16 %v137
    %v494 = vunpack.c.h.b16 %v137
    %v495 = vunpack.c.l.b16 %v138
    %v496 = vunpack.c.h.b16 %v138
    %v497 = vunpack.c.l.b16 %v139
    %v498 = vunpack.c.h.b16 %v139
    %v499 = vunpack.c.l.b16 %v140
    %v500 = vunpack.c.h.b16 %v140
    %v501 = vunpack.c.l.b16 %v141
    %v502 = vunpack.c.h.b16 %v141
    %v503 = vunpack.c.l.b16 %v142
    %v504 = vunpack.c.h.b16 %v142
    %v505 = vunpack.c.l.b16 %v143
    %v506 = vunpack.c.h.b16 %v143
    %v507 = vunpack.c.l.b16 %v144
    %v508 = vunpack.c.h.b16 %v144
    %v509 = vunpack.c.l.b16 %v145
    %v510 = vunpack.c.h.b16 %v145
    %v511 = vunpack.c.l.b16 %v146
    %v512 = vunpack.c.h.b16 %v146
    %v513 = vunpack.c.l.b16 %v147
    %v514 = vunpack.c.h.b16 %v147
    %v515 = vunpack.c.l.b16 %v148
    %v516 = vunpack.c.h.b16 %v148
    %v517 = vunpack.c.l.b16 %v149
    %v518 = vunpack.c.h.b16 %v149
    %v519 = vunpack.c.l.b16 %v150
    %v520 = vunpack.c.h.b16 %v150
    %v521 = vunpack.c.l.b16 %v151
    %v522 = vunpack.c.h.b16 %v151
    %v523 = vunpack.c.l.b16 %v152
    %v524 = vunpack.c.h.b16 %v152
    %v525 = vunpack.c.l.b16 %v153
    %v526 = vunpack.c.h.b16 %v153
    %v527 = vunpack.c.l.b16 %v154
    %v528 = vunpack.c.h.b16 %v154
    %v529 = vunpack.c.l.b16 %v155
    %v530 = vunpack.c.h.b16 %v155
    %v531 = vunpack.c.l.b16 %v156
    %v532 = vunpack.c.h.b16 %v156
    %v533 = vunpack.c.l.b16 %v157
    %v534 = vunpack.c.h.b16 %v157
    %v535 = vunpack.c.l.b16 %v158
    %v536 = vunpack.c.h.b16 %v158
    %v537 = vunpack.c.l.b16 %v159
    %v538 = vunpack.c.h.b16 %v159
    %v539 = vunpack.c.l.b16 %v160
    %v540 = vunpack.c.h.b16 %v160
    %v541 = vunpack.c.l.b16 %v161
    %v542 = vunpack.c.h.b16 %v161
    %v543 = vunpack.c.l.b16 %v162
    %v544 = vunpack.c.h.b16 %v162
    %v545 = vunpack.c.l.b16 %v163
    %v546 = vunpack.c.h.b16 %v163
    %v547 = vunpack.c.l.b16 %v164
    %v548 = vunpack.c.h.b16 %v164
    %v549 = vunpack.c.l.b16 %v165
    %v550 = vunpack.c.h.b16 %v165
    %v551 = vunpack.c.l.b16 %v166
    %v552 = vunpack.c.h.b16 %v166
    %v553 = vunpack.c.l.b16 %v167
    %v554 = vunpack.c.h.b16 %v167
    %v555 = vunpack.c.l.b16 %v168
    %v556 = vunpack.c.h.b16 %v168
    %v557 = vunpack.c.l.b16 %v169
    %v558 = vunpack.c.h.b16 %v169
    %v559 = vunpack.c.l.b16 %v170
    %v560 = vunpack.c.h.b16 %v170
    %v561 = vunpack.c.l.b16 %v171
    %v562 = vunpack.c.h.b16 %v171
    %v563 = vunpack.c.l.b16 %v172
    %v564 = vunpack.c.h.b16 %v172
    %v565 = vunpack.c.l.b16 %v173
    %v566 = vunpack.c.h.b16 %v173
    %v567 = vunpack.c.l.b16 %v174
    %v568 = vunpack.c.h.b16 %v174
    %v569 = vunpack.c.l.b16 %v175
    %v570 = vunpack.c.h.b16 %v175
    %v571 = vunpack.c.l.b16 %v176
    %v572 = vunpack.c.h.b16 %v176
    %v573 = vunpack.c.l.b16 %v177
    %v574 = vunpack.c.h.b16 %v177
    %v575 = vunpack.c.l.b16 %v178
    %v576 = vunpack.c.h.b16 %v178
    %v577 = vunpack.c.l.b16 %v179
    %v578 = vunpack.c.h.b16 %v179
    %v579 = vunpack.c.l.b16 %v180
    %v580 = vunpack.c.h.b16 %v180
    %v581 = vunpack.c.l.b16 %v181
    %v582 = vunpack.c.h.b16 %v181
    %v583 = vunpack.c.l.b16 %v182
    %v584 = vunpack.c.h.b16 %v182
    %v585 = vunpack.c.l.b16 %v183
    %v586 = vunpack.c.h.b16 %v183
    %v587 = vunpack.c.l.b16 %v184
    %v588 = vunpack.c.h.b16 %v184
    %v589 = vunpack.c.l.b16 %v185
    %v590 = vunpack.c.h.b16 %v185
    %v591 = vunpack.c.l.b16 %v186
    %v592 = vunpack.c.h.b16 %v186
    %v593 = vunpack.c.l.b16 %v187
    %v594 = vunpack.c.h.b16 %v187
    %v595 = vunpack.c.l.b16 %v188
    %v596 = vunpack.c.h.b16 %v188
    %v597 = vunpack.c.l.b16 %v189
    %v598 = vunpack.c.h.b16 %v189
    %v599 = vunpack.c.l.b16 %v190
    %v600 = vunpack.c.h.b16 %v190
    %v601 = vunpack.c.l.b16 %v191
    %v602 = vunpack.c.h.b16 %v191
    %v603 = vunpack.c.l.b16 %v192
    %v604 = vunpack.c.h.b16 %v192
    %v605 = vunpack.c.l.b16 %v193
    %v606 = vunpack.c.h.b16 %v193
    %v607 = vunpack.c.l.b16 %v194
    %v608 = vunpack.c.h.b16 %v194
    %v609 = vunpack.c.l.b16 %v195
    %v610 = vunpack.c.h.b16 %v195
    %v611 = vunpack.c.l.b16 %v196
    %v612 = vunpack.c.h.b16 %v196
    %v613 = vunpack.c.l.b16 %v197
    %v614 = vunpack.c.h.b16 %v197
    %v615 = vunpack.c.l.b16 %v198
    %v616 = vunpack.c.h.b16 %v198
    %v617 = vunpack.c.l.b16 %v199
    %v618 = vunpack.c.h.b16 %v199
    %v619 = vunpack.c.l.b16 %v200
    %v620 = vunpack.c.h.b16 %v200
    %v621 = vunpack.c.l.b16 %v201
    %v622 = vunpack.c.h.b16 %v201
    %v623 = vunpack.c.l.b16 %v202
    %v624 = vunpack.c.h.b16 %v202
    %v625 = vunpack.c.l.b16 %v203
    %v626 = vunpack.c.h.b16 %v203
    %v627 = vunpack.c.l.b16 %v204
    %v628 = vunpack.c.h.b16 %v204
    %v629 = vunpack.c.l.b16 %v205
    %v630 = vunpack.c.h.b16 %v205
    %v631 = vunpack.c.l.b16 %v206
    %v632 = vunpack.c.h.b16 %v206
    %v633 = vunpack.c.l.b16 %v207
    %v634 = vunpack.c.h.b16 %v207
    %v635 = vunpack.c.l.b16 %v208
    %v636 = vunpack.c.h.b16 %v208
    %v637 = vpack.c.b16 %v445, %v437
    %v638 = vpack.c.b16 %v446, %v438
    %v639 = vpack.c.b16 %v447, %v439
    %v640 = vpack.c.b16 %v448, %v440
    %v641 = vpack.c.b16 %v449, %v441
    %v642 = vpack.c.b16 %v450, %v442
    %v643 = vpack.c.b16 %v451, %v443
    %v644 = vpack.c.b16 %v452, %v444
    %v645 = vpack.c.b16 %v461, %v453
    %v646 = vpack.c.b16 %v462, %v454
    %v647 = vpack.c.b16 %v463, %v455
    %v648 = vpack.c.b16 %v464, %v456
    %v649 = vpack.c.b16 %v465, %v457
    %v650 = vpack.c.b16 %v466, %v458
    %v651 = vpack.c.b16 %v467, %v459
    %v652 = vpack.c.b16 %v468, %v460
    %v653 = vpack.c.b16 %v477, %v469
    %v654 = vpack.c.b16 %v478, %v470
    %v655 = vpack.c.b16 %v479, %v471
    %v656 = vpack.c.b16 %v480, %v472
    %v657 = vpack.c.b16 %v481, %v473
    %v658 = vpack.c.b16 %v482, %v474
    %v659 = vpack.c.b16 %v483, %v475
    %v660 = vpack.c.b16 %v484, %v476
    %v661 = vpack.c.b16 %v493, %v485
    %v662 = vpack.c.b16 %v494, %v486
    %v663 = vpack.c.b16 %v495, %v487
    %v664 = vpack.c.b16 %v496, %v488
    %v665 = vpack.c.b16 %v497, %v489
    %v666 = vpack.c.b16 %v498, %v490
    %v667 = vpack.c.b16 %v499, %v491
    %v668 = vpack.c.b16 %v500, %v492
    %v669 = vpack.c.b16 %v509, %v501
    %v670 = vpack.c.b16 %v510, %v502
    %v671 = vpack.c.b16 %v511, %v503
    %v672 = vpack.c.b16 %v512, %v504
    %v673 = vpack.c.b16 %v513, %v505
    %v674 = vpack.c.b16 %v514, %v506
    %v675 = vpack.c.b16 %v515, %v507
    %v676 = vpack.c.b16 %v516, %v508
    %v677 = vpack.c.b16 %v525, %v517
    %v678 = vpack.c.b16 %v526, %v518
    %v679 = vpack.c.b16 %v527, %v519
    %v680 = vpack.c.b16 %v528, %v520
    %v681 = vpack.c.b16 %v529, %v521
    %v682 = vpack.c.b16 %v530, %v522
    %v683 = vpack.c.b16 %v531, %v523
    %v684 = vpack.c.b16 %v532, %v524
    %v685 = vpack.c.b16 %v541, %v533
    %v686 = vpack.c.b16 %v542, %v534
    %v687 = vpack.c.b16 %v543, %v535
    %v688 = vpack.c.b16 %v544, %v536
    %v689 = vpack.c.b16 %v545, %v537
    %v690 = vpack.c.b16 %v546, %v538
    %v691 = vpack.c.b16 %v547, %v539
    %v692 = vpack.c.b16 %v548, %v540
    %v693 = vpack.c.b16 %v557, %v549
    %v694 = vpack.c.b16 %v558, %v550
    %v695 = vpack.c.b16 %v559, %v551
    %v696 = vpack.c.b16 %v560, %v552
    %v697 = vpack.c.b16 %v561, %v553
    %v698 = vpack.c.b16 %v562, %v554
    %v699 = vpack.c.b16 %v563, %v555
    %v700 = vpack.c.b16 %v564, %v556
    %v701 = vpack.c.b16 %v573, %v565
    %v702 = vpack.c.b16 %v574, %v566
    %v703 = vpack.c.b16 %v575, %v567
    %v704 = vpack.c.b16 %v576, %v568
    %v705 = vpack.c.b16 %v577, %v569
    %v706 = vpack.c.b16 %v578, %v570
    %v707 = vpack.c.b16 %v579, %v571
    %v708 = vpack.c.b16 %v580, %v572
    %v709 = vpack.c.b16 %v589, %v581
    %v710 = vpack.c.b16 %v590, %v582
    %v711 = vpack.c.b16 %v591, %v583
    %v712 = vpack.c.b16 %v592, %v584
    %v713 = vpack.c.b16 %v593, %v585
    %v714 = vpack.c.b16 %v594, %v586
    %v715 = vpack.c.b16 %v595, %v587
    %v716 = vpack.c.b16 %v596, %v588
    %v717 = vpack.c.b16 %v605, %v597
    %v718 = vpack.c.b16 %v606, %v598
    %v719 = vpack.c.b16 %v607, %v599
    %v720 = vpack.c.b16 %v608, %v600
    %v721 = vpack.c.b16 %v609, %v601
    %v722 = vpack.c.b16 %v610, %v602
    %v723 = vpack.c.b16 %v611, %v603
    %v724 = vpack.c.b16 %v612, %v604
    %v725 = vpack.c.b16 %v621, %v613
    %v726 = vpack.c.b16 %v622, %v614
    %v727 = vpack.c.b16 %v623, %v615
    %v728 = vpack.c.b16 %v624, %v616
    %v729 = vpack.c.b16 %v625, %v617
    %v730 = vpack.c.b16 %v626, %v618
    %v731 = vpack.c.b16 %v627, %v619
    %v732 = vpack.c.b16 %v628, %v620
    %v733 = vpack.c.b16 %v629, %v629
    %v734 = vpack.c.b16 %v630, %v630
    %v735 = vpack.c.b16 %v631, %v631
    %v736 = vpack.c.b16 %v632, %v632
    %v737 = vpack.c.b16 %v633, %v633
    %v738 = vpack.c.b16 %v634, %v634
    %v739 = vpack.c.b16 %v635, %v635
    %v740 = vpack.c.b16 %v636, %v636
    %v973 = vunpack.c.l.b16 %v209
    %v974 = vunpack.c.l.b16 %v210
    %v975 = vunpack.c.l.b16 %v211
    %v976 = vunpack.c.l.b16 %v212
    %v977 = vunpack.c.l.b16 %v213
    %v978 = vunpack.c.l.b16 %v214
    %v979 = vunpack.c.l.b16 %v215
    %v980 = vunpack.c.l.b16 %v216
    %v981 = vunpack.c.l.b16 %v217
    %v982 = vunpack.c.l.b16 %v218
    %v983 = vunpack.c.l.b16 %v219
    %v984 = vunpack.c.l.b16 %v220
    %v985 = vunpack.c.l.b16 %v221
    %v986 = vunpack.c.l.b16 %v222
    %v987 = vunpack.c.l.b16 %v223
    %v988 = vunpack.c.l.b16 %v224
    %v989 = vunpack.c.l.b16 %v225
    %v990 = vunpack.c.l.b16 %v226
    %v991 = vunpack.c.l.b16 %v227
    %v992 = vunpack.c.l.b16 %v228
    %v993 = vunpack.c.l.b16 %v229
    %v994 = vunpack.c.l.b16 %v230
    %v995 = vunpack.c.l.b16 %v231
    %v996 = vunpack.c.l.b16 %v232
    %v997 = vunpack.c.l.b16 %v233
    %v998 = vunpack.c.l.b16 %v234
    %v999 = vunpack.c.l.b16 %v235
    %v1000 = vunpack.c.l.b16 %v236
    %v1001 = vunpack.c.l.b16 %v237
    %v1002 = vunpack.c.l.b16 %v238
    %v1003 = vunpack.c.l.b16 %v239
    %v1004 = vunpack.c.l.b16 %v240
    %v1005 = vunpack.c.l.b16 %v241
    %v1006 = vunpack.c.l.b16 %v242
    %v1007 = vunpack.c.l.b16 %v243
    %v1008 = vunpack.c.l.b16 %v244
    %v1009 = vunpack.c.l.b16 %v245
    %v1010 = vunpack.c.l.b16 %v246
    %v1011 = vunpack.c.l.b16 %v247
    %v1012 = vunpack.c.l.b16 %v248
    %v1013 = vunpack.c.l.b16 %v249
    %v1014 = vunpack.c.l.b16 %v250
    %v1015 = vunpack.c.l.b16 %v251
    %v1016 = vunpack.c.l.b16 %v252
    %v1017 = vunpack.c.l.b16 %v253
    %v1018 = vunpack.c.l.b16 %v254
    %v1019 = vunpack.c.l.b16 %v255
    %v1020 = vunpack.c.l.b16 %v256
    %v1021 = vunpack.c.l.b16 %v257
    %v1022 = vunpack.c.l.b16 %v258
    %v1023 = vunpack.c.l.b16 %v259
    %v1024 = vunpack.c.l.b16 %v260
    %v1025 = vunpack.c.l.b16 %v261
    %v1026 = vunpack.c.l.b16 %v262
    %v1027 = vunpack.c.l.b16 %v263
    %v1028 = vunpack.c.l.b16 %v264
    %v1029 = vunpack.c.l.b16 %v265
    %v1030 = vunpack.c.l.b16 %v266
    %v1031 = vunpack.c.l.b16 %v267
    %v1032 = vunpack.c.l.b16 %v268
    %v1033 = vunpack.c.l.b16 %v269
    %v1034 = vunpack.c.l.b16 %v270
    %v1035 = vunpack.c.l.b16 %v271
    %v1036 = vunpack.c.l.b16 %v272
    %v1037 = vunpack.c.l.b16 %v273
    %v1038 = vunpack.c.l.b16 %v274
    %v1039 = vunpack.c.l.b16 %v275
    %v1040 = vunpack.c.l.b16 %v276
    %v1041 = vunpack.c.l.b16 %v277
    %v1042 = vunpack.c.l.b16 %v278
    %v1043 = vunpack.c.l.b16 %v279
    %v1044 = vunpack.c.l.b16 %v280
    %v1045 = vunpack.c.l.b16 %v281
    %v1046 = vunpack.c.l.b16 %v282
    %v1047 = vunpack.c.l.b16 %v283
    %v1048 = vunpack.c.l.b16 %v284
    %v1049 = vunpack.c.l.b16 %v285
    %v1050 = vunpack.c.l.b16 %v286
    %v1051 = vunpack.c.l.b16 %v287
    %v1052 = vunpack.c.l.b16 %v288
    %v1053 = vunpack.c.l.b16 %v289
    %v1054 = vunpack.c.l.b16 %v290
    %v1055 = vunpack.c.l.b16 %v291
    %v1056 = vunpack.c.l.b16 %v292
    %v1057 = vunpack.c.l.b16 %v293
    %v1058 = vunpack.c.l.b16 %v294
    %v1059 = vunpack.c.l.b16 %v295
    %v1060 = vunpack.c.l.b16 %v296
    %v1061 = vunpack.c.l.b16 %v297
    %v1062 = vunpack.c.l.b16 %v298
    %v1063 = vunpack.c.l.b16 %v299
    %v1064 = vunpack.c.l.b16 %v300
    %v1065 = vunpack.c.l.b16 %v301
    %v1066 = vunpack.c.l.b16 %v302
    %v1067 = vunpack.c.l.b16 %v303
    %v1068 = vunpack.c.l.b16 %v304
    %v1069 = vunpack.c.l.b16 %v305
    %v1070 = vunpack.c.l.b16 %v306
    %v1071 = vunpack.c.l.b16 %v307
    %v1072 = vunpack.c.l.b16 %v308
    %v1073 = vunpack.c.l.b16 %v309
    %v1074 = vunpack.c.l.b16 %v310
    %v1075 = vunpack.c.l.b16 %v311
    %v1076 = vunpack.c.l.b16 %v312
    %v1077 = vunpack.c.l.b16 %v313
    %v1078 = vunpack.c.l.b16 %v314
    %v1079 = vunpack.c.l.b16 %v315
    %v1080 = vunpack.c.l.b16 %v316
    %v1081 = vunpack.c.l.b16 %v317
    %v1082 = vunpack.c.l.b16 %v318
    %v1083 = vunpack.c.l.b16 %v319
    %v1084 = vunpack.c.l.b16 %v320
    %v1085 = vunpack.c.l.b16 %v321
    %v1086 = vunpack.c.l.b16 %v322
    %v1087 = vunpack.c.l.b16 %v323
    %v1088 = vunpack.c.l.b16 %v324
    %v1089 = vunpack.c.l.b16 %v325
    %v1090 = vunpack.c.l.b16 %v326
    %v1091 = vunpack.c.l.b16 %v327
    %v1092 = vunpack.c.l.b16 %v328
    %v1093 = vunpack.c.l.b16 %v329
    %v1094 = vunpack.c.l.b16 %v330
    %v1095 = vunpack.c.l.b16 %v331
    %v1096 = vunpack.c.l.b16 %v332
    %v1097 = vunpack.c.l.b16 %v333
    %v1098 = vunpack.c.l.b16 %v334
    %v1099 = vunpack.c.l.b16 %v335
    %v1100 = vunpack.c.l.b16 %v336
    %v1101 = vpack.c.b16 %v974, %v973
    %v1102 = vpack.c.b16 %v976, %v975
    %v1103 = vpack.c.b16 %v978, %v977
    %v1104 = vpack.c.b16 %v980, %v979
    %v1105 = vpack.c.b16 %v982, %v981
    %v1106 = vpack.c.b16 %v984, %v983
    %v1107 = vpack.c.b16 %v986, %v985
    %v1108 = vpack.c.b16 %v988, %v987
    %v1109 = vpack.c.b16 %v990, %v989
    %v1110 = vpack.c.b16 %v992, %v991
    %v1111 = vpack.c.b16 %v994, %v993
    %v1112 = vpack.c.b16 %v996, %v995
    %v1113 = vpack.c.b16 %v998, %v997
    %v1114 = vpack.c.b16 %v1000, %v999
    %v1115 = vpack.c.b16 %v1002, %v1001
    %v1116 = vpack.c.b16 %v1004, %v1003
    %v1117 = vpack.c.b16 %v1006, %v1005
    %v1118 = vpack.c.b16 %v1008, %v1007
    %v1119 = vpack.c.b16 %v1010, %v1009
    %v1120 = vpack.c.b16 %v1012, %v1011
    %v1121 = vpack.c.b16 %v1014, %v1013
    %v1122 = vpack.c.b16 %v1016, %v1015
    %v1123 = vpack.c.b16 %v1018, %v1017
    %v1124 = vpack.c.b16 %v1020, %v1019
    %v1125 = vpack.c.b16 %v1022, %v1021
    %v1126 = vpack.c.b16 %v1024, %v1023
    %v1127 = vpack.c.b16 %v1026, %v1025
    %v1128 = vpack.c.b16 %v1028, %v1027
    %v1129 = vpack.c.b16 %v1030, %v1029
    %v1130 = vpack.c.b16 %v1032, %v1031
    %v1131 = vpack.c.b16 %v1034, %v1033
    %v1132 = vpack.c.b16 %v1036, %v1035
    %v1133 = vpack.c.b16 %v1038, %v1037
    %v1134 = vpack.c.b16 %v1040, %v1039
    %v1135 = vpack.c.b16 %v1042, %v1041
    %v1136 = vpack.c.b16 %v1044, %v1043
    %v1137 = vpack.c.b16 %v1046, %v1045
    %v1138 = vpack.c.b16 %v1048, %v1047
    %v1139 = vpack.c.b16 %v1050, %v1049
    %v1140 = vpack.c.b16 %v1052, %v1051
    %v1141 = vpack.c.b16 %v1054, %v1053
    %v1142 = vpack.c.b16 %v1056, %v1055
    %v1143 = vpack.c.b16 %v1058, %v1057
    %v1144 = vpack.c.b16 %v1060, %v1059
    %v1145 = vpack.c.b16 %v1062, %v1061
    %v1146 = vpack.c.b16 %v1064, %v1063
    %v1147 = vpack.c.b16 %v1066, %v1065
    %v1148 = vpack.c.b16 %v1068, %v1067
    %v1149 = vpack.c.b16 %v1070, %v1069
    %v1150 = vpack.c.b16 %v1072, %v1071
    %v1151 = vpack.c.b16 %v1074, %v1073
    %v1152 = vpack.c.b16 %v1076, %v1075
    %v1153 = vpack.c.b16 %v1078, %v1077
    %v1154 = vpack.c.b16 %v1080, %v1079
    %v1155 = vpack.c.b16 %v1082, %v1081
    %v1156 = vpack.c.b16 %v1084, %v1083
    %v1157 = vpack.c.b16 %v1086, %v1085
    %v1158 = vpack.c.b16 %v1088, %v1087
    %v1159 = vpack.c.b16 %v1090, %v1089
    %v1160 = vpack.c.b16 %v1092, %v1091
    %v1161 = vpack.c.b16 %v1094, %v1093
    %v1162 = vpack.c.b16 %v1096, %v1095
    %v1163 = vpack.c.b16 %v1098, %v1097
    %v1164 = vpack.c.b16 %v1100, %v1099
    %1229 = vmatprep.subr.bf16.mxu0 0
    %1230 = vmatpush1.bf16.msra.mxu0 %v1108
    %1231 = vmatprep.subr.bf16.mxu0 0
    %1232 = vmatpush1.bf16.msra.mxu0 %v1107
    %1233 = vmatprep.subr.bf16.mxu0 0
    %1234 = vmatpush1.bf16.msra.mxu0 %v1106
    %1235 = vmatprep.subr.bf16.mxu0 0
    %1236 = vmatpush1.bf16.msra.mxu0 %v1105
    %1237 = vmatprep.subr.bf16.mxu0 0
    %1238 = vmatpush1.bf16.msra.mxu0 %v1104
    %1239 = vmatprep.subr.bf16.mxu0 0
    %1240 = vmatpush1.bf16.msra.mxu0 %v1103
    %1241 = vmatprep.subr.bf16.mxu0 0
    %1242 = vmatpush1.bf16.msra.mxu0 %v1102
    %1243 = vmatprep.subr.bf16.mxu0 0
    %1244 = vmatpush1.bf16.msra.mxu0 %v1101
    %1245 = vmatprep.subr.bf16.mxu0 0
    %1246 = vmatpush2.bf16.msra.mxu0 %v1116
    %1247 = vmatprep.subr.bf16.mxu0 0
    %1248 = vmatpush2.bf16.msra.mxu0 %v1115
    %1249 = vmatprep.subr.bf16.mxu0 0
    %1250 = vmatpush2.bf16.msra.mxu0 %v1114
    %1251 = vmatprep.subr.bf16.mxu0 0
    %1252 = vmatpush2.bf16.msra.mxu0 %v1113
    %1253 = vmatprep.subr.bf16.mxu0 0
    %1254 = vmatpush2.bf16.msra.mxu0 %v1112
    %1255 = vmatprep.subr.bf16.mxu0 0
    %1256 = vmatpush2.bf16.msra.mxu0 %v1111
    %1257 = vmatprep.subr.bf16.mxu0 0
    %1258 = vmatpush2.bf16.msra.mxu0 %v1110
    %1259 = vmatprep.subr.bf16.mxu0 0
    %1260 = vmatpush2.bf16.msra.mxu0 %v1109
    %1261 = vmatprep.mubr.bf16.mxu0 %v638
    %1262 = vmatmul.mubr.bf16.gmra.mxu0 %v637
    %v1263 = vpop.f32.mrf.mxu0
    %v1264 = vadd.f32 0.0, %v1263
    %v1265 = vpop.f32.mrf.mxu0
    %v1266 = vpop.f32.mrf.mxu0
    %v1267 = vadd.f32 0.0, %v1266
    %v1268 = vpop.f32.mrf.mxu0
    %1269 = vmatprep.mubr.bf16.mxu0 %v646
    %1270 = vmatmul.mubr.bf16.gmra.mxu0 %v645
    %v1271 = vpop.f32.mrf.mxu0
    %v1272 = vadd.f32 0.0, %v1271
    %v1273 = vpop.f32.mrf.mxu0
    %v1274 = vpop.f32.mrf.mxu0
    %v1275 = vadd.f32 0.0, %v1274
    %v1276 = vpop.f32.mrf.mxu0
    %1277 = vmatprep.mubr.bf16.mxu0 %v654
    %1278 = vmatmul.mubr.bf16.gmra.mxu0 %v653
    %v1279 = vpop.f32.mrf.mxu0
    %v1280 = vadd.f32 0.0, %v1279
    %v1281 = vpop.f32.mrf.mxu0
    %v1282 = vpop.f32.mrf.mxu0
    %v1283 = vadd.f32 0.0, %v1282
    %v1284 = vpop.f32.mrf.mxu0
    %1285 = vmatprep.mubr.bf16.mxu0 %v662
    %1286 = vmatmul.mubr.bf16.gmra.mxu0 %v661
    %v1287 = vpop.f32.mrf.mxu0
    %v1288 = vadd.f32 0.0, %v1287
    %v1289 = vpop.f32.mrf.mxu0
    %v1290 = vpop.f32.mrf.mxu0
    %v1291 = vadd.f32 0.0, %v1290
    %v1292 = vpop.f32.mrf.mxu0
    %1293 = vmatprep.mubr.bf16.mxu0 %v670
    %1294 = vmatmul.mubr.bf16.gmra.mxu0 %v669
    %v1295 = vpop.f32.mrf.mxu0
    %v1296 = vadd.f32 0.0, %v1295
    %v1297 = vpop.f32.mrf.mxu0
    %v1298 = vpop.f32.mrf.mxu0
    %v1299 = vadd.f32 0.0, %v1298
    %v1300 = vpop.f32.mrf.mxu0
    %1301 = vmatprep.mubr.bf16.mxu0 %v678
    %1302 = vmatmul.mubr.bf16.gmra.mxu0 %v677
    %v1303 = vpop.f32.mrf.mxu0
    %v1304 = vadd.f32 0.0, %v1303
    %v1305 = vpop.f32.mrf.mxu0
    %v1306 = vpop.f32.mrf.mxu0
    %v1307 = vadd.f32 0.0, %v1306
    %v1308 = vpop.f32.mrf.mxu0
    %1309 = vmatprep.mubr.bf16.mxu0 %v686
    %1310 = vmatmul.mubr.bf16.gmra.mxu0 %v685
    %v1311 = vpop.f32.mrf.mxu0
    %v1312 = vadd.f32 0.0, %v1311
    %v1313 = vpop.f32.mrf.mxu0
    %v1314 = vpop.f32.mrf.mxu0
    %v1315 = vadd.f32 0.0, %v1314
    %v1316 = vpop.f32.mrf.mxu0
    %1317 = vmatprep.mubr.bf16.mxu0 %v694
    %1318 = vmatmul.mubr.bf16.gmra.mxu0 %v693
    %v1319 = vpop.f32.mrf.mxu0
    %v1320 = vadd.f32 0.0, %v1319
    %v1321 = vpop.f32.mrf.mxu0
    %v1322 = vpop.f32.mrf.mxu0
    %v1323 = vadd.f32 0.0, %v1322
    %v1324 = vpop.f32.mrf.mxu0
    %1325 = vmatprep.mubr.bf16.mxu0 %v702
    %1326 = vmatmul.mubr.bf16.gmra.mxu0 %v701
    %v1327 = vpop.f32.mrf.mxu0
    %v1328 = vadd.f32 0.0, %v1327
    %v1329 = vpop.f32.mrf.mxu0
    %v1330 = vpop.f32.mrf.mxu0
    %v1331 = vadd.f32 0.0, %v1330
    %v1332 = vpop.f32.mrf.mxu0
    %1333 = vmatprep.mubr.bf16.mxu0 %v710
    %1334 = vmatmul.mubr.bf16.gmra.mxu0 %v709
    %v1335 = vpop.f32.mrf.mxu0
    %v1336 = vadd.f32 0.0, %v1335
    %v1337 = vpop.f32.mrf.mxu0
    %v1338 = vpop.f32.mrf.mxu0
    %v1339 = vadd.f32 0.0, %v1338
    %v1340 = vpop.f32.mrf.mxu0
    %1341 = vmatprep.mubr.bf16.mxu0 %v718
    %1342 = vmatmul.mubr.bf16.gmra.mxu0 %v717
    %v1343 = vpop.f32.mrf.mxu0
    %v1344 = vadd.f32 0.0, %v1343
    %v1345 = vpop.f32.mrf.mxu0
    %v1346 = vpop.f32.mrf.mxu0
    %v1347 = vadd.f32 0.0, %v1346
    %v1348 = vpop.f32.mrf.mxu0
    %1349 = vmatprep.mubr.bf16.mxu0 %v726
    %1350 = vmatmul.mubr.bf16.gmra.mxu0 %v725
    %v1351 = vpop.f32.mrf.mxu0
    %v1352 = vadd.f32 0.0, %v1351
    %v1353 = vpop.f32.mrf.mxu0
    %v1354 = vpop.f32.mrf.mxu0
    %v1355 = vadd.f32 0.0, %v1354
    %v1356 = vpop.f32.mrf.mxu0
    %1357 = vmatprep.mubr.bf16.mxu0 %v734
    %1358 = vmatmul.mubr.bf16.gmra.mxu0 %v733
    %v1359 = vpop.f32.mrf.mxu0
    %v1360 = vadd.f32 0.0, %v1359
    %v1361 = vpop.f32.mrf.mxu0
    %v1362 = vpop.f32.mrf.mxu0
    %v1363 = vpop.f32.mrf.mxu0
    %1364 = vdwg.mxu0
    %1365 = vmatprep.subr.bf16.mxu0 0
    %1366 = vmatpush1.bf16.msra.mxu0 %v1124
    %1367 = vmatprep.subr.bf16.mxu0 0
    %1368 = vmatpush1.bf16.msra.mxu0 %v1123
    %1369 = vmatprep.subr.bf16.mxu0 0
    %1370 = vmatpush1.bf16.msra.mxu0 %v1122
    %1371 = vmatprep.subr.bf16.mxu0 0
    %1372 = vmatpush1.bf16.msra.mxu0 %v1121
    %1373 = vmatprep.subr.bf16.mxu0 0
    %1374 = vmatpush1.bf16.msra.mxu0 %v1120
    %1375 = vmatprep.subr.bf16.mxu0 0
    %1376 = vmatpush1.bf16.msra.mxu0 %v1119
    %1377 = vmatprep.subr.bf16.mxu0 0
    %1378 = vmatpush1.bf16.msra.mxu0 %v1118
    %1379 = vmatprep.subr.bf16.mxu0 0
    %1380 = vmatpush1.bf16.msra.mxu0 %v1117
    %1381 = vmatprep.subr.bf16.mxu0 0
    %1382 = vmatpush2.bf16.msra.mxu0 %v1132
    %1383 = vmatprep.subr.bf16.mxu0 0
    %1384 = vmatpush2.bf16.msra.mxu0 %v1131
    %1385 = vmatprep.subr.bf16.mxu0 0
    %1386 = vmatpush2.bf16.msra.mxu0 %v1130
    %1387 = vmatprep.subr.bf16.mxu0 0
    %1388 = vmatpush2.bf16.msra.mxu0 %v1129
    %1389 = vmatprep.subr.bf16.mxu0 0
    %1390 = vmatpush2.bf16.msra.mxu0 %v1128
    %1391 = vmatprep.subr.bf16.mxu0 0
    %1392 = vmatpush2.bf16.msra.mxu0 %v1127
    %1393 = vmatprep.subr.bf16.mxu0 0
    %1394 = vmatpush2.bf16.msra.mxu0 %v1126
    %1395 = vmatprep.subr.bf16.mxu0 0
    %1396 = vmatpush2.bf16.msra.mxu0 %v1125
    %1397 = vmatprep.mubr.bf16.mxu0 %v640
    %1398 = vmatmul.mubr.bf16.gmra.mxu0 %v639
    %v1399 = vpop.f32.mrf.mxu0
    %v1400 = vadd.f32 %v1264, %v1399
    %v1401 = vpop.f32.mrf.mxu0
    %v1402 = vpop.f32.mrf.mxu0
    %v1403 = vadd.f32 %v1267, %v1402
    %v1404 = vpop.f32.mrf.mxu0
    %1405 = vmatprep.mubr.bf16.mxu0 %v648
    %1406 = vmatmul.mubr.bf16.gmra.mxu0 %v647
    %v1407 = vpop.f32.mrf.mxu0
    %v1408 = vadd.f32 %v1272, %v1407
    %v1409 = vpop.f32.mrf.mxu0
    %v1410 = vpop.f32.mrf.mxu0
    %v1411 = vadd.f32 %v1275, %v1410
    %v1412 = vpop.f32.mrf.mxu0
    %1413 = vmatprep.mubr.bf16.mxu0 %v656
    %1414 = vmatmul.mubr.bf16.gmra.mxu0 %v655
    %v1415 = vpop.f32.mrf.mxu0
    %v1416 = vadd.f32 %v1280, %v1415
    %v1417 = vpop.f32.mrf.mxu0
    %v1418 = vpop.f32.mrf.mxu0
    %v1419 = vadd.f32 %v1283, %v1418
    %v1420 = vpop.f32.mrf.mxu0
    %1421 = vmatprep.mubr.bf16.mxu0 %v664
    %1422 = vmatmul.mubr.bf16.gmra.mxu0 %v663
    %v1423 = vpop.f32.mrf.mxu0
    %v1424 = vadd.f32 %v1288, %v1423
    %v1425 = vpop.f32.mrf.mxu0
    %v1426 = vpop.f32.mrf.mxu0
    %v1427 = vadd.f32 %v1291, %v1426
    %v1428 = vpop.f32.mrf.mxu0
    %1429 = vmatprep.mubr.bf16.mxu0 %v672
    %1430 = vmatmul.mubr.bf16.gmra.mxu0 %v671
    %v1431 = vpop.f32.mrf.mxu0
    %v1432 = vadd.f32 %v1296, %v1431
    %v1433 = vpop.f32.mrf.mxu0
    %v1434 = vpop.f32.mrf.mxu0
    %v1435 = vadd.f32 %v1299, %v1434
    %v1436 = vpop.f32.mrf.mxu0
    %1437 = vmatprep.mubr.bf16.mxu0 %v680
    %1438 = vmatmul.mubr.bf16.gmra.mxu0 %v679
    %v1439 = vpop.f32.mrf.mxu0
    %v1440 = vadd.f32 %v1304, %v1439
    %v1441 = vpop.f32.mrf.mxu0
    %v1442 = vpop.f32.mrf.mxu0
    %v1443 = vadd.f32 %v1307, %v1442
    %v1444 = vpop.f32.mrf.mxu0
    %1445 = vmatprep.mubr.bf16.mxu0 %v688
    %1446 = vmatmul.mubr.bf16.gmra.mxu0 %v687
    %v1447 = vpop.f32.mrf.mxu0
    %v1448 = vadd.f32 %v1312, %v1447
    %v1449 = vpop.f32.mrf.mxu0
    %v1450 = vpop.f32.mrf.mxu0
    %v1451 = vadd.f32 %v1315, %v1450
    %v1452 = vpop.f32.mrf.mxu0
    %1453 = vmatprep.mubr.bf16.mxu0 %v696
    %1454 = vmatmul.mubr.bf16.gmra.mxu0 %v695
    %v1455 = vpop.f32.mrf.mxu0
    %v1456 = vadd.f32 %v1320, %v1455
    %v1457 = vpop.f32.mrf.mxu0
    %v1458 = vpop.f32.mrf.mxu0
    %v1459 = vadd.f32 %v1323, %v1458
    %v1460 = vpop.f32.mrf.mxu0
    %1461 = vmatprep.mubr.bf16.mxu0 %v704
    %1462 = vmatmul.mubr.bf16.gmra.mxu0 %v703
    %v1463 = vpop.f32.mrf.mxu0
    %v1464 = vadd.f32 %v1328, %v1463
    %v1465 = vpop.f32.mrf.mxu0
    %v1466 = vpop.f32.mrf.mxu0
    %v1467 = vadd.f32 %v1331, %v1466
    %v1468 = vpop.f32.mrf.mxu0
    %1469 = vmatprep.mubr.bf16.mxu0 %v712
    %1470 = vmatmul.mubr.bf16.gmra.mxu0 %v711
    %v1471 = vpop.f32.mrf.mxu0
    %v1472 = vadd.f32 %v1336, %v1471
    %v1473 = vpop.f32.mrf.mxu0
    %v1474 = vpop.f32.mrf.mxu0
    %v1475 = vadd.f32 %v1339, %v1474
    %v1476 = vpop.f32.mrf.mxu0
    %1477 = vmatprep.mubr.bf16.mxu0 %v720
    %1478 = vmatmul.mubr.bf16.gmra.mxu0 %v719
    %v1479 = vpop.f32.mrf.mxu0
    %v1480 = vadd.f32 %v1344, %v1479
    %v1481 = vpop.f32.mrf.mxu0
    %v1482 = vpop.f32.mrf.mxu0
    %v1483 = vadd.f32 %v1347, %v1482
    %v1484 = vpop.f32.mrf.mxu0
    %1485 = vmatprep.mubr.bf16.mxu0 %v728
    %1486 = vmatmul.mubr.bf16.gmra.mxu0 %v727
    %v1487 = vpop.f32.mrf.mxu0
    %v1488 = vadd.f32 %v1352, %v1487
    %v1489 = vpop.f32.mrf.mxu0
    %v1490 = vpop.f32.mrf.mxu0
    %v1491 = vadd.f32 %v1355, %v1490
    %v1492 = vpop.f32.mrf.mxu0
    %1493 = vmatprep.mubr.bf16.mxu0 %v736
    %1494 = vmatmul.mubr.bf16.gmra.mxu0 %v735
    %v1495 = vpop.f32.mrf.mxu0
    %v1496 = vadd.f32 %v1360, %v1495
    %v1497 = vpop.f32.mrf.mxu0
    %v1498 = vpop.f32.mrf.mxu0
    %v1499 = vpop.f32.mrf.mxu0
    %1500 = vdwg.mxu0
    %1501 = vmatprep.subr.bf16.mxu0 0
    %1502 = vmatpush1.bf16.msra.mxu0 %v1140
    %1503 = vmatprep.subr.bf16.mxu0 0
    %1504 = vmatpush1.bf16.msra.mxu0 %v1139
    %1505 = vmatprep.subr.bf16.mxu0 0
    %1506 = vmatpush1.bf16.msra.mxu0 %v1138
    %1507 = vmatprep.subr.bf16.mxu0 0
    %1508 = vmatpush1.bf16.msra.mxu0 %v1137
    %1509 = vmatprep.subr.bf16.mxu0 0
    %1510 = vmatpush1.bf16.msra.mxu0 %v1136
    %1511 = vmatprep.subr.bf16.mxu0 0
    %1512 = vmatpush1.bf16.msra.mxu0 %v1135
    %1513 = vmatprep.subr.bf16.mxu0 0
    %1514 = vmatpush1.bf16.msra.mxu0 %v1134
    %1515 = vmatprep.subr.bf16.mxu0 0
    %1516 = vmatpush1.bf16.msra.mxu0 %v1133
    %1517 = vmatprep.subr.bf16.mxu0 0
    %1518 = vmatpush2.bf16.msra.mxu0 %v1148
    %1519 = vmatprep.subr.bf16.mxu0 0
    %1520 = vmatpush2.bf16.msra.mxu0 %v1147
    %1521 = vmatprep.subr.bf16.mxu0 0
    %1522 = vmatpush2.bf16.msra.mxu0 %v1146
    %1523 = vmatprep.subr.bf16.mxu0 0
    %1524 = vmatpush2.bf16.msra.mxu0 %v1145
    %1525 = vmatprep.subr.bf16.mxu0 0
    %1526 = vmatpush2.bf16.msra.mxu0 %v1144
    %1527 = vmatprep.subr.bf16.mxu0 0
    %1528 = vmatpush2.bf16.msra.mxu0 %v1143
    %1529 = vmatprep.subr.bf16.mxu0 0
    %1530 = vmatpush2.bf16.msra.mxu0 %v1142
    %1531 = vmatprep.subr.bf16.mxu0 0
    %1532 = vmatpush2.bf16.msra.mxu0 %v1141
    %1533 = vmatprep.mubr.bf16.mxu0 %v642
    %1534 = vmatmul.mubr.bf16.gmra.mxu0 %v641
    %v1535 = vpop.f32.mrf.mxu0
    %v1536 = vadd.f32 %v1400, %v1535
    %v1537 = vpop.f32.mrf.mxu0
    %v1538 = vpop.f32.mrf.mxu0
    %v1539 = vadd.f32 %v1403, %v1538
    %v1540 = vpop.f32.mrf.mxu0
    %1541 = vmatprep.mubr.bf16.mxu0 %v650
    %1542 = vmatmul.mubr.bf16.gmra.mxu0 %v649
    %v1543 = vpop.f32.mrf.mxu0
    %v1544 = vadd.f32 %v1408, %v1543
    %v1545 = vpop.f32.mrf.mxu0
    %v1546 = vpop.f32.mrf.mxu0
    %v1547 = vadd.f32 %v1411, %v1546
    %v1548 = vpop.f32.mrf.mxu0
    %1549 = vmatprep.mubr.bf16.mxu0 %v658
    %1550 = vmatmul.mubr.bf16.gmra.mxu0 %v657
    %v1551 = vpop.f32.mrf.mxu0
    %v1552 = vadd.f32 %v1416, %v1551
    %v1553 = vpop.f32.mrf.mxu0
    %v1554 = vpop.f32.mrf.mxu0
    %v1555 = vadd.f32 %v1419, %v1554
    %v1556 = vpop.f32.mrf.mxu0
    %1557 = vmatprep.mubr.bf16.mxu0 %v666
    %1558 = vmatmul.mubr.bf16.gmra.mxu0 %v665
    %v1559 = vpop.f32.mrf.mxu0
    %v1560 = vadd.f32 %v1424, %v1559
    %v1561 = vpop.f32.mrf.mxu0
    %v1562 = vpop.f32.mrf.mxu0
    %v1563 = vadd.f32 %v1427, %v1562
    %v1564 = vpop.f32.mrf.mxu0
    %1565 = vmatprep.mubr.bf16.mxu0 %v674
    %1566 = vmatmul.mubr.bf16.gmra.mxu0 %v673
    %v1567 = vpop.f32.mrf.mxu0
    %v1568 = vadd.f32 %v1432, %v1567
    %v1569 = vpop.f32.mrf.mxu0
    %v1570 = vpop.f32.mrf.mxu0
    %v1571 = vadd.f32 %v1435, %v1570
    %v1572 = vpop.f32.mrf.mxu0
    %1573 = vmatprep.mubr.bf16.mxu0 %v682
    %1574 = vmatmul.mubr.bf16.gmra.mxu0 %v681
    %v1575 = vpop.f32.mrf.mxu0
    %v1576 = vadd.f32 %v1440, %v1575
    %v1577 = vpop.f32.mrf.mxu0
    %v1578 = vpop.f32.mrf.mxu0
    %v1579 = vadd.f32 %v1443, %v1578
    %v1580 = vpop.f32.mrf.mxu0
    %1581 = vmatprep.mubr.bf16.mxu0 %v690
    %1582 = vmatmul.mubr.bf16.gmra.mxu0 %v689
    %v1583 = vpop.f32.mrf.mxu0
    %v1584 = vadd.f32 %v1448, %v1583
    %v1585 = vpop.f32.mrf.mxu0
    %v1586 = vpop.f32.mrf.mxu0
    %v1587 = vadd.f32 %v1451, %v1586
    %v1588 = vpop.f32.mrf.mxu0
    %1589 = vmatprep.mubr.bf16.mxu0 %v698
    %1590 = vmatmul.mubr.bf16.gmra.mxu0 %v697
    %v1591 = vpop.f32.mrf.mxu0
    %v1592 = vadd.f32 %v1456, %v1591
    %v1593 = vpop.f32.mrf.mxu0
    %v1594 = vpop.f32.mrf.mxu0
    %v1595 = vadd.f32 %v1459, %v1594
    %v1596 = vpop.f32.mrf.mxu0
    %1597 = vmatprep.mubr.bf16.mxu0 %v706
    %1598 = vmatmul.mubr.bf16.gmra.mxu0 %v705
    %v1599 = vpop.f32.mrf.mxu0
    %v1600 = vadd.f32 %v1464, %v1599
    %v1601 = vpop.f32.mrf.mxu0
    %v1602 = vpop.f32.mrf.mxu0
    %v1603 = vadd.f32 %v1467, %v1602
    %v1604 = vpop.f32.mrf.mxu0
    %1605 = vmatprep.mubr.bf16.mxu0 %v714
    %1606 = vmatmul.mubr.bf16.gmra.mxu0 %v713
    %v1607 = vpop.f32.mrf.mxu0
    %v1608 = vadd.f32 %v1472, %v1607
    %v1609 = vpop.f32.mrf.mxu0
    %v1610 = vpop.f32.mrf.mxu0
    %v1611 = vadd.f32 %v1475, %v1610
    %v1612 = vpop.f32.mrf.mxu0
    %1613 = vmatprep.mubr.bf16.mxu0 %v722
    %1614 = vmatmul.mubr.bf16.gmra.mxu0 %v721
    %v1615 = vpop.f32.mrf.mxu0
    %v1616 = vadd.f32 %v1480, %v1615
    %v1617 = vpop.f32.mrf.mxu0
    %v1618 = vpop.f32.mrf.mxu0
    %v1619 = vadd.f32 %v1483, %v1618
    %v1620 = vpop.f32.mrf.mxu0
    %1621 = vmatprep.mubr.bf16.mxu0 %v730
    %1622 = vmatmul.mubr.bf16.gmra.mxu0 %v729
    %v1623 = vpop.f32.mrf.mxu0
    %v1624 = vadd.f32 %v1488, %v1623
    %v1625 = vpop.f32.mrf.mxu0
    %v1626 = vpop.f32.mrf.mxu0
    %v1627 = vadd.f32 %v1491, %v1626
    %v1628 = vpop.f32.mrf.mxu0
    %1629 = vmatprep.mubr.bf16.mxu0 %v738
    %1630 = vmatmul.mubr.bf16.gmra.mxu0 %v737
    %v1631 = vpop.f32.mrf.mxu0
    %v1632 = vadd.f32 %v1496, %v1631
    %v1633 = vpop.f32.mrf.mxu0
    %v1634 = vpop.f32.mrf.mxu0
    %v1635 = vpop.f32.mrf.mxu0
    %1636 = vdwg.mxu0
    %1637 = vmatprep.subr.bf16.mxu0 0
    %1638 = vmatpush1.bf16.msra.mxu0 %v1156
    %1639 = vmatprep.subr.bf16.mxu0 0
    %1640 = vmatpush1.bf16.msra.mxu0 %v1155
    %1641 = vmatprep.subr.bf16.mxu0 0
    %1642 = vmatpush1.bf16.msra.mxu0 %v1154
    %1643 = vmatprep.subr.bf16.mxu0 0
    %1644 = vmatpush1.bf16.msra.mxu0 %v1153
    %1645 = vmatprep.subr.bf16.mxu0 0
    %1646 = vmatpush1.bf16.msra.mxu0 %v1152
    %1647 = vmatprep.subr.bf16.mxu0 0
    %1648 = vmatpush1.bf16.msra.mxu0 %v1151
    %1649 = vmatprep.subr.bf16.mxu0 0
    %1650 = vmatpush1.bf16.msra.mxu0 %v1150
    %1651 = vmatprep.subr.bf16.mxu0 0
    %1652 = vmatpush1.bf16.msra.mxu0 %v1149
    %1653 = vmatprep.subr.bf16.mxu0 0
    %1654 = vmatpush2.bf16.msra.mxu0 %v1164
    %1655 = vmatprep.subr.bf16.mxu0 0
    %1656 = vmatpush2.bf16.msra.mxu0 %v1163
    %1657 = vmatprep.subr.bf16.mxu0 0
    %1658 = vmatpush2.bf16.msra.mxu0 %v1162
    %1659 = vmatprep.subr.bf16.mxu0 0
    %1660 = vmatpush2.bf16.msra.mxu0 %v1161
    %1661 = vmatprep.subr.bf16.mxu0 0
    %1662 = vmatpush2.bf16.msra.mxu0 %v1160
    %1663 = vmatprep.subr.bf16.mxu0 0
    %1664 = vmatpush2.bf16.msra.mxu0 %v1159
    %1665 = vmatprep.subr.bf16.mxu0 0
    %1666 = vmatpush2.bf16.msra.mxu0 %v1158
    %1667 = vmatprep.subr.bf16.mxu0 0
    %1668 = vmatpush2.bf16.msra.mxu0 %v1157
    %1669 = vmatprep.mubr.bf16.mxu0 %v644
    %1670 = vmatmul.mubr.bf16.gmra.mxu0 %v643
    %v1671 = vpop.f32.mrf.mxu0
    %v1672 = vadd.f32 %v1536, %v1671
    %v1673 = vpop.f32.mrf.mxu0
    %v1674 = vpop.f32.mrf.mxu0
    %v1675 = vadd.f32 %v1539, %v1674
    %v1676 = vpop.f32.mrf.mxu0
    %1677 = vmatprep.mubr.bf16.mxu0 %v652
    %1678 = vmatmul.mubr.bf16.gmra.mxu0 %v651
    %v1679 = vpop.f32.mrf.mxu0
    %v1680 = vadd.f32 %v1544, %v1679
    %v1681 = vpop.f32.mrf.mxu0
    %v1682 = vpop.f32.mrf.mxu0
    %v1683 = vadd.f32 %v1547, %v1682
    %v1684 = vpop.f32.mrf.mxu0
    %1685 = vmatprep.mubr.bf16.mxu0 %v660
    %1686 = vmatmul.mubr.bf16.gmra.mxu0 %v659
    %v1687 = vpop.f32.mrf.mxu0
    %v1688 = vadd.f32 %v1552, %v1687
    %v1689 = vpop.f32.mrf.mxu0
    %v1690 = vpop.f32.mrf.mxu0
    %v1691 = vadd.f32 %v1555, %v1690
    %v1692 = vpop.f32.mrf.mxu0
    %1693 = vmatprep.mubr.bf16.mxu0 %v668
    %1694 = vmatmul.mubr.bf16.gmra.mxu0 %v667
    %v1695 = vpop.f32.mrf.mxu0
    %v1696 = vadd.f32 %v1560, %v1695
    %v1697 = vpop.f32.mrf.mxu0
    %v1698 = vpop.f32.mrf.mxu0
    %v1699 = vadd.f32 %v1563, %v1698
    %v1700 = vpop.f32.mrf.mxu0
    %1701 = vmatprep.mubr.bf16.mxu0 %v676
    %1702 = vmatmul.mubr.bf16.gmra.mxu0 %v675
    %v1703 = vpop.f32.mrf.mxu0
    %v1704 = vadd.f32 %v1568, %v1703
    %v1705 = vpop.f32.mrf.mxu0
    %v1706 = vpop.f32.mrf.mxu0
    %v1707 = vadd.f32 %v1571, %v1706
    %v1708 = vpop.f32.mrf.mxu0
    %1709 = vmatprep.mubr.bf16.mxu0 %v684
    %1710 = vmatmul.mubr.bf16.gmra.mxu0 %v683
    %v1711 = vpop.f32.mrf.mxu0
    %v1712 = vadd.f32 %v1576, %v1711
    %v1713 = vpop.f32.mrf.mxu0
    %v1714 = vpop.f32.mrf.mxu0
    %v1715 = vadd.f32 %v1579, %v1714
    %v1716 = vpop.f32.mrf.mxu0
    %1717 = vmatprep.mubr.bf16.mxu0 %v692
    %1718 = vmatmul.mubr.bf16.gmra.mxu0 %v691
    %v1719 = vpop.f32.mrf.mxu0
    %v1720 = vadd.f32 %v1584, %v1719
    %v1721 = vpop.f32.mrf.mxu0
    %v1722 = vpop.f32.mrf.mxu0
    %v1723 = vadd.f32 %v1587, %v1722
    %v1724 = vpop.f32.mrf.mxu0
    %1725 = vmatprep.mubr.bf16.mxu0 %v700
    %1726 = vmatmul.mubr.bf16.gmra.mxu0 %v699
    %v1727 = vpop.f32.mrf.mxu0
    %v1728 = vadd.f32 %v1592, %v1727
    %v1729 = vpop.f32.mrf.mxu0
    %v1730 = vpop.f32.mrf.mxu0
    %v1731 = vadd.f32 %v1595, %v1730
    %v1732 = vpop.f32.mrf.mxu0
    %1733 = vmatprep.mubr.bf16.mxu0 %v708
    %1734 = vmatmul.mubr.bf16.gmra.mxu0 %v707
    %v1735 = vpop.f32.mrf.mxu0
    %v1736 = vadd.f32 %v1600, %v1735
    %v1737 = vpop.f32.mrf.mxu0
    %v1738 = vpop.f32.mrf.mxu0
    %v1739 = vadd.f32 %v1603, %v1738
    %v1740 = vpop.f32.mrf.mxu0
    %1741 = vmatprep.mubr.bf16.mxu0 %v716
    %1742 = vmatmul.mubr.bf16.gmra.mxu0 %v715
    %v1743 = vpop.f32.mrf.mxu0
    %v1744 = vadd.f32 %v1608, %v1743
    %v1745 = vpop.f32.mrf.mxu0
    %v1746 = vpop.f32.mrf.mxu0
    %v1747 = vadd.f32 %v1611, %v1746
    %v1748 = vpop.f32.mrf.mxu0
    %1749 = vmatprep.mubr.bf16.mxu0 %v724
    %1750 = vmatmul.mubr.bf16.gmra.mxu0 %v723
    %v1751 = vpop.f32.mrf.mxu0
    %v1752 = vadd.f32 %v1616, %v1751
    %v1753 = vpop.f32.mrf.mxu0
    %v1754 = vpop.f32.mrf.mxu0
    %v1755 = vadd.f32 %v1619, %v1754
    %v1756 = vpop.f32.mrf.mxu0
    %1757 = vmatprep.mubr.bf16.mxu0 %v732
    %1758 = vmatmul.mubr.bf16.gmra.mxu0 %v731
    %v1759 = vpop.f32.mrf.mxu0
    %v1760 = vadd.f32 %v1624, %v1759
    %v1761 = vpop.f32.mrf.mxu0
    %v1762 = vpop.f32.mrf.mxu0
    %v1763 = vadd.f32 %v1627, %v1762
    %v1764 = vpop.f32.mrf.mxu0
    %1765 = vmatprep.mubr.bf16.mxu0 %v740
    %1766 = vmatmul.mubr.bf16.gmra.mxu0 %v739
    %v1767 = vpop.f32.mrf.mxu0
    %v1768 = vadd.f32 %v1632, %v1767
    %v1769 = vpop.f32.mrf.mxu0
    %v1770 = vpop.f32.mrf.mxu0
    %v1771 = vpop.f32.mrf.mxu0
    %1772 = vdwg.mxu0
    %v1773 = vadd.f32 %v84, %v1672
    %v1774 = vadd.f32 %v85, %v1675
    %v1775 = vadd.f32 %v86, %v1680
    %v1776 = vadd.f32 %v87, %v1683
    %v1777 = vadd.f32 %v88, %v1688
    %v1778 = vadd.f32 %v89, %v1691
    %v1779 = vadd.f32 %v90, %v1696
    %v1780 = vadd.f32 %v91, %v1699
    %v1781 = vadd.f32 %v92, %v1704
    %v1782 = vadd.f32 %v93, %v1707
    %v1783 = vadd.f32 %v94, %v1712
    %v1784 = vadd.f32 %v95, %v1715
    %v1785 = vadd.f32 %v96, %v1720
    %v1786 = vadd.f32 %v97, %v1723
    %v1787 = vadd.f32 %v98, %v1728
    %v1788 = vadd.f32 %v99, %v1731
    %v1789 = vadd.f32 %v100, %v1736
    %v1790 = vadd.f32 %v101, %v1739
    %v1791 = vadd.f32 %v102, %v1744
    %v1792 = vadd.f32 %v103, %v1747
    %v1793 = vadd.f32 %v104, %v1752
    %v1794 = vadd.f32 %v105, %v1755
    %v1795 = vadd.f32 %v106, %v1760
    %v1796 = vadd.f32 %v107, %v1763
    %v1797 = vadd.f32 %v108, %v1768
    %1798 = vst [vmem:[%s4] sm:$0xff] %v1773
    %1799 = vst [vmem:[%s4 + $0x8] sm:$0xff] %v1774
    %1800 = vst [vmem:[%s4 + $0x10] sm:$0xff] %v1775
    %1801 = vst [vmem:[%s4 + $0x18] sm:$0xff] %v1776
    %1802 = vst [vmem:[%s4 + $0x20] sm:$0xff] %v1777
    %1803 = vst [vmem:[%s4 + $0x28] sm:$0xff] %v1778
    %1804 = vst [vmem:[%s4 + $0x30] sm:$0xff] %v1779
    %1805 = vst [vmem:[%s4 + $0x38] sm:$0xff] %v1780
    %1806 = vst [vmem:[%s4 + $0x40] sm:$0xff] %v1781
    %1807 = vst [vmem:[%s4 + $0x48] sm:$0xff] %v1782
    %1808 = vst [vmem:[%s4 + $0x50] sm:$0xff] %v1783
    %1809 = vst [vmem:[%s4 + $0x58] sm:$0xff] %v1784
    %1810 = vst [vmem:[%s4 + $0x60] sm:$0xff] %v1785
    %1811 = vst [vmem:[%s4 + $0x68] sm:$0xff] %v1786
    %1812 = vst [vmem:[%s4 + $0x70] sm:$0xff] %v1787
    %1813 = vst [vmem:[%s4 + $0x78] sm:$0xff] %v1788
    %1814 = vst [vmem:[%s4 + $0x80] sm:$0xff] %v1789
    %1815 = vst [vmem:[%s4 + $0x88] sm:$0xff] %v1790
    %1816 = vst [vmem:[%s4 + $0x90] sm:$0xff] %v1791
    %1817 = vst [vmem:[%s4 + $0x98] sm:$0xff] %v1792
    %1818 = vst [vmem:[%s4 + $0xa0] sm:$0xff] %v1793
    %1819 = vst [vmem:[%s4 + $0xa8] sm:$0xff] %v1794
    %1820 = vst [vmem:[%s4 + $0xb0] sm:$0xff] %v1795
    %1821 = vst [vmem:[%s4 + $0xb8] sm:$0xff] %v1796
    %1822 = vst [vmem:[%s4 + $0xc0] sm:$0xf] %v1797
    // Predicated region
    $region34: #{discriminator_forward.4} parent=1 // pred_check
      %p1823 = pneg %p55
    $region35: #{discriminator_forward.4} parent=1 // pred_check_branch
      %1825 = sbr.rel (%p1823) target = $region37
    $region36: #{discriminator_forward.4} parent=1 // pred_region
      %v1826 = vld [vmem:[%s4] sm:$0xff]
      %v1827 = vld [vmem:[%s4 + $0x8] sm:$0xff]
      %v1828 = vld [vmem:[%s4 + $0x10] sm:$0xff]
      %v1829 = vld [vmem:[%s4 + $0x18] sm:$0xff]
      %v1830 = vld [vmem:[%s4 + $0x20] sm:$0xff]
      %v1831 = vld [vmem:[%s4 + $0x28] sm:$0xff]
      %v1832 = vld [vmem:[%s4 + $0x30] sm:$0xff]
      %v1833 = vld [vmem:[%s4 + $0x38] sm:$0xff]
      %v1834 = vld [vmem:[%s4 + $0x40] sm:$0xff]
      %v1835 = vld [vmem:[%s4 + $0x48] sm:$0xff]
      %v1836 = vld [vmem:[%s4 + $0x50] sm:$0xff]
      %v1837 = vld [vmem:[%s4 + $0x58] sm:$0xff]
      %v1838 = vld [vmem:[%s4 + $0x60] sm:$0xff]
      %v1839 = vld [vmem:[%s4 + $0x68] sm:$0xff]
      %v1840 = vld [vmem:[%s4 + $0x70] sm:$0xff]
      %v1841 = vld [vmem:[%s4 + $0x78] sm:$0xff]
      %v1842 = vld [vmem:[%s4 + $0x80] sm:$0xff]
      %v1843 = vld [vmem:[%s4 + $0x88] sm:$0xff]
      %v1844 = vld [vmem:[%s4 + $0x90] sm:$0xff]
      %v1845 = vld [vmem:[%s4 + $0x98] sm:$0xff]
      %v1846 = vld [vmem:[%s4 + $0xa0] sm:$0xff]
      %v1847 = vld [vmem:[%s4 + $0xa8] sm:$0xff]
      %v1848 = vld [vmem:[%s4 + $0xb0] sm:$0xff]
      %v1849 = vld [vmem:[%s4 + $0xb8] sm:$0xff]
      %v1850 = vld [vmem:[%s4 + $0xc0] sm:$0xf]
      %v1851 = vadd.f32 %v1826, %v1827
      %v1852 = vadd.f32 %v1851, %v1828
      %v1853 = vadd.f32 %v1852, %v1829
      %v1854 = vadd.f32 %v1853, %v1830
      %v1855 = vadd.f32 %v1854, %v1831
      %v1856 = vadd.f32 %v1855, %v1832
      %v1857 = vadd.f32 %v1856, %v1833
      %v1858 = vadd.f32 %v1857, %v1834
      %v1859 = vadd.f32 %v1858, %v1835
      %v1860 = vadd.f32 %v1859, %v1836
      %v1861 = vadd.f32 %v1860, %v1837
      %v1862 = vadd.f32 %v1861, %v1838
      %v1863 = vadd.f32 %v1862, %v1839
      %v1864 = vadd.f32 %v1863, %v1840
      %v1865 = vadd.f32 %v1864, %v1841
      %v1866 = vadd.f32 %v1865, %v1842
      %v1867 = vadd.f32 %v1866, %v1843
      %v1868 = vadd.f32 %v1867, %v1844
      %v1869 = vadd.f32 %v1868, %v1845
      %v1870 = vadd.f32 %v1869, %v1846
      %v1871 = vadd.f32 %v1870, %v1847
      %v1872 = vadd.f32 %v1871, %v1848
      %v1873 = vadd.f32 %v1872, %v1849
      %vm1874 = vcmask 1043456
      %v1875 = vsel %vm1874, %v1850, 0.0
      %v1876 = vadd.f32 %v1873, %v1875
      %v1877 = vrot.slane %v1876, 4
      %v1878 = vadd.f32 %v1876, %v1877
      %v1879 = vrot.slane %v1878, 2
      %v1880 = vadd.f32 %v1878, %v1879
      %v1881 = vrot.slane %v1880, 1
      %v1882 = vadd.f32 %v1880, %v1881
      %v1883 = vrcp.pop 196.0
      %v1884 = vmul.f32 %v1882, %v1883
      %v1885 = vsub.f32 %v1826, %v1884
      %v1886 = vsub.f32 %v1827, %v1884
      %v1887 = vsub.f32 %v1828, %v1884
      %v1888 = vsub.f32 %v1829, %v1884
      %v1889 = vsub.f32 %v1830, %v1884
      %v1890 = vsub.f32 %v1831, %v1884
      %v1891 = vsub.f32 %v1832, %v1884
      %v1892 = vsub.f32 %v1833, %v1884
      %v1893 = vsub.f32 %v1834, %v1884
      %v1894 = vsub.f32 %v1835, %v1884
      %v1895 = vsub.f32 %v1836, %v1884
      %v1896 = vsub.f32 %v1837, %v1884
      %v1897 = vsub.f32 %v1838, %v1884
      %v1898 = vsub.f32 %v1839, %v1884
      %v1899 = vsub.f32 %v1840, %v1884
      %v1900 = vsub.f32 %v1841, %v1884
      %v1901 = vsub.f32 %v1842, %v1884
      %v1902 = vsub.f32 %v1843, %v1884
      %v1903 = vsub.f32 %v1844, %v1884
      %v1904 = vsub.f32 %v1845, %v1884
      %v1905 = vsub.f32 %v1846, %v1884
      %v1906 = vsub.f32 %v1847, %v1884
      %v1907 = vsub.f32 %v1848, %v1884
      %v1908 = vsub.f32 %v1849, %v1884
      %v1909 = vsub.f32 %v1850, %v1884
      %v1910 = vmul.f32 %v1885, %v1885
      %v1911 = vmul.f32 %v1886, %v1886
      %v1912 = vmul.f32 %v1887, %v1887
      %v1913 = vmul.f32 %v1888, %v1888
      %v1914 = vmul.f32 %v1889, %v1889
      %v1915 = vmul.f32 %v1890, %v1890
      %v1916 = vmul.f32 %v1891, %v1891
      %v1917 = vmul.f32 %v1892, %v1892
      %v1918 = vmul.f32 %v1893, %v1893
      %v1919 = vmul.f32 %v1894, %v1894
      %v1920 = vmul.f32 %v1895, %v1895
      %v1921 = vmul.f32 %v1896, %v1896
      %v1922 = vmul.f32 %v1897, %v1897
      %v1923 = vmul.f32 %v1898, %v1898
      %v1924 = vmul.f32 %v1899, %v1899
      %v1925 = vmul.f32 %v1900, %v1900
      %v1926 = vmul.f32 %v1901, %v1901
      %v1927 = vmul.f32 %v1902, %v1902
      %v1928 = vmul.f32 %v1903, %v1903
      %v1929 = vmul.f32 %v1904, %v1904
      %v1930 = vmul.f32 %v1905, %v1905
      %v1931 = vmul.f32 %v1906, %v1906
      %v1932 = vmul.f32 %v1907, %v1907
      %v1933 = vmul.f32 %v1908, %v1908
      %v1934 = vmul.f32 %v1909, %v1909
      %v1935 = vadd.f32 %v1910, %v1911
      %v1936 = vadd.f32 %v1935, %v1912
      %v1937 = vadd.f32 %v1936, %v1913
      %v1938 = vadd.f32 %v1937, %v1914
      %v1939 = vadd.f32 %v1938, %v1915
      %v1940 = vadd.f32 %v1939, %v1916
      %v1941 = vadd.f32 %v1940, %v1917
      %v1942 = vadd.f32 %v1941, %v1918
      %v1943 = vadd.f32 %v1942, %v1919
      %v1944 = vadd.f32 %v1943, %v1920
      %v1945 = vadd.f32 %v1944, %v1921
      %v1946 = vadd.f32 %v1945, %v1922
      %v1947 = vadd.f32 %v1946, %v1923
      %v1948 = vadd.f32 %v1947, %v1924
      %v1949 = vadd.f32 %v1948, %v1925
      %v1950 = vadd.f32 %v1949, %v1926
      %v1951 = vadd.f32 %v1950, %v1927
      %v1952 = vadd.f32 %v1951, %v1928
      %v1953 = vadd.f32 %v1952, %v1929
      %v1954 = vadd.f32 %v1953, %v1930
      %v1955 = vadd.f32 %v1954, %v1931
      %v1956 = vadd.f32 %v1955, %v1932
      %v1957 = vadd.f32 %v1956, %v1933
      %v1958 = vsel %vm1874, %v1934, 0.0
      %v1959 = vadd.f32 %v1957, %v1958
      %v1960 = vrot.slane %v1959, 4
      %v1961 = vadd.f32 %v1959, %v1960
      %v1962 = vrot.slane %v1961, 2
      %v1963 = vadd.f32 %v1961, %v1962
      %v1964 = vrot.slane %v1963, 1
      %v1965 = vadd.f32 %v1963, %v1964
      %v1966 = vmul.f32 %v1965, %v1883
      %v1967 = vld [vmem:[#allocation4] sm:$0x1]
      %v1969 = vlaneseq
      %v1970 = vshrl.u32 %v1969, 7
      %v1971 = vsub.s32 0, %v1970
      %v1972 = vrot.slane %v1967, %v1971
      %v1974 = vmul.f32 %v1972, %v1885
      %v1975 = vmul.f32 %v1972, %v1886
      %v1976 = vmul.f32 %v1972, %v1887
      %v1977 = vmul.f32 %v1972, %v1888
      %v1978 = vmul.f32 %v1972, %v1889
      %v1979 = vmul.f32 %v1972, %v1890
      %v1980 = vmul.f32 %v1972, %v1891
      %v1981 = vmul.f32 %v1972, %v1892
      %v1982 = vmul.f32 %v1972, %v1893
      %v1983 = vmul.f32 %v1972, %v1894
      %v1984 = vmul.f32 %v1972, %v1895
      %v1985 = vmul.f32 %v1972, %v1896
      %v1986 = vmul.f32 %v1972, %v1897
      %v1987 = vmul.f32 %v1972, %v1898
      %v1988 = vmul.f32 %v1972, %v1899
      %v1989 = vmul.f32 %v1972, %v1900
      %v1990 = vmul.f32 %v1972, %v1901
      %v1991 = vmul.f32 %v1972, %v1902
      %v1992 = vmul.f32 %v1972, %v1903
      %v1993 = vmul.f32 %v1972, %v1904
      %v1994 = vmul.f32 %v1972, %v1905
      %v1995 = vmul.f32 %v1972, %v1906
      %v1996 = vmul.f32 %v1972, %v1907
      %v1997 = vmul.f32 %v1972, %v1908
      %v1998 = vmul.f32 %v1972, %v1909
      %v1999 = vadd.f32 %v1966, 1e-05
      %v2000 = vrsqrt.pop %v1999
      %v2001 = vmul.f32 %v1974, %v2000
      %v2002 = vmul.f32 %v1975, %v2000
      %v2003 = vmul.f32 %v1976, %v2000
      %v2004 = vmul.f32 %v1977, %v2000
      %v2005 = vmul.f32 %v1978, %v2000
      %v2006 = vmul.f32 %v1979, %v2000
      %v2007 = vmul.f32 %v1980, %v2000
      %v2008 = vmul.f32 %v1981, %v2000
      %v2009 = vmul.f32 %v1982, %v2000
      %v2010 = vmul.f32 %v1983, %v2000
      %v2011 = vmul.f32 %v1984, %v2000
      %v2012 = vmul.f32 %v1985, %v2000
      %v2013 = vmul.f32 %v1986, %v2000
      %v2014 = vmul.f32 %v1987, %v2000
      %v2015 = vmul.f32 %v1988, %v2000
      %v2016 = vmul.f32 %v1989, %v2000
      %v2017 = vmul.f32 %v1990, %v2000
      %v2018 = vmul.f32 %v1991, %v2000
      %v2019 = vmul.f32 %v1992, %v2000
      %v2020 = vmul.f32 %v1993, %v2000
      %v2021 = vmul.f32 %v1994, %v2000
      %v2022 = vmul.f32 %v1995, %v2000
      %v2023 = vmul.f32 %v1996, %v2000
      %v2024 = vmul.f32 %v1997, %v2000
      %v2025 = vmul.f32 %v1998, %v2000
      %v2026 = vld [vmem:[#allocation6] sm:$0x1]
      %v2028 = vlaneseq
      %v2029 = vshrl.u32 %v2028, 7
      %v2030 = vsub.s32 0, %v2029
      %v2031 = vrot.slane %v2026, %v2030
      %v2033 = vadd.f32 %v2001, %v2031
      %v2034 = vadd.f32 %v2002, %v2031
      %v2035 = vadd.f32 %v2003, %v2031
      %v2036 = vadd.f32 %v2004, %v2031
      %v2037 = vadd.f32 %v2005, %v2031
      %v2038 = vadd.f32 %v2006, %v2031
      %v2039 = vadd.f32 %v2007, %v2031
      %v2040 = vadd.f32 %v2008, %v2031
      %v2041 = vadd.f32 %v2009, %v2031
      %v2042 = vadd.f32 %v2010, %v2031
      %v2043 = vadd.f32 %v2011, %v2031
      %v2044 = vadd.f32 %v2012, %v2031
      %v2045 = vadd.f32 %v2013, %v2031
      %v2046 = vadd.f32 %v2014, %v2031
      %v2047 = vadd.f32 %v2015, %v2031
      %v2048 = vadd.f32 %v2016, %v2031
      %v2049 = vadd.f32 %v2017, %v2031
      %v2050 = vadd.f32 %v2018, %v2031
      %v2051 = vadd.f32 %v2019, %v2031
      %v2052 = vadd.f32 %v2020, %v2031
      %v2053 = vadd.f32 %v2021, %v2031
      %v2054 = vadd.f32 %v2022, %v2031
      %v2055 = vadd.f32 %v2023, %v2031
      %v2056 = vadd.f32 %v2024, %v2031
      %v2057 = vadd.f32 %v2025, %v2031
      %vm2058 = vcmp.gt.f32.partialorder %v2033, 0.0
      %vm2059 = vcmp.gt.f32.partialorder %v2034, 0.0
      %vm2060 = vcmp.gt.f32.partialorder %v2035, 0.0
      %vm2061 = vcmp.gt.f32.partialorder %v2036, 0.0
      %vm2062 = vcmp.gt.f32.partialorder %v2037, 0.0
      %vm2063 = vcmp.gt.f32.partialorder %v2038, 0.0
      %vm2064 = vcmp.gt.f32.partialorder %v2039, 0.0
      %vm2065 = vcmp.gt.f32.partialorder %v2040, 0.0
      %vm2066 = vcmp.gt.f32.partialorder %v2041, 0.0
      %vm2067 = vcmp.gt.f32.partialorder %v2042, 0.0
      %vm2068 = vcmp.gt.f32.partialorder %v2043, 0.0
      %vm2069 = vcmp.gt.f32.partialorder %v2044, 0.0
      %vm2070 = vcmp.gt.f32.partialorder %v2045, 0.0
      %vm2071 = vcmp.gt.f32.partialorder %v2046, 0.0
      %vm2072 = vcmp.gt.f32.partialorder %v2047, 0.0
      %vm2073 = vcmp.gt.f32.partialorder %v2048, 0.0
      %vm2074 = vcmp.gt.f32.partialorder %v2049, 0.0
      %vm2075 = vcmp.gt.f32.partialorder %v2050, 0.0
      %vm2076 = vcmp.gt.f32.partialorder %v2051, 0.0
      %vm2077 = vcmp.gt.f32.partialorder %v2052, 0.0
      %vm2078 = vcmp.gt.f32.partialorder %v2053, 0.0
      %vm2079 = vcmp.gt.f32.partialorder %v2054, 0.0
      %vm2080 = vcmp.gt.f32.partialorder %v2055, 0.0
      %vm2081 = vcmp.gt.f32.partialorder %v2056, 0.0
      %vm2082 = vcmp.gt.f32.partialorder %v2057, 0.0
      %v2083 = vmul.f32 %v2033, 0.01
      %v2084 = vmul.f32 %v2034, 0.01
      %v2085 = vmul.f32 %v2035, 0.01
      %v2086 = vmul.f32 %v2036, 0.01
      %v2087 = vmul.f32 %v2037, 0.01
      %v2088 = vmul.f32 %v2038, 0.01
      %v2089 = vmul.f32 %v2039, 0.01
      %v2090 = vmul.f32 %v2040, 0.01
      %v2091 = vmul.f32 %v2041, 0.01
      %v2092 = vmul.f32 %v2042, 0.01
      %v2093 = vmul.f32 %v2043, 0.01
      %v2094 = vmul.f32 %v2044, 0.01
      %v2095 = vmul.f32 %v2045, 0.01
      %v2096 = vmul.f32 %v2046, 0.01
      %v2097 = vmul.f32 %v2047, 0.01
      %v2098 = vmul.f32 %v2048, 0.01
      %v2099 = vmul.f32 %v2049, 0.01
      %v2100 = vmul.f32 %v2050, 0.01
      %v2101 = vmul.f32 %v2051, 0.01
      %v2102 = vmul.f32 %v2052, 0.01
      %v2103 = vmul.f32 %v2053, 0.01
      %v2104 = vmul.f32 %v2054, 0.01
      %v2105 = vmul.f32 %v2055, 0.01
      %v2106 = vmul.f32 %v2056, 0.01
      %v2107 = vmul.f32 %v2057, 0.01
      %v2108 = vsel %vm2058, %v2033, %v2083
      %v2109 = vsel %vm2059, %v2034, %v2084
      %v2110 = vsel %vm2060, %v2035, %v2085
      %v2111 = vsel %vm2061, %v2036, %v2086
      %v2112 = vsel %vm2062, %v2037, %v2087
      %v2113 = vsel %vm2063, %v2038, %v2088
      %v2114 = vsel %vm2064, %v2039, %v2089
      %v2115 = vsel %vm2065, %v2040, %v2090
      %v2116 = vsel %vm2066, %v2041, %v2091
      %v2117 = vsel %vm2067, %v2042, %v2092
      %v2118 = vsel %vm2068, %v2043, %v2093
      %v2119 = vsel %vm2069, %v2044, %v2094
      %v2120 = vsel %vm2070, %v2045, %v2095
      %v2121 = vsel %vm2071, %v2046, %v2096
      %v2122 = vsel %vm2072, %v2047, %v2097
      %v2123 = vsel %vm2073, %v2048, %v2098
      %v2124 = vsel %vm2074, %v2049, %v2099
      %v2125 = vsel %vm2075, %v2050, %v2100
      %v2126 = vsel %vm2076, %v2051, %v2101
      %v2127 = vsel %vm2077, %v2052, %v2102
      %v2128 = vsel %vm2078, %v2053, %v2103
      %v2129 = vsel %vm2079, %v2054, %v2104
      %v2130 = vsel %vm2080, %v2055, %v2105
      %v2131 = vsel %vm2081, %v2056, %v2106
      %v2132 = vsel %vm2082, %v2057, %v2107
      %2133 = vst [vmem:[%s4] sm:$0xff] %v2108
      %2134 = vst [vmem:[%s4 + $0x8] sm:$0xff] %v2109
      %2135 = vst [vmem:[%s4 + $0x10] sm:$0xff] %v2110
      %2136 = vst [vmem:[%s4 + $0x18] sm:$0xff] %v2111
      %2137 = vst [vmem:[%s4 + $0x20] sm:$0xff] %v2112
      %2138 = vst [vmem:[%s4 + $0x28] sm:$0xff] %v2113
      %2139 = vst [vmem:[%s4 + $0x30] sm:$0xff] %v2114
      %2140 = vst [vmem:[%s4 + $0x38] sm:$0xff] %v2115
      %2141 = vst [vmem:[%s4 + $0x40] sm:$0xff] %v2116
      %2142 = vst [vmem:[%s4 + $0x48] sm:$0xff] %v2117
      %2143 = vst [vmem:[%s4 + $0x50] sm:$0xff] %v2118
      %2144 = vst [vmem:[%s4 + $0x58] sm:$0xff] %v2119
      %2145 = vst [vmem:[%s4 + $0x60] sm:$0xff] %v2120
      %2146 = vst [vmem:[%s4 + $0x68] sm:$0xff] %v2121
      %2147 = vst [vmem:[%s4 + $0x70] sm:$0xff] %v2122
      %2148 = vst [vmem:[%s4 + $0x78] sm:$0xff] %v2123
      %2149 = vst [vmem:[%s4 + $0x80] sm:$0xff] %v2124
      %2150 = vst [vmem:[%s4 + $0x88] sm:$0xff] %v2125
      %2151 = vst [vmem:[%s4 + $0x90] sm:$0xff] %v2126
      %2152 = vst [vmem:[%s4 + $0x98] sm:$0xff] %v2127
      %2153 = vst [vmem:[%s4 + $0xa0] sm:$0xff] %v2128
      %2154 = vst [vmem:[%s4 + $0xa8] sm:$0xff] %v2129
      %2155 = vst [vmem:[%s4 + $0xb0] sm:$0xff] %v2130
      %2156 = vst [vmem:[%s4 + $0xb8] sm:$0xff] %v2131
      %2157 = vst [vmem:[%s4 + $0xc0] sm:$0xf] %v2132
    $region37: #{discriminator_forward.4} parent=1 // pred_fallthru
      _
    // Predicated region
    $region38: #{discriminator_forward.4} parent=1 // pred_check
      _
    $region39: #{discriminator_forward.4} parent=1 // pred_check_branch
      %2159 = sbr.rel (0) target = $region41
    $region40: #{discriminator_forward.4} parent=1 // pred_region
      _
    $region41: #{discriminator_forward.4} parent=1 // pred_fallthru
      _
    // Predicated region
    $region42: #{discriminator_forward.4} parent=1 // pred_check
      _
    $region43: #{discriminator_forward.4} parent=1 // pred_check_branch
      %2161 = sbr.rel (0) target = $region45
    $region44: #{discriminator_forward.4} parent=1 // pred_region
      _
    $region45: #{discriminator_forward.4} parent=1 // pred_fallthru
      _
    %2162 = vsyncpa [#allocation3], 1
    %2163 = vsyncpa [#allocation5], 1

// kernel: discriminator_forward.5
$region0: #{discriminator_forward.5}
  #allocation0 [shape = 'u32[]', space=smem, size = 0x4, offset = 0x4, fixed_abs, tag = 'smem constant byte address 0x4 - core index']
  #allocation1 [shape = 'u32[144,128]{1,0:T(1,128)}', space=vmem, size = 0x12000, scoped, tag = 'internal scratch']
  #allocation2 [shape = 'f32[4,1024]{1,0:T(4,128)}', space=vmem, size = 0x4000, scoped, tag = 'scratch operand']
  #allocation3 [shape = 'f32[1,1]{1,0:T(1,128)S(1)}', space=vmem, size = 0x200, scoped, tag = 'scoped memory for discriminator_forward.5']
  %s0 = inlined_call_operand.vmem [shape: bf16[4,6272], index: 0, kind: input, shape index: {}]
  %s1 = inlined_call_operand.hbm [shape: bf16[6272,1024], index: 1, kind: input, shape index: {}]
  %s2 = inlined_call_operand.hbm [shape: f32[1,1024], index: 2, kind: input, shape index: {}]
  %s3 = inlined_call_operand.hbm [shape: f32[1,1024], index: 3, kind: input, shape index: {}]
  %s4 = inlined_call_operand.vmem [shape: f32[1024,1], index: 4, kind: input, shape index: {}]
  %s5 = inlined_call_operand.<no memory space> [shape: f32[1,1], index: 5, kind: input, shape index: {}]
  %s6 = inlined_call_operand.vmem [shape: f32[4,1], index: 6, kind: output, shape index: {}]
  %s7 = sld [smem:[#allocation0]]
  $region77: #{discriminator_forward.5} parent=0
    _
  %s9 = ssub.s32 1, %s7
  %s10 = scalar_select 0, %s9, %s7
  %v11 = vstv %s5
  %12 = vst [vmem:[#allocation3] sm:$0x1] %v11
  $region1: #{discriminator_forward.5} parent=0
    #allocation4 [shape = 'u8[3670016]{0}', space=vmem, size = 0x380000, scoped, tag = 'input window, operand 1']
    #allocation5 [shape = 's32[2]{0}', space=sflag, size = 0x8, scoped, tag = 'scoped memory for discriminator_forward.5']
    #allocation6 [shape = 'u8[4096]{0}', space=vmem, size = 0x1000, scoped, tag = 'input window, operand 2, single buffered']
    #allocation7 [shape = 's32[1]{0}', space=sflag, size = 0x4, scoped, tag = 'scoped memory for discriminator_forward.5']
    #allocation8 [shape = 'u8[4096]{0}', space=vmem, size = 0x1000, scoped, tag = 'input window, operand 3, single buffered']
    %13 = vsyncpa [#allocation5], 0
    %s14 = scalar_lea.sflag [#allocation5], 1
    %15 = vsyncpa %s14, 0
    %16 = vsyncpa [#allocation7], 0
    loop: start=0, step=1, limit=9
    $region2: #{discriminator_forward.5} parent=1 // loop_pre_header
      _
    $region3: #{discriminator_forward.5} parent=1 // loop_header
      %s18 = sphi 0, %s22
      %p19 = scmp.ge.s32.totalorder %s18, 9
      %s28 = sphi 0, %s30
      %s31 = sphi 0, %s28
      %s32 = sphi 0, %s31
      %s48 = sphi 0, %s32
      %s54 = sphi 0, %s56
      %s57 = sphi 0, %s54
      %s58 = sphi 0, %s57
      %s74 = sphi 0, %s58
      %s78 = sphi 0, %s78
      %s80 = sphi 0, %s78
      %s81 = sphi 0, %s80
      %s95 = sphi 0, %s81
      %s99 = sphi 0, %s99
      %s101 = sphi 0, %s99
      %s102 = sphi 0, %s101
      %s116 = sphi 0, %s102
      %s120 = sphi 0, %s120
      %s122 = sphi 0, %s120
      %s123 = sphi 0, %s122
      %s137 = sphi 0, %s123
      %s141 = sphi 0, %s141
      %s143 = sphi 0, %s141
      %s144 = sphi 0, %s143
      %s158 = sphi 0, %s144
      %s162 = sphi 0, %s162
      %s164 = sphi 0, %s162
      %s165 = sphi 0, %s164
      %s179 = sphi 0, %s165
    $region4: #{discriminator_forward.5} parent=1 // loop_header_branch
      %21 = sbr.rel (%p19) target = $region8
    $region5: #{discriminator_forward.5} parent=1 // loop_body
      %s23 = ssub.s32 %s18, 1
      %s24 = ssub.s32 %s18, 2
      %s25 = sadd.s32 %s18, 1
      %s26 = ssub.s32 %s18, %s25
      %p27 = scmp.eq.s32.totalorder %s26, 0
      %s29 = sadd.s32 %s28, 1
      %s30 = scalar_select %p27, %s28, %s29
      %p33 = pneg %p27
      %p34 = scmp.eq.s32.totalorder %s18, 6
      %p35 = por %p33, %p34
      %p36 = scmp.ne.s32.totalorder %s28, %s31
      %p37 = scmp.eq.s32.totalorder %s18, 0
      %p38 = por %p36, %p37
      %p39 = scmp.ne.s32.totalorder %s28, %s31
      %p40 = scmp.eq.s32.totalorder %s23, 6
      %p41 = por %p39, %p40
      %p42 = scmp.ne.s32.totalorder %s31, %s32
      %p43 = scmp.eq.s32.totalorder %s23, 0
      %p44 = por %p42, %p43
      %p45 = scmp.ne.s32.totalorder %s31, %s32
      %p46 = scmp.eq.s32.totalorder %s24, 6
      %p47 = por %p45, %p46
      %p49 = scmp.ne.s32.totalorder %s32, %s48
      %p50 = scmp.eq.s32.totalorder %s24, 0
      %p51 = por %p49, %p50
      %s52 = ssub.s32 %s18, %s25
      %p53 = scmp.eq.s32.totalorder %s52, 0
      %s55 = sadd.s32 %s54, 1
      %s56 = scalar_select %p53, %s54, %s55
      %p59 = pneg %p53
      %p60 = scmp.eq.s32.totalorder %s18, 6
      %p61 = por %p59, %p60
      %p62 = scmp.ne.s32.totalorder %s54, %s57
      %p63 = scmp.eq.s32.totalorder %s18, 0
      %p64 = por %p62, %p63
      %p65 = scmp.ne.s32.totalorder %s54, %s57
      %p66 = scmp.eq.s32.totalorder %s23, 6
      %p67 = por %p65, %p66
      %p68 = scmp.ne.s32.totalorder %s57, %s58
      %p69 = scmp.eq.s32.totalorder %s23, 0
      %p70 = por %p68, %p69
      %p71 = scmp.ne.s32.totalorder %s57, %s58
      %p72 = scmp.eq.s32.totalorder %s24, 6
      %p73 = por %p71, %p72
      %p75 = scmp.ne.s32.totalorder %s58, %s74
      %p76 = scmp.eq.s32.totalorder %s24, 0
      %p77 = por %p75, %p76
      %s79 = sadd.s32 %s78, 1
      %p82 = scmp.eq.s32.totalorder %s18, 6
      %p83 = scmp.ne.s32.totalorder %s78, %s80
      %p84 = scmp.eq.s32.totalorder %s18, 0
      %p85 = por %p83, %p84
      %p86 = scmp.ne.s32.totalorder %s78, %s80
      %p87 = scmp.eq.s32.totalorder %s23, 6
      %p88 = por %p86, %p87
      %p89 = scmp.ne.s32.totalorder %s80, %s81
      %p90 = scmp.eq.s32.totalorder %s23, 0
      %p91 = por %p89, %p90
      %p92 = scmp.ne.s32.totalorder %s80, %s81
      %p93 = scmp.eq.s32.totalorder %s24, 6
      %p94 = por %p92, %p93
      %p96 = scmp.ne.s32.totalorder %s81, %s95
      %p97 = scmp.eq.s32.totalorder %s24, 0
      %p98 = por %p96, %p97
      %s100 = sadd.s32 %s99, 1
      %p103 = scmp.eq.s32.totalorder %s18, 6
      %p104 = scmp.ne.s32.totalorder %s99, %s101
      %p105 = scmp.eq.s32.totalorder %s18, 0
      %p106 = por %p104, %p105
      %p107 = scmp.ne.s32.totalorder %s99, %s101
      %p108 = scmp.eq.s32.totalorder %s23, 6
      %p109 = por %p107, %p108
      %p110 = scmp.ne.s32.totalorder %s101, %s102
      %p111 = scmp.eq.s32.totalorder %s23, 0
      %p112 = por %p110, %p111
      %p113 = scmp.ne.s32.totalorder %s101, %s102
      %p114 = scmp.eq.s32.totalorder %s24, 6
      %p115 = por %p113, %p114
      %p117 = scmp.ne.s32.totalorder %s102, %s116
      %p118 = scmp.eq.s32.totalorder %s24, 0
      %p119 = por %p117, %p118
      %s121 = sadd.s32 %s120, 1
      %p124 = scmp.eq.s32.totalorder %s18, 6
      %p125 = scmp.ne.s32.totalorder %s120, %s122
      %p126 = scmp.eq.s32.totalorder %s18, 0
      %p127 = por %p125, %p126
      %p128 = scmp.ne.s32.totalorder %s120, %s122
      %p129 = scmp.eq.s32.totalorder %s23, 6
      %p130 = por %p128, %p129
      %p131 = scmp.ne.s32.totalorder %s122, %s123
      %p132 = scmp.eq.s32.totalorder %s23, 0
      %p133 = por %p131, %p132
      %p134 = scmp.ne.s32.totalorder %s122, %s123
      %p135 = scmp.eq.s32.totalorder %s24, 6
      %p136 = por %p134, %p135
      %p138 = scmp.ne.s32.totalorder %s123, %s137
      %p139 = scmp.eq.s32.totalorder %s24, 0
      %p140 = por %p138, %p139
      %s142 = sadd.s32 %s141, 1
      %p145 = scmp.eq.s32.totalorder %s18, 6
      %p146 = scmp.ne.s32.totalorder %s141, %s143
      %p147 = scmp.eq.s32.totalorder %s18, 0
      %p148 = por %p146, %p147
      %p149 = scmp.ne.s32.totalorder %s141, %s143
      %p150 = scmp.eq.s32.totalorder %s23, 6
      %p151 = por %p149, %p150
      %p152 = scmp.ne.s32.totalorder %s143, %s144
      %p153 = scmp.eq.s32.totalorder %s23, 0
      %p154 = por %p152, %p153
      %p155 = scmp.ne.s32.totalorder %s143, %s144
      %p156 = scmp.eq.s32.totalorder %s24, 6
      %p157 = por %p155, %p156
      %p159 = scmp.ne.s32.totalorder %s144, %s158
      %p160 = scmp.eq.s32.totalorder %s24, 0
      %p161 = por %p159, %p160
      %s163 = sadd.s32 %s162, 1
      %p166 = scmp.eq.s32.totalorder %s18, 6
      %p167 = scmp.ne.s32.totalorder %s162, %s164
      %p168 = scmp.eq.s32.totalorder %s18, 0
      %p169 = por %p167, %p168
      %p170 = scmp.ne.s32.totalorder %s162, %s164
      %p171 = scmp.eq.s32.totalorder %s23, 6
      %p172 = por %p170, %p171
      %p173 = scmp.ne.s32.totalorder %s164, %s165
      %p174 = scmp.eq.s32.totalorder %s23, 0
      %p175 = por %p173, %p174
      %p176 = scmp.ne.s32.totalorder %s164, %s165
      %p177 = scmp.eq.s32.totalorder %s24, 6
      %p178 = por %p176, %p177
      %p180 = scmp.ne.s32.totalorder %s165, %s179
      %p181 = scmp.eq.s32.totalorder %s24, 0
      %p182 = por %p180, %p181
      %p183 = scmp.le.s32.totalorder 1, %s18
      %p184 = scmp.lt.s32.totalorder %s18, 8
      %p185 = pnand %p183, %p184
      %p186 = pneg %p185
      // Predicated region
      $region9: #{discriminator_forward.5} parent=5 // pred_check
        _
      $region10: #{discriminator_forward.5} parent=5 // pred_check_branch
        %188 = sbr.rel (%p185) target = $region12
      $region11: #{discriminator_forward.5} parent=5 // pred_region
        %s189 = ssub.s32 %s18, 1
        // Predicated region
        $region13: #{discriminator_forward.5} parent=11 // pred_check
          %p190 = pneg %p91
        $region14: #{discriminator_forward.5} parent=11 // pred_check_branch
          %192 = sbr.rel (%p190) target = $region16
        $region15: #{discriminator_forward.5} parent=11 // pred_region
          %s194 = ssub.s32 128, 128
          %195 = vsyncadd [#allocation7], %s194
          %s197 = sshll.u32 [#allocation6], 4
          %s198 = int_to_ptr.vmem [resolvable:$true] %s197
          %200 = dma.hbm_to_vmem [thread:$0]  %s2, 128, %s198, [#allocation7]
        $region16: #{discriminator_forward.5} parent=11 // pred_fallthru
          _
        // Predicated region
        $region17: #{discriminator_forward.5} parent=11 // pred_check
          %p201 = pneg %p112
        $region18: #{discriminator_forward.5} parent=11 // pred_check_branch
          %203 = sbr.rel (%p201) target = $region20
        $region19: #{discriminator_forward.5} parent=11 // pred_region
          %s205 = ssub.s32 128, 128
          %206 = vsyncadd [#allocation7], %s205
          %s208 = sshll.u32 [#allocation8], 4
          %s209 = int_to_ptr.vmem [resolvable:$true] %s208
          %211 = dma.hbm_to_vmem [thread:$0]  %s3, 128, %s209, [#allocation7]
        $region20: #{discriminator_forward.5} parent=11 // pred_fallthru
          _
        // Predicated region
        $region21: #{discriminator_forward.5} parent=11 // pred_check
          %p212 = pneg %p133
        $region22: #{discriminator_forward.5} parent=11 // pred_check_branch
          %214 = sbr.rel (%p212) target = $region24
        $region23: #{discriminator_forward.5} parent=11 // pred_region
          _
        $region24: #{discriminator_forward.5} parent=11 // pred_fallthru
          _
        // Predicated region
        $region25: #{discriminator_forward.5} parent=11 // pred_check
          %p215 = pneg %p154
        $region26: #{discriminator_forward.5} parent=11 // pred_check_branch
          %217 = sbr.rel (%p215) target = $region28
        $region27: #{discriminator_forward.5} parent=11 // pred_region
          _
        $region28: #{discriminator_forward.5} parent=11 // pred_fallthru
          _
      $region12: #{discriminator_forward.5} parent=5 // pred_fallthru
        _
      %p218 = scmp.lt.s32.totalorder %s18, 7
      // Predicated region
      $region29: #{discriminator_forward.5} parent=5 // pred_check
        %p219 = pneg %p218
      $region30: #{discriminator_forward.5} parent=5 // pred_check_branch
        %221 = sbr.rel (%p219) target = $region32
      $region31: #{discriminator_forward.5} parent=5 // pred_region
        // Predicated region
        $region33: #{discriminator_forward.5} parent=31 // pred_check
          %p222 = pneg %p38
        $region34: #{discriminator_forward.5} parent=31 // pred_check_branch
          %224 = sbr.rel (%p222) target = $region36
        $region35: #{discriminator_forward.5} parent=31 // pred_region
          %s225 = smul.u32 7, %s18
          %p226 = scmp.lt.s32.totalorder %s225, 48
          %s227 = scalar_select %p226, %s225, 48
          %s228 = smul.addr %s227, 2
          %s229 = scalar_lea.vmem %s0, %s228
          %s230 = smul.u32 7, %s18
        $region36: #{discriminator_forward.5} parent=31 // pred_fallthru
          _
        // Predicated region
        $region37: #{discriminator_forward.5} parent=31 // pred_check
          %p231 = pneg %p64
        $region38: #{discriminator_forward.5} parent=31 // pred_check_branch
          %233 = sbr.rel (%p231) target = $region40
        $region39: #{discriminator_forward.5} parent=31 // pred_region
          %s234 = sand.u32 %s54, 1
          %s235 = scalar_lea.sflag [#allocation5], %s234
          %s236 = sand.u32 %s54, 1
          %s237 = smul.addr %s236, 3584
          %s238 = scalar_lea.vmem [#allocation4], %s237
          %s239 = smul.u32 112, %s18
          %s241 = ssub.s32 57344, 57344
          %242 = vsyncadd %s235, %s241
          %s243 = smul.addr %s239, 8
          %s244 = smul.addr %s243, 64
          %s245 = scalar_lea.hbm %s1, %s244
          %s246 = sshll.u32 %s238, 4
          %s247 = int_to_ptr.vmem [resolvable:$true] %s246
          %252 = dma.hbm_to_vmem [thread:$0]  %s245, 57344, %s247, %s235, 512, 512, 32
        $region40: #{discriminator_forward.5} parent=31 // pred_fallthru
          _
      $region32: #{discriminator_forward.5} parent=5 // pred_fallthru
        _
      %p253 = scmp.le.s32.totalorder 1, %s18
      %p254 = scmp.lt.s32.totalorder %s18, 8
      %p255 = pnand %p253, %p254
      %p256 = pneg %p255
      // Predicated region
      $region41: #{discriminator_forward.5} parent=5 // pred_check
        _
      $region42: #{discriminator_forward.5} parent=5 // pred_check_branch
        %258 = sbr.rel (%p255) target = $region44
      $region43: #{discriminator_forward.5} parent=5 // pred_region
        %s259 = ssub.s32 %s18, 1
        %s260 = sand.u32 %s57, 1
        %s261 = scalar_lea.sflag [#allocation5], %s260
        %s262 = sand.u32 %s57, 1
        %s263 = smul.addr %s262, 3584
        %s264 = scalar_lea.vmem [#allocation4], %s263
        // Predicated region
        $region45: #{discriminator_forward.5} parent=43 // pred_check
          %p265 = pneg %p70
        $region46: #{discriminator_forward.5} parent=43 // pred_check_branch
          %267 = sbr.rel (%p265) target = $region48
        $region47: #{discriminator_forward.5} parent=43 // pred_region
          %268 = dma.done %s261, 57344
        $region48: #{discriminator_forward.5} parent=43 // pred_fallthru
          _
        // Predicated region
        $region49: #{discriminator_forward.5} parent=43 // pred_check
          %p269 = pneg %p91
        $region50: #{discriminator_forward.5} parent=43 // pred_check_branch
          %271 = sbr.rel (%p269) target = $region52
        $region51: #{discriminator_forward.5} parent=43 // pred_region
          %272 = dma.done [#allocation7], 128
        $region52: #{discriminator_forward.5} parent=43 // pred_fallthru
          _
        // Predicated region
        $region53: #{discriminator_forward.5} parent=43 // pred_check
          %p273 = pneg %p112
        $region54: #{discriminator_forward.5} parent=43 // pred_check_branch
          %275 = sbr.rel (%p273) target = $region56
        $region55: #{discriminator_forward.5} parent=43 // pred_region
          %276 = dma.done [#allocation7], 128
        $region56: #{discriminator_forward.5} parent=43 // pred_fallthru
          _
        %s277 = smul.u32 7, %s23
        %p278 = scmp.lt.s32.totalorder %s277, 48
        %s279 = scalar_select %p278, %s277, 48
        %s280 = smul.addr %s279, 2
        %s281 = scalar_lea.vmem %s0, %s280
        %p282 = pneg %p44
        %p283 = pneg %p41
        %s284 = sand.u32 %s57, 1
        %s285 = scalar_lea.sflag [#allocation5], %s284
        %s286 = sand.u32 %s57, 1
        %s287 = smul.addr %s286, 3584
        %s288 = scalar_lea.vmem [#allocation4], %s287
        %p289 = pneg %p70
        %p290 = pneg %p67
        %p291 = pneg %p91
        %p292 = pneg %p88
        %p293 = pneg %p112
        %p294 = pneg %p109
        %p295 = pneg %p133
        %p296 = pneg %p130
        %p297 = pneg %p154
        %p298 = pneg %p151
        %p299 = pneg %p175
        %p300 = pneg %p172
        %s301 = smul.u32 7, %s23
        %p302 = scmp.lt.s32.totalorder %s301, 48
        %s303 = scalar_select %p302, %s301, 48
        %s304 = smul.addr %s303, 2
        %s305 = scalar_lea.vmem %s0, %s304
        %s306 = smul.u32 7, %s23
        %s307 = smul.u32 112, %s23
        %p309 = scmp.eq.s32.totalorder %s23, 0
        // Predicated region
        $region57: #{discriminator_forward.5} parent=43 // pred_check
          %p310 = pneg %p309
        $region58: #{discriminator_forward.5} parent=43 // pred_check_branch
          %312 = sbr.rel (%p310) target = $region60
        $region59: #{discriminator_forward.5} parent=43 // pred_region
          %313 = vst [vmem:[#allocation2] sm:$0xff] 0.0
          %314 = vst [vmem:[#allocation2 + $0x8] sm:$0xff] 0.0
          %315 = vst [vmem:[#allocation2 + $0x10] sm:$0xff] 0.0
          %316 = vst [vmem:[#allocation2 + $0x18] sm:$0xff] 0.0
        $region60: #{discriminator_forward.5} parent=43 // pred_fallthru
          _
        %v317 = vld [vmem:[#allocation2] sm:$0xff]
        %v318 = vld [vmem:[#allocation2 + $0x8] sm:$0xff]
        %v319 = vld [vmem:[#allocation2 + $0x10] sm:$0xff]
        %v320 = vld [vmem:[#allocation2 + $0x18] sm:$0xff]
        %v321 = vld [vmem:[%s305] sm:$0xff]
        %v322 = vld [vmem:[%s305 + $0x8] sm:$0x3f]
        %v323 = vld [vmem:[%s264] sm:$0xff]
        %v324 = vld [vmem:[%s264 + $0x8] sm:$0xff]
        %v325 = vld [vmem:[%s264 + $0x10] sm:$0xff]
        %v326 = vld [vmem:[%s264 + $0x18] sm:$0xff]
        %v327 = vld [vmem:[%s264 + $0x20] sm:$0xff]
        %v328 = vld [vmem:[%s264 + $0x28] sm:$0xff]
        %v329 = vld [vmem:[%s264 + $0x30] sm:$0xff]
        %v330 = vld [vmem:[%s264 + $0x38] sm:$0xff]
        %v331 = vld [vmem:[%s264 + $0x40] sm:$0xff]
        %v332 = vld [vmem:[%s264 + $0x48] sm:$0xff]
        %v333 = vld [vmem:[%s264 + $0x50] sm:$0xff]
        %v334 = vld [vmem:[%s264 + $0x58] sm:$0xff]
        %v335 = vld [vmem:[%s264 + $0x60] sm:$0xff]
        %v336 = vld [vmem:[%s264 + $0x68] sm:$0xff]
        %v337 = vld [vmem:[%s264 + $0x70] sm:$0xff]
        %v338 = vld [vmem:[%s264 + $0x78] sm:$0xff]
        %v339 = vld [vmem:[%s264 + $0x80] sm:$0xff]
        %v340 = vld [vmem:[%s264 + $0x88] sm:$0xff]
        %v341 = vld [vmem:[%s264 + $0x90] sm:$0xff]
        %v342 = vld [vmem:[%s264 + $0x98] sm:$0xff]
        %v343 = vld [vmem:[%s264 + $0xa0] sm:$0xff]
        %v344 = vld [vmem:[%s264 + $0xa8] sm:$0xff]
        %v345 = vld [vmem:[%s264 + $0xb0] sm:$0xff]
        %v346 = vld [vmem:[%s264 + $0xb8] sm:$0xff]
        %v347 = vld [vmem:[%s264 + $0xc0] sm:$0xff]
        %v348 = vld [vmem:[%s264 + $0xc8] sm:$0xff]
        %v349 = vld [vmem:[%s264 + $0xd0] sm:$0xff]
        %v350 = vld [vmem:[%s264 + $0xd8] sm:$0xff]
        %v351 = vld [vmem:[%s264 + $0xe0] sm:$0xff]
        %v352 = vld [vmem:[%s264 + $0xe8] sm:$0xff]
        %v353 = vld [vmem:[%s264 + $0xf0] sm:$0xff]
        %v354 = vld [vmem:[%s264 + $0xf8] sm:$0xff]
        %v355 = vld [vmem:[%s264 + $0x100] sm:$0xff]
        %v356 = vld [vmem:[%s264 + $0x108] sm:$0xff]
        %v357 = vld [vmem:[%s264 + $0x110] sm:$0xff]
        %v358 = vld [vmem:[%s264 + $0x118] sm:$0xff]
        %v359 = vld [vmem:[%s264 + $0x120] sm:$0xff]
        %v360 = vld [vmem:[%s264 + $0x128] sm:$0xff]
        %v361 = vld [vmem:[%s264 + $0x130] sm:$0xff]
        %v362 = vld [vmem:[%s264 + $0x138] sm:$0xff]
        %v363 = vld [vmem:[%s264 + $0x140] sm:$0xff]
        %v364 = vld [vmem:[%s264 + $0x148] sm:$0xff]
        %v365 = vld [vmem:[%s264 + $0x150] sm:$0xff]
        %v366 = vld [vmem:[%s264 + $0x158] sm:$0xff]
        %v367 = vld [vmem:[%s264 + $0x160] sm:$0xff]
        %v368 = vld [vmem:[%s264 + $0x168] sm:$0xff]
        %v369 = vld [vmem:[%s264 + $0x170] sm:$0xff]
        %v370 = vld [vmem:[%s264 + $0x178] sm:$0xff]
        %v371 = vld [vmem:[%s264 + $0x180] sm:$0xff]
        %v372 = vld [vmem:[%s264 + $0x188] sm:$0xff]
        %v373 = vld [vmem:[%s264 + $0x190] sm:$0xff]
        %v374 = vld [vmem:[%s264 + $0x198] sm:$0xff]
        %v375 = vld [vmem:[%s264 + $0x1a0] sm:$0xff]
        %v376 = vld [vmem:[%s264 + $0x1a8] sm:$0xff]
        %v377 = vld [vmem:[%s264 + $0x1b0] sm:$0xff]
        %v378 = vld [vmem:[%s264 + $0x1b8] sm:$0xff]
        %v379 = vld [vmem:[%s264 + $0x1c0] sm:$0xff]
        %v380 = vld [vmem:[%s264 + $0x1c8] sm:$0xff]
        %v381 = vld [vmem:[%s264 + $0x1d0] sm:$0xff]
        %v382 = vld [vmem:[%s264 + $0x1d8] sm:$0xff]
        %v383 = vld [vmem:[%s264 + $0x1e0] sm:$0xff]
        %v384 = vld [vmem:[%s264 + $0x1e8] sm:$0xff]
        %v385 = vld [vmem:[%s264 + $0x1f0] sm:$0xff]
        %v386 = vld [vmem:[%s264 + $0x1f8] sm:$0xff]
        %v387 = vld [vmem:[%s264 + $0x200] sm:$0xff]
        %v388 = vld [vmem:[%s264 + $0x208] sm:$0xff]
        %v389 = vld [vmem:[%s264 + $0x210] sm:$0xff]
        %v390 = vld [vmem:[%s264 + $0x218] sm:$0xff]
        %v391 = vld [vmem:[%s264 + $0x220] sm:$0xff]
        %v392 = vld [vmem:[%s264 + $0x228] sm:$0xff]
        %v393 = vld [vmem:[%s264 + $0x230] sm:$0xff]
        %v394 = vld [vmem:[%s264 + $0x238] sm:$0xff]
        %v395 = vld [vmem:[%s264 + $0x240] sm:$0xff]
        %v396 = vld [vmem:[%s264 + $0x248] sm:$0xff]
        %v397 = vld [vmem:[%s264 + $0x250] sm:$0xff]
        %v398 = vld [vmem:[%s264 + $0x258] sm:$0xff]
        %v399 = vld [vmem:[%s264 + $0x260] sm:$0xff]
        %v400 = vld [vmem:[%s264 + $0x268] sm:$0xff]
        %v401 = vld [vmem:[%s264 + $0x270] sm:$0xff]
        %v402 = vld [vmem:[%s264 + $0x278] sm:$0xff]
        %v403 = vld [vmem:[%s264 + $0x280] sm:$0xff]
        %v404 = vld [vmem:[%s264 + $0x288] sm:$0xff]
        %v405 = vld [vmem:[%s264 + $0x290] sm:$0xff]
        %v406 = vld [vmem:[%s264 + $0x298] sm:$0xff]
        %v407 = vld [vmem:[%s264 + $0x2a0] sm:$0xff]
        %v408 = vld [vmem:[%s264 + $0x2a8] sm:$0xff]
        %v409 = vld [vmem:[%s264 + $0x2b0] sm:$0xff]
        %v410 = vld [vmem:[%s264 + $0x2b8] sm:$0xff]
        %v411 = vld [vmem:[%s264 + $0x2c0] sm:$0xff]
        %v412 = vld [vmem:[%s264 + $0x2c8] sm:$0xff]
        %v413 = vld [vmem:[%s264 + $0x2d0] sm:$0xff]
        %v414 = vld [vmem:[%s264 + $0x2d8] sm:$0xff]
        %v415 = vld [vmem:[%s264 + $0x2e0] sm:$0xff]
        %v416 = vld [vmem:[%s264 + $0x2e8] sm:$0xff]
        %v417 = vld [vmem:[%s264 + $0x2f0] sm:$0xff]
        %v418 = vld [vmem:[%s264 + $0x2f8] sm:$0xff]
        %v419 = vld [vmem:[%s264 + $0x300] sm:$0xff]
        %v420 = vld [vmem:[%s264 + $0x308] sm:$0xff]
        %v421 = vld [vmem:[%s264 + $0x310] sm:$0xff]
        %v422 = vld [vmem:[%s264 + $0x318] sm:$0xff]
        %v423 = vld [vmem:[%s264 + $0x320] sm:$0xff]
        %v424 = vld [vmem:[%s264 + $0x328] sm:$0xff]
        %v425 = vld [vmem:[%s264 + $0x330] sm:$0xff]
        %v426 = vld [vmem:[%s264 + $0x338] sm:$0xff]
        %v427 = vld [vmem:[%s264 + $0x340] sm:$0xff]
        %v428 = vld [vmem:[%s264 + $0x348] sm:$0xff]
        %v429 = vld [vmem:[%s264 + $0x350] sm:$0xff]
        %v430 = vld [vmem:[%s264 + $0x358] sm:$0xff]
        %v431 = vld [vmem:[%s264 + $0x360] sm:$0xff]
        %v432 = vld [vmem:[%s264 + $0x368] sm:$0xff]
        %v433 = vld [vmem:[%s264 + $0x370] sm:$0xff]
        %v434 = vld [vmem:[%s264 + $0x378] sm:$0xff]
        %v435 = vld [vmem:[%s264 + $0x380] sm:$0xff]
        %v436 = vld [vmem:[%s264 + $0x388] sm:$0xff]
        %v437 = vld [vmem:[%s264 + $0x390] sm:$0xff]
        %v438 = vld [vmem:[%s264 + $0x398] sm:$0xff]
        %v439 = vld [vmem:[%s264 + $0x3a0] sm:$0xff]
        %v440 = vld [vmem:[%s264 + $0x3a8] sm:$0xff]
        %v441 = vld [vmem:[%s264 + $0x3b0] sm:$0xff]
        %v442 = vld [vmem:[%s264 + $0x3b8] sm:$0xff]
        %v443 = vld [vmem:[%s264 + $0x3c0] sm:$0xff]
        %v444 = vld [vmem:[%s264 + $0x3c8] sm:$0xff]
        %v445 = vld [vmem:[%s264 + $0x3d0] sm:$0xff]
        %v446 = vld [vmem:[%s264 + $0x3d8] sm:$0xff]
        %v447 = vld [vmem:[%s264 + $0x3e0] sm:$0xff]
        %v448 = vld [vmem:[%s264 + $0x3e8] sm:$0xff]
        %v449 = vld [vmem:[%s264 + $0x3f0] sm:$0xff]
        %v450 = vld [vmem:[%s264 + $0x3f8] sm:$0xff]
        %v451 = vld [vmem:[%s264 + $0x400] sm:$0xff]
        %v452 = vld [vmem:[%s264 + $0x408] sm:$0xff]
        %v453 = vld [vmem:[%s264 + $0x410] sm:$0xff]
        %v454 = vld [vmem:[%s264 + $0x418] sm:$0xff]
        %v455 = vld [vmem:[%s264 + $0x420] sm:$0xff]
        %v456 = vld [vmem:[%s264 + $0x428] sm:$0xff]
        %v457 = vld [vmem:[%s264 + $0x430] sm:$0xff]
        %v458 = vld [vmem:[%s264 + $0x438] sm:$0xff]
        %v459 = vld [vmem:[%s264 + $0x440] sm:$0xff]
        %v460 = vld [vmem:[%s264 + $0x448] sm:$0xff]
        %v461 = vld [vmem:[%s264 + $0x450] sm:$0xff]
        %v462 = vld [vmem:[%s264 + $0x458] sm:$0xff]
        %v463 = vld [vmem:[%s264 + $0x460] sm:$0xff]
        %v464 = vld [vmem:[%s264 + $0x468] sm:$0xff]
        %v465 = vld [vmem:[%s264 + $0x470] sm:$0xff]
        %v466 = vld [vmem:[%s264 + $0x478] sm:$0xff]
        %v467 = vld [vmem:[%s264 + $0x480] sm:$0xff]
        %v468 = vld [vmem:[%s264 + $0x488] sm:$0xff]
        %v469 = vld [vmem:[%s264 + $0x490] sm:$0xff]
        %v470 = vld [vmem:[%s264 + $0x498] sm:$0xff]
        %v471 = vld [vmem:[%s264 + $0x4a0] sm:$0xff]
        %v472 = vld [vmem:[%s264 + $0x4a8] sm:$0xff]
        %v473 = vld [vmem:[%s264 + $0x4b0] sm:$0xff]
        %v474 = vld [vmem:[%s264 + $0x4b8] sm:$0xff]
        %v475 = vld [vmem:[%s264 + $0x4c0] sm:$0xff]
        %v476 = vld [vmem:[%s264 + $0x4c8] sm:$0xff]
        %v477 = vld [vmem:[%s264 + $0x4d0] sm:$0xff]
        %v478 = vld [vmem:[%s264 + $0x4d8] sm:$0xff]
        %v479 = vld [vmem:[%s264 + $0x4e0] sm:$0xff]
        %v480 = vld [vmem:[%s264 + $0x4e8] sm:$0xff]
        %v481 = vld [vmem:[%s264 + $0x4f0] sm:$0xff]
        %v482 = vld [vmem:[%s264 + $0x4f8] sm:$0xff]
        %v483 = vld [vmem:[%s264 + $0x500] sm:$0xff]
        %v484 = vld [vmem:[%s264 + $0x508] sm:$0xff]
        %v485 = vld [vmem:[%s264 + $0x510] sm:$0xff]
        %v486 = vld [vmem:[%s264 + $0x518] sm:$0xff]
        %v487 = vld [vmem:[%s264 + $0x520] sm:$0xff]
        %v488 = vld [vmem:[%s264 + $0x528] sm:$0xff]
        %v489 = vld [vmem:[%s264 + $0x530] sm:$0xff]
        %v490 = vld [vmem:[%s264 + $0x538] sm:$0xff]
        %v491 = vld [vmem:[%s264 + $0x540] sm:$0xff]
        %v492 = vld [vmem:[%s264 + $0x548] sm:$0xff]
        %v493 = vld [vmem:[%s264 + $0x550] sm:$0xff]
        %v494 = vld [vmem:[%s264 + $0x558] sm:$0xff]
        %v495 = vld [vmem:[%s264 + $0x560] sm:$0xff]
        %v496 = vld [vmem:[%s264 + $0x568] sm:$0xff]
        %v497 = vld [vmem:[%s264 + $0x570] sm:$0xff]
        %v498 = vld [vmem:[%s264 + $0x578] sm:$0xff]
        %v499 = vld [vmem:[%s264 + $0x580] sm:$0xff]
        %v500 = vld [vmem:[%s264 + $0x588] sm:$0xff]
        %v501 = vld [vmem:[%s264 + $0x590] sm:$0xff]
        %v502 = vld [vmem:[%s264 + $0x598] sm:$0xff]
        %v503 = vld [vmem:[%s264 + $0x5a0] sm:$0xff]
        %v504 = vld [vmem:[%s264 + $0x5a8] sm:$0xff]
        %v505 = vld [vmem:[%s264 + $0x5b0] sm:$0xff]
        %v506 = vld [vmem:[%s264 + $0x5b8] sm:$0xff]
        %v507 = vld [vmem:[%s264 + $0x5c0] sm:$0xff]
        %v508 = vld [vmem:[%s264 + $0x5c8] sm:$0xff]
        %v509 = vld [vmem:[%s264 + $0x5d0] sm:$0xff]
        %v510 = vld [vmem:[%s264 + $0x5d8] sm:$0xff]
        %v511 = vld [vmem:[%s264 + $0x5e0] sm:$0xff]
        %v512 = vld [vmem:[%s264 + $0x5e8] sm:$0xff]
        %v513 = vld [vmem:[%s264 + $0x5f0] sm:$0xff]
        %v514 = vld [vmem:[%s264 + $0x5f8] sm:$0xff]
        %v515 = vld [vmem:[%s264 + $0x600] sm:$0xff]
        %v516 = vld [vmem:[%s264 + $0x608] sm:$0xff]
        %v517 = vld [vmem:[%s264 + $0x610] sm:$0xff]
        %v518 = vld [vmem:[%s264 + $0x618] sm:$0xff]
        %v519 = vld [vmem:[%s264 + $0x620] sm:$0xff]
        %v520 = vld [vmem:[%s264 + $0x628] sm:$0xff]
        %v521 = vld [vmem:[%s264 + $0x630] sm:$0xff]
        %v522 = vld [vmem:[%s264 + $0x638] sm:$0xff]
        %v523 = vld [vmem:[%s264 + $0x640] sm:$0xff]
        %v524 = vld [vmem:[%s264 + $0x648] sm:$0xff]
        %v525 = vld [vmem:[%s264 + $0x650] sm:$0xff]
        %v526 = vld [vmem:[%s264 + $0x658] sm:$0xff]
        %v527 = vld [vmem:[%s264 + $0x660] sm:$0xff]
        %v528 = vld [vmem:[%s264 + $0x668] sm:$0xff]
        %v529 = vld [vmem:[%s264 + $0x670] sm:$0xff]
        %v530 = vld [vmem:[%s264 + $0x678] sm:$0xff]
        %v531 = vld [vmem:[%s264 + $0x680] sm:$0xff]
        %v532 = vld [vmem:[%s264 + $0x688] sm:$0xff]
        %v533 = vld [vmem:[%s264 + $0x690] sm:$0xff]
        %v534 = vld [vmem:[%s264 + $0x698] sm:$0xff]
        %v535 = vld [vmem:[%s264 + $0x6a0] sm:$0xff]
        %v536 = vld [vmem:[%s264 + $0x6a8] sm:$0xff]
        %v537 = vld [vmem:[%s264 + $0x6b0] sm:$0xff]
        %v538 = vld [vmem:[%s264 + $0x6b8] sm:$0xff]
        %v539 = vld [vmem:[%s264 + $0x6c0] sm:$0xff]
        %v540 = vld [vmem:[%s264 + $0x6c8] sm:$0xff]
        %v541 = vld [vmem:[%s264 + $0x6d0] sm:$0xff]
        %v542 = vld [vmem:[%s264 + $0x6d8] sm:$0xff]
        %v543 = vld [vmem:[%s264 + $0x6e0] sm:$0xff]
        %v544 = vld [vmem:[%s264 + $0x6e8] sm:$0xff]
        %v545 = vld [vmem:[%s264 + $0x6f0] sm:$0xff]
        %v546 = vld [vmem:[%s264 + $0x6f8] sm:$0xff]
        %v547 = vld [vmem:[%s264 + $0x700] sm:$0xff]
        %v548 = vld [vmem:[%s264 + $0x708] sm:$0xff]
        %v549 = vld [vmem:[%s264 + $0x710] sm:$0xff]
        %v550 = vld [vmem:[%s264 + $0x718] sm:$0xff]
        %v551 = vld [vmem:[%s264 + $0x720] sm:$0xff]
        %v552 = vld [vmem:[%s264 + $0x728] sm:$0xff]
        %v553 = vld [vmem:[%s264 + $0x730] sm:$0xff]
        %v554 = vld [vmem:[%s264 + $0x738] sm:$0xff]
        %v555 = vld [vmem:[%s264 + $0x740] sm:$0xff]
        %v556 = vld [vmem:[%s264 + $0x748] sm:$0xff]
        %v557 = vld [vmem:[%s264 + $0x750] sm:$0xff]
        %v558 = vld [vmem:[%s264 + $0x758] sm:$0xff]
        %v559 = vld [vmem:[%s264 + $0x760] sm:$0xff]
        %v560 = vld [vmem:[%s264 + $0x768] sm:$0xff]
        %v561 = vld [vmem:[%s264 + $0x770] sm:$0xff]
        %v562 = vld [vmem:[%s264 + $0x778] sm:$0xff]
        %v563 = vld [vmem:[%s264 + $0x780] sm:$0xff]
        %v564 = vld [vmem:[%s264 + $0x788] sm:$0xff]
        %v565 = vld [vmem:[%s264 + $0x790] sm:$0xff]
        %v566 = vld [vmem:[%s264 + $0x798] sm:$0xff]
        %v567 = vld [vmem:[%s264 + $0x7a0] sm:$0xff]
        %v568 = vld [vmem:[%s264 + $0x7a8] sm:$0xff]
        %v569 = vld [vmem:[%s264 + $0x7b0] sm:$0xff]
        %v570 = vld [vmem:[%s264 + $0x7b8] sm:$0xff]
        %v571 = vld [vmem:[%s264 + $0x7c0] sm:$0xff]
        %v572 = vld [vmem:[%s264 + $0x7c8] sm:$0xff]
        %v573 = vld [vmem:[%s264 + $0x7d0] sm:$0xff]
        %v574 = vld [vmem:[%s264 + $0x7d8] sm:$0xff]
        %v575 = vld [vmem:[%s264 + $0x7e0] sm:$0xff]
        %v576 = vld [vmem:[%s264 + $0x7e8] sm:$0xff]
        %v577 = vld [vmem:[%s264 + $0x7f0] sm:$0xff]
        %v578 = vld [vmem:[%s264 + $0x7f8] sm:$0xff]
        %v579 = vld [vmem:[%s264 + $0x800] sm:$0xff]
        %v580 = vld [vmem:[%s264 + $0x808] sm:$0xff]
        %v581 = vld [vmem:[%s264 + $0x810] sm:$0xff]
        %v582 = vld [vmem:[%s264 + $0x818] sm:$0xff]
        %v583 = vld [vmem:[%s264 + $0x820] sm:$0xff]
        %v584 = vld [vmem:[%s264 + $0x828] sm:$0xff]
        %v585 = vld [vmem:[%s264 + $0x830] sm:$0xff]
        %v586 = vld [vmem:[%s264 + $0x838] sm:$0xff]
        %v587 = vld [vmem:[%s264 + $0x840] sm:$0xff]
        %v588 = vld [vmem:[%s264 + $0x848] sm:$0xff]
        %v589 = vld [vmem:[%s264 + $0x850] sm:$0xff]
        %v590 = vld [vmem:[%s264 + $0x858] sm:$0xff]
        %v591 = vld [vmem:[%s264 + $0x860] sm:$0xff]
        %v592 = vld [vmem:[%s264 + $0x868] sm:$0xff]
        %v593 = vld [vmem:[%s264 + $0x870] sm:$0xff]
        %v594 = vld [vmem:[%s264 + $0x878] sm:$0xff]
        %v595 = vld [vmem:[%s264 + $0x880] sm:$0xff]
        %v596 = vld [vmem:[%s264 + $0x888] sm:$0xff]
        %v597 = vld [vmem:[%s264 + $0x890] sm:$0xff]
        %v598 = vld [vmem:[%s264 + $0x898] sm:$0xff]
        %v599 = vld [vmem:[%s264 + $0x8a0] sm:$0xff]
        %v600 = vld [vmem:[%s264 + $0x8a8] sm:$0xff]
        %v601 = vld [vmem:[%s264 + $0x8b0] sm:$0xff]
        %v602 = vld [vmem:[%s264 + $0x8b8] sm:$0xff]
        %v603 = vld [vmem:[%s264 + $0x8c0] sm:$0xff]
        %v604 = vld [vmem:[%s264 + $0x8c8] sm:$0xff]
        %v605 = vld [vmem:[%s264 + $0x8d0] sm:$0xff]
        %v606 = vld [vmem:[%s264 + $0x8d8] sm:$0xff]
        %v607 = vld [vmem:[%s264 + $0x8e0] sm:$0xff]
        %v608 = vld [vmem:[%s264 + $0x8e8] sm:$0xff]
        %v609 = vld [vmem:[%s264 + $0x8f0] sm:$0xff]
        %v610 = vld [vmem:[%s264 + $0x8f8] sm:$0xff]
        %v611 = vld [vmem:[%s264 + $0x900] sm:$0xff]
        %v612 = vld [vmem:[%s264 + $0x908] sm:$0xff]
        %v613 = vld [vmem:[%s264 + $0x910] sm:$0xff]
        %v614 = vld [vmem:[%s264 + $0x918] sm:$0xff]
        %v615 = vld [vmem:[%s264 + $0x920] sm:$0xff]
        %v616 = vld [vmem:[%s264 + $0x928] sm:$0xff]
        %v617 = vld [vmem:[%s264 + $0x930] sm:$0xff]
        %v618 = vld [vmem:[%s264 + $0x938] sm:$0xff]
        %v619 = vld [vmem:[%s264 + $0x940] sm:$0xff]
        %v620 = vld [vmem:[%s264 + $0x948] sm:$0xff]
        %v621 = vld [vmem:[%s264 + $0x950] sm:$0xff]
        %v622 = vld [vmem:[%s264 + $0x958] sm:$0xff]
        %v623 = vld [vmem:[%s264 + $0x960] sm:$0xff]
        %v624 = vld [vmem:[%s264 + $0x968] sm:$0xff]
        %v625 = vld [vmem:[%s264 + $0x970] sm:$0xff]
        %v626 = vld [vmem:[%s264 + $0x978] sm:$0xff]
        %v627 = vld [vmem:[%s264 + $0x980] sm:$0xff]
        %v628 = vld [vmem:[%s264 + $0x988] sm:$0xff]
        %v629 = vld [vmem:[%s264 + $0x990] sm:$0xff]
        %v630 = vld [vmem:[%s264 + $0x998] sm:$0xff]
        %v631 = vld [vmem:[%s264 + $0x9a0] sm:$0xff]
        %v632 = vld [vmem:[%s264 + $0x9a8] sm:$0xff]
        %v633 = vld [vmem:[%s264 + $0x9b0] sm:$0xff]
        %v634 = vld [vmem:[%s264 + $0x9b8] sm:$0xff]
        %v635 = vld [vmem:[%s264 + $0x9c0] sm:$0xff]
        %v636 = vld [vmem:[%s264 + $0x9c8] sm:$0xff]
        %v637 = vld [vmem:[%s264 + $0x9d0] sm:$0xff]
        %v638 = vld [vmem:[%s264 + $0x9d8] sm:$0xff]
        %v639 = vld [vmem:[%s264 + $0x9e0] sm:$0xff]
        %v640 = vld [vmem:[%s264 + $0x9e8] sm:$0xff]
        %v641 = vld [vmem:[%s264 + $0x9f0] sm:$0xff]
        %v642 = vld [vmem:[%s264 + $0x9f8] sm:$0xff]
        %v643 = vld [vmem:[%s264 + $0xa00] sm:$0xff]
        %v644 = vld [vmem:[%s264 + $0xa08] sm:$0xff]
        %v645 = vld [vmem:[%s264 + $0xa10] sm:$0xff]
        %v646 = vld [vmem:[%s264 + $0xa18] sm:$0xff]
        %v647 = vld [vmem:[%s264 + $0xa20] sm:$0xff]
        %v648 = vld [vmem:[%s264 + $0xa28] sm:$0xff]
        %v649 = vld [vmem:[%s264 + $0xa30] sm:$0xff]
        %v650 = vld [vmem:[%s264 + $0xa38] sm:$0xff]
        %v651 = vld [vmem:[%s264 + $0xa40] sm:$0xff]
        %v652 = vld [vmem:[%s264 + $0xa48] sm:$0xff]
        %v653 = vld [vmem:[%s264 + $0xa50] sm:$0xff]
        %v654 = vld [vmem:[%s264 + $0xa58] sm:$0xff]
        %v655 = vld [vmem:[%s264 + $0xa60] sm:$0xff]
        %v656 = vld [vmem:[%s264 + $0xa68] sm:$0xff]
        %v657 = vld [vmem:[%s264 + $0xa70] sm:$0xff]
        %v658 = vld [vmem:[%s264 + $0xa78] sm:$0xff]
        %v659 = vld [vmem:[%s264 + $0xa80] sm:$0xff]
        %v660 = vld [vmem:[%s264 + $0xa88] sm:$0xff]
        %v661 = vld [vmem:[%s264 + $0xa90] sm:$0xff]
        %v662 = vld [vmem:[%s264 + $0xa98] sm:$0xff]
        %v663 = vld [vmem:[%s264 + $0xaa0] sm:$0xff]
        %v664 = vld [vmem:[%s264 + $0xaa8] sm:$0xff]
        %v665 = vld [vmem:[%s264 + $0xab0] sm:$0xff]
        %v666 = vld [vmem:[%s264 + $0xab8] sm:$0xff]
        %v667 = vld [vmem:[%s264 + $0xac0] sm:$0xff]
        %v668 = vld [vmem:[%s264 + $0xac8] sm:$0xff]
        %v669 = vld [vmem:[%s264 + $0xad0] sm:$0xff]
        %v670 = vld [vmem:[%s264 + $0xad8] sm:$0xff]
        %v671 = vld [vmem:[%s264 + $0xae0] sm:$0xff]
        %v672 = vld [vmem:[%s264 + $0xae8] sm:$0xff]
        %v673 = vld [vmem:[%s264 + $0xaf0] sm:$0xff]
        %v674 = vld [vmem:[%s264 + $0xaf8] sm:$0xff]
        %v675 = vld [vmem:[%s264 + $0xb00] sm:$0xff]
        %v676 = vld [vmem:[%s264 + $0xb08] sm:$0xff]
        %v677 = vld [vmem:[%s264 + $0xb10] sm:$0xff]
        %v678 = vld [vmem:[%s264 + $0xb18] sm:$0xff]
        %v679 = vld [vmem:[%s264 + $0xb20] sm:$0xff]
        %v680 = vld [vmem:[%s264 + $0xb28] sm:$0xff]
        %v681 = vld [vmem:[%s264 + $0xb30] sm:$0xff]
        %v682 = vld [vmem:[%s264 + $0xb38] sm:$0xff]
        %v683 = vld [vmem:[%s264 + $0xb40] sm:$0xff]
        %v684 = vld [vmem:[%s264 + $0xb48] sm:$0xff]
        %v685 = vld [vmem:[%s264 + $0xb50] sm:$0xff]
        %v686 = vld [vmem:[%s264 + $0xb58] sm:$0xff]
        %v687 = vld [vmem:[%s264 + $0xb60] sm:$0xff]
        %v688 = vld [vmem:[%s264 + $0xb68] sm:$0xff]
        %v689 = vld [vmem:[%s264 + $0xb70] sm:$0xff]
        %v690 = vld [vmem:[%s264 + $0xb78] sm:$0xff]
        %v691 = vld [vmem:[%s264 + $0xb80] sm:$0xff]
        %v692 = vld [vmem:[%s264 + $0xb88] sm:$0xff]
        %v693 = vld [vmem:[%s264 + $0xb90] sm:$0xff]
        %v694 = vld [vmem:[%s264 + $0xb98] sm:$0xff]
        %v695 = vld [vmem:[%s264 + $0xba0] sm:$0xff]
        %v696 = vld [vmem:[%s264 + $0xba8] sm:$0xff]
        %v697 = vld [vmem:[%s264 + $0xbb0] sm:$0xff]
        %v698 = vld [vmem:[%s264 + $0xbb8] sm:$0xff]
        %v699 = vld [vmem:[%s264 + $0xbc0] sm:$0xff]
        %v700 = vld [vmem:[%s264 + $0xbc8] sm:$0xff]
        %v701 = vld [vmem:[%s264 + $0xbd0] sm:$0xff]
        %v702 = vld [vmem:[%s264 + $0xbd8] sm:$0xff]
        %v703 = vld [vmem:[%s264 + $0xbe0] sm:$0xff]
        %v704 = vld [vmem:[%s264 + $0xbe8] sm:$0xff]
        %v705 = vld [vmem:[%s264 + $0xbf0] sm:$0xff]
        %v706 = vld [vmem:[%s264 + $0xbf8] sm:$0xff]
        %v707 = vld [vmem:[%s264 + $0xc00] sm:$0xff]
        %v708 = vld [vmem:[%s264 + $0xc08] sm:$0xff]
        %v709 = vld [vmem:[%s264 + $0xc10] sm:$0xff]
        %v710 = vld [vmem:[%s264 + $0xc18] sm:$0xff]
        %v711 = vld [vmem:[%s264 + $0xc20] sm:$0xff]
        %v712 = vld [vmem:[%s264 + $0xc28] sm:$0xff]
        %v713 = vld [vmem:[%s264 + $0xc30] sm:$0xff]
        %v714 = vld [vmem:[%s264 + $0xc38] sm:$0xff]
        %v715 = vld [vmem:[%s264 + $0xc40] sm:$0xff]
        %v716 = vld [vmem:[%s264 + $0xc48] sm:$0xff]
        %v717 = vld [vmem:[%s264 + $0xc50] sm:$0xff]
        %v718 = vld [vmem:[%s264 + $0xc58] sm:$0xff]
        %v719 = vld [vmem:[%s264 + $0xc60] sm:$0xff]
        %v720 = vld [vmem:[%s264 + $0xc68] sm:$0xff]
        %v721 = vld [vmem:[%s264 + $0xc70] sm:$0xff]
        %v722 = vld [vmem:[%s264 + $0xc78] sm:$0xff]
        %v723 = vld [vmem:[%s264 + $0xc80] sm:$0xff]
        %v724 = vld [vmem:[%s264 + $0xc88] sm:$0xff]
        %v725 = vld [vmem:[%s264 + $0xc90] sm:$0xff]
        %v726 = vld [vmem:[%s264 + $0xc98] sm:$0xff]
        %v727 = vld [vmem:[%s264 + $0xca0] sm:$0xff]
        %v728 = vld [vmem:[%s264 + $0xca8] sm:$0xff]
        %v729 = vld [vmem:[%s264 + $0xcb0] sm:$0xff]
        %v730 = vld [vmem:[%s264 + $0xcb8] sm:$0xff]
        %v731 = vld [vmem:[%s264 + $0xcc0] sm:$0xff]
        %v732 = vld [vmem:[%s264 + $0xcc8] sm:$0xff]
        %v733 = vld [vmem:[%s264 + $0xcd0] sm:$0xff]
        %v734 = vld [vmem:[%s264 + $0xcd8] sm:$0xff]
        %v735 = vld [vmem:[%s264 + $0xce0] sm:$0xff]
        %v736 = vld [vmem:[%s264 + $0xce8] sm:$0xff]
        %v737 = vld [vmem:[%s264 + $0xcf0] sm:$0xff]
        %v738 = vld [vmem:[%s264 + $0xcf8] sm:$0xff]
        %v739 = vld [vmem:[%s264 + $0xd00] sm:$0xff]
        %v740 = vld [vmem:[%s264 + $0xd08] sm:$0xff]
        %v741 = vld [vmem:[%s264 + $0xd10] sm:$0xff]
        %v742 = vld [vmem:[%s264 + $0xd18] sm:$0xff]
        %v743 = vld [vmem:[%s264 + $0xd20] sm:$0xff]
        %v744 = vld [vmem:[%s264 + $0xd28] sm:$0xff]
        %v745 = vld [vmem:[%s264 + $0xd30] sm:$0xff]
        %v746 = vld [vmem:[%s264 + $0xd38] sm:$0xff]
        %v747 = vld [vmem:[%s264 + $0xd40] sm:$0xff]
        %v748 = vld [vmem:[%s264 + $0xd48] sm:$0xff]
        %v749 = vld [vmem:[%s264 + $0xd50] sm:$0xff]
        %v750 = vld [vmem:[%s264 + $0xd58] sm:$0xff]
        %v751 = vld [vmem:[%s264 + $0xd60] sm:$0xff]
        %v752 = vld [vmem:[%s264 + $0xd68] sm:$0xff]
        %v753 = vld [vmem:[%s264 + $0xd70] sm:$0xff]
        %v754 = vld [vmem:[%s264 + $0xd78] sm:$0xff]
        %v755 = vld [vmem:[%s264 + $0xd80] sm:$0xff]
        %v756 = vld [vmem:[%s264 + $0xd88] sm:$0xff]
        %v757 = vld [vmem:[%s264 + $0xd90] sm:$0xff]
        %v758 = vld [vmem:[%s264 + $0xd98] sm:$0xff]
        %v759 = vld [vmem:[%s264 + $0xda0] sm:$0xff]
        %v760 = vld [vmem:[%s264 + $0xda8] sm:$0xff]
        %v761 = vld [vmem:[%s264 + $0xdb0] sm:$0xff]
        %v762 = vld [vmem:[%s264 + $0xdb8] sm:$0xff]
        %v763 = vld [vmem:[%s264 + $0xdc0] sm:$0xff]
        %v764 = vld [vmem:[%s264 + $0xdc8] sm:$0xff]
        %v765 = vld [vmem:[%s264 + $0xdd0] sm:$0xff]
        %v766 = vld [vmem:[%s264 + $0xdd8] sm:$0xff]
        %v767 = vld [vmem:[%s264 + $0xde0] sm:$0xff]
        %v768 = vld [vmem:[%s264 + $0xde8] sm:$0xff]
        %v769 = vld [vmem:[%s264 + $0xdf0] sm:$0xff]
        %v770 = vld [vmem:[%s264 + $0xdf8] sm:$0xff]
        %v773 = vcombine.high %v321, %v321
        %v775 = vunpack.c.l.s4 1983009808
        %v776 = vunpack.c.0.s8 %v775
        %v777 = vlaneseq
        %v778 = vshrl.u32 %v777, 7
        %v779 = vsub.s32 %v776, %v778
        %v780 = vrot.slane %v321, %v779
        %v782 = vunpack.c.l.s4 1983009808
        %v783 = vunpack.c.0.s8 %v782
        %v784 = vlaneseq
        %v785 = vshrl.u32 %v784, 7
        %v786 = vsub.s32 %v783, %v785
        %v787 = vrot.slane %v773, %v786
        %v788 = vcombine.high %v780, %v780
        %v789 = vcombine.high %v787, %v787
        %v790 = vcombine.high %v322, %v322
        %v792 = vunpack.c.l.s4 1983009808
        %v793 = vunpack.c.0.s8 %v792
        %v794 = vlaneseq
        %v795 = vshrl.u32 %v794, 7
        %v796 = vsub.s32 %v793, %v795
        %v797 = vrot.slane %v322, %v796
        %v799 = vunpack.c.l.s4 1983009808
        %v800 = vunpack.c.0.s8 %v799
        %v801 = vlaneseq
        %v802 = vshrl.u32 %v801, 7
        %v803 = vsub.s32 %v800, %v802
        %v804 = vrot.slane %v790, %v803
        %v805 = vcombine.high %v797, %v797
        %v1261 = vunpack.c.l.b16 %v323
        %v1262 = vunpack.c.h.b16 %v323
        %v1263 = vunpack.c.l.b16 %v324
        %v1264 = vunpack.c.h.b16 %v324
        %v1265 = vunpack.c.l.b16 %v325
        %v1266 = vunpack.c.h.b16 %v325
        %v1267 = vunpack.c.l.b16 %v326
        %v1268 = vunpack.c.h.b16 %v326
        %v1269 = vunpack.c.l.b16 %v327
        %v1270 = vunpack.c.h.b16 %v327
        %v1271 = vunpack.c.l.b16 %v328
        %v1272 = vunpack.c.h.b16 %v328
        %v1273 = vunpack.c.l.b16 %v329
        %v1274 = vunpack.c.h.b16 %v329
        %v1275 = vunpack.c.l.b16 %v330
        %v1276 = vunpack.c.h.b16 %v330
        %v1277 = vunpack.c.l.b16 %v331
        %v1278 = vunpack.c.h.b16 %v331
        %v1279 = vunpack.c.l.b16 %v332
        %v1280 = vunpack.c.h.b16 %v332
        %v1281 = vunpack.c.l.b16 %v333
        %v1282 = vunpack.c.h.b16 %v333
        %v1283 = vunpack.c.l.b16 %v334
        %v1284 = vunpack.c.h.b16 %v334
        %v1285 = vunpack.c.l.b16 %v335
        %v1286 = vunpack.c.h.b16 %v335
        %v1287 = vunpack.c.l.b16 %v336
        %v1288 = vunpack.c.h.b16 %v336
        %v1289 = vunpack.c.l.b16 %v337
        %v1290 = vunpack.c.h.b16 %v337
        %v1291 = vunpack.c.l.b16 %v338
        %v1292 = vunpack.c.h.b16 %v338
        %v1293 = vunpack.c.l.b16 %v339
        %v1294 = vunpack.c.h.b16 %v339
        %v1295 = vunpack.c.l.b16 %v340
        %v1296 = vunpack.c.h.b16 %v340
        %v1297 = vunpack.c.l.b16 %v341
        %v1298 = vunpack.c.h.b16 %v341
        %v1299 = vunpack.c.l.b16 %v342
        %v1300 = vunpack.c.h.b16 %v342
        %v1301 = vunpack.c.l.b16 %v343
        %v1302 = vunpack.c.h.b16 %v343
        %v1303 = vunpack.c.l.b16 %v344
        %v1304 = vunpack.c.h.b16 %v344
        %v1305 = vunpack.c.l.b16 %v345
        %v1306 = vunpack.c.h.b16 %v345
        %v1307 = vunpack.c.l.b16 %v346
        %v1308 = vunpack.c.h.b16 %v346
        %v1309 = vunpack.c.l.b16 %v347
        %v1310 = vunpack.c.h.b16 %v347
        %v1311 = vunpack.c.l.b16 %v348
        %v1312 = vunpack.c.h.b16 %v348
        %v1313 = vunpack.c.l.b16 %v349
        %v1314 = vunpack.c.h.b16 %v349
        %v1315 = vunpack.c.l.b16 %v350
        %v1316 = vunpack.c.h.b16 %v350
        %v1317 = vunpack.c.l.b16 %v351
        %v1318 = vunpack.c.h.b16 %v351
        %v1319 = vunpack.c.l.b16 %v352
        %v1320 = vunpack.c.h.b16 %v352
        %v1321 = vunpack.c.l.b16 %v353
        %v1322 = vunpack.c.h.b16 %v353
        %v1323 = vunpack.c.l.b16 %v354
        %v1324 = vunpack.c.h.b16 %v354
        %v1325 = vunpack.c.l.b16 %v355
        %v1326 = vunpack.c.h.b16 %v355
        %v1327 = vunpack.c.l.b16 %v356
        %v1328 = vunpack.c.h.b16 %v356
        %v1329 = vunpack.c.l.b16 %v357
        %v1330 = vunpack.c.h.b16 %v357
        %v1331 = vunpack.c.l.b16 %v358
        %v1332 = vunpack.c.h.b16 %v358
        %v1333 = vunpack.c.l.b16 %v359
        %v1334 = vunpack.c.h.b16 %v359
        %v1335 = vunpack.c.l.b16 %v360
        %v1336 = vunpack.c.h.b16 %v360
        %v1337 = vunpack.c.l.b16 %v361
        %v1338 = vunpack.c.h.b16 %v361
        %v1339 = vunpack.c.l.b16 %v362
        %v1340 = vunpack.c.h.b16 %v362
        %v1341 = vunpack.c.l.b16 %v363
        %v1342 = vunpack.c.h.b16 %v363
        %v1343 = vunpack.c.l.b16 %v364
        %v1344 = vunpack.c.h.b16 %v364
        %v1345 = vunpack.c.l.b16 %v365
        %v1346 = vunpack.c.h.b16 %v365
        %v1347 = vunpack.c.l.b16 %v366
        %v1348 = vunpack.c.h.b16 %v366
        %v1349 = vunpack.c.l.b16 %v367
        %v1350 = vunpack.c.h.b16 %v367
        %v1351 = vunpack.c.l.b16 %v368
        %v1352 = vunpack.c.h.b16 %v368
        %v1353 = vunpack.c.l.b16 %v369
        %v1354 = vunpack.c.h.b16 %v369
        %v1355 = vunpack.c.l.b16 %v370
        %v1356 = vunpack.c.h.b16 %v370
        %v1357 = vunpack.c.l.b16 %v371
        %v1358 = vunpack.c.h.b16 %v371
        %v1359 = vunpack.c.l.b16 %v372
        %v1360 = vunpack.c.h.b16 %v372
        %v1361 = vunpack.c.l.b16 %v373
        %v1362 = vunpack.c.h.b16 %v373
        %v1363 = vunpack.c.l.b16 %v374
        %v1364 = vunpack.c.h.b16 %v374
        %v1365 = vunpack.c.l.b16 %v375
        %v1366 = vunpack.c.h.b16 %v375
        %v1367 = vunpack.c.l.b16 %v376
        %v1368 = vunpack.c.h.b16 %v376
        %v1369 = vunpack.c.l.b16 %v377
        %v1370 = vunpack.c.h.b16 %v377
        %v1371 = vunpack.c.l.b16 %v378
        %v1372 = vunpack.c.h.b16 %v378
        %v1373 = vunpack.c.l.b16 %v379
        %v1374 = vunpack.c.h.b16 %v379
        %v1375 = vunpack.c.l.b16 %v380
        %v1376 = vunpack.c.h.b16 %v380
        %v1377 = vunpack.c.l.b16 %v381
        %v1378 = vunpack.c.h.b16 %v381
        %v1379 = vunpack.c.l.b16 %v382
        %v1380 = vunpack.c.h.b16 %v382
        %v1381 = vunpack.c.l.b16 %v383
        %v1382 = vunpack.c.h.b16 %v383
        %v1383 = vunpack.c.l.b16 %v384
        %v1384 = vunpack.c.h.b16 %v384
        %v1385 = vunpack.c.l.b16 %v385
        %v1386 = vunpack.c.h.b16 %v385
        %v1387 = vunpack.c.l.b16 %v386
        %v1388 = vunpack.c.h.b16 %v386
        %v1389 = vunpack.c.l.b16 %v387
        %v1390 = vunpack.c.h.b16 %v387
        %v1391 = vunpack.c.l.b16 %v388
        %v1392 = vunpack.c.h.b16 %v388
        %v1393 = vunpack.c.l.b16 %v389
        %v1394 = vunpack.c.h.b16 %v389
        %v1395 = vunpack.c.l.b16 %v390
        %v1396 = vunpack.c.h.b16 %v390
        %v1397 = vunpack.c.l.b16 %v391
        %v1398 = vunpack.c.h.b16 %v391
        %v1399 = vunpack.c.l.b16 %v392
        %v1400 = vunpack.c.h.b16 %v392
        %v1401 = vunpack.c.l.b16 %v393
        %v1402 = vunpack.c.h.b16 %v393
        %v1403 = vunpack.c.l.b16 %v394
        %v1404 = vunpack.c.h.b16 %v394
        %v1405 = vunpack.c.l.b16 %v395
        %v1406 = vunpack.c.h.b16 %v395
        %v1407 = vunpack.c.l.b16 %v396
        %v1408 = vunpack.c.h.b16 %v396
        %v1409 = vunpack.c.l.b16 %v397
        %v1410 = vunpack.c.h.b16 %v397
        %v1411 = vunpack.c.l.b16 %v398
        %v1412 = vunpack.c.h.b16 %v398
        %v1413 = vunpack.c.l.b16 %v399
        %v1414 = vunpack.c.h.b16 %v399
        %v1415 = vunpack.c.l.b16 %v400
        %v1416 = vunpack.c.h.b16 %v400
        %v1417 = vunpack.c.l.b16 %v401
        %v1418 = vunpack.c.h.b16 %v401
        %v1419 = vunpack.c.l.b16 %v402
        %v1420 = vunpack.c.h.b16 %v402
        %v1421 = vunpack.c.l.b16 %v403
        %v1422 = vunpack.c.h.b16 %v403
        %v1423 = vunpack.c.l.b16 %v404
        %v1424 = vunpack.c.h.b16 %v404
        %v1425 = vunpack.c.l.b16 %v405
        %v1426 = vunpack.c.h.b16 %v405
        %v1427 = vunpack.c.l.b16 %v406
        %v1428 = vunpack.c.h.b16 %v406
        %v1429 = vunpack.c.l.b16 %v407
        %v1430 = vunpack.c.h.b16 %v407
        %v1431 = vunpack.c.l.b16 %v408
        %v1432 = vunpack.c.h.b16 %v408
        %v1433 = vunpack.c.l.b16 %v409
        %v1434 = vunpack.c.h.b16 %v409
        %v1435 = vunpack.c.l.b16 %v410
        %v1436 = vunpack.c.h.b16 %v410
        %v1437 = vunpack.c.l.b16 %v411
        %v1438 = vunpack.c.h.b16 %v411
        %v1439 = vunpack.c.l.b16 %v412
        %v1440 = vunpack.c.h.b16 %v412
        %v1441 = vunpack.c.l.b16 %v413
        %v1442 = vunpack.c.h.b16 %v413
        %v1443 = vunpack.c.l.b16 %v414
        %v1444 = vunpack.c.h.b16 %v414
        %v1445 = vunpack.c.l.b16 %v415
        %v1446 = vunpack.c.h.b16 %v415
        %v1447 = vunpack.c.l.b16 %v416
        %v1448 = vunpack.c.h.b16 %v416
        %v1449 = vunpack.c.l.b16 %v417
        %v1450 = vunpack.c.h.b16 %v417
        %v1451 = vunpack.c.l.b16 %v418
        %v1452 = vunpack.c.h.b16 %v418
        %v1453 = vunpack.c.l.b16 %v419
        %v1454 = vunpack.c.h.b16 %v419
        %v1455 = vunpack.c.l.b16 %v420
        %v1456 = vunpack.c.h.b16 %v420
        %v1457 = vunpack.c.l.b16 %v421
        %v1458 = vunpack.c.h.b16 %v421
        %v1459 = vunpack.c.l.b16 %v422
        %v1460 = vunpack.c.h.b16 %v422
        %v1461 = vunpack.c.l.b16 %v423
        %v1462 = vunpack.c.h.b16 %v423
        %v1463 = vunpack.c.l.b16 %v424
        %v1464 = vunpack.c.h.b16 %v424
        %v1465 = vunpack.c.l.b16 %v425
        %v1466 = vunpack.c.h.b16 %v425
        %v1467 = vunpack.c.l.b16 %v426
        %v1468 = vunpack.c.h.b16 %v426
        %v1469 = vunpack.c.l.b16 %v427
        %v1470 = vunpack.c.h.b16 %v427
        %v1471 = vunpack.c.l.b16 %v428
        %v1472 = vunpack.c.h.b16 %v428
        %v1473 = vunpack.c.l.b16 %v429
        %v1474 = vunpack.c.h.b16 %v429
        %v1475 = vunpack.c.l.b16 %v430
        %v1476 = vunpack.c.h.b16 %v430
        %v1477 = vunpack.c.l.b16 %v431
        %v1478 = vunpack.c.h.b16 %v431
        %v1479 = vunpack.c.l.b16 %v432
        %v1480 = vunpack.c.h.b16 %v432
        %v1481 = vunpack.c.l.b16 %v433
        %v1482 = vunpack.c.h.b16 %v433
        %v1483 = vunpack.c.l.b16 %v434
        %v1484 = vunpack.c.h.b16 %v434
        %v1485 = vunpack.c.l.b16 %v435
        %v1486 = vunpack.c.h.b16 %v435
        %v1487 = vunpack.c.l.b16 %v436
        %v1488 = vunpack.c.h.b16 %v436
        %v1489 = vunpack.c.l.b16 %v437
        %v1490 = vunpack.c.h.b16 %v437
        %v1491 = vunpack.c.l.b16 %v438
        %v1492 = vunpack.c.h.b16 %v438
        %v1493 = vunpack.c.l.b16 %v439
        %v1494 = vunpack.c.h.b16 %v439
        %v1495 = vunpack.c.l.b16 %v440
        %v1496 = vunpack.c.h.b16 %v440
        %v1497 = vunpack.c.l.b16 %v441
        %v1498 = vunpack.c.h.b16 %v441
        %v1499 = vunpack.c.l.b16 %v442
        %v1500 = vunpack.c.h.b16 %v442
        %v1501 = vunpack.c.l.b16 %v443
        %v1502 = vunpack.c.h.b16 %v443
        %v1503 = vunpack.c.l.b16 %v444
        %v1504 = vunpack.c.h.b16 %v444
        %v1505 = vunpack.c.l.b16 %v445
        %v1506 = vunpack.c.h.b16 %v445
        %v1507 = vunpack.c.l.b16 %v446
        %v1508 = vunpack.c.h.b16 %v446
        %v1509 = vunpack.c.l.b16 %v447
        %v1510 = vunpack.c.h.b16 %v447
        %v1511 = vunpack.c.l.b16 %v448
        %v1512 = vunpack.c.h.b16 %v448
        %v1513 = vunpack.c.l.b16 %v449
        %v1514 = vunpack.c.h.b16 %v449
        %v1515 = vunpack.c.l.b16 %v450
        %v1516 = vunpack.c.h.b16 %v450
        %v1517 = vunpack.c.l.b16 %v451
        %v1518 = vunpack.c.h.b16 %v451
        %v1519 = vunpack.c.l.b16 %v452
        %v1520 = vunpack.c.h.b16 %v452
        %v1521 = vunpack.c.l.b16 %v453
        %v1522 = vunpack.c.h.b16 %v453
        %v1523 = vunpack.c.l.b16 %v454
        %v1524 = vunpack.c.h.b16 %v454
        %v1525 = vunpack.c.l.b16 %v455
        %v1526 = vunpack.c.h.b16 %v455
        %v1527 = vunpack.c.l.b16 %v456
        %v1528 = vunpack.c.h.b16 %v456
        %v1529 = vunpack.c.l.b16 %v457
        %v1530 = vunpack.c.h.b16 %v457
        %v1531 = vunpack.c.l.b16 %v458
        %v1532 = vunpack.c.h.b16 %v458
        %v1533 = vunpack.c.l.b16 %v459
        %v1534 = vunpack.c.h.b16 %v459
        %v1535 = vunpack.c.l.b16 %v460
        %v1536 = vunpack.c.h.b16 %v460
        %v1537 = vunpack.c.l.b16 %v461
        %v1538 = vunpack.c.h.b16 %v461
        %v1539 = vunpack.c.l.b16 %v462
        %v1540 = vunpack.c.h.b16 %v462
        %v1541 = vunpack.c.l.b16 %v463
        %v1542 = vunpack.c.h.b16 %v463
        %v1543 = vunpack.c.l.b16 %v464
        %v1544 = vunpack.c.h.b16 %v464
        %v1545 = vunpack.c.l.b16 %v465
        %v1546 = vunpack.c.h.b16 %v465
        %v1547 = vunpack.c.l.b16 %v466
        %v1548 = vunpack.c.h.b16 %v466
        %v1549 = vunpack.c.l.b16 %v467
        %v1550 = vunpack.c.h.b16 %v467
        %v1551 = vunpack.c.l.b16 %v468
        %v1552 = vunpack.c.h.b16 %v468
        %v1553 = vunpack.c.l.b16 %v469
        %v1554 = vunpack.c.h.b16 %v469
        %v1555 = vunpack.c.l.b16 %v470
        %v1556 = vunpack.c.h.b16 %v470
        %v1557 = vunpack.c.l.b16 %v471
        %v1558 = vunpack.c.h.b16 %v471
        %v1559 = vunpack.c.l.b16 %v472
        %v1560 = vunpack.c.h.b16 %v472
        %v1561 = vunpack.c.l.b16 %v473
        %v1562 = vunpack.c.h.b16 %v473
        %v1563 = vunpack.c.l.b16 %v474
        %v1564 = vunpack.c.h.b16 %v474
        %v1565 = vunpack.c.l.b16 %v475
        %v1566 = vunpack.c.h.b16 %v475
        %v1567 = vunpack.c.l.b16 %v476
        %v1568 = vunpack.c.h.b16 %v476
        %v1569 = vunpack.c.l.b16 %v477
        %v1570 = vunpack.c.h.b16 %v477
        %v1571 = vunpack.c.l.b16 %v478
        %v1572 = vunpack.c.h.b16 %v478
        %v1573 = vunpack.c.l.b16 %v479
        %v1574 = vunpack.c.h.b16 %v479
        %v1575 = vunpack.c.l.b16 %v480
        %v1576 = vunpack.c.h.b16 %v480
        %v1577 = vunpack.c.l.b16 %v481
        %v1578 = vunpack.c.h.b16 %v481
        %v1579 = vunpack.c.l.b16 %v482
        %v1580 = vunpack.c.h.b16 %v482
        %v1581 = vunpack.c.l.b16 %v483
        %v1582 = vunpack.c.h.b16 %v483
        %v1583 = vunpack.c.l.b16 %v484
        %v1584 = vunpack.c.h.b16 %v484
        %v1585 = vunpack.c.l.b16 %v485
        %v1586 = vunpack.c.h.b16 %v485
        %v1587 = vunpack.c.l.b16 %v486
        %v1588 = vunpack.c.h.b16 %v486
        %v1589 = vunpack.c.l.b16 %v487
        %v1590 = vunpack.c.h.b16 %v487
        %v1591 = vunpack.c.l.b16 %v488
        %v1592 = vunpack.c.h.b16 %v488
        %v1593 = vunpack.c.l.b16 %v489
        %v1594 = vunpack.c.h.b16 %v489
        %v1595 = vunpack.c.l.b16 %v490
        %v1596 = vunpack.c.h.b16 %v490
        %v1597 = vunpack.c.l.b16 %v491
        %v1598 = vunpack.c.h.b16 %v491
        %v1599 = vunpack.c.l.b16 %v492
        %v1600 = vunpack.c.h.b16 %v492
        %v1601 = vunpack.c.l.b16 %v493
        %v1602 = vunpack.c.h.b16 %v493
        %v1603 = vunpack.c.l.b16 %v494
        %v1604 = vunpack.c.h.b16 %v494
        %v1605 = vunpack.c.l.b16 %v495
        %v1606 = vunpack.c.h.b16 %v495
        %v1607 = vunpack.c.l.b16 %v496
        %v1608 = vunpack.c.h.b16 %v496
        %v1609 = vunpack.c.l.b16 %v497
        %v1610 = vunpack.c.h.b16 %v497
        %v1611 = vunpack.c.l.b16 %v498
        %v1612 = vunpack.c.h.b16 %v498
        %v1613 = vunpack.c.l.b16 %v499
        %v1614 = vunpack.c.h.b16 %v499
        %v1615 = vunpack.c.l.b16 %v500
        %v1616 = vunpack.c.h.b16 %v500
        %v1617 = vunpack.c.l.b16 %v501
        %v1618 = vunpack.c.h.b16 %v501
        %v1619 = vunpack.c.l.b16 %v502
        %v1620 = vunpack.c.h.b16 %v502
        %v1621 = vunpack.c.l.b16 %v503
        %v1622 = vunpack.c.h.b16 %v503
        %v1623 = vunpack.c.l.b16 %v504
        %v1624 = vunpack.c.h.b16 %v504
        %v1625 = vunpack.c.l.b16 %v505
        %v1626 = vunpack.c.h.b16 %v505
        %v1627 = vunpack.c.l.b16 %v506
        %v1628 = vunpack.c.h.b16 %v506
        %v1629 = vunpack.c.l.b16 %v507
        %v1630 = vunpack.c.h.b16 %v507
        %v1631 = vunpack.c.l.b16 %v508
        %v1632 = vunpack.c.h.b16 %v508
        %v1633 = vunpack.c.l.b16 %v509
        %v1634 = vunpack.c.h.b16 %v509
        %v1635 = vunpack.c.l.b16 %v510
        %v1636 = vunpack.c.h.b16 %v510
        %v1637 = vunpack.c.l.b16 %v511
        %v1638 = vunpack.c.h.b16 %v511
        %v1639 = vunpack.c.l.b16 %v512
        %v1640 = vunpack.c.h.b16 %v512
        %v1641 = vunpack.c.l.b16 %v513
        %v1642 = vunpack.c.h.b16 %v513
        %v1643 = vunpack.c.l.b16 %v514
        %v1644 = vunpack.c.h.b16 %v514
        %v1645 = vunpack.c.l.b16 %v515
        %v1646 = vunpack.c.h.b16 %v515
        %v1647 = vunpack.c.l.b16 %v516
        %v1648 = vunpack.c.h.b16 %v516
        %v1649 = vunpack.c.l.b16 %v517
        %v1650 = vunpack.c.h.b16 %v517
        %v1651 = vunpack.c.l.b16 %v518
        %v1652 = vunpack.c.h.b16 %v518
        %v1653 = vunpack.c.l.b16 %v519
        %v1654 = vunpack.c.h.b16 %v519
        %v1655 = vunpack.c.l.b16 %v520
        %v1656 = vunpack.c.h.b16 %v520
        %v1657 = vunpack.c.l.b16 %v521
        %v1658 = vunpack.c.h.b16 %v521
        %v1659 = vunpack.c.l.b16 %v522
        %v1660 = vunpack.c.h.b16 %v522
        %v1661 = vunpack.c.l.b16 %v523
        %v1662 = vunpack.c.h.b16 %v523
        %v1663 = vunpack.c.l.b16 %v524
        %v1664 = vunpack.c.h.b16 %v524
        %v1665 = vunpack.c.l.b16 %v525
        %v1666 = vunpack.c.h.b16 %v525
        %v1667 = vunpack.c.l.b16 %v526
        %v1668 = vunpack.c.h.b16 %v526
        %v1669 = vunpack.c.l.b16 %v527
        %v1670 = vunpack.c.h.b16 %v527
        %v1671 = vunpack.c.l.b16 %v528
        %v1672 = vunpack.c.h.b16 %v528
        %v1673 = vunpack.c.l.b16 %v529
        %v1674 = vunpack.c.h.b16 %v529
        %v1675 = vunpack.c.l.b16 %v530
        %v1676 = vunpack.c.h.b16 %v530
        %v1677 = vunpack.c.l.b16 %v531
        %v1678 = vunpack.c.h.b16 %v531
        %v1679 = vunpack.c.l.b16 %v532
        %v1680 = vunpack.c.h.b16 %v532
        %v1681 = vunpack.c.l.b16 %v533
        %v1682 = vunpack.c.h.b16 %v533
        %v1683 = vunpack.c.l.b16 %v534
        %v1684 = vunpack.c.h.b16 %v534
        %v1685 = vunpack.c.l.b16 %v535
        %v1686 = vunpack.c.h.b16 %v535
        %v1687 = vunpack.c.l.b16 %v536
        %v1688 = vunpack.c.h.b16 %v536
        %v1689 = vunpack.c.l.b16 %v537
        %v1690 = vunpack.c.h.b16 %v537
        %v1691 = vunpack.c.l.b16 %v538
        %v1692 = vunpack.c.h.b16 %v538
        %v1693 = vunpack.c.l.b16 %v539
        %v1694 = vunpack.c.h.b16 %v539
        %v1695 = vunpack.c.l.b16 %v540
        %v1696 = vunpack.c.h.b16 %v540
        %v1697 = vunpack.c.l.b16 %v541
        %v1698 = vunpack.c.h.b16 %v541
        %v1699 = vunpack.c.l.b16 %v542
        %v1700 = vunpack.c.h.b16 %v542
        %v1701 = vunpack.c.l.b16 %v543
        %v1702 = vunpack.c.h.b16 %v543
        %v1703 = vunpack.c.l.b16 %v544
        %v1704 = vunpack.c.h.b16 %v544
        %v1705 = vunpack.c.l.b16 %v545
        %v1706 = vunpack.c.h.b16 %v545
        %v1707 = vunpack.c.l.b16 %v546
        %v1708 = vunpack.c.h.b16 %v546
        %v1709 = vunpack.c.l.b16 %v547
        %v1710 = vunpack.c.h.b16 %v547
        %v1711 = vunpack.c.l.b16 %v548
        %v1712 = vunpack.c.h.b16 %v548
        %v1713 = vunpack.c.l.b16 %v549
        %v1714 = vunpack.c.h.b16 %v549
        %v1715 = vunpack.c.l.b16 %v550
        %v1716 = vunpack.c.h.b16 %v550
        %v1717 = vunpack.c.l.b16 %v551
        %v1718 = vunpack.c.h.b16 %v551
        %v1719 = vunpack.c.l.b16 %v552
        %v1720 = vunpack.c.h.b16 %v552
        %v1721 = vunpack.c.l.b16 %v553
        %v1722 = vunpack.c.h.b16 %v553
        %v1723 = vunpack.c.l.b16 %v554
        %v1724 = vunpack.c.h.b16 %v554
        %v1725 = vunpack.c.l.b16 %v555
        %v1726 = vunpack.c.h.b16 %v555
        %v1727 = vunpack.c.l.b16 %v556
        %v1728 = vunpack.c.h.b16 %v556
        %v1729 = vunpack.c.l.b16 %v557
        %v1730 = vunpack.c.h.b16 %v557
        %v1731 = vunpack.c.l.b16 %v558
        %v1732 = vunpack.c.h.b16 %v558
        %v1733 = vunpack.c.l.b16 %v559
        %v1734 = vunpack.c.h.b16 %v559
        %v1735 = vunpack.c.l.b16 %v560
        %v1736 = vunpack.c.h.b16 %v560
        %v1737 = vunpack.c.l.b16 %v561
        %v1738 = vunpack.c.h.b16 %v561
        %v1739 = vunpack.c.l.b16 %v562
        %v1740 = vunpack.c.h.b16 %v562
        %v1741 = vunpack.c.l.b16 %v563
        %v1742 = vunpack.c.h.b16 %v563
        %v1743 = vunpack.c.l.b16 %v564
        %v1744 = vunpack.c.h.b16 %v564
        %v1745 = vunpack.c.l.b16 %v565
        %v1746 = vunpack.c.h.b16 %v565
        %v1747 = vunpack.c.l.b16 %v566
        %v1748 = vunpack.c.h.b16 %v566
        %v1749 = vunpack.c.l.b16 %v567
        %v1750 = vunpack.c.h.b16 %v567
        %v1751 = vunpack.c.l.b16 %v568
        %v1752 = vunpack.c.h.b16 %v568
        %v1753 = vunpack.c.l.b16 %v569
        %v1754 = vunpack.c.h.b16 %v569
        %v1755 = vunpack.c.l.b16 %v570
        %v1756 = vunpack.c.h.b16 %v570
        %v1757 = vunpack.c.l.b16 %v571
        %v1758 = vunpack.c.h.b16 %v571
        %v1759 = vunpack.c.l.b16 %v572
        %v1760 = vunpack.c.h.b16 %v572
        %v1761 = vunpack.c.l.b16 %v573
        %v1762 = vunpack.c.h.b16 %v573
        %v1763 = vunpack.c.l.b16 %v574
        %v1764 = vunpack.c.h.b16 %v574
        %v1765 = vunpack.c.l.b16 %v575
        %v1766 = vunpack.c.h.b16 %v575
        %v1767 = vunpack.c.l.b16 %v576
        %v1768 = vunpack.c.h.b16 %v576
        %v1769 = vunpack.c.l.b16 %v577
        %v1770 = vunpack.c.h.b16 %v577
        %v1771 = vunpack.c.l.b16 %v578
        %v1772 = vunpack.c.h.b16 %v578
        %v1773 = vunpack.c.l.b16 %v579
        %v1774 = vunpack.c.h.b16 %v579
        %v1775 = vunpack.c.l.b16 %v580
        %v1776 = vunpack.c.h.b16 %v580
        %v1777 = vunpack.c.l.b16 %v581
        %v1778 = vunpack.c.h.b16 %v581
        %v1779 = vunpack.c.l.b16 %v582
        %v1780 = vunpack.c.h.b16 %v582
        %v1781 = vunpack.c.l.b16 %v583
        %v1782 = vunpack.c.h.b16 %v583
        %v1783 = vunpack.c.l.b16 %v584
        %v1784 = vunpack.c.h.b16 %v584
        %v1785 = vunpack.c.l.b16 %v585
        %v1786 = vunpack.c.h.b16 %v585
        %v1787 = vunpack.c.l.b16 %v586
        %v1788 = vunpack.c.h.b16 %v586
        %v1789 = vunpack.c.l.b16 %v587
        %v1790 = vunpack.c.h.b16 %v587
        %v1791 = vunpack.c.l.b16 %v588
        %v1792 = vunpack.c.h.b16 %v588
        %v1793 = vunpack.c.l.b16 %v589
        %v1794 = vunpack.c.h.b16 %v589
        %v1795 = vunpack.c.l.b16 %v590
        %v1796 = vunpack.c.h.b16 %v590
        %v1797 = vunpack.c.l.b16 %v591
        %v1798 = vunpack.c.h.b16 %v591
        %v1799 = vunpack.c.l.b16 %v592
        %v1800 = vunpack.c.h.b16 %v592
        %v1801 = vunpack.c.l.b16 %v593
        %v1802 = vunpack.c.h.b16 %v593
        %v1803 = vunpack.c.l.b16 %v594
        %v1804 = vunpack.c.h.b16 %v594
        %v1805 = vunpack.c.l.b16 %v595
        %v1806 = vunpack.c.h.b16 %v595
        %v1807 = vunpack.c.l.b16 %v596
        %v1808 = vunpack.c.h.b16 %v596
        %v1809 = vunpack.c.l.b16 %v597
        %v1810 = vunpack.c.h.b16 %v597
        %v1811 = vunpack.c.l.b16 %v598
        %v1812 = vunpack.c.h.b16 %v598
        %v1813 = vunpack.c.l.b16 %v599
        %v1814 = vunpack.c.h.b16 %v599
        %v1815 = vunpack.c.l.b16 %v600
        %v1816 = vunpack.c.h.b16 %v600
        %v1817 = vunpack.c.l.b16 %v601
        %v1818 = vunpack.c.h.b16 %v601
        %v1819 = vunpack.c.l.b16 %v602
        %v1820 = vunpack.c.h.b16 %v602
        %v1821 = vunpack.c.l.b16 %v603
        %v1822 = vunpack.c.h.b16 %v603
        %v1823 = vunpack.c.l.b16 %v604
        %v1824 = vunpack.c.h.b16 %v604
        %v1825 = vunpack.c.l.b16 %v605
        %v1826 = vunpack.c.h.b16 %v605
        %v1827 = vunpack.c.l.b16 %v606
        %v1828 = vunpack.c.h.b16 %v606
        %v1829 = vunpack.c.l.b16 %v607
        %v1830 = vunpack.c.h.b16 %v607
        %v1831 = vunpack.c.l.b16 %v608
        %v1832 = vunpack.c.h.b16 %v608
        %v1833 = vunpack.c.l.b16 %v609
        %v1834 = vunpack.c.h.b16 %v609
        %v1835 = vunpack.c.l.b16 %v610
        %v1836 = vunpack.c.h.b16 %v610
        %v1837 = vunpack.c.l.b16 %v611
        %v1838 = vunpack.c.h.b16 %v611
        %v1839 = vunpack.c.l.b16 %v612
        %v1840 = vunpack.c.h.b16 %v612
        %v1841 = vunpack.c.l.b16 %v613
        %v1842 = vunpack.c.h.b16 %v613
        %v1843 = vunpack.c.l.b16 %v614
        %v1844 = vunpack.c.h.b16 %v614
        %v1845 = vunpack.c.l.b16 %v615
        %v1846 = vunpack.c.h.b16 %v615
        %v1847 = vunpack.c.l.b16 %v616
        %v1848 = vunpack.c.h.b16 %v616
        %v1849 = vunpack.c.l.b16 %v617
        %v1850 = vunpack.c.h.b16 %v617
        %v1851 = vunpack.c.l.b16 %v618
        %v1852 = vunpack.c.h.b16 %v618
        %v1853 = vunpack.c.l.b16 %v619
        %v1854 = vunpack.c.h.b16 %v619
        %v1855 = vunpack.c.l.b16 %v620
        %v1856 = vunpack.c.h.b16 %v620
        %v1857 = vunpack.c.l.b16 %v621
        %v1858 = vunpack.c.h.b16 %v621
        %v1859 = vunpack.c.l.b16 %v622
        %v1860 = vunpack.c.h.b16 %v622
        %v1861 = vunpack.c.l.b16 %v623
        %v1862 = vunpack.c.h.b16 %v623
        %v1863 = vunpack.c.l.b16 %v624
        %v1864 = vunpack.c.h.b16 %v624
        %v1865 = vunpack.c.l.b16 %v625
        %v1866 = vunpack.c.h.b16 %v625
        %v1867 = vunpack.c.l.b16 %v626
        %v1868 = vunpack.c.h.b16 %v626
        %v1869 = vunpack.c.l.b16 %v627
        %v1870 = vunpack.c.h.b16 %v627
        %v1871 = vunpack.c.l.b16 %v628
        %v1872 = vunpack.c.h.b16 %v628
        %v1873 = vunpack.c.l.b16 %v629
        %v1874 = vunpack.c.h.b16 %v629
        %v1875 = vunpack.c.l.b16 %v630
        %v1876 = vunpack.c.h.b16 %v630
        %v1877 = vunpack.c.l.b16 %v631
        %v1878 = vunpack.c.h.b16 %v631
        %v1879 = vunpack.c.l.b16 %v632
        %v1880 = vunpack.c.h.b16 %v632
        %v1881 = vunpack.c.l.b16 %v633
        %v1882 = vunpack.c.h.b16 %v633
        %v1883 = vunpack.c.l.b16 %v634
        %v1884 = vunpack.c.h.b16 %v634
        %v1885 = vunpack.c.l.b16 %v635
        %v1886 = vunpack.c.h.b16 %v635
        %v1887 = vunpack.c.l.b16 %v636
        %v1888 = vunpack.c.h.b16 %v636
        %v1889 = vunpack.c.l.b16 %v637
        %v1890 = vunpack.c.h.b16 %v637
        %v1891 = vunpack.c.l.b16 %v638
        %v1892 = vunpack.c.h.b16 %v638
        %v1893 = vunpack.c.l.b16 %v639
        %v1894 = vunpack.c.h.b16 %v639
        %v1895 = vunpack.c.l.b16 %v640
        %v1896 = vunpack.c.h.b16 %v640
        %v1897 = vunpack.c.l.b16 %v641
        %v1898 = vunpack.c.h.b16 %v641
        %v1899 = vunpack.c.l.b16 %v642
        %v1900 = vunpack.c.h.b16 %v642
        %v1901 = vunpack.c.l.b16 %v643
        %v1902 = vunpack.c.h.b16 %v643
        %v1903 = vunpack.c.l.b16 %v644
        %v1904 = vunpack.c.h.b16 %v644
        %v1905 = vunpack.c.l.b16 %v645
        %v1906 = vunpack.c.h.b16 %v645
        %v1907 = vunpack.c.l.b16 %v646
        %v1908 = vunpack.c.h.b16 %v646
        %v1909 = vunpack.c.l.b16 %v647
        %v1910 = vunpack.c.h.b16 %v647
        %v1911 = vunpack.c.l.b16 %v648
        %v1912 = vunpack.c.h.b16 %v648
        %v1913 = vunpack.c.l.b16 %v649
        %v1914 = vunpack.c.h.b16 %v649
        %v1915 = vunpack.c.l.b16 %v650
        %v1916 = vunpack.c.h.b16 %v650
        %v1917 = vunpack.c.l.b16 %v651
        %v1918 = vunpack.c.h.b16 %v651
        %v1919 = vunpack.c.l.b16 %v652
        %v1920 = vunpack.c.h.b16 %v652
        %v1921 = vunpack.c.l.b16 %v653
        %v1922 = vunpack.c.h.b16 %v653
        %v1923 = vunpack.c.l.b16 %v654
        %v1924 = vunpack.c.h.b16 %v654
        %v1925 = vunpack.c.l.b16 %v655
        %v1926 = vunpack.c.h.b16 %v655
        %v1927 = vunpack.c.l.b16 %v656
        %v1928 = vunpack.c.h.b16 %v656
        %v1929 = vunpack.c.l.b16 %v657
        %v1930 = vunpack.c.h.b16 %v657
        %v1931 = vunpack.c.l.b16 %v658
        %v1932 = vunpack.c.h.b16 %v658
        %v1933 = vunpack.c.l.b16 %v659
        %v1934 = vunpack.c.h.b16 %v659
        %v1935 = vunpack.c.l.b16 %v660
        %v1936 = vunpack.c.h.b16 %v660
        %v1937 = vunpack.c.l.b16 %v661
        %v1938 = vunpack.c.h.b16 %v661
        %v1939 = vunpack.c.l.b16 %v662
        %v1940 = vunpack.c.h.b16 %v662
        %v1941 = vunpack.c.l.b16 %v663
        %v1942 = vunpack.c.h.b16 %v663
        %v1943 = vunpack.c.l.b16 %v664
        %v1944 = vunpack.c.h.b16 %v664
        %v1945 = vunpack.c.l.b16 %v665
        %v1946 = vunpack.c.h.b16 %v665
        %v1947 = vunpack.c.l.b16 %v666
        %v1948 = vunpack.c.h.b16 %v666
        %v1949 = vunpack.c.l.b16 %v667
        %v1950 = vunpack.c.h.b16 %v667
        %v1951 = vunpack.c.l.b16 %v668
        %v1952 = vunpack.c.h.b16 %v668
        %v1953 = vunpack.c.l.b16 %v669
        %v1954 = vunpack.c.h.b16 %v669
        %v1955 = vunpack.c.l.b16 %v670
        %v1956 = vunpack.c.h.b16 %v670
        %v1957 = vunpack.c.l.b16 %v671
        %v1958 = vunpack.c.h.b16 %v671
        %v1959 = vunpack.c.l.b16 %v672
        %v1960 = vunpack.c.h.b16 %v672
        %v1961 = vunpack.c.l.b16 %v673
        %v1962 = vunpack.c.h.b16 %v673
        %v1963 = vunpack.c.l.b16 %v674
        %v1964 = vunpack.c.h.b16 %v674
        %v1965 = vunpack.c.l.b16 %v675
        %v1966 = vunpack.c.h.b16 %v675
        %v1967 = vunpack.c.l.b16 %v676
        %v1968 = vunpack.c.h.b16 %v676
        %v1969 = vunpack.c.l.b16 %v677
        %v1970 = vunpack.c.h.b16 %v677
        %v1971 = vunpack.c.l.b16 %v678
        %v1972 = vunpack.c.h.b16 %v678
        %v1973 = vunpack.c.l.b16 %v679
        %v1974 = vunpack.c.h.b16 %v679
        %v1975 = vunpack.c.l.b16 %v680
        %v1976 = vunpack.c.h.b16 %v680
        %v1977 = vunpack.c.l.b16 %v681
        %v1978 = vunpack.c.h.b16 %v681
        %v1979 = vunpack.c.l.b16 %v682
        %v1980 = vunpack.c.h.b16 %v682
        %v1981 = vunpack.c.l.b16 %v683
        %v1982 = vunpack.c.h.b16 %v683
        %v1983 = vunpack.c.l.b16 %v684
        %v1984 = vunpack.c.h.b16 %v684
        %v1985 = vunpack.c.l.b16 %v685
        %v1986 = vunpack.c.h.b16 %v685
        %v1987 = vunpack.c.l.b16 %v686
        %v1988 = vunpack.c.h.b16 %v686
        %v1989 = vunpack.c.l.b16 %v687
        %v1990 = vunpack.c.h.b16 %v687
        %v1991 = vunpack.c.l.b16 %v688
        %v1992 = vunpack.c.h.b16 %v688
        %v1993 = vunpack.c.l.b16 %v689
        %v1994 = vunpack.c.h.b16 %v689
        %v1995 = vunpack.c.l.b16 %v690
        %v1996 = vunpack.c.h.b16 %v690
        %v1997 = vunpack.c.l.b16 %v691
        %v1998 = vunpack.c.h.b16 %v691
        %v1999 = vunpack.c.l.b16 %v692
        %v2000 = vunpack.c.h.b16 %v692
        %v2001 = vunpack.c.l.b16 %v693
        %v2002 = vunpack.c.h.b16 %v693
        %v2003 = vunpack.c.l.b16 %v694
        %v2004 = vunpack.c.h.b16 %v694
        %v2005 = vunpack.c.l.b16 %v695
        %v2006 = vunpack.c.h.b16 %v695
        %v2007 = vunpack.c.l.b16 %v696
        %v2008 = vunpack.c.h.b16 %v696
        %v2009 = vunpack.c.l.b16 %v697
        %v2010 = vunpack.c.h.b16 %v697
        %v2011 = vunpack.c.l.b16 %v698
        %v2012 = vunpack.c.h.b16 %v698
        %v2013 = vunpack.c.l.b16 %v699
        %v2014 = vunpack.c.h.b16 %v699
        %v2015 = vunpack.c.l.b16 %v700
        %v2016 = vunpack.c.h.b16 %v700
        %v2017 = vunpack.c.l.b16 %v701
        %v2018 = vunpack.c.h.b16 %v701
        %v2019 = vunpack.c.l.b16 %v702
        %v2020 = vunpack.c.h.b16 %v702
        %v2021 = vunpack.c.l.b16 %v703
        %v2022 = vunpack.c.h.b16 %v703
        %v2023 = vunpack.c.l.b16 %v704
        %v2024 = vunpack.c.h.b16 %v704
        %v2025 = vunpack.c.l.b16 %v705
        %v2026 = vunpack.c.h.b16 %v705
        %v2027 = vunpack.c.l.b16 %v706
        %v2028 = vunpack.c.h.b16 %v706
        %v2029 = vunpack.c.l.b16 %v707
        %v2030 = vunpack.c.h.b16 %v707
        %v2031 = vunpack.c.l.b16 %v708
        %v2032 = vunpack.c.h.b16 %v708
        %v2033 = vunpack.c.l.b16 %v709
        %v2034 = vunpack.c.h.b16 %v709
        %v2035 = vunpack.c.l.b16 %v710
        %v2036 = vunpack.c.h.b16 %v710
        %v2037 = vunpack.c.l.b16 %v711
        %v2038 = vunpack.c.h.b16 %v711
        %v2039 = vunpack.c.l.b16 %v712
        %v2040 = vunpack.c.h.b16 %v712
        %v2041 = vunpack.c.l.b16 %v713
        %v2042 = vunpack.c.h.b16 %v713
        %v2043 = vunpack.c.l.b16 %v714
        %v2044 = vunpack.c.h.b16 %v714
        %v2045 = vunpack.c.l.b16 %v715
        %v2046 = vunpack.c.h.b16 %v715
        %v2047 = vunpack.c.l.b16 %v716
        %v2048 = vunpack.c.h.b16 %v716
        %v2049 = vunpack.c.l.b16 %v717
        %v2050 = vunpack.c.h.b16 %v717
        %v2051 = vunpack.c.l.b16 %v718
        %v2052 = vunpack.c.h.b16 %v718
        %v2053 = vunpack.c.l.b16 %v719
        %v2054 = vunpack.c.h.b16 %v719
        %v2055 = vunpack.c.l.b16 %v720
        %v2056 = vunpack.c.h.b16 %v720
        %v2057 = vunpack.c.l.b16 %v721
        %v2058 = vunpack.c.h.b16 %v721
        %v2059 = vunpack.c.l.b16 %v722
        %v2060 = vunpack.c.h.b16 %v722
        %v2061 = vunpack.c.l.b16 %v723
        %v2062 = vunpack.c.h.b16 %v723
        %v2063 = vunpack.c.l.b16 %v724
        %v2064 = vunpack.c.h.b16 %v724
        %v2065 = vunpack.c.l.b16 %v725
        %v2066 = vunpack.c.h.b16 %v725
        %v2067 = vunpack.c.l.b16 %v726
        %v2068 = vunpack.c.h.b16 %v726
        %v2069 = vunpack.c.l.b16 %v727
        %v2070 = vunpack.c.h.b16 %v727
        %v2071 = vunpack.c.l.b16 %v728
        %v2072 = vunpack.c.h.b16 %v728
        %v2073 = vunpack.c.l.b16 %v729
        %v2074 = vunpack.c.h.b16 %v729
        %v2075 = vunpack.c.l.b16 %v730
        %v2076 = vunpack.c.h.b16 %v730
        %v2077 = vunpack.c.l.b16 %v731
        %v2078 = vunpack.c.h.b16 %v731
        %v2079 = vunpack.c.l.b16 %v732
        %v2080 = vunpack.c.h.b16 %v732
        %v2081 = vunpack.c.l.b16 %v733
        %v2082 = vunpack.c.h.b16 %v733
        %v2083 = vunpack.c.l.b16 %v734
        %v2084 = vunpack.c.h.b16 %v734
        %v2085 = vunpack.c.l.b16 %v735
        %v2086 = vunpack.c.h.b16 %v735
        %v2087 = vunpack.c.l.b16 %v736
        %v2088 = vunpack.c.h.b16 %v736
        %v2089 = vunpack.c.l.b16 %v737
        %v2090 = vunpack.c.h.b16 %v737
        %v2091 = vunpack.c.l.b16 %v738
        %v2092 = vunpack.c.h.b16 %v738
        %v2093 = vunpack.c.l.b16 %v739
        %v2094 = vunpack.c.h.b16 %v739
        %v2095 = vunpack.c.l.b16 %v740
        %v2096 = vunpack.c.h.b16 %v740
        %v2097 = vunpack.c.l.b16 %v741
        %v2098 = vunpack.c.h.b16 %v741
        %v2099 = vunpack.c.l.b16 %v742
        %v2100 = vunpack.c.h.b16 %v742
        %v2101 = vunpack.c.l.b16 %v743
        %v2102 = vunpack.c.h.b16 %v743
        %v2103 = vunpack.c.l.b16 %v744
        %v2104 = vunpack.c.h.b16 %v744
        %v2105 = vunpack.c.l.b16 %v745
        %v2106 = vunpack.c.h.b16 %v745
        %v2107 = vunpack.c.l.b16 %v746
        %v2108 = vunpack.c.h.b16 %v746
        %v2109 = vunpack.c.l.b16 %v747
        %v2110 = vunpack.c.h.b16 %v747
        %v2111 = vunpack.c.l.b16 %v748
        %v2112 = vunpack.c.h.b16 %v748
        %v2113 = vunpack.c.l.b16 %v749
        %v2114 = vunpack.c.h.b16 %v749
        %v2115 = vunpack.c.l.b16 %v750
        %v2116 = vunpack.c.h.b16 %v750
        %v2117 = vunpack.c.l.b16 %v751
        %v2118 = vunpack.c.h.b16 %v751
        %v2119 = vunpack.c.l.b16 %v752
        %v2120 = vunpack.c.h.b16 %v752
        %v2121 = vunpack.c.l.b16 %v753
        %v2122 = vunpack.c.h.b16 %v753
        %v2123 = vunpack.c.l.b16 %v754
        %v2124 = vunpack.c.h.b16 %v754
        %v2125 = vunpack.c.l.b16 %v755
        %v2126 = vunpack.c.h.b16 %v755
        %v2127 = vunpack.c.l.b16 %v756
        %v2128 = vunpack.c.h.b16 %v756
        %v2129 = vunpack.c.l.b16 %v757
        %v2130 = vunpack.c.h.b16 %v757
        %v2131 = vunpack.c.l.b16 %v758
        %v2132 = vunpack.c.h.b16 %v758
        %v2133 = vunpack.c.l.b16 %v759
        %v2134 = vunpack.c.h.b16 %v759
        %v2135 = vunpack.c.l.b16 %v760
        %v2136 = vunpack.c.h.b16 %v760
        %v2137 = vunpack.c.l.b16 %v761
        %v2138 = vunpack.c.h.b16 %v761
        %v2139 = vunpack.c.l.b16 %v762
        %v2140 = vunpack.c.h.b16 %v762
        %v2141 = vunpack.c.l.b16 %v763
        %v2142 = vunpack.c.h.b16 %v763
        %v2143 = vunpack.c.l.b16 %v764
        %v2144 = vunpack.c.h.b16 %v764
        %v2145 = vunpack.c.l.b16 %v765
        %v2146 = vunpack.c.h.b16 %v765
        %v2147 = vunpack.c.l.b16 %v766
        %v2148 = vunpack.c.h.b16 %v766
        %v2149 = vunpack.c.l.b16 %v767
        %v2150 = vunpack.c.h.b16 %v767
        %v2151 = vunpack.c.l.b16 %v768
        %v2152 = vunpack.c.h.b16 %v768
        %v2153 = vunpack.c.l.b16 %v769
        %v2154 = vunpack.c.h.b16 %v769
        %v2155 = vunpack.c.l.b16 %v770
        %v2156 = vunpack.c.h.b16 %v770
        %v2157 = vpack.c.b16 %v1269, %v1261
        %v2158 = vpack.c.b16 %v1270, %v1262
        %v2159 = vpack.c.b16 %v1271, %v1263
        %v2160 = vpack.c.b16 %v1272, %v1264
        %v2161 = vpack.c.b16 %v1273, %v1265
        %v2162 = vpack.c.b16 %v1274, %v1266
        %v2163 = vpack.c.b16 %v1275, %v1267
        %v2164 = vpack.c.b16 %v1276, %v1268
        %v2165 = vpack.c.b16 %v1285, %v1277
        %v2166 = vpack.c.b16 %v1286, %v1278
        %v2167 = vpack.c.b16 %v1287, %v1279
        %v2168 = vpack.c.b16 %v1288, %v1280
        %v2169 = vpack.c.b16 %v1289, %v1281
        %v2170 = vpack.c.b16 %v1290, %v1282
        %v2171 = vpack.c.b16 %v1291, %v1283
        %v2172 = vpack.c.b16 %v1292, %v1284
        %v2173 = vpack.c.b16 %v1301, %v1293
        %v2174 = vpack.c.b16 %v1302, %v1294
        %v2175 = vpack.c.b16 %v1303, %v1295
        %v2176 = vpack.c.b16 %v1304, %v1296
        %v2177 = vpack.c.b16 %v1305, %v1297
        %v2178 = vpack.c.b16 %v1306, %v1298
        %v2179 = vpack.c.b16 %v1307, %v1299
        %v2180 = vpack.c.b16 %v1308, %v1300
        %v2181 = vpack.c.b16 %v1317, %v1309
        %v2182 = vpack.c.b16 %v1318, %v1310
        %v2183 = vpack.c.b16 %v1319, %v1311
        %v2184 = vpack.c.b16 %v1320, %v1312
        %v2185 = vpack.c.b16 %v1321, %v1313
        %v2186 = vpack.c.b16 %v1322, %v1314
        %v2187 = vpack.c.b16 %v1323, %v1315
        %v2188 = vpack.c.b16 %v1324, %v1316
        %v2189 = vpack.c.b16 %v1333, %v1325
        %v2190 = vpack.c.b16 %v1334, %v1326
        %v2191 = vpack.c.b16 %v1335, %v1327
        %v2192 = vpack.c.b16 %v1336, %v1328
        %v2193 = vpack.c.b16 %v1337, %v1329
        %v2194 = vpack.c.b16 %v1338, %v1330
        %v2195 = vpack.c.b16 %v1339, %v1331
        %v2196 = vpack.c.b16 %v1340, %v1332
        %v2197 = vpack.c.b16 %v1349, %v1341
        %v2198 = vpack.c.b16 %v1350, %v1342
        %v2199 = vpack.c.b16 %v1351, %v1343
        %v2200 = vpack.c.b16 %v1352, %v1344
        %v2201 = vpack.c.b16 %v1353, %v1345
        %v2202 = vpack.c.b16 %v1354, %v1346
        %v2203 = vpack.c.b16 %v1355, %v1347
        %v2204 = vpack.c.b16 %v1356, %v1348
        %v2205 = vpack.c.b16 %v1365, %v1357
        %v2206 = vpack.c.b16 %v1366, %v1358
        %v2207 = vpack.c.b16 %v1367, %v1359
        %v2208 = vpack.c.b16 %v1368, %v1360
        %v2209 = vpack.c.b16 %v1369, %v1361
        %v2210 = vpack.c.b16 %v1370, %v1362
        %v2211 = vpack.c.b16 %v1371, %v1363
        %v2212 = vpack.c.b16 %v1372, %v1364
        %v2213 = vpack.c.b16 %v1381, %v1373
        %v2214 = vpack.c.b16 %v1382, %v1374
        %v2215 = vpack.c.b16 %v1383, %v1375
        %v2216 = vpack.c.b16 %v1384, %v1376
        %v2217 = vpack.c.b16 %v1385, %v1377
        %v2218 = vpack.c.b16 %v1386, %v1378
        %v2219 = vpack.c.b16 %v1387, %v1379
        %v2220 = vpack.c.b16 %v1388, %v1380
        %v2221 = vpack.c.b16 %v1397, %v1389
        %v2222 = vpack.c.b16 %v1398, %v1390
        %v2223 = vpack.c.b16 %v1399, %v1391
        %v2224 = vpack.c.b16 %v1400, %v1392
        %v2225 = vpack.c.b16 %v1401, %v1393
        %v2226 = vpack.c.b16 %v1402, %v1394
        %v2227 = vpack.c.b16 %v1403, %v1395
        %v2228 = vpack.c.b16 %v1404, %v1396
        %v2229 = vpack.c.b16 %v1413, %v1405
        %v2230 = vpack.c.b16 %v1414, %v1406
        %v2231 = vpack.c.b16 %v1415, %v1407
        %v2232 = vpack.c.b16 %v1416, %v1408
        %v2233 = vpack.c.b16 %v1417, %v1409
        %v2234 = vpack.c.b16 %v1418, %v1410
        %v2235 = vpack.c.b16 %v1419, %v1411
        %v2236 = vpack.c.b16 %v1420, %v1412
        %v2237 = vpack.c.b16 %v1429, %v1421
        %v2238 = vpack.c.b16 %v1430, %v1422
        %v2239 = vpack.c.b16 %v1431, %v1423
        %v2240 = vpack.c.b16 %v1432, %v1424
        %v2241 = vpack.c.b16 %v1433, %v1425
        %v2242 = vpack.c.b16 %v1434, %v1426
        %v2243 = vpack.c.b16 %v1435, %v1427
        %v2244 = vpack.c.b16 %v1436, %v1428
        %v2245 = vpack.c.b16 %v1445, %v1437
        %v2246 = vpack.c.b16 %v1446, %v1438
        %v2247 = vpack.c.b16 %v1447, %v1439
        %v2248 = vpack.c.b16 %v1448, %v1440
        %v2249 = vpack.c.b16 %v1449, %v1441
        %v2250 = vpack.c.b16 %v1450, %v1442
        %v2251 = vpack.c.b16 %v1451, %v1443
        %v2252 = vpack.c.b16 %v1452, %v1444
        %v2253 = vpack.c.b16 %v1461, %v1453
        %v2254 = vpack.c.b16 %v1462, %v1454
        %v2255 = vpack.c.b16 %v1463, %v1455
        %v2256 = vpack.c.b16 %v1464, %v1456
        %v2257 = vpack.c.b16 %v1465, %v1457
        %v2258 = vpack.c.b16 %v1466, %v1458
        %v2259 = vpack.c.b16 %v1467, %v1459
        %v2260 = vpack.c.b16 %v1468, %v1460
        %v2261 = vpack.c.b16 %v1477, %v1469
        %v2262 = vpack.c.b16 %v1478, %v1470
        %v2263 = vpack.c.b16 %v1479, %v1471
        %v2264 = vpack.c.b16 %v1480, %v1472
        %v2265 = vpack.c.b16 %v1481, %v1473
        %v2266 = vpack.c.b16 %v1482, %v1474
        %v2267 = vpack.c.b16 %v1483, %v1475
        %v2268 = vpack.c.b16 %v1484, %v1476
        %v2269 = vpack.c.b16 %v1493, %v1485
        %v2270 = vpack.c.b16 %v1494, %v1486
        %v2271 = vpack.c.b16 %v1495, %v1487
        %v2272 = vpack.c.b16 %v1496, %v1488
        %v2273 = vpack.c.b16 %v1497, %v1489
        %v2274 = vpack.c.b16 %v1498, %v1490
        %v2275 = vpack.c.b16 %v1499, %v1491
        %v2276 = vpack.c.b16 %v1500, %v1492
        %v2277 = vpack.c.b16 %v1509, %v1501
        %v2278 = vpack.c.b16 %v1510, %v1502
        %v2279 = vpack.c.b16 %v1511, %v1503
        %v2280 = vpack.c.b16 %v1512, %v1504
        %v2281 = vpack.c.b16 %v1513, %v1505
        %v2282 = vpack.c.b16 %v1514, %v1506
        %v2283 = vpack.c.b16 %v1515, %v1507
        %v2284 = vpack.c.b16 %v1516, %v1508
        %v2285 = vpack.c.b16 %v1525, %v1517
        %v2286 = vpack.c.b16 %v1526, %v1518
        %v2287 = vpack.c.b16 %v1527, %v1519
        %v2288 = vpack.c.b16 %v1528, %v1520
        %v2289 = vpack.c.b16 %v1529, %v1521
        %v2290 = vpack.c.b16 %v1530, %v1522
        %v2291 = vpack.c.b16 %v1531, %v1523
        %v2292 = vpack.c.b16 %v1532, %v1524
        %v2293 = vpack.c.b16 %v1541, %v1533
        %v2294 = vpack.c.b16 %v1542, %v1534
        %v2295 = vpack.c.b16 %v1543, %v1535
        %v2296 = vpack.c.b16 %v1544, %v1536
        %v2297 = vpack.c.b16 %v1545, %v1537
        %v2298 = vpack.c.b16 %v1546, %v1538
        %v2299 = vpack.c.b16 %v1547, %v1539
        %v2300 = vpack.c.b16 %v1548, %v1540
        %v2301 = vpack.c.b16 %v1557, %v1549
        %v2302 = vpack.c.b16 %v1558, %v1550
        %v2303 = vpack.c.b16 %v1559, %v1551
        %v2304 = vpack.c.b16 %v1560, %v1552
        %v2305 = vpack.c.b16 %v1561, %v1553
        %v2306 = vpack.c.b16 %v1562, %v1554
        %v2307 = vpack.c.b16 %v1563, %v1555
        %v2308 = vpack.c.b16 %v1564, %v1556
        %v2309 = vpack.c.b16 %v1573, %v1565
        %v2310 = vpack.c.b16 %v1574, %v1566
        %v2311 = vpack.c.b16 %v1575, %v1567
        %v2312 = vpack.c.b16 %v1576, %v1568
        %v2313 = vpack.c.b16 %v1577, %v1569
        %v2314 = vpack.c.b16 %v1578, %v1570
        %v2315 = vpack.c.b16 %v1579, %v1571
        %v2316 = vpack.c.b16 %v1580, %v1572
        %v2317 = vpack.c.b16 %v1589, %v1581
        %v2318 = vpack.c.b16 %v1590, %v1582
        %v2319 = vpack.c.b16 %v1591, %v1583
        %v2320 = vpack.c.b16 %v1592, %v1584
        %v2321 = vpack.c.b16 %v1593, %v1585
        %v2322 = vpack.c.b16 %v1594, %v1586
        %v2323 = vpack.c.b16 %v1595, %v1587
        %v2324 = vpack.c.b16 %v1596, %v1588
        %v2325 = vpack.c.b16 %v1605, %v1597
        %v2326 = vpack.c.b16 %v1606, %v1598
        %v2327 = vpack.c.b16 %v1607, %v1599
        %v2328 = vpack.c.b16 %v1608, %v1600
        %v2329 = vpack.c.b16 %v1609, %v1601
        %v2330 = vpack.c.b16 %v1610, %v1602
        %v2331 = vpack.c.b16 %v1611, %v1603
        %v2332 = vpack.c.b16 %v1612, %v1604
        %v2333 = vpack.c.b16 %v1621, %v1613
        %v2334 = vpack.c.b16 %v1622, %v1614
        %v2335 = vpack.c.b16 %v1623, %v1615
        %v2336 = vpack.c.b16 %v1624, %v1616
        %v2337 = vpack.c.b16 %v1625, %v1617
        %v2338 = vpack.c.b16 %v1626, %v1618
        %v2339 = vpack.c.b16 %v1627, %v1619
        %v2340 = vpack.c.b16 %v1628, %v1620
        %v2341 = vpack.c.b16 %v1637, %v1629
        %v2342 = vpack.c.b16 %v1638, %v1630
        %v2343 = vpack.c.b16 %v1639, %v1631
        %v2344 = vpack.c.b16 %v1640, %v1632
        %v2345 = vpack.c.b16 %v1641, %v1633
        %v2346 = vpack.c.b16 %v1642, %v1634
        %v2347 = vpack.c.b16 %v1643, %v1635
        %v2348 = vpack.c.b16 %v1644, %v1636
        %v2349 = vpack.c.b16 %v1653, %v1645
        %v2350 = vpack.c.b16 %v1654, %v1646
        %v2351 = vpack.c.b16 %v1655, %v1647
        %v2352 = vpack.c.b16 %v1656, %v1648
        %v2353 = vpack.c.b16 %v1657, %v1649
        %v2354 = vpack.c.b16 %v1658, %v1650
        %v2355 = vpack.c.b16 %v1659, %v1651
        %v2356 = vpack.c.b16 %v1660, %v1652
        %v2357 = vpack.c.b16 %v1669, %v1661
        %v2358 = vpack.c.b16 %v1670, %v1662
        %v2359 = vpack.c.b16 %v1671, %v1663
        %v2360 = vpack.c.b16 %v1672, %v1664
        %v2361 = vpack.c.b16 %v1673, %v1665
        %v2362 = vpack.c.b16 %v1674, %v1666
        %v2363 = vpack.c.b16 %v1675, %v1667
        %v2364 = vpack.c.b16 %v1676, %v1668
        %v2365 = vpack.c.b16 %v1685, %v1677
        %v2366 = vpack.c.b16 %v1686, %v1678
        %v2367 = vpack.c.b16 %v1687, %v1679
        %v2368 = vpack.c.b16 %v1688, %v1680
        %v2369 = vpack.c.b16 %v1689, %v1681
        %v2370 = vpack.c.b16 %v1690, %v1682
        %v2371 = vpack.c.b16 %v1691, %v1683
        %v2372 = vpack.c.b16 %v1692, %v1684
        %v2373 = vpack.c.b16 %v1701, %v1693
        %v2374 = vpack.c.b16 %v1702, %v1694
        %v2375 = vpack.c.b16 %v1703, %v1695
        %v2376 = vpack.c.b16 %v1704, %v1696
        %v2377 = vpack.c.b16 %v1705, %v1697
        %v2378 = vpack.c.b16 %v1706, %v1698
        %v2379 = vpack.c.b16 %v1707, %v1699
        %v2380 = vpack.c.b16 %v1708, %v1700
        %v2381 = vpack.c.b16 %v1717, %v1709
        %v2382 = vpack.c.b16 %v1718, %v1710
        %v2383 = vpack.c.b16 %v1719, %v1711
        %v2384 = vpack.c.b16 %v1720, %v1712
        %v2385 = vpack.c.b16 %v1721, %v1713
        %v2386 = vpack.c.b16 %v1722, %v1714
        %v2387 = vpack.c.b16 %v1723, %v1715
        %v2388 = vpack.c.b16 %v1724, %v1716
        %v2389 = vpack.c.b16 %v1733, %v1725
        %v2390 = vpack.c.b16 %v1734, %v1726
        %v2391 = vpack.c.b16 %v1735, %v1727
        %v2392 = vpack.c.b16 %v1736, %v1728
        %v2393 = vpack.c.b16 %v1737, %v1729
        %v2394 = vpack.c.b16 %v1738, %v1730
        %v2395 = vpack.c.b16 %v1739, %v1731
        %v2396 = vpack.c.b16 %v1740, %v1732
        %v2397 = vpack.c.b16 %v1749, %v1741
        %v2398 = vpack.c.b16 %v1750, %v1742
        %v2399 = vpack.c.b16 %v1751, %v1743
        %v2400 = vpack.c.b16 %v1752, %v1744
        %v2401 = vpack.c.b16 %v1753, %v1745
        %v2402 = vpack.c.b16 %v1754, %v1746
        %v2403 = vpack.c.b16 %v1755, %v1747
        %v2404 = vpack.c.b16 %v1756, %v1748
        %v2405 = vpack.c.b16 %v1765, %v1757
        %v2406 = vpack.c.b16 %v1766, %v1758
        %v2407 = vpack.c.b16 %v1767, %v1759
        %v2408 = vpack.c.b16 %v1768, %v1760
        %v2409 = vpack.c.b16 %v1769, %v1761
        %v2410 = vpack.c.b16 %v1770, %v1762
        %v2411 = vpack.c.b16 %v1771, %v1763
        %v2412 = vpack.c.b16 %v1772, %v1764
        %v2413 = vpack.c.b16 %v1781, %v1773
        %v2414 = vpack.c.b16 %v1782, %v1774
        %v2415 = vpack.c.b16 %v1783, %v1775
        %v2416 = vpack.c.b16 %v1784, %v1776
        %v2417 = vpack.c.b16 %v1785, %v1777
        %v2418 = vpack.c.b16 %v1786, %v1778
        %v2419 = vpack.c.b16 %v1787, %v1779
        %v2420 = vpack.c.b16 %v1788, %v1780
        %v2421 = vpack.c.b16 %v1797, %v1789
        %v2422 = vpack.c.b16 %v1798, %v1790
        %v2423 = vpack.c.b16 %v1799, %v1791
        %v2424 = vpack.c.b16 %v1800, %v1792
        %v2425 = vpack.c.b16 %v1801, %v1793
        %v2426 = vpack.c.b16 %v1802, %v1794
        %v2427 = vpack.c.b16 %v1803, %v1795
        %v2428 = vpack.c.b16 %v1804, %v1796
        %v2429 = vpack.c.b16 %v1813, %v1805
        %v2430 = vpack.c.b16 %v1814, %v1806
        %v2431 = vpack.c.b16 %v1815, %v1807
        %v2432 = vpack.c.b16 %v1816, %v1808
        %v2433 = vpack.c.b16 %v1817, %v1809
        %v2434 = vpack.c.b16 %v1818, %v1810
        %v2435 = vpack.c.b16 %v1819, %v1811
        %v2436 = vpack.c.b16 %v1820, %v1812
        %v2437 = vpack.c.b16 %v1829, %v1821
        %v2438 = vpack.c.b16 %v1830, %v1822
        %v2439 = vpack.c.b16 %v1831, %v1823
        %v2440 = vpack.c.b16 %v1832, %v1824
        %v2441 = vpack.c.b16 %v1833, %v1825
        %v2442 = vpack.c.b16 %v1834, %v1826
        %v2443 = vpack.c.b16 %v1835, %v1827
        %v2444 = vpack.c.b16 %v1836, %v1828
        %v2445 = vpack.c.b16 %v1845, %v1837
        %v2446 = vpack.c.b16 %v1846, %v1838
        %v2447 = vpack.c.b16 %v1847, %v1839
        %v2448 = vpack.c.b16 %v1848, %v1840
        %v2449 = vpack.c.b16 %v1849, %v1841
        %v2450 = vpack.c.b16 %v1850, %v1842
        %v2451 = vpack.c.b16 %v1851, %v1843
        %v2452 = vpack.c.b16 %v1852, %v1844
        %v2453 = vpack.c.b16 %v1861, %v1853
        %v2454 = vpack.c.b16 %v1862, %v1854
        %v2455 = vpack.c.b16 %v1863, %v1855
        %v2456 = vpack.c.b16 %v1864, %v1856
        %v2457 = vpack.c.b16 %v1865, %v1857
        %v2458 = vpack.c.b16 %v1866, %v1858
        %v2459 = vpack.c.b16 %v1867, %v1859
        %v2460 = vpack.c.b16 %v1868, %v1860
        %v2461 = vpack.c.b16 %v1877, %v1869
        %v2462 = vpack.c.b16 %v1878, %v1870
        %v2463 = vpack.c.b16 %v1879, %v1871
        %v2464 = vpack.c.b16 %v1880, %v1872
        %v2465 = vpack.c.b16 %v1881, %v1873
        %v2466 = vpack.c.b16 %v1882, %v1874
        %v2467 = vpack.c.b16 %v1883, %v1875
        %v2468 = vpack.c.b16 %v1884, %v1876
        %v2469 = vpack.c.b16 %v1893, %v1885
        %v2470 = vpack.c.b16 %v1894, %v1886
        %v2471 = vpack.c.b16 %v1895, %v1887
        %v2472 = vpack.c.b16 %v1896, %v1888
        %v2473 = vpack.c.b16 %v1897, %v1889
        %v2474 = vpack.c.b16 %v1898, %v1890
        %v2475 = vpack.c.b16 %v1899, %v1891
        %v2476 = vpack.c.b16 %v1900, %v1892
        %v2477 = vpack.c.b16 %v1909, %v1901
        %v2478 = vpack.c.b16 %v1910, %v1902
        %v2479 = vpack.c.b16 %v1911, %v1903
        %v2480 = vpack.c.b16 %v1912, %v1904
        %v2481 = vpack.c.b16 %v1913, %v1905
        %v2482 = vpack.c.b16 %v1914, %v1906
        %v2483 = vpack.c.b16 %v1915, %v1907
        %v2484 = vpack.c.b16 %v1916, %v1908
        %v2485 = vpack.c.b16 %v1925, %v1917
        %v2486 = vpack.c.b16 %v1926, %v1918
        %v2487 = vpack.c.b16 %v1927, %v1919
        %v2488 = vpack.c.b16 %v1928, %v1920
        %v2489 = vpack.c.b16 %v1929, %v1921
        %v2490 = vpack.c.b16 %v1930, %v1922
        %v2491 = vpack.c.b16 %v1931, %v1923
        %v2492 = vpack.c.b16 %v1932, %v1924
        %v2493 = vpack.c.b16 %v1941, %v1933
        %v2494 = vpack.c.b16 %v1942, %v1934
        %v2495 = vpack.c.b16 %v1943, %v1935
        %v2496 = vpack.c.b16 %v1944, %v1936
        %v2497 = vpack.c.b16 %v1945, %v1937
        %v2498 = vpack.c.b16 %v1946, %v1938
        %v2499 = vpack.c.b16 %v1947, %v1939
        %v2500 = vpack.c.b16 %v1948, %v1940
        %v2501 = vpack.c.b16 %v1957, %v1949
        %v2502 = vpack.c.b16 %v1958, %v1950
        %v2503 = vpack.c.b16 %v1959, %v1951
        %v2504 = vpack.c.b16 %v1960, %v1952
        %v2505 = vpack.c.b16 %v1961, %v1953
        %v2506 = vpack.c.b16 %v1962, %v1954
        %v2507 = vpack.c.b16 %v1963, %v1955
        %v2508 = vpack.c.b16 %v1964, %v1956
        %v2509 = vpack.c.b16 %v1973, %v1965
        %v2510 = vpack.c.b16 %v1974, %v1966
        %v2511 = vpack.c.b16 %v1975, %v1967
        %v2512 = vpack.c.b16 %v1976, %v1968
        %v2513 = vpack.c.b16 %v1977, %v1969
        %v2514 = vpack.c.b16 %v1978, %v1970
        %v2515 = vpack.c.b16 %v1979, %v1971
        %v2516 = vpack.c.b16 %v1980, %v1972
        %v2517 = vpack.c.b16 %v1989, %v1981
        %v2518 = vpack.c.b16 %v1990, %v1982
        %v2519 = vpack.c.b16 %v1991, %v1983
        %v2520 = vpack.c.b16 %v1992, %v1984
        %v2521 = vpack.c.b16 %v1993, %v1985
        %v2522 = vpack.c.b16 %v1994, %v1986
        %v2523 = vpack.c.b16 %v1995, %v1987
        %v2524 = vpack.c.b16 %v1996, %v1988
        %v2525 = vpack.c.b16 %v2005, %v1997
        %v2526 = vpack.c.b16 %v2006, %v1998
        %v2527 = vpack.c.b16 %v2007, %v1999
        %v2528 = vpack.c.b16 %v2008, %v2000
        %v2529 = vpack.c.b16 %v2009, %v2001
        %v2530 = vpack.c.b16 %v2010, %v2002
        %v2531 = vpack.c.b16 %v2011, %v2003
        %v2532 = vpack.c.b16 %v2012, %v2004
        %v2533 = vpack.c.b16 %v2021, %v2013
        %v2534 = vpack.c.b16 %v2022, %v2014
        %v2535 = vpack.c.b16 %v2023, %v2015
        %v2536 = vpack.c.b16 %v2024, %v2016
        %v2537 = vpack.c.b16 %v2025, %v2017
        %v2538 = vpack.c.b16 %v2026, %v2018
        %v2539 = vpack.c.b16 %v2027, %v2019
        %v2540 = vpack.c.b16 %v2028, %v2020
        %v2541 = vpack.c.b16 %v2037, %v2029
        %v2542 = vpack.c.b16 %v2038, %v2030
        %v2543 = vpack.c.b16 %v2039, %v2031
        %v2544 = vpack.c.b16 %v2040, %v2032
        %v2545 = vpack.c.b16 %v2041, %v2033
        %v2546 = vpack.c.b16 %v2042, %v2034
        %v2547 = vpack.c.b16 %v2043, %v2035
        %v2548 = vpack.c.b16 %v2044, %v2036
        %v2549 = vpack.c.b16 %v2053, %v2045
        %v2550 = vpack.c.b16 %v2054, %v2046
        %v2551 = vpack.c.b16 %v2055, %v2047
        %v2552 = vpack.c.b16 %v2056, %v2048
        %v2553 = vpack.c.b16 %v2057, %v2049
        %v2554 = vpack.c.b16 %v2058, %v2050
        %v2555 = vpack.c.b16 %v2059, %v2051
        %v2556 = vpack.c.b16 %v2060, %v2052
        %v2557 = vpack.c.b16 %v2069, %v2061
        %v2558 = vpack.c.b16 %v2070, %v2062
        %v2559 = vpack.c.b16 %v2071, %v2063
        %v2560 = vpack.c.b16 %v2072, %v2064
        %v2561 = vpack.c.b16 %v2073, %v2065
        %v2562 = vpack.c.b16 %v2074, %v2066
        %v2563 = vpack.c.b16 %v2075, %v2067
        %v2564 = vpack.c.b16 %v2076, %v2068
        %v2565 = vpack.c.b16 %v2085, %v2077
        %v2566 = vpack.c.b16 %v2086, %v2078
        %v2567 = vpack.c.b16 %v2087, %v2079
        %v2568 = vpack.c.b16 %v2088, %v2080
        %v2569 = vpack.c.b16 %v2089, %v2081
        %v2570 = vpack.c.b16 %v2090, %v2082
        %v2571 = vpack.c.b16 %v2091, %v2083
        %v2572 = vpack.c.b16 %v2092, %v2084
        %v2573 = vpack.c.b16 %v2101, %v2093
        %v2574 = vpack.c.b16 %v2102, %v2094
        %v2575 = vpack.c.b16 %v2103, %v2095
        %v2576 = vpack.c.b16 %v2104, %v2096
        %v2577 = vpack.c.b16 %v2105, %v2097
        %v2578 = vpack.c.b16 %v2106, %v2098
        %v2579 = vpack.c.b16 %v2107, %v2099
        %v2580 = vpack.c.b16 %v2108, %v2100
        %v2581 = vpack.c.b16 %v2117, %v2109
        %v2582 = vpack.c.b16 %v2118, %v2110
        %v2583 = vpack.c.b16 %v2119, %v2111
        %v2584 = vpack.c.b16 %v2120, %v2112
        %v2585 = vpack.c.b16 %v2121, %v2113
        %v2586 = vpack.c.b16 %v2122, %v2114
        %v2587 = vpack.c.b16 %v2123, %v2115
        %v2588 = vpack.c.b16 %v2124, %v2116
        %v2589 = vpack.c.b16 %v2133, %v2125
        %v2590 = vpack.c.b16 %v2134, %v2126
        %v2591 = vpack.c.b16 %v2135, %v2127
        %v2592 = vpack.c.b16 %v2136, %v2128
        %v2593 = vpack.c.b16 %v2137, %v2129
        %v2594 = vpack.c.b16 %v2138, %v2130
        %v2595 = vpack.c.b16 %v2139, %v2131
        %v2596 = vpack.c.b16 %v2140, %v2132
        %v2597 = vpack.c.b16 %v2149, %v2141
        %v2598 = vpack.c.b16 %v2150, %v2142
        %v2599 = vpack.c.b16 %v2151, %v2143
        %v2600 = vpack.c.b16 %v2152, %v2144
        %v2601 = vpack.c.b16 %v2153, %v2145
        %v2602 = vpack.c.b16 %v2154, %v2146
        %v2603 = vpack.c.b16 %v2155, %v2147
        %v2604 = vpack.c.b16 %v2156, %v2148
        %3053 = vmatprep.subr.bf16.mxu0 %v2214
        %3054 = vmatpush1.bf16.msra.mxu0 %v2213
        %3055 = vmatprep.subr.bf16.mxu0 %v2206
        %3056 = vmatpush1.bf16.msra.mxu0 %v2205
        %3057 = vmatprep.subr.bf16.mxu0 %v2198
        %3058 = vmatpush1.bf16.msra.mxu0 %v2197
        %3059 = vmatprep.subr.bf16.mxu0 %v2190
        %3060 = vmatpush1.bf16.msra.mxu0 %v2189
        %3061 = vmatprep.subr.bf16.mxu0 %v2182
        %3062 = vmatpush1.bf16.msra.mxu0 %v2181
        %3063 = vmatprep.subr.bf16.mxu0 %v2174
        %3064 = vmatpush1.bf16.msra.mxu0 %v2173
        %3065 = vmatprep.subr.bf16.mxu0 %v2166
        %3066 = vmatpush1.bf16.msra.mxu0 %v2165
        %3067 = vmatprep.subr.bf16.mxu0 %v2158
        %3068 = vmatpush1.bf16.msra.mxu0 %v2157
        %3069 = vmatprep.subr.bf16.mxu0 %v2278
        %3070 = vmatpush2.bf16.msra.mxu0 %v2277
        %3071 = vmatprep.subr.bf16.mxu0 %v2270
        %3072 = vmatpush2.bf16.msra.mxu0 %v2269
        %3073 = vmatprep.subr.bf16.mxu0 %v2262
        %3074 = vmatpush2.bf16.msra.mxu0 %v2261
        %3075 = vmatprep.subr.bf16.mxu0 %v2254
        %3076 = vmatpush2.bf16.msra.mxu0 %v2253
        %3077 = vmatprep.subr.bf16.mxu0 %v2246
        %3078 = vmatpush2.bf16.msra.mxu0 %v2245
        %3079 = vmatprep.subr.bf16.mxu0 %v2238
        %3080 = vmatpush2.bf16.msra.mxu0 %v2237
        %3081 = vmatprep.subr.bf16.mxu0 %v2230
        %3082 = vmatpush2.bf16.msra.mxu0 %v2229
        %3083 = vmatprep.subr.bf16.mxu0 %v2222
        %3084 = vmatpush2.bf16.msra.mxu0 %v2221
        %3085 = vmatprep.mubr.bf16.mxu0 %v788
        %3086 = vmatmul.mubr.bf16.gmra.mxu0 %v780
        %v3087 = vpop.f32.mrf.mxu0
        %v3088 = vadd.f32 0.0, %v3087
        %v3089 = vpop.f32.mrf.mxu0
        %v3090 = vadd.f32 0.0, %v3089
        %v3091 = vpop.f32.mrf.mxu0
        %v3092 = vpop.f32.mrf.mxu0
        %3093 = vdwg.mxu0
        %3094 = vmatprep.subr.bf16.mxu0 %v2342
        %3095 = vmatpush1.bf16.msra.mxu0 %v2341
        %3096 = vmatprep.subr.bf16.mxu0 %v2334
        %3097 = vmatpush1.bf16.msra.mxu0 %v2333
        %3098 = vmatprep.subr.bf16.mxu0 %v2326
        %3099 = vmatpush1.bf16.msra.mxu0 %v2325
        %3100 = vmatprep.subr.bf16.mxu0 %v2318
        %3101 = vmatpush1.bf16.msra.mxu0 %v2317
        %3102 = vmatprep.subr.bf16.mxu0 %v2310
        %3103 = vmatpush1.bf16.msra.mxu0 %v2309
        %3104 = vmatprep.subr.bf16.mxu0 %v2302
        %3105 = vmatpush1.bf16.msra.mxu0 %v2301
        %3106 = vmatprep.subr.bf16.mxu0 %v2294
        %3107 = vmatpush1.bf16.msra.mxu0 %v2293
        %3108 = vmatprep.subr.bf16.mxu0 %v2286
        %3109 = vmatpush1.bf16.msra.mxu0 %v2285
        %3110 = vmatprep.subr.bf16.mxu0 %v2406
        %3111 = vmatpush2.bf16.msra.mxu0 %v2405
        %3112 = vmatprep.subr.bf16.mxu0 %v2398
        %3113 = vmatpush2.bf16.msra.mxu0 %v2397
        %3114 = vmatprep.subr.bf16.mxu0 %v2390
        %3115 = vmatpush2.bf16.msra.mxu0 %v2389
        %3116 = vmatprep.subr.bf16.mxu0 %v2382
        %3117 = vmatpush2.bf16.msra.mxu0 %v2381
        %3118 = vmatprep.subr.bf16.mxu0 %v2374
        %3119 = vmatpush2.bf16.msra.mxu0 %v2373
        %3120 = vmatprep.subr.bf16.mxu0 %v2366
        %3121 = vmatpush2.bf16.msra.mxu0 %v2365
        %3122 = vmatprep.subr.bf16.mxu0 %v2358
        %3123 = vmatpush2.bf16.msra.mxu0 %v2357
        %3124 = vmatprep.subr.bf16.mxu0 %v2350
        %3125 = vmatpush2.bf16.msra.mxu0 %v2349
        %3126 = vmatprep.mubr.bf16.mxu0 %v789
        %3127 = vmatmul.mubr.bf16.gmra.mxu0 %v787
        %v3128 = vpop.f32.mrf.mxu0
        %v3129 = vadd.f32 %v3088, %v3128
        %v3130 = vpop.f32.mrf.mxu0
        %v3131 = vadd.f32 %v3090, %v3130
        %v3132 = vpop.f32.mrf.mxu0
        %v3133 = vpop.f32.mrf.mxu0
        %3134 = vdwg.mxu0
        %3135 = vmatprep.subr.bf16.mxu0 %v2470
        %3136 = vmatpush1.bf16.msra.mxu0 %v2469
        %3137 = vmatprep.subr.bf16.mxu0 %v2462
        %3138 = vmatpush1.bf16.msra.mxu0 %v2461
        %3139 = vmatprep.subr.bf16.mxu0 %v2454
        %3140 = vmatpush1.bf16.msra.mxu0 %v2453
        %3141 = vmatprep.subr.bf16.mxu0 %v2446
        %3142 = vmatpush1.bf16.msra.mxu0 %v2445
        %3143 = vmatprep.subr.bf16.mxu0 %v2438
        %3144 = vmatpush1.bf16.msra.mxu0 %v2437
        %3145 = vmatprep.subr.bf16.mxu0 %v2430
        %3146 = vmatpush1.bf16.msra.mxu0 %v2429
        %3147 = vmatprep.subr.bf16.mxu0 %v2422
        %3148 = vmatpush1.bf16.msra.mxu0 %v2421
        %3149 = vmatprep.subr.bf16.mxu0 %v2414
        %3150 = vmatpush1.bf16.msra.mxu0 %v2413
        %3151 = vmatprep.subr.bf16.mxu0 %v2534
        %3152 = vmatpush2.bf16.msra.mxu0 %v2533
        %3153 = vmatprep.subr.bf16.mxu0 %v2526
        %3154 = vmatpush2.bf16.msra.mxu0 %v2525
        %3155 = vmatprep.subr.bf16.mxu0 %v2518
        %3156 = vmatpush2.bf16.msra.mxu0 %v2517
        %3157 = vmatprep.subr.bf16.mxu0 %v2510
        %3158 = vmatpush2.bf16.msra.mxu0 %v2509
        %3159 = vmatprep.subr.bf16.mxu0 %v2502
        %3160 = vmatpush2.bf16.msra.mxu0 %v2501
        %3161 = vmatprep.subr.bf16.mxu0 %v2494
        %3162 = vmatpush2.bf16.msra.mxu0 %v2493
        %3163 = vmatprep.subr.bf16.mxu0 %v2486
        %3164 = vmatpush2.bf16.msra.mxu0 %v2485
        %3165 = vmatprep.subr.bf16.mxu0 %v2478
        %3166 = vmatpush2.bf16.msra.mxu0 %v2477
        %3167 = vmatprep.mubr.bf16.mxu0 %v805
        %3168 = vmatmul.mubr.bf16.gmra.mxu0 %v797
        %v3169 = vpop.f32.mrf.mxu0
        %v3170 = vadd.f32 %v3129, %v3169
        %v3171 = vpop.f32.mrf.mxu0
        %v3172 = vadd.f32 %v3131, %v3171
        %v3173 = vpop.f32.mrf.mxu0
        %v3174 = vpop.f32.mrf.mxu0
        %3175 = vdwg.mxu0
        %3176 = vmatprep.subr.bf16.mxu0 %v2598
        %3177 = vmatpush1.bf16.msra.mxu0 %v2597
        %3178 = vmatprep.subr.bf16.mxu0 %v2590
        %3179 = vmatpush1.bf16.msra.mxu0 %v2589
        %3180 = vmatprep.subr.bf16.mxu0 %v2582
        %3181 = vmatpush1.bf16.msra.mxu0 %v2581
        %3182 = vmatprep.subr.bf16.mxu0 %v2574
        %3183 = vmatpush1.bf16.msra.mxu0 %v2573
        %3184 = vmatprep.subr.bf16.mxu0 %v2566
        %3185 = vmatpush1.bf16.msra.mxu0 %v2565
        %3186 = vmatprep.subr.bf16.mxu0 %v2558
        %3187 = vmatpush1.bf16.msra.mxu0 %v2557
        %3188 = vmatprep.subr.bf16.mxu0 %v2550
        %3189 = vmatpush1.bf16.msra.mxu0 %v2549
        %3190 = vmatprep.subr.bf16.mxu0 %v2542
        %3191 = vmatpush1.bf16.msra.mxu0 %v2541
        %3192 = vmatprep.subr.bf16.mxu0 0
        %3193 = vmatpush2.bf16.msra.mxu0 0
        %3194 = vmatprep.subr.bf16.mxu0 0
        %3195 = vmatpush2.bf16.msra.mxu0 0
        %3196 = vmatprep.subr.bf16.mxu0 0
        %3197 = vmatpush2.bf16.msra.mxu0 0
        %3198 = vmatprep.subr.bf16.mxu0 0
        %3199 = vmatpush2.bf16.msra.mxu0 0
        %3200 = vmatprep.subr.bf16.mxu0 0
        %3201 = vmatpush2.bf16.msra.mxu0 0
        %3202 = vmatprep.subr.bf16.mxu0 0
        %3203 = vmatpush2.bf16.msra.mxu0 0
        %3204 = vmatprep.subr.bf16.mxu0 0
        %3205 = vmatpush2.bf16.msra.mxu0 0
        %3206 = vmatprep.subr.bf16.mxu0 0
        %3207 = vmatpush2.bf16.msra.mxu0 0
        %3208 = vmatprep.mubr.bf16.mxu0 0
        %3209 = vmatmul.mubr.bf16.gmra.mxu0 %v804
        %v3210 = vpop.f32.mrf.mxu0
        %v3211 = vadd.f32 %v3170, %v3210
        %v3212 = vpop.f32.mrf.mxu0
        %v3213 = vadd.f32 %v3172, %v3212
        %v3214 = vpop.f32.mrf.mxu0
        %v3215 = vpop.f32.mrf.mxu0
        %3216 = vdwg.mxu0
        %3217 = vmatprep.subr.bf16.mxu0 %v2216
        %3218 = vmatpush1.bf16.msra.mxu0 %v2215
        %3219 = vmatprep.subr.bf16.mxu0 %v2208
        %3220 = vmatpush1.bf16.msra.mxu0 %v2207
        %3221 = vmatprep.subr.bf16.mxu0 %v2200
        %3222 = vmatpush1.bf16.msra.mxu0 %v2199
        %3223 = vmatprep.subr.bf16.mxu0 %v2192
        %3224 = vmatpush1.bf16.msra.mxu0 %v2191
        %3225 = vmatprep.subr.bf16.mxu0 %v2184
        %3226 = vmatpush1.bf16.msra.mxu0 %v2183
        %3227 = vmatprep.subr.bf16.mxu0 %v2176
        %3228 = vmatpush1.bf16.msra.mxu0 %v2175
        %3229 = vmatprep.subr.bf16.mxu0 %v2168
        %3230 = vmatpush1.bf16.msra.mxu0 %v2167
        %3231 = vmatprep.subr.bf16.mxu0 %v2160
        %3232 = vmatpush1.bf16.msra.mxu0 %v2159
        %3233 = vmatprep.subr.bf16.mxu0 %v2280
        %3234 = vmatpush2.bf16.msra.mxu0 %v2279
        %3235 = vmatprep.subr.bf16.mxu0 %v2272
        %3236 = vmatpush2.bf16.msra.mxu0 %v2271
        %3237 = vmatprep.subr.bf16.mxu0 %v2264
        %3238 = vmatpush2.bf16.msra.mxu0 %v2263
        %3239 = vmatprep.subr.bf16.mxu0 %v2256
        %3240 = vmatpush2.bf16.msra.mxu0 %v2255
        %3241 = vmatprep.subr.bf16.mxu0 %v2248
        %3242 = vmatpush2.bf16.msra.mxu0 %v2247
        %3243 = vmatprep.subr.bf16.mxu0 %v2240
        %3244 = vmatpush2.bf16.msra.mxu0 %v2239
        %3245 = vmatprep.subr.bf16.mxu0 %v2232
        %3246 = vmatpush2.bf16.msra.mxu0 %v2231
        %3247 = vmatprep.subr.bf16.mxu0 %v2224
        %3248 = vmatpush2.bf16.msra.mxu0 %v2223
        %3249 = vmatprep.mubr.bf16.mxu0 %v788
        %3250 = vmatmul.mubr.bf16.gmra.mxu0 %v780
        %v3251 = vpop.f32.mrf.mxu0
        %v3252 = vadd.f32 0.0, %v3251
        %v3253 = vpop.f32.mrf.mxu0
        %v3254 = vadd.f32 0.0, %v3253
        %v3255 = vpop.f32.mrf.mxu0
        %v3256 = vpop.f32.mrf.mxu0
        %3257 = vdwg.mxu0
        %3258 = vmatprep.subr.bf16.mxu0 %v2344
        %3259 = vmatpush1.bf16.msra.mxu0 %v2343
        %3260 = vmatprep.subr.bf16.mxu0 %v2336
        %3261 = vmatpush1.bf16.msra.mxu0 %v2335
        %3262 = vmatprep.subr.bf16.mxu0 %v2328
        %3263 = vmatpush1.bf16.msra.mxu0 %v2327
        %3264 = vmatprep.subr.bf16.mxu0 %v2320
        %3265 = vmatpush1.bf16.msra.mxu0 %v2319
        %3266 = vmatprep.subr.bf16.mxu0 %v2312
        %3267 = vmatpush1.bf16.msra.mxu0 %v2311
        %3268 = vmatprep.subr.bf16.mxu0 %v2304
        %3269 = vmatpush1.bf16.msra.mxu0 %v2303
        %3270 = vmatprep.subr.bf16.mxu0 %v2296
        %3271 = vmatpush1.bf16.msra.mxu0 %v2295
        %3272 = vmatprep.subr.bf16.mxu0 %v2288
        %3273 = vmatpush1.bf16.msra.mxu0 %v2287
        %3274 = vmatprep.subr.bf16.mxu0 %v2408
        %3275 = vmatpush2.bf16.msra.mxu0 %v2407
        %3276 = vmatprep.subr.bf16.mxu0 %v2400
        %3277 = vmatpush2.bf16.msra.mxu0 %v2399
        %3278 = vmatprep.subr.bf16.mxu0 %v2392
        %3279 = vmatpush2.bf16.msra.mxu0 %v2391
        %3280 = vmatprep.subr.bf16.mxu0 %v2384
        %3281 = vmatpush2.bf16.msra.mxu0 %v2383
        %3282 = vmatprep.subr.bf16.mxu0 %v2376
        %3283 = vmatpush2.bf16.msra.mxu0 %v2375
        %3284 = vmatprep.subr.bf16.mxu0 %v2368
        %3285 = vmatpush2.bf16.msra.mxu0 %v2367
        %3286 = vmatprep.subr.bf16.mxu0 %v2360
        %3287 = vmatpush2.bf16.msra.mxu0 %v2359
        %3288 = vmatprep.subr.bf16.mxu0 %v2352
        %3289 = vmatpush2.bf16.msra.mxu0 %v2351
        %3290 = vmatprep.mubr.bf16.mxu0 %v789
        %3291 = vmatmul.mubr.bf16.gmra.mxu0 %v787
        %v3292 = vpop.f32.mrf.mxu0
        %v3293 = vadd.f32 %v3252, %v3292
        %v3294 = vpop.f32.mrf.mxu0
        %v3295 = vadd.f32 %v3254, %v3294
        %v3296 = vpop.f32.mrf.mxu0
        %v3297 = vpop.f32.mrf.mxu0
        %3298 = vdwg.mxu0
        %3299 = vmatprep.subr.bf16.mxu0 %v2472
        %3300 = vmatpush1.bf16.msra.mxu0 %v2471
        %3301 = vmatprep.subr.bf16.mxu0 %v2464
        %3302 = vmatpush1.bf16.msra.mxu0 %v2463
        %3303 = vmatprep.subr.bf16.mxu0 %v2456
        %3304 = vmatpush1.bf16.msra.mxu0 %v2455
        %3305 = vmatprep.subr.bf16.mxu0 %v2448
        %3306 = vmatpush1.bf16.msra.mxu0 %v2447
        %3307 = vmatprep.subr.bf16.mxu0 %v2440
        %3308 = vmatpush1.bf16.msra.mxu0 %v2439
        %3309 = vmatprep.subr.bf16.mxu0 %v2432
        %3310 = vmatpush1.bf16.msra.mxu0 %v2431
        %3311 = vmatprep.subr.bf16.mxu0 %v2424
        %3312 = vmatpush1.bf16.msra.mxu0 %v2423
        %3313 = vmatprep.subr.bf16.mxu0 %v2416
        %3314 = vmatpush1.bf16.msra.mxu0 %v2415
        %3315 = vmatprep.subr.bf16.mxu0 %v2536
        %3316 = vmatpush2.bf16.msra.mxu0 %v2535
        %3317 = vmatprep.subr.bf16.mxu0 %v2528
        %3318 = vmatpush2.bf16.msra.mxu0 %v2527
        %3319 = vmatprep.subr.bf16.mxu0 %v2520
        %3320 = vmatpush2.bf16.msra.mxu0 %v2519
        %3321 = vmatprep.subr.bf16.mxu0 %v2512
        %3322 = vmatpush2.bf16.msra.mxu0 %v2511
        %3323 = vmatprep.subr.bf16.mxu0 %v2504
        %3324 = vmatpush2.bf16.msra.mxu0 %v2503
        %3325 = vmatprep.subr.bf16.mxu0 %v2496
        %3326 = vmatpush2.bf16.msra.mxu0 %v2495
        %3327 = vmatprep.subr.bf16.mxu0 %v2488
        %3328 = vmatpush2.bf16.msra.mxu0 %v2487
        %3329 = vmatprep.subr.bf16.mxu0 %v2480
        %3330 = vmatpush2.bf16.msra.mxu0 %v2479
        %3331 = vmatprep.mubr.bf16.mxu0 %v805
        %3332 = vmatmul.mubr.bf16.gmra.mxu0 %v797
        %v3333 = vpop.f32.mrf.mxu0
        %v3334 = vadd.f32 %v3293, %v3333
        %v3335 = vpop.f32.mrf.mxu0
        %v3336 = vadd.f32 %v3295, %v3335
        %v3337 = vpop.f32.mrf.mxu0
        %v3338 = vpop.f32.mrf.mxu0
        %3339 = vdwg.mxu0
        %3340 = vmatprep.subr.bf16.mxu0 %v2600
        %3341 = vmatpush1.bf16.msra.mxu0 %v2599
        %3342 = vmatprep.subr.bf16.mxu0 %v2592
        %3343 = vmatpush1.bf16.msra.mxu0 %v2591
        %3344 = vmatprep.subr.bf16.mxu0 %v2584
        %3345 = vmatpush1.bf16.msra.mxu0 %v2583
        %3346 = vmatprep.subr.bf16.mxu0 %v2576
        %3347 = vmatpush1.bf16.msra.mxu0 %v2575
        %3348 = vmatprep.subr.bf16.mxu0 %v2568
        %3349 = vmatpush1.bf16.msra.mxu0 %v2567
        %3350 = vmatprep.subr.bf16.mxu0 %v2560
        %3351 = vmatpush1.bf16.msra.mxu0 %v2559
        %3352 = vmatprep.subr.bf16.mxu0 %v2552
        %3353 = vmatpush1.bf16.msra.mxu0 %v2551
        %3354 = vmatprep.subr.bf16.mxu0 %v2544
        %3355 = vmatpush1.bf16.msra.mxu0 %v2543
        %3356 = vmatprep.subr.bf16.mxu0 0
        %3357 = vmatpush2.bf16.msra.mxu0 0
        %3358 = vmatprep.subr.bf16.mxu0 0
        %3359 = vmatpush2.bf16.msra.mxu0 0
        %3360 = vmatprep.subr.bf16.mxu0 0
        %3361 = vmatpush2.bf16.msra.mxu0 0
        %3362 = vmatprep.subr.bf16.mxu0 0
        %3363 = vmatpush2.bf16.msra.mxu0 0
        %3364 = vmatprep.subr.bf16.mxu0 0
        %3365 = vmatpush2.bf16.msra.mxu0 0
        %3366 = vmatprep.subr.bf16.mxu0 0
        %3367 = vmatpush2.bf16.msra.mxu0 0
        %3368 = vmatprep.subr.bf16.mxu0 0
        %3369 = vmatpush2.bf16.msra.mxu0 0
        %3370 = vmatprep.subr.bf16.mxu0 0
        %3371 = vmatpush2.bf16.msra.mxu0 0
        %3372 = vmatprep.mubr.bf16.mxu0 0
        %3373 = vmatmul.mubr.bf16.gmra.mxu0 %v804
        %v3374 = vpop.f32.mrf.mxu0
        %v3375 = vadd.f32 %v3334, %v3374
        %v3376 = vpop.f32.mrf.mxu0
        %v3377 = vadd.f32 %v3336, %v3376
        %v3378 = vpop.f32.mrf.mxu0
        %v3379 = vpop.f32.mrf.mxu0
        %3380 = vdwg.mxu0
        %3381 = vmatprep.subr.bf16.mxu0 %v2218
        %3382 = vmatpush1.bf16.msra.mxu0 %v2217
        %3383 = vmatprep.subr.bf16.mxu0 %v2210
        %3384 = vmatpush1.bf16.msra.mxu0 %v2209
        %3385 = vmatprep.subr.bf16.mxu0 %v2202
        %3386 = vmatpush1.bf16.msra.mxu0 %v2201
        %3387 = vmatprep.subr.bf16.mxu0 %v2194
        %3388 = vmatpush1.bf16.msra.mxu0 %v2193
        %3389 = vmatprep.subr.bf16.mxu0 %v2186
        %3390 = vmatpush1.bf16.msra.mxu0 %v2185
        %3391 = vmatprep.subr.bf16.mxu0 %v2178
        %3392 = vmatpush1.bf16.msra.mxu0 %v2177
        %3393 = vmatprep.subr.bf16.mxu0 %v2170
        %3394 = vmatpush1.bf16.msra.mxu0 %v2169
        %3395 = vmatprep.subr.bf16.mxu0 %v2162
        %3396 = vmatpush1.bf16.msra.mxu0 %v2161
        %3397 = vmatprep.subr.bf16.mxu0 %v2282
        %3398 = vmatpush2.bf16.msra.mxu0 %v2281
        %3399 = vmatprep.subr.bf16.mxu0 %v2274
        %3400 = vmatpush2.bf16.msra.mxu0 %v2273
        %3401 = vmatprep.subr.bf16.mxu0 %v2266
        %3402 = vmatpush2.bf16.msra.mxu0 %v2265
        %3403 = vmatprep.subr.bf16.mxu0 %v2258
        %3404 = vmatpush2.bf16.msra.mxu0 %v2257
        %3405 = vmatprep.subr.bf16.mxu0 %v2250
        %3406 = vmatpush2.bf16.msra.mxu0 %v2249
        %3407 = vmatprep.subr.bf16.mxu0 %v2242
        %3408 = vmatpush2.bf16.msra.mxu0 %v2241
        %3409 = vmatprep.subr.bf16.mxu0 %v2234
        %3410 = vmatpush2.bf16.msra.mxu0 %v2233
        %3411 = vmatprep.subr.bf16.mxu0 %v2226
        %3412 = vmatpush2.bf16.msra.mxu0 %v2225
        %3413 = vmatprep.mubr.bf16.mxu0 %v788
        %3414 = vmatmul.mubr.bf16.gmra.mxu0 %v780
        %v3415 = vpop.f32.mrf.mxu0
        %v3416 = vadd.f32 0.0, %v3415
        %v3417 = vpop.f32.mrf.mxu0
        %v3418 = vadd.f32 0.0, %v3417
        %v3419 = vpop.f32.mrf.mxu0
        %v3420 = vpop.f32.mrf.mxu0
        %3421 = vdwg.mxu0
        %3422 = vmatprep.subr.bf16.mxu0 %v2346
        %3423 = vmatpush1.bf16.msra.mxu0 %v2345
        %3424 = vmatprep.subr.bf16.mxu0 %v2338
        %3425 = vmatpush1.bf16.msra.mxu0 %v2337
        %3426 = vmatprep.subr.bf16.mxu0 %v2330
        %3427 = vmatpush1.bf16.msra.mxu0 %v2329
        %3428 = vmatprep.subr.bf16.mxu0 %v2322
        %3429 = vmatpush1.bf16.msra.mxu0 %v2321
        %3430 = vmatprep.subr.bf16.mxu0 %v2314
        %3431 = vmatpush1.bf16.msra.mxu0 %v2313
        %3432 = vmatprep.subr.bf16.mxu0 %v2306
        %3433 = vmatpush1.bf16.msra.mxu0 %v2305
        %3434 = vmatprep.subr.bf16.mxu0 %v2298
        %3435 = vmatpush1.bf16.msra.mxu0 %v2297
        %3436 = vmatprep.subr.bf16.mxu0 %v2290
        %3437 = vmatpush1.bf16.msra.mxu0 %v2289
        %3438 = vmatprep.subr.bf16.mxu0 %v2410
        %3439 = vmatpush2.bf16.msra.mxu0 %v2409
        %3440 = vmatprep.subr.bf16.mxu0 %v2402
        %3441 = vmatpush2.bf16.msra.mxu0 %v2401
        %3442 = vmatprep.subr.bf16.mxu0 %v2394
        %3443 = vmatpush2.bf16.msra.mxu0 %v2393
        %3444 = vmatprep.subr.bf16.mxu0 %v2386
        %3445 = vmatpush2.bf16.msra.mxu0 %v2385
        %3446 = vmatprep.subr.bf16.mxu0 %v2378
        %3447 = vmatpush2.bf16.msra.mxu0 %v2377
        %3448 = vmatprep.subr.bf16.mxu0 %v2370
        %3449 = vmatpush2.bf16.msra.mxu0 %v2369
        %3450 = vmatprep.subr.bf16.mxu0 %v2362
        %3451 = vmatpush2.bf16.msra.mxu0 %v2361
        %3452 = vmatprep.subr.bf16.mxu0 %v2354
        %3453 = vmatpush2.bf16.msra.mxu0 %v2353
        %3454 = vmatprep.mubr.bf16.mxu0 %v789
        %3455 = vmatmul.mubr.bf16.gmra.mxu0 %v787
        %v3456 = vpop.f32.mrf.mxu0
        %v3457 = vadd.f32 %v3416, %v3456
        %v3458 = vpop.f32.mrf.mxu0
        %v3459 = vadd.f32 %v3418, %v3458
        %v3460 = vpop.f32.mrf.mxu0
        %v3461 = vpop.f32.mrf.mxu0
        %3462 = vdwg.mxu0
        %3463 = vmatprep.subr.bf16.mxu0 %v2474
        %3464 = vmatpush1.bf16.msra.mxu0 %v2473
        %3465 = vmatprep.subr.bf16.mxu0 %v2466
        %3466 = vmatpush1.bf16.msra.mxu0 %v2465
        %3467 = vmatprep.subr.bf16.mxu0 %v2458
        %3468 = vmatpush1.bf16.msra.mxu0 %v2457
        %3469 = vmatprep.subr.bf16.mxu0 %v2450
        %3470 = vmatpush1.bf16.msra.mxu0 %v2449
        %3471 = vmatprep.subr.bf16.mxu0 %v2442
        %3472 = vmatpush1.bf16.msra.mxu0 %v2441
        %3473 = vmatprep.subr.bf16.mxu0 %v2434
        %3474 = vmatpush1.bf16.msra.mxu0 %v2433
        %3475 = vmatprep.subr.bf16.mxu0 %v2426
        %3476 = vmatpush1.bf16.msra.mxu0 %v2425
        %3477 = vmatprep.subr.bf16.mxu0 %v2418
        %3478 = vmatpush1.bf16.msra.mxu0 %v2417
        %3479 = vmatprep.subr.bf16.mxu0 %v2538
        %3480 = vmatpush2.bf16.msra.mxu0 %v2537
        %3481 = vmatprep.subr.bf16.mxu0 %v2530
        %3482 = vmatpush2.bf16.msra.mxu0 %v2529
        %3483 = vmatprep.subr.bf16.mxu0 %v2522
        %3484 = vmatpush2.bf16.msra.mxu0 %v2521
        %3485 = vmatprep.subr.bf16.mxu0 %v2514
        %3486 = vmatpush2.bf16.msra.mxu0 %v2513
        %3487 = vmatprep.subr.bf16.mxu0 %v2506
        %3488 = vmatpush2.bf16.msra.mxu0 %v2505
        %3489 = vmatprep.subr.bf16.mxu0 %v2498
        %3490 = vmatpush2.bf16.msra.mxu0 %v2497
        %3491 = vmatprep.subr.bf16.mxu0 %v2490
        %3492 = vmatpush2.bf16.msra.mxu0 %v2489
        %3493 = vmatprep.subr.bf16.mxu0 %v2482
        %3494 = vmatpush2.bf16.msra.mxu0 %v2481
        %3495 = vmatprep.mubr.bf16.mxu0 %v805
        %3496 = vmatmul.mubr.bf16.gmra.mxu0 %v797
        %v3497 = vpop.f32.mrf.mxu0
        %v3498 = vadd.f32 %v3457, %v3497
        %v3499 = vpop.f32.mrf.mxu0
        %v3500 = vadd.f32 %v3459, %v3499
        %v3501 = vpop.f32.mrf.mxu0
        %v3502 = vpop.f32.mrf.mxu0
        %3503 = vdwg.mxu0
        %3504 = vmatprep.subr.bf16.mxu0 %v2602
        %3505 = vmatpush1.bf16.msra.mxu0 %v2601
        %3506 = vmatprep.subr.bf16.mxu0 %v2594
        %3507 = vmatpush1.bf16.msra.mxu0 %v2593
        %3508 = vmatprep.subr.bf16.mxu0 %v2586
        %3509 = vmatpush1.bf16.msra.mxu0 %v2585
        %3510 = vmatprep.subr.bf16.mxu0 %v2578
        %3511 = vmatpush1.bf16.msra.mxu0 %v2577
        %3512 = vmatprep.subr.bf16.mxu0 %v2570
        %3513 = vmatpush1.bf16.msra.mxu0 %v2569
        %3514 = vmatprep.subr.bf16.mxu0 %v2562
        %3515 = vmatpush1.bf16.msra.mxu0 %v2561
        %3516 = vmatprep.subr.bf16.mxu0 %v2554
        %3517 = vmatpush1.bf16.msra.mxu0 %v2553
        %3518 = vmatprep.subr.bf16.mxu0 %v2546
        %3519 = vmatpush1.bf16.msra.mxu0 %v2545
        %3520 = vmatprep.subr.bf16.mxu0 0
        %3521 = vmatpush2.bf16.msra.mxu0 0
        %3522 = vmatprep.subr.bf16.mxu0 0
        %3523 = vmatpush2.bf16.msra.mxu0 0
        %3524 = vmatprep.subr.bf16.mxu0 0
        %3525 = vmatpush2.bf16.msra.mxu0 0
        %3526 = vmatprep.subr.bf16.mxu0 0
        %3527 = vmatpush2.bf16.msra.mxu0 0
        %3528 = vmatprep.subr.bf16.mxu0 0
        %3529 = vmatpush2.bf16.msra.mxu0 0
        %3530 = vmatprep.subr.bf16.mxu0 0
        %3531 = vmatpush2.bf16.msra.mxu0 0
        %3532 = vmatprep.subr.bf16.mxu0 0
        %3533 = vmatpush2.bf16.msra.mxu0 0
        %3534 = vmatprep.subr.bf16.mxu0 0
        %3535 = vmatpush2.bf16.msra.mxu0 0
        %3536 = vmatprep.mubr.bf16.mxu0 0
        %3537 = vmatmul.mubr.bf16.gmra.mxu0 %v804
        %v3538 = vpop.f32.mrf.mxu0
        %v3539 = vadd.f32 %v3498, %v3538
        %v3540 = vpop.f32.mrf.mxu0
        %v3541 = vadd.f32 %v3500, %v3540
        %v3542 = vpop.f32.mrf.mxu0
        %v3543 = vpop.f32.mrf.mxu0
        %3544 = vdwg.mxu0
        %3545 = vmatprep.subr.bf16.mxu0 %v2220
        %3546 = vmatpush1.bf16.msra.mxu0 %v2219
        %3547 = vmatprep.subr.bf16.mxu0 %v2212
        %3548 = vmatpush1.bf16.msra.mxu0 %v2211
        %3549 = vmatprep.subr.bf16.mxu0 %v2204
        %3550 = vmatpush1.bf16.msra.mxu0 %v2203
        %3551 = vmatprep.subr.bf16.mxu0 %v2196
        %3552 = vmatpush1.bf16.msra.mxu0 %v2195
        %3553 = vmatprep.subr.bf16.mxu0 %v2188
        %3554 = vmatpush1.bf16.msra.mxu0 %v2187
        %3555 = vmatprep.subr.bf16.mxu0 %v2180
        %3556 = vmatpush1.bf16.msra.mxu0 %v2179
        %3557 = vmatprep.subr.bf16.mxu0 %v2172
        %3558 = vmatpush1.bf16.msra.mxu0 %v2171
        %3559 = vmatprep.subr.bf16.mxu0 %v2164
        %3560 = vmatpush1.bf16.msra.mxu0 %v2163
        %3561 = vmatprep.subr.bf16.mxu0 %v2284
        %3562 = vmatpush2.bf16.msra.mxu0 %v2283
        %3563 = vmatprep.subr.bf16.mxu0 %v2276
        %3564 = vmatpush2.bf16.msra.mxu0 %v2275
        %3565 = vmatprep.subr.bf16.mxu0 %v2268
        %3566 = vmatpush2.bf16.msra.mxu0 %v2267
        %3567 = vmatprep.subr.bf16.mxu0 %v2260
        %3568 = vmatpush2.bf16.msra.mxu0 %v2259
        %3569 = vmatprep.subr.bf16.mxu0 %v2252
        %3570 = vmatpush2.bf16.msra.mxu0 %v2251
        %3571 = vmatprep.subr.bf16.mxu0 %v2244
        %3572 = vmatpush2.bf16.msra.mxu0 %v2243
        %3573 = vmatprep.subr.bf16.mxu0 %v2236
        %3574 = vmatpush2.bf16.msra.mxu0 %v2235
        %3575 = vmatprep.subr.bf16.mxu0 %v2228
        %3576 = vmatpush2.bf16.msra.mxu0 %v2227
        %3577 = vmatprep.mubr.bf16.mxu0 %v788
        %3578 = vmatmul.mubr.bf16.gmra.mxu0 %v780
        %v3579 = vpop.f32.mrf.mxu0
        %v3580 = vadd.f32 0.0, %v3579
        %v3581 = vpop.f32.mrf.mxu0
        %v3582 = vadd.f32 0.0, %v3581
        %v3583 = vpop.f32.mrf.mxu0
        %v3584 = vpop.f32.mrf.mxu0
        %3585 = vdwg.mxu0
        %3586 = vmatprep.subr.bf16.mxu0 %v2348
        %3587 = vmatpush1.bf16.msra.mxu0 %v2347
        %3588 = vmatprep.subr.bf16.mxu0 %v2340
        %3589 = vmatpush1.bf16.msra.mxu0 %v2339
        %3590 = vmatprep.subr.bf16.mxu0 %v2332
        %3591 = vmatpush1.bf16.msra.mxu0 %v2331
        %3592 = vmatprep.subr.bf16.mxu0 %v2324
        %3593 = vmatpush1.bf16.msra.mxu0 %v2323
        %3594 = vmatprep.subr.bf16.mxu0 %v2316
        %3595 = vmatpush1.bf16.msra.mxu0 %v2315
        %3596 = vmatprep.subr.bf16.mxu0 %v2308
        %3597 = vmatpush1.bf16.msra.mxu0 %v2307
        %3598 = vmatprep.subr.bf16.mxu0 %v2300
        %3599 = vmatpush1.bf16.msra.mxu0 %v2299
        %3600 = vmatprep.subr.bf16.mxu0 %v2292
        %3601 = vmatpush1.bf16.msra.mxu0 %v2291
        %3602 = vmatprep.subr.bf16.mxu0 %v2412
        %3603 = vmatpush2.bf16.msra.mxu0 %v2411
        %3604 = vmatprep.subr.bf16.mxu0 %v2404
        %3605 = vmatpush2.bf16.msra.mxu0 %v2403
        %3606 = vmatprep.subr.bf16.mxu0 %v2396
        %3607 = vmatpush2.bf16.msra.mxu0 %v2395
        %3608 = vmatprep.subr.bf16.mxu0 %v2388
        %3609 = vmatpush2.bf16.msra.mxu0 %v2387
        %3610 = vmatprep.subr.bf16.mxu0 %v2380
        %3611 = vmatpush2.bf16.msra.mxu0 %v2379
        %3612 = vmatprep.subr.bf16.mxu0 %v2372
        %3613 = vmatpush2.bf16.msra.mxu0 %v2371
        %3614 = vmatprep.subr.bf16.mxu0 %v2364
        %3615 = vmatpush2.bf16.msra.mxu0 %v2363
        %3616 = vmatprep.subr.bf16.mxu0 %v2356
        %3617 = vmatpush2.bf16.msra.mxu0 %v2355
        %3618 = vmatprep.mubr.bf16.mxu0 %v789
        %3619 = vmatmul.mubr.bf16.gmra.mxu0 %v787
        %v3620 = vpop.f32.mrf.mxu0
        %v3621 = vadd.f32 %v3580, %v3620
        %v3622 = vpop.f32.mrf.mxu0
        %v3623 = vadd.f32 %v3582, %v3622
        %v3624 = vpop.f32.mrf.mxu0
        %v3625 = vpop.f32.mrf.mxu0
        %3626 = vdwg.mxu0
        %3627 = vmatprep.subr.bf16.mxu0 %v2476
        %3628 = vmatpush1.bf16.msra.mxu0 %v2475
        %3629 = vmatprep.subr.bf16.mxu0 %v2468
        %3630 = vmatpush1.bf16.msra.mxu0 %v2467
        %3631 = vmatprep.subr.bf16.mxu0 %v2460
        %3632 = vmatpush1.bf16.msra.mxu0 %v2459
        %3633 = vmatprep.subr.bf16.mxu0 %v2452
        %3634 = vmatpush1.bf16.msra.mxu0 %v2451
        %3635 = vmatprep.subr.bf16.mxu0 %v2444
        %3636 = vmatpush1.bf16.msra.mxu0 %v2443
        %3637 = vmatprep.subr.bf16.mxu0 %v2436
        %3638 = vmatpush1.bf16.msra.mxu0 %v2435
        %3639 = vmatprep.subr.bf16.mxu0 %v2428
        %3640 = vmatpush1.bf16.msra.mxu0 %v2427
        %3641 = vmatprep.subr.bf16.mxu0 %v2420
        %3642 = vmatpush1.bf16.msra.mxu0 %v2419
        %3643 = vmatprep.subr.bf16.mxu0 %v2540
        %3644 = vmatpush2.bf16.msra.mxu0 %v2539
        %3645 = vmatprep.subr.bf16.mxu0 %v2532
        %3646 = vmatpush2.bf16.msra.mxu0 %v2531
        %3647 = vmatprep.subr.bf16.mxu0 %v2524
        %3648 = vmatpush2.bf16.msra.mxu0 %v2523
        %3649 = vmatprep.subr.bf16.mxu0 %v2516
        %3650 = vmatpush2.bf16.msra.mxu0 %v2515
        %3651 = vmatprep.subr.bf16.mxu0 %v2508
        %3652 = vmatpush2.bf16.msra.mxu0 %v2507
        %3653 = vmatprep.subr.bf16.mxu0 %v2500
        %3654 = vmatpush2.bf16.msra.mxu0 %v2499
        %3655 = vmatprep.subr.bf16.mxu0 %v2492
        %3656 = vmatpush2.bf16.msra.mxu0 %v2491
        %3657 = vmatprep.subr.bf16.mxu0 %v2484
        %3658 = vmatpush2.bf16.msra.mxu0 %v2483
        %3659 = vmatprep.mubr.bf16.mxu0 %v805
        %3660 = vmatmul.mubr.bf16.gmra.mxu0 %v797
        %v3661 = vpop.f32.mrf.mxu0
        %v3662 = vadd.f32 %v3621, %v3661
        %v3663 = vpop.f32.mrf.mxu0
        %v3664 = vadd.f32 %v3623, %v3663
        %v3665 = vpop.f32.mrf.mxu0
        %v3666 = vpop.f32.mrf.mxu0
        %3667 = vdwg.mxu0
        %3668 = vmatprep.subr.bf16.mxu0 %v2604
        %3669 = vmatpush1.bf16.msra.mxu0 %v2603
        %3670 = vmatprep.subr.bf16.mxu0 %v2596
        %3671 = vmatpush1.bf16.msra.mxu0 %v2595
        %3672 = vmatprep.subr.bf16.mxu0 %v2588
        %3673 = vmatpush1.bf16.msra.mxu0 %v2587
        %3674 = vmatprep.subr.bf16.mxu0 %v2580
        %3675 = vmatpush1.bf16.msra.mxu0 %v2579
        %3676 = vmatprep.subr.bf16.mxu0 %v2572
        %3677 = vmatpush1.bf16.msra.mxu0 %v2571
        %3678 = vmatprep.subr.bf16.mxu0 %v2564
        %3679 = vmatpush1.bf16.msra.mxu0 %v2563
        %3680 = vmatprep.subr.bf16.mxu0 %v2556
        %3681 = vmatpush1.bf16.msra.mxu0 %v2555
        %3682 = vmatprep.subr.bf16.mxu0 %v2548
        %3683 = vmatpush1.bf16.msra.mxu0 %v2547
        %3684 = vmatprep.subr.bf16.mxu0 0
        %3685 = vmatpush2.bf16.msra.mxu0 0
        %3686 = vmatprep.subr.bf16.mxu0 0
        %3687 = vmatpush2.bf16.msra.mxu0 0
        %3688 = vmatprep.subr.bf16.mxu0 0
        %3689 = vmatpush2.bf16.msra.mxu0 0
        %3690 = vmatprep.subr.bf16.mxu0 0
        %3691 = vmatpush2.bf16.msra.mxu0 0
        %3692 = vmatprep.subr.bf16.mxu0 0
        %3693 = vmatpush2.bf16.msra.mxu0 0
        %3694 = vmatprep.subr.bf16.mxu0 0
        %3695 = vmatpush2.bf16.msra.mxu0 0
        %3696 = vmatprep.subr.bf16.mxu0 0
        %3697 = vmatpush2.bf16.msra.mxu0 0
        %3698 = vmatprep.subr.bf16.mxu0 0
        %3699 = vmatpush2.bf16.msra.mxu0 0
        %3700 = vmatprep.mubr.bf16.mxu0 0
        %3701 = vmatmul.mubr.bf16.gmra.mxu0 %v804
        %v3702 = vpop.f32.mrf.mxu0
        %v3703 = vadd.f32 %v3662, %v3702
        %v3704 = vpop.f32.mrf.mxu0
        %v3705 = vadd.f32 %v3664, %v3704
        %v3706 = vpop.f32.mrf.mxu0
        %v3707 = vpop.f32.mrf.mxu0
        %3708 = vdwg.mxu0
        %v3717 = vcombine.low %v3211, %v3213
        %v3718 = vcombine.low %v3375, %v3377
        %v3719 = vcombine.low %v3539, %v3541
        %v3720 = vcombine.low %v3703, %v3705
        %v3725 = vadd.f32 %v317, %v3717
        %v3726 = vadd.f32 %v318, %v3718
        %v3727 = vadd.f32 %v319, %v3719
        %v3728 = vadd.f32 %v320, %v3720
        %3729 = vst [vmem:[#allocation2] sm:$0xff] %v3725
        %3730 = vst [vmem:[#allocation2 + $0x8] sm:$0xff] %v3726
        %3731 = vst [vmem:[#allocation2 + $0x10] sm:$0xff] %v3727
        %3732 = vst [vmem:[#allocation2 + $0x18] sm:$0xff] %v3728
        %p3733 = scmp.eq.s32.totalorder %s23, 6
        // Predicated region
        $region61: #{discriminator_forward.5} parent=43 // pred_check
          %p3734 = pneg %p3733
        $region62: #{discriminator_forward.5} parent=43 // pred_check_branch
          %3736 = sbr.rel (%p3734) target = $region64
        $region63: #{discriminator_forward.5} parent=43 // pred_region
          %v3737 = vld [vmem:[#allocation2] sm:$0xff]
          %v3738 = vld [vmem:[#allocation2 + $0x8] sm:$0xff]
          %v3739 = vld [vmem:[#allocation2 + $0x10] sm:$0xff]
          %v3740 = vld [vmem:[#allocation2 + $0x18] sm:$0xff]
          %v3745 = vcombine.high %v3737, %v3737
          %v3746 = vcombine.high %v3738, %v3738
          %v3747 = vcombine.high %v3739, %v3739
          %v3748 = vcombine.high %v3740, %v3740
          %vm3753 = vcmask 1043456
          %v3754 = vsel %vm3753, %v3737, 0.0
          %v3755 = vrot.slane %v3754, 4
          %v3756 = vadd.f32 %v3754, %v3755
          %v3757 = vrot.slane %v3756, 2
          %v3758 = vadd.f32 %v3756, %v3757
          %v3759 = vrot.slane %v3758, 1
          %v3760 = vadd.f32 %v3758, %v3759
          %v3761 = vsel %vm3753, %v3745, 0.0
          %v3762 = vrot.slane %v3761, 4
          %v3763 = vadd.f32 %v3761, %v3762
          %v3764 = vrot.slane %v3763, 2
          %v3765 = vadd.f32 %v3763, %v3764
          %v3766 = vrot.slane %v3765, 1
          %v3767 = vadd.f32 %v3765, %v3766
          %v3768 = vsel %vm3753, %v3738, 0.0
          %v3769 = vrot.slane %v3768, 4
          %v3770 = vadd.f32 %v3768, %v3769
          %v3771 = vrot.slane %v3770, 2
          %v3772 = vadd.f32 %v3770, %v3771
          %v3773 = vrot.slane %v3772, 1
          %v3774 = vadd.f32 %v3772, %v3773
          %v3775 = vsel %vm3753, %v3746, 0.0
          %v3776 = vrot.slane %v3775, 4
          %v3777 = vadd.f32 %v3775, %v3776
          %v3778 = vrot.slane %v3777, 2
          %v3779 = vadd.f32 %v3777, %v3778
          %v3780 = vrot.slane %v3779, 1
          %v3781 = vadd.f32 %v3779, %v3780
          %v3782 = vsel %vm3753, %v3739, 0.0
          %v3783 = vrot.slane %v3782, 4
          %v3784 = vadd.f32 %v3782, %v3783
          %v3785 = vrot.slane %v3784, 2
          %v3786 = vadd.f32 %v3784, %v3785
          %v3787 = vrot.slane %v3786, 1
          %v3788 = vadd.f32 %v3786, %v3787
          %v3789 = vsel %vm3753, %v3747, 0.0
          %v3790 = vrot.slane %v3789, 4
          %v3791 = vadd.f32 %v3789, %v3790
          %v3792 = vrot.slane %v3791, 2
          %v3793 = vadd.f32 %v3791, %v3792
          %v3794 = vrot.slane %v3793, 1
          %v3795 = vadd.f32 %v3793, %v3794
          %v3796 = vsel %vm3753, %v3740, 0.0
          %v3797 = vrot.slane %v3796, 4
          %v3798 = vadd.f32 %v3796, %v3797
          %v3799 = vrot.slane %v3798, 2
          %v3800 = vadd.f32 %v3798, %v3799
          %v3801 = vrot.slane %v3800, 1
          %v3802 = vadd.f32 %v3800, %v3801
          %v3803 = vsel %vm3753, %v3748, 0.0
          %v3804 = vrot.slane %v3803, 4
          %v3805 = vadd.f32 %v3803, %v3804
          %v3806 = vrot.slane %v3805, 2
          %v3807 = vadd.f32 %v3805, %v3806
          %v3808 = vrot.slane %v3807, 1
          %v3809 = vadd.f32 %v3807, %v3808
          %v3810 = vrcp.pop 4.0
          %v3811 = vmul.f32 %v3760, %v3810
          %v3812 = vmul.f32 %v3767, %v3810
          %v3813 = vmul.f32 %v3774, %v3810
          %v3814 = vmul.f32 %v3781, %v3810
          %v3815 = vmul.f32 %v3788, %v3810
          %v3816 = vmul.f32 %v3795, %v3810
          %v3817 = vmul.f32 %v3802, %v3810
          %v3818 = vmul.f32 %v3809, %v3810
          %v3827 = vcombine.low %v3811, %v3812
          %v3828 = vcombine.low %v3813, %v3814
          %v3829 = vcombine.low %v3815, %v3816
          %v3830 = vcombine.low %v3817, %v3818
          %v3835 = vsub.f32 %v3737, %v3827
          %v3836 = vsub.f32 %v3738, %v3828
          %v3837 = vsub.f32 %v3739, %v3829
          %v3838 = vsub.f32 %v3740, %v3830
          %v3839 = vmul.f32 %v3835, %v3835
          %v3840 = vmul.f32 %v3836, %v3836
          %v3841 = vmul.f32 %v3837, %v3837
          %v3842 = vmul.f32 %v3838, %v3838
          %v3847 = vcombine.high %v3839, %v3839
          %v3848 = vcombine.high %v3840, %v3840
          %v3849 = vcombine.high %v3841, %v3841
          %v3850 = vcombine.high %v3842, %v3842
          %v3855 = vsel %vm3753, %v3839, 0.0
          %v3856 = vrot.slane %v3855, 4
          %v3857 = vadd.f32 %v3855, %v3856
          %v3858 = vrot.slane %v3857, 2
          %v3859 = vadd.f32 %v3857, %v3858
          %v3860 = vrot.slane %v3859, 1
          %v3861 = vadd.f32 %v3859, %v3860
          %v3862 = vsel %vm3753, %v3847, 0.0
          %v3863 = vrot.slane %v3862, 4
          %v3864 = vadd.f32 %v3862, %v3863
          %v3865 = vrot.slane %v3864, 2
          %v3866 = vadd.f32 %v3864, %v3865
          %v3867 = vrot.slane %v3866, 1
          %v3868 = vadd.f32 %v3866, %v3867
          %v3869 = vsel %vm3753, %v3840, 0.0
          %v3870 = vrot.slane %v3869, 4
          %v3871 = vadd.f32 %v3869, %v3870
          %v3872 = vrot.slane %v3871, 2
          %v3873 = vadd.f32 %v3871, %v3872
          %v3874 = vrot.slane %v3873, 1
          %v3875 = vadd.f32 %v3873, %v3874
          %v3876 = vsel %vm3753, %v3848, 0.0
          %v3877 = vrot.slane %v3876, 4
          %v3878 = vadd.f32 %v3876, %v3877
          %v3879 = vrot.slane %v3878, 2
          %v3880 = vadd.f32 %v3878, %v3879
          %v3881 = vrot.slane %v3880, 1
          %v3882 = vadd.f32 %v3880, %v3881
          %v3883 = vsel %vm3753, %v3841, 0.0
          %v3884 = vrot.slane %v3883, 4
          %v3885 = vadd.f32 %v3883, %v3884
          %v3886 = vrot.slane %v3885, 2
          %v3887 = vadd.f32 %v3885, %v3886
          %v3888 = vrot.slane %v3887, 1
          %v3889 = vadd.f32 %v3887, %v3888
          %v3890 = vsel %vm3753, %v3849, 0.0
          %v3891 = vrot.slane %v3890, 4
          %v3892 = vadd.f32 %v3890, %v3891
          %v3893 = vrot.slane %v3892, 2
          %v3894 = vadd.f32 %v3892, %v3893
          %v3895 = vrot.slane %v3894, 1
          %v3896 = vadd.f32 %v3894, %v3895
          %v3897 = vsel %vm3753, %v3842, 0.0
          %v3898 = vrot.slane %v3897, 4
          %v3899 = vadd.f32 %v3897, %v3898
          %v3900 = vrot.slane %v3899, 2
          %v3901 = vadd.f32 %v3899, %v3900
          %v3902 = vrot.slane %v3901, 1
          %v3903 = vadd.f32 %v3901, %v3902
          %v3904 = vsel %vm3753, %v3850, 0.0
          %v3905 = vrot.slane %v3904, 4
          %v3906 = vadd.f32 %v3904, %v3905
          %v3907 = vrot.slane %v3906, 2
          %v3908 = vadd.f32 %v3906, %v3907
          %v3909 = vrot.slane %v3908, 1
          %v3910 = vadd.f32 %v3908, %v3909
          %v3911 = vmul.f32 %v3861, %v3810
          %v3912 = vmul.f32 %v3868, %v3810
          %v3913 = vmul.f32 %v3875, %v3810
          %v3914 = vmul.f32 %v3882, %v3810
          %v3915 = vmul.f32 %v3889, %v3810
          %v3916 = vmul.f32 %v3896, %v3810
          %v3917 = vmul.f32 %v3903, %v3810
          %v3918 = vmul.f32 %v3910, %v3810
          %v3919 = vld [vmem:[#allocation6] sm:$0xff]
          %v3921 = vlaneseq
          %v3922 = vshrl.u32 %v3921, 7
          %v3923 = vsub.s32 0, %v3922
          %v3924 = vrot.slane %v3919, %v3923
          %v3925 = vlaneseq
          %v3926 = vshrl.u32 %v3925, 7
          %v3927 = vsub.s32 1, %v3926
          %v3928 = vrot.slane %v3919, %v3927
          %v3929 = vlaneseq
          %v3930 = vshrl.u32 %v3929, 7
          %v3931 = vsub.s32 2, %v3930
          %v3932 = vrot.slane %v3919, %v3931
          %v3933 = vlaneseq
          %v3934 = vshrl.u32 %v3933, 7
          %v3935 = vsub.s32 3, %v3934
          %v3936 = vrot.slane %v3919, %v3935
          %v3937 = vlaneseq
          %v3938 = vshrl.u32 %v3937, 7
          %v3939 = vsub.s32 4, %v3938
          %v3940 = vrot.slane %v3919, %v3939
          %v3941 = vlaneseq
          %v3942 = vshrl.u32 %v3941, 7
          %v3943 = vsub.s32 5, %v3942
          %v3944 = vrot.slane %v3919, %v3943
          %v3945 = vlaneseq
          %v3946 = vshrl.u32 %v3945, 7
          %v3947 = vsub.s32 6, %v3946
          %v3948 = vrot.slane %v3919, %v3947
          %v3949 = vlaneseq
          %v3950 = vshrl.u32 %v3949, 7
          %v3951 = vsub.s32 7, %v3950
          %v3952 = vrot.slane %v3919, %v3951
          %v3965 = vcombine.high %v3835, %v3835
          %v3966 = vcombine.high %v3836, %v3836
          %v3967 = vcombine.high %v3837, %v3837
          %v3968 = vcombine.high %v3838, %v3838
          %v3973 = vmul.f32 %v3924, %v3835
          %v3974 = vmul.f32 %v3928, %v3965
          %v3975 = vmul.f32 %v3932, %v3836
          %v3976 = vmul.f32 %v3936, %v3966
          %v3977 = vmul.f32 %v3940, %v3837
          %v3978 = vmul.f32 %v3944, %v3967
          %v3979 = vmul.f32 %v3948, %v3838
          %v3980 = vmul.f32 %v3952, %v3968
          %v3981 = vadd.f32 %v3911, 1e-05
          %v3982 = vadd.f32 %v3912, 1e-05
          %v3983 = vadd.f32 %v3913, 1e-05
          %v3984 = vadd.f32 %v3914, 1e-05
          %v3985 = vadd.f32 %v3915, 1e-05
          %v3986 = vadd.f32 %v3916, 1e-05
          %v3987 = vadd.f32 %v3917, 1e-05
          %v3988 = vadd.f32 %v3918, 1e-05
          %v3989 = vrsqrt.pop %v3981
          %v3990 = vrsqrt.pop %v3982
          %v3991 = vrsqrt.pop %v3983
          %v3992 = vrsqrt.pop %v3984
          %v3993 = vrsqrt.pop %v3985
          %v3994 = vrsqrt.pop %v3986
          %v3995 = vrsqrt.pop %v3987
          %v3996 = vrsqrt.pop %v3988
          %v3997 = vmul.f32 %v3973, %v3989
          %v3998 = vmul.f32 %v3974, %v3990
          %v3999 = vmul.f32 %v3975, %v3991
          %v4000 = vmul.f32 %v3976, %v3992
          %v4001 = vmul.f32 %v3977, %v3993
          %v4002 = vmul.f32 %v3978, %v3994
          %v4003 = vmul.f32 %v3979, %v3995
          %v4004 = vmul.f32 %v3980, %v3996
          %v4005 = vld [vmem:[#allocation8] sm:$0xff]
          %v4007 = vlaneseq
          %v4008 = vshrl.u32 %v4007, 7
          %v4009 = vsub.s32 0, %v4008
          %v4010 = vrot.slane %v4005, %v4009
          %v4011 = vlaneseq
          %v4012 = vshrl.u32 %v4011, 7
          %v4013 = vsub.s32 1, %v4012
          %v4014 = vrot.slane %v4005, %v4013
          %v4015 = vlaneseq
          %v4016 = vshrl.u32 %v4015, 7
          %v4017 = vsub.s32 2, %v4016
          %v4018 = vrot.slane %v4005, %v4017
          %v4019 = vlaneseq
          %v4020 = vshrl.u32 %v4019, 7
          %v4021 = vsub.s32 3, %v4020
          %v4022 = vrot.slane %v4005, %v4021
          %v4023 = vlaneseq
          %v4024 = vshrl.u32 %v4023, 7
          %v4025 = vsub.s32 4, %v4024
          %v4026 = vrot.slane %v4005, %v4025
          %v4027 = vlaneseq
          %v4028 = vshrl.u32 %v4027, 7
          %v4029 = vsub.s32 5, %v4028
          %v4030 = vrot.slane %v4005, %v4029
          %v4031 = vlaneseq
          %v4032 = vshrl.u32 %v4031, 7
          %v4033 = vsub.s32 6, %v4032
          %v4034 = vrot.slane %v4005, %v4033
          %v4035 = vlaneseq
          %v4036 = vshrl.u32 %v4035, 7
          %v4037 = vsub.s32 7, %v4036
          %v4038 = vrot.slane %v4005, %v4037
          %v4047 = vadd.f32 %v3997, %v4010
          %v4048 = vadd.f32 %v3998, %v4014
          %v4049 = vadd.f32 %v3999, %v4018
          %v4050 = vadd.f32 %v4000, %v4022
          %v4051 = vadd.f32 %v4001, %v4026
          %v4052 = vadd.f32 %v4002, %v4030
          %v4053 = vadd.f32 %v4003, %v4034
          %v4054 = vadd.f32 %v4004, %v4038
          %vm4055 = vcmp.gt.f32.partialorder %v4047, 0.0
          %vm4056 = vcmp.gt.f32.partialorder %v4048, 0.0
          %vm4057 = vcmp.gt.f32.partialorder %v4049, 0.0
          %vm4058 = vcmp.gt.f32.partialorder %v4050, 0.0
          %vm4059 = vcmp.gt.f32.partialorder %v4051, 0.0
          %vm4060 = vcmp.gt.f32.partialorder %v4052, 0.0
          %vm4061 = vcmp.gt.f32.partialorder %v4053, 0.0
          %vm4062 = vcmp.gt.f32.partialorder %v4054, 0.0
          %v4063 = vmul.f32 %v4047, 0.01
          %v4064 = vmul.f32 %v4048, 0.01
          %v4065 = vmul.f32 %v4049, 0.01
          %v4066 = vmul.f32 %v4050, 0.01
          %v4067 = vmul.f32 %v4051, 0.01
          %v4068 = vmul.f32 %v4052, 0.01
          %v4069 = vmul.f32 %v4053, 0.01
          %v4070 = vmul.f32 %v4054, 0.01
          %v4071 = vsel %vm4055, %v4047, %v4063
          %v4072 = vsel %vm4056, %v4048, %v4064
          %v4073 = vsel %vm4057, %v4049, %v4065
          %v4074 = vsel %vm4058, %v4050, %v4066
          %v4075 = vsel %vm4059, %v4051, %v4067
          %v4076 = vsel %vm4060, %v4052, %v4068
          %v4077 = vsel %vm4061, %v4053, %v4069
          %v4078 = vsel %vm4062, %v4054, %v4070
          %v4079 = vld [vmem:[%s4] sm:$0xff]
          %v4080 = vld [vmem:[%s4 + $0x8] sm:$0xff]
          %v4081 = vld [vmem:[%s4 + $0x10] sm:$0xff]
          %v4082 = vld [vmem:[%s4 + $0x18] sm:$0xff]
          %v4083 = vld [vmem:[%s4 + $0x20] sm:$0xff]
          %v4084 = vld [vmem:[%s4 + $0x28] sm:$0xff]
          %v4085 = vld [vmem:[%s4 + $0x30] sm:$0xff]
          %v4086 = vld [vmem:[%s4 + $0x38] sm:$0xff]
          %v4087 = vld [vmem:[%s4 + $0x40] sm:$0xff]
          %v4088 = vld [vmem:[%s4 + $0x48] sm:$0xff]
          %v4089 = vld [vmem:[%s4 + $0x50] sm:$0xff]
          %v4090 = vld [vmem:[%s4 + $0x58] sm:$0xff]
          %v4091 = vld [vmem:[%s4 + $0x60] sm:$0xff]
          %v4092 = vld [vmem:[%s4 + $0x68] sm:$0xff]
          %v4093 = vld [vmem:[%s4 + $0x70] sm:$0xff]
          %v4094 = vld [vmem:[%s4 + $0x78] sm:$0xff]
          %v4095 = vld [vmem:[%s4 + $0x80] sm:$0xff]
          %v4096 = vld [vmem:[%s4 + $0x88] sm:$0xff]
          %v4097 = vld [vmem:[%s4 + $0x90] sm:$0xff]
          %v4098 = vld [vmem:[%s4 + $0x98] sm:$0xff]
          %v4099 = vld [vmem:[%s4 + $0xa0] sm:$0xff]
          %v4100 = vld [vmem:[%s4 + $0xa8] sm:$0xff]
          %v4101 = vld [vmem:[%s4 + $0xb0] sm:$0xff]
          %v4102 = vld [vmem:[%s4 + $0xb8] sm:$0xff]
          %v4103 = vld [vmem:[%s4 + $0xc0] sm:$0xff]
          %v4104 = vld [vmem:[%s4 + $0xc8] sm:$0xff]
          %v4105 = vld [vmem:[%s4 + $0xd0] sm:$0xff]
          %v4106 = vld [vmem:[%s4 + $0xd8] sm:$0xff]
          %v4107 = vld [vmem:[%s4 + $0xe0] sm:$0xff]
          %v4108 = vld [vmem:[%s4 + $0xe8] sm:$0xff]
          %v4109 = vld [vmem:[%s4 + $0xf0] sm:$0xff]
          %v4110 = vld [vmem:[%s4 + $0xf8] sm:$0xff]
          %v4111 = vld [vmem:[%s4 + $0x100] sm:$0xff]
          %v4112 = vld [vmem:[%s4 + $0x108] sm:$0xff]
          %v4113 = vld [vmem:[%s4 + $0x110] sm:$0xff]
          %v4114 = vld [vmem:[%s4 + $0x118] sm:$0xff]
          %v4115 = vld [vmem:[%s4 + $0x120] sm:$0xff]
          %v4116 = vld [vmem:[%s4 + $0x128] sm:$0xff]
          %v4117 = vld [vmem:[%s4 + $0x130] sm:$0xff]
          %v4118 = vld [vmem:[%s4 + $0x138] sm:$0xff]
          %v4119 = vld [vmem:[%s4 + $0x140] sm:$0xff]
          %v4120 = vld [vmem:[%s4 + $0x148] sm:$0xff]
          %v4121 = vld [vmem:[%s4 + $0x150] sm:$0xff]
          %v4122 = vld [vmem:[%s4 + $0x158] sm:$0xff]
          %v4123 = vld [vmem:[%s4 + $0x160] sm:$0xff]
          %v4124 = vld [vmem:[%s4 + $0x168] sm:$0xff]
          %v4125 = vld [vmem:[%s4 + $0x170] sm:$0xff]
          %v4126 = vld [vmem:[%s4 + $0x178] sm:$0xff]
          %v4127 = vld [vmem:[%s4 + $0x180] sm:$0xff]
          %v4128 = vld [vmem:[%s4 + $0x188] sm:$0xff]
          %v4129 = vld [vmem:[%s4 + $0x190] sm:$0xff]
          %v4130 = vld [vmem:[%s4 + $0x198] sm:$0xff]
          %v4131 = vld [vmem:[%s4 + $0x1a0] sm:$0xff]
          %v4132 = vld [vmem:[%s4 + $0x1a8] sm:$0xff]
          %v4133 = vld [vmem:[%s4 + $0x1b0] sm:$0xff]
          %v4134 = vld [vmem:[%s4 + $0x1b8] sm:$0xff]
          %v4135 = vld [vmem:[%s4 + $0x1c0] sm:$0xff]
          %v4136 = vld [vmem:[%s4 + $0x1c8] sm:$0xff]
          %v4137 = vld [vmem:[%s4 + $0x1d0] sm:$0xff]
          %v4138 = vld [vmem:[%s4 + $0x1d8] sm:$0xff]
          %v4139 = vld [vmem:[%s4 + $0x1e0] sm:$0xff]
          %v4140 = vld [vmem:[%s4 + $0x1e8] sm:$0xff]
          %v4141 = vld [vmem:[%s4 + $0x1f0] sm:$0xff]
          %v4142 = vld [vmem:[%s4 + $0x1f8] sm:$0xff]
          %v4143 = vld [vmem:[%s4 + $0x200] sm:$0xff]
          %v4144 = vld [vmem:[%s4 + $0x208] sm:$0xff]
          %v4145 = vld [vmem:[%s4 + $0x210] sm:$0xff]
          %v4146 = vld [vmem:[%s4 + $0x218] sm:$0xff]
          %v4147 = vld [vmem:[%s4 + $0x220] sm:$0xff]
          %v4148 = vld [vmem:[%s4 + $0x228] sm:$0xff]
          %v4149 = vld [vmem:[%s4 + $0x230] sm:$0xff]
          %v4150 = vld [vmem:[%s4 + $0x238] sm:$0xff]
          %v4151 = vld [vmem:[%s4 + $0x240] sm:$0xff]
          %v4152 = vld [vmem:[%s4 + $0x248] sm:$0xff]
          %v4153 = vld [vmem:[%s4 + $0x250] sm:$0xff]
          %v4154 = vld [vmem:[%s4 + $0x258] sm:$0xff]
          %v4155 = vld [vmem:[%s4 + $0x260] sm:$0xff]
          %v4156 = vld [vmem:[%s4 + $0x268] sm:$0xff]
          %v4157 = vld [vmem:[%s4 + $0x270] sm:$0xff]
          %v4158 = vld [vmem:[%s4 + $0x278] sm:$0xff]
          %v4159 = vld [vmem:[%s4 + $0x280] sm:$0xff]
          %v4160 = vld [vmem:[%s4 + $0x288] sm:$0xff]
          %v4161 = vld [vmem:[%s4 + $0x290] sm:$0xff]
          %v4162 = vld [vmem:[%s4 + $0x298] sm:$0xff]
          %v4163 = vld [vmem:[%s4 + $0x2a0] sm:$0xff]
          %v4164 = vld [vmem:[%s4 + $0x2a8] sm:$0xff]
          %v4165 = vld [vmem:[%s4 + $0x2b0] sm:$0xff]
          %v4166 = vld [vmem:[%s4 + $0x2b8] sm:$0xff]
          %v4167 = vld [vmem:[%s4 + $0x2c0] sm:$0xff]
          %v4168 = vld [vmem:[%s4 + $0x2c8] sm:$0xff]
          %v4169 = vld [vmem:[%s4 + $0x2d0] sm:$0xff]
          %v4170 = vld [vmem:[%s4 + $0x2d8] sm:$0xff]
          %v4171 = vld [vmem:[%s4 + $0x2e0] sm:$0xff]
          %v4172 = vld [vmem:[%s4 + $0x2e8] sm:$0xff]
          %v4173 = vld [vmem:[%s4 + $0x2f0] sm:$0xff]
          %v4174 = vld [vmem:[%s4 + $0x2f8] sm:$0xff]
          %v4175 = vld [vmem:[%s4 + $0x300] sm:$0xff]
          %v4176 = vld [vmem:[%s4 + $0x308] sm:$0xff]
          %v4177 = vld [vmem:[%s4 + $0x310] sm:$0xff]
          %v4178 = vld [vmem:[%s4 + $0x318] sm:$0xff]
          %v4179 = vld [vmem:[%s4 + $0x320] sm:$0xff]
          %v4180 = vld [vmem:[%s4 + $0x328] sm:$0xff]
          %v4181 = vld [vmem:[%s4 + $0x330] sm:$0xff]
          %v4182 = vld [vmem:[%s4 + $0x338] sm:$0xff]
          %v4183 = vld [vmem:[%s4 + $0x340] sm:$0xff]
          %v4184 = vld [vmem:[%s4 + $0x348] sm:$0xff]
          %v4185 = vld [vmem:[%s4 + $0x350] sm:$0xff]
          %v4186 = vld [vmem:[%s4 + $0x358] sm:$0xff]
          %v4187 = vld [vmem:[%s4 + $0x360] sm:$0xff]
          %v4188 = vld [vmem:[%s4 + $0x368] sm:$0xff]
          %v4189 = vld [vmem:[%s4 + $0x370] sm:$0xff]
          %v4190 = vld [vmem:[%s4 + $0x378] sm:$0xff]
          %v4191 = vld [vmem:[%s4 + $0x380] sm:$0xff]
          %v4192 = vld [vmem:[%s4 + $0x388] sm:$0xff]
          %v4193 = vld [vmem:[%s4 + $0x390] sm:$0xff]
          %v4194 = vld [vmem:[%s4 + $0x398] sm:$0xff]
          %v4195 = vld [vmem:[%s4 + $0x3a0] sm:$0xff]
          %v4196 = vld [vmem:[%s4 + $0x3a8] sm:$0xff]
          %v4197 = vld [vmem:[%s4 + $0x3b0] sm:$0xff]
          %v4198 = vld [vmem:[%s4 + $0x3b8] sm:$0xff]
          %v4199 = vld [vmem:[%s4 + $0x3c0] sm:$0xff]
          %v4200 = vld [vmem:[%s4 + $0x3c8] sm:$0xff]
          %v4201 = vld [vmem:[%s4 + $0x3d0] sm:$0xff]
          %v4202 = vld [vmem:[%s4 + $0x3d8] sm:$0xff]
          %v4203 = vld [vmem:[%s4 + $0x3e0] sm:$0xff]
          %v4204 = vld [vmem:[%s4 + $0x3e8] sm:$0xff]
          %v4205 = vld [vmem:[%s4 + $0x3f0] sm:$0xff]
          %v4206 = vld [vmem:[%s4 + $0x3f8] sm:$0xff]
          %v4207 = vld [vmem:[#allocation3] sm:$0x1]
          %v4209 = vlaneseq
          %v4210 = vshrl.u32 %v4209, 7
          %v4211 = vsub.s32 0, %v4210
          %v4212 = vrot.slane %v4207, %v4211
          %4214 = vmatprep.subr.mxu0 0.0
          %4215 = vmatpush1.msra.mxu0 %v4094
          %4216 = vmatprep.subr.mxu0 0.0
          %4217 = vmatpush1.msra.mxu0 %v4093
          %4218 = vmatprep.subr.mxu0 0.0
          %4219 = vmatpush1.msra.mxu0 %v4092
          %4220 = vmatprep.subr.mxu0 0.0
          %4221 = vmatpush1.msra.mxu0 %v4091
          %4222 = vmatprep.subr.mxu0 0.0
          %4223 = vmatpush1.msra.mxu0 %v4090
          %4224 = vmatprep.subr.mxu0 0.0
          %4225 = vmatpush1.msra.mxu0 %v4089
          %4226 = vmatprep.subr.mxu0 0.0
          %4227 = vmatpush1.msra.mxu0 %v4088
          %4228 = vmatprep.subr.mxu0 0.0
          %4229 = vmatpush1.msra.mxu0 %v4087
          %4230 = vmatprep.subr.mxu0 0.0
          %4231 = vmatpush1.msra.mxu0 %v4086
          %4232 = vmatprep.subr.mxu0 0.0
          %4233 = vmatpush1.msra.mxu0 %v4085
          %4234 = vmatprep.subr.mxu0 0.0
          %4235 = vmatpush1.msra.mxu0 %v4084
          %4236 = vmatprep.subr.mxu0 0.0
          %4237 = vmatpush1.msra.mxu0 %v4083
          %4238 = vmatprep.subr.mxu0 0.0
          %4239 = vmatpush1.msra.mxu0 %v4082
          %4240 = vmatprep.subr.mxu0 0.0
          %4241 = vmatpush1.msra.mxu0 %v4081
          %4242 = vmatprep.subr.mxu0 0.0
          %4243 = vmatpush1.msra.mxu0 %v4080
          %4244 = vmatprep.subr.mxu0 0.0
          %4245 = vmatpush1.msra.mxu0 %v4079
          %4246 = vmatprep.subr.mxu0 0.0
          %4247 = vmatpush2.msra.mxu0 %v4110
          %4248 = vmatprep.subr.mxu0 0.0
          %4249 = vmatpush2.msra.mxu0 %v4109
          %4250 = vmatprep.subr.mxu0 0.0
          %4251 = vmatpush2.msra.mxu0 %v4108
          %4252 = vmatprep.subr.mxu0 0.0
          %4253 = vmatpush2.msra.mxu0 %v4107
          %4254 = vmatprep.subr.mxu0 0.0
          %4255 = vmatpush2.msra.mxu0 %v4106
          %4256 = vmatprep.subr.mxu0 0.0
          %4257 = vmatpush2.msra.mxu0 %v4105
          %4258 = vmatprep.subr.mxu0 0.0
          %4259 = vmatpush2.msra.mxu0 %v4104
          %4260 = vmatprep.subr.mxu0 0.0
          %4261 = vmatpush2.msra.mxu0 %v4103
          %4262 = vmatprep.subr.mxu0 0.0
          %4263 = vmatpush2.msra.mxu0 %v4102
          %4264 = vmatprep.subr.mxu0 0.0
          %4265 = vmatpush2.msra.mxu0 %v4101
          %4266 = vmatprep.subr.mxu0 0.0
          %4267 = vmatpush2.msra.mxu0 %v4100
          %4268 = vmatprep.subr.mxu0 0.0
          %4269 = vmatpush2.msra.mxu0 %v4099
          %4270 = vmatprep.subr.mxu0 0.0
          %4271 = vmatpush2.msra.mxu0 %v4098
          %4272 = vmatprep.subr.mxu0 0.0
          %4273 = vmatpush2.msra.mxu0 %v4097
          %4274 = vmatprep.subr.mxu0 0.0
          %4275 = vmatpush2.msra.mxu0 %v4096
          %4276 = vmatprep.subr.mxu0 0.0
          %4277 = vmatpush2.msra.mxu0 %v4095
          %4278 = vmatprep.mubr.f32.mxu0 %v4072
          %4279 = vmatmul.mubr.f32.gmra.mxu0 %v4071
          %v4280 = vpop.f32.mrf.mxu0
          %v4281 = vadd.f32 %v4212, %v4280
          %v4282 = vpop.f32.mrf.mxu0
          %4283 = vdwg.mxu0
          %4284 = vmatprep.subr.mxu0 0.0
          %4285 = vmatpush1.msra.mxu0 %v4126
          %4286 = vmatprep.subr.mxu0 0.0
          %4287 = vmatpush1.msra.mxu0 %v4125
          %4288 = vmatprep.subr.mxu0 0.0
          %4289 = vmatpush1.msra.mxu0 %v4124
          %4290 = vmatprep.subr.mxu0 0.0
          %4291 = vmatpush1.msra.mxu0 %v4123
          %4292 = vmatprep.subr.mxu0 0.0
          %4293 = vmatpush1.msra.mxu0 %v4122
          %4294 = vmatprep.subr.mxu0 0.0
          %4295 = vmatpush1.msra.mxu0 %v4121
          %4296 = vmatprep.subr.mxu0 0.0
          %4297 = vmatpush1.msra.mxu0 %v4120
          %4298 = vmatprep.subr.mxu0 0.0
          %4299 = vmatpush1.msra.mxu0 %v4119
          %4300 = vmatprep.subr.mxu0 0.0
          %4301 = vmatpush1.msra.mxu0 %v4118
          %4302 = vmatprep.subr.mxu0 0.0
          %4303 = vmatpush1.msra.mxu0 %v4117
          %4304 = vmatprep.subr.mxu0 0.0
          %4305 = vmatpush1.msra.mxu0 %v4116
          %4306 = vmatprep.subr.mxu0 0.0
          %4307 = vmatpush1.msra.mxu0 %v4115
          %4308 = vmatprep.subr.mxu0 0.0
          %4309 = vmatpush1.msra.mxu0 %v4114
          %4310 = vmatprep.subr.mxu0 0.0
          %4311 = vmatpush1.msra.mxu0 %v4113
          %4312 = vmatprep.subr.mxu0 0.0
          %4313 = vmatpush1.msra.mxu0 %v4112
          %4314 = vmatprep.subr.mxu0 0.0
          %4315 = vmatpush1.msra.mxu0 %v4111
          %4316 = vmatprep.subr.mxu0 0.0
          %4317 = vmatpush2.msra.mxu0 %v4142
          %4318 = vmatprep.subr.mxu0 0.0
          %4319 = vmatpush2.msra.mxu0 %v4141
          %4320 = vmatprep.subr.mxu0 0.0
          %4321 = vmatpush2.msra.mxu0 %v4140
          %4322 = vmatprep.subr.mxu0 0.0
          %4323 = vmatpush2.msra.mxu0 %v4139
          %4324 = vmatprep.subr.mxu0 0.0
          %4325 = vmatpush2.msra.mxu0 %v4138
          %4326 = vmatprep.subr.mxu0 0.0
          %4327 = vmatpush2.msra.mxu0 %v4137
          %4328 = vmatprep.subr.mxu0 0.0
          %4329 = vmatpush2.msra.mxu0 %v4136
          %4330 = vmatprep.subr.mxu0 0.0
          %4331 = vmatpush2.msra.mxu0 %v4135
          %4332 = vmatprep.subr.mxu0 0.0
          %4333 = vmatpush2.msra.mxu0 %v4134
          %4334 = vmatprep.subr.mxu0 0.0
          %4335 = vmatpush2.msra.mxu0 %v4133
          %4336 = vmatprep.subr.mxu0 0.0
          %4337 = vmatpush2.msra.mxu0 %v4132
          %4338 = vmatprep.subr.mxu0 0.0
          %4339 = vmatpush2.msra.mxu0 %v4131
          %4340 = vmatprep.subr.mxu0 0.0
          %4341 = vmatpush2.msra.mxu0 %v4130
          %4342 = vmatprep.subr.mxu0 0.0
          %4343 = vmatpush2.msra.mxu0 %v4129
          %4344 = vmatprep.subr.mxu0 0.0
          %4345 = vmatpush2.msra.mxu0 %v4128
          %4346 = vmatprep.subr.mxu0 0.0
          %4347 = vmatpush2.msra.mxu0 %v4127
          %4348 = vmatprep.mubr.f32.mxu0 %v4074
          %4349 = vmatmul.mubr.f32.gmra.mxu0 %v4073
          %v4350 = vpop.f32.mrf.mxu0
          %v4351 = vadd.f32 %v4281, %v4350
          %v4352 = vpop.f32.mrf.mxu0
          %4353 = vdwg.mxu0
          %4354 = vmatprep.subr.mxu0 0.0
          %4355 = vmatpush1.msra.mxu0 %v4158
          %4356 = vmatprep.subr.mxu0 0.0
          %4357 = vmatpush1.msra.mxu0 %v4157
          %4358 = vmatprep.subr.mxu0 0.0
          %4359 = vmatpush1.msra.mxu0 %v4156
          %4360 = vmatprep.subr.mxu0 0.0
          %4361 = vmatpush1.msra.mxu0 %v4155
          %4362 = vmatprep.subr.mxu0 0.0
          %4363 = vmatpush1.msra.mxu0 %v4154
          %4364 = vmatprep.subr.mxu0 0.0
          %4365 = vmatpush1.msra.mxu0 %v4153
          %4366 = vmatprep.subr.mxu0 0.0
          %4367 = vmatpush1.msra.mxu0 %v4152
          %4368 = vmatprep.subr.mxu0 0.0
          %4369 = vmatpush1.msra.mxu0 %v4151
          %4370 = vmatprep.subr.mxu0 0.0
          %4371 = vmatpush1.msra.mxu0 %v4150
          %4372 = vmatprep.subr.mxu0 0.0
          %4373 = vmatpush1.msra.mxu0 %v4149
          %4374 = vmatprep.subr.mxu0 0.0
          %4375 = vmatpush1.msra.mxu0 %v4148
          %4376 = vmatprep.subr.mxu0 0.0
          %4377 = vmatpush1.msra.mxu0 %v4147
          %4378 = vmatprep.subr.mxu0 0.0
          %4379 = vmatpush1.msra.mxu0 %v4146
          %4380 = vmatprep.subr.mxu0 0.0
          %4381 = vmatpush1.msra.mxu0 %v4145
          %4382 = vmatprep.subr.mxu0 0.0
          %4383 = vmatpush1.msra.mxu0 %v4144
          %4384 = vmatprep.subr.mxu0 0.0
          %4385 = vmatpush1.msra.mxu0 %v4143
          %4386 = vmatprep.subr.mxu0 0.0
          %4387 = vmatpush2.msra.mxu0 %v4174
          %4388 = vmatprep.subr.mxu0 0.0
          %4389 = vmatpush2.msra.mxu0 %v4173
          %4390 = vmatprep.subr.mxu0 0.0
          %4391 = vmatpush2.msra.mxu0 %v4172
          %4392 = vmatprep.subr.mxu0 0.0
          %4393 = vmatpush2.msra.mxu0 %v4171
          %4394 = vmatprep.subr.mxu0 0.0
          %4395 = vmatpush2.msra.mxu0 %v4170
          %4396 = vmatprep.subr.mxu0 0.0
          %4397 = vmatpush2.msra.mxu0 %v4169
          %4398 = vmatprep.subr.mxu0 0.0
          %4399 = vmatpush2.msra.mxu0 %v4168
          %4400 = vmatprep.subr.mxu0 0.0
          %4401 = vmatpush2.msra.mxu0 %v4167
          %4402 = vmatprep.subr.mxu0 0.0
          %4403 = vmatpush2.msra.mxu0 %v4166
          %4404 = vmatprep.subr.mxu0 0.0
          %4405 = vmatpush2.msra.mxu0 %v4165
          %4406 = vmatprep.subr.mxu0 0.0
          %4407 = vmatpush2.msra.mxu0 %v4164
          %4408 = vmatprep.subr.mxu0 0.0
          %4409 = vmatpush2.msra.mxu0 %v4163
          %4410 = vmatprep.subr.mxu0 0.0
          %4411 = vmatpush2.msra.mxu0 %v4162
          %4412 = vmatprep.subr.mxu0 0.0
          %4413 = vmatpush2.msra.mxu0 %v4161
          %4414 = vmatprep.subr.mxu0 0.0
          %4415 = vmatpush2.msra.mxu0 %v4160
          %4416 = vmatprep.subr.mxu0 0.0
          %4417 = vmatpush2.msra.mxu0 %v4159
          %4418 = vmatprep.mubr.f32.mxu0 %v4076
          %4419 = vmatmul.mubr.f32.gmra.mxu0 %v4075
          %v4420 = vpop.f32.mrf.mxu0
          %v4421 = vadd.f32 %v4351, %v4420
          %v4422 = vpop.f32.mrf.mxu0
          %4423 = vdwg.mxu0
          %4424 = vmatprep.subr.mxu0 0.0
          %4425 = vmatpush1.msra.mxu0 %v4190
          %4426 = vmatprep.subr.mxu0 0.0
          %4427 = vmatpush1.msra.mxu0 %v4189
          %4428 = vmatprep.subr.mxu0 0.0
          %4429 = vmatpush1.msra.mxu0 %v4188
          %4430 = vmatprep.subr.mxu0 0.0
          %4431 = vmatpush1.msra.mxu0 %v4187
          %4432 = vmatprep.subr.mxu0 0.0
          %4433 = vmatpush1.msra.mxu0 %v4186
          %4434 = vmatprep.subr.mxu0 0.0
          %4435 = vmatpush1.msra.mxu0 %v4185
          %4436 = vmatprep.subr.mxu0 0.0
          %4437 = vmatpush1.msra.mxu0 %v4184
          %4438 = vmatprep.subr.mxu0 0.0
          %4439 = vmatpush1.msra.mxu0 %v4183
          %4440 = vmatprep.subr.mxu0 0.0
          %4441 = vmatpush1.msra.mxu0 %v4182
          %4442 = vmatprep.subr.mxu0 0.0
          %4443 = vmatpush1.msra.mxu0 %v4181
          %4444 = vmatprep.subr.mxu0 0.0
          %4445 = vmatpush1.msra.mxu0 %v4180
          %4446 = vmatprep.subr.mxu0 0.0
          %4447 = vmatpush1.msra.mxu0 %v4179
          %4448 = vmatprep.subr.mxu0 0.0
          %4449 = vmatpush1.msra.mxu0 %v4178
          %4450 = vmatprep.subr.mxu0 0.0
          %4451 = vmatpush1.msra.mxu0 %v4177
          %4452 = vmatprep.subr.mxu0 0.0
          %4453 = vmatpush1.msra.mxu0 %v4176
          %4454 = vmatprep.subr.mxu0 0.0
          %4455 = vmatpush1.msra.mxu0 %v4175
          %4456 = vmatprep.subr.mxu0 0.0
          %4457 = vmatpush2.msra.mxu0 %v4206
          %4458 = vmatprep.subr.mxu0 0.0
          %4459 = vmatpush2.msra.mxu0 %v4205
          %4460 = vmatprep.subr.mxu0 0.0
          %4461 = vmatpush2.msra.mxu0 %v4204
          %4462 = vmatprep.subr.mxu0 0.0
          %4463 = vmatpush2.msra.mxu0 %v4203
          %4464 = vmatprep.subr.mxu0 0.0
          %4465 = vmatpush2.msra.mxu0 %v4202
          %4466 = vmatprep.subr.mxu0 0.0
          %4467 = vmatpush2.msra.mxu0 %v4201
          %4468 = vmatprep.subr.mxu0 0.0
          %4469 = vmatpush2.msra.mxu0 %v4200
          %4470 = vmatprep.subr.mxu0 0.0
          %4471 = vmatpush2.msra.mxu0 %v4199
          %4472 = vmatprep.subr.mxu0 0.0
          %4473 = vmatpush2.msra.mxu0 %v4198
          %4474 = vmatprep.subr.mxu0 0.0
          %4475 = vmatpush2.msra.mxu0 %v4197
          %4476 = vmatprep.subr.mxu0 0.0
          %4477 = vmatpush2.msra.mxu0 %v4196
          %4478 = vmatprep.subr.mxu0 0.0
          %4479 = vmatpush2.msra.mxu0 %v4195
          %4480 = vmatprep.subr.mxu0 0.0
          %4481 = vmatpush2.msra.mxu0 %v4194
          %4482 = vmatprep.subr.mxu0 0.0
          %4483 = vmatpush2.msra.mxu0 %v4193
          %4484 = vmatprep.subr.mxu0 0.0
          %4485 = vmatpush2.msra.mxu0 %v4192
          %4486 = vmatprep.subr.mxu0 0.0
          %4487 = vmatpush2.msra.mxu0 %v4191
          %4488 = vmatprep.mubr.f32.mxu0 %v4078
          %4489 = vmatmul.mubr.f32.gmra.mxu0 %v4077
          %v4490 = vpop.f32.mrf.mxu0
          %v4491 = vadd.f32 %v4421, %v4490
          %v4492 = vpop.f32.mrf.mxu0
          %4493 = vdwg.mxu0
          %v4494 = vsub.f32 0.0, %v4491
          %v4495 = vmul.f32 %v4494, 1.442695
          %v4496 = vpow.pop %v4495
          %v4497 = vadd.f32 %v4496, 1.0
          %v4498 = vrcp.pop %v4497
          %vm4499 = vcmask 3072
          %4500 = vst.msk [vmem:[%s6] sm:$0xf] %vm4499, %v4498
        $region64: #{discriminator_forward.5} parent=43 // pred_fallthru
          _
        // Predicated region
        $region65: #{discriminator_forward.5} parent=43 // pred_check
          %p4501 = pneg %p172
        $region66: #{discriminator_forward.5} parent=43 // pred_check_branch
          %4503 = sbr.rel (%p4501) target = $region68
        $region67: #{discriminator_forward.5} parent=43 // pred_region
          _
        $region68: #{discriminator_forward.5} parent=43 // pred_fallthru
          _
        // Predicated region
        $region69: #{discriminator_forward.5} parent=43 // pred_check
          %p4504 = pneg %p172
        $region70: #{discriminator_forward.5} parent=43 // pred_check_branch
          %4506 = sbr.rel (%p4504) target = $region72
        $region71: #{discriminator_forward.5} parent=43 // pred_region
          _
        $region72: #{discriminator_forward.5} parent=43 // pred_fallthru
          _
      $region44: #{discriminator_forward.5} parent=5 // pred_fallthru
        _
      %p4507 = scmp.le.s32.totalorder 2, %s18
      // Predicated region
      $region73: #{discriminator_forward.5} parent=5 // pred_check
        %p4508 = pneg %p4507
      $region74: #{discriminator_forward.5} parent=5 // pred_check_branch
        %4510 = sbr.rel (%p4508) target = $region76
      $region75: #{discriminator_forward.5} parent=5 // pred_region
        %s4511 = ssub.s32 %s18, 2
      $region76: #{discriminator_forward.5} parent=5 // pred_fallthru
        _
    $region6: #{discriminator_forward.5} parent=1 // loop_footer
      %s22 = sadd.s32 1, %s18
    $region7: #{discriminator_forward.5} parent=1 // loop_footer_branch
      %17 = sbr.rel target = $region3
    $region8: #{discriminator_forward.5} parent=1 // loop_exit
      _
    %4512 = vsyncpa [#allocation5], 1
    %s4513 = scalar_lea.sflag [#allocation5], 1
    %4514 = vsyncpa %s4513, 1
    %4515 = vsyncpa [#allocation7], 1

</llo_original>
